<compile_context>
chip_gen: v7x
topology: tpu7x:2x2x1
jax: 0.10.0
libtpu: 0.0.40
codegen_flags: <defaults>
</compile_context>

<pallas_src>
import jax
import jax.numpy as jnp
from jax.experimental import pallas as pl
from jax.experimental.pallas import tpu as pltpu

EPS = 1e-5  # nn.InstanceNorm2d default


def _resnet_block_kernel(x_ref, w1_ref, w2_ref, o_ref, pad_scr):
    # x_ref:   (1, H, W, Cp)    f32   one sample per grid step, NHWC, channels lane-dense
    # w*_ref:  (9, Cp, Cp)      bf16  per-tap weights, index t = kh*3 + kw, (cin, cout)
    # o_ref:   (1, H, W, Cp)    f32
    # pad_scr: (H+2, W+2, Cp)   bf16  persistent reflection-pad scratch (reused by both convs)
    _, H, W, Cp = x_ref.shape
    HW = H * W

    def reflect_pad(a):
        # ReflectionPad2d(1): interior + mirrored edge rows, then mirrored edge columns
        # read back from the scratch itself (this also fills the corners correctly).
        pad_scr[pl.ds(1, H), pl.ds(1, W), :] = a
        pad_scr[pl.ds(0, 1), pl.ds(1, W), :] = a[1:2]
        pad_scr[pl.ds(H + 1, 1), pl.ds(1, W), :] = a[H - 2:H - 1]
        pad_scr[:, pl.ds(0, 1), :] = pad_scr[:, pl.ds(2, 1), :]
        pad_scr[:, pl.ds(W + 1, 1), :] = pad_scr[:, pl.ds(W - 1, 1), :]

    def conv3x3_in(w_ref):
        # 9 accumulating matmuls (one per tap), bf16 x bf16 -> f32, pure value chain.
        acc = None
        for kh in range(3):
            for kw in range(3):
                lhs = pad_scr[pl.ds(kh, H), pl.ds(kw, W), :].reshape(HW, Cp)  # bf16
                part = jnp.dot(lhs, w_ref[kh * 3 + kw],
                               preferred_element_type=jnp.float32)
                acc = part if acc is None else acc + part
        # Fused InstanceNorm (no affine), two-pass / centered variance (biased, like PyTorch).
        inv_n = 1.0 / HW
        mean = jnp.sum(acc, axis=0, keepdims=True) * inv_n
        centered = acc - mean
        var = jnp.sum(centered * centered, axis=0, keepdims=True) * inv_n
        return centered * jax.lax.rsqrt(var + EPS)          # (HW, Cp) f32

    # conv1 -> instance norm -> relu
    reflect_pad(x_ref[0].astype(jnp.bfloat16))
    h = jnp.maximum(conv3x3_in(w1_ref), 0.0)
    # TODO(synk): dropout (p=0.5) branch of the module is not implemented (default dropout=False).

    # conv2 -> instance norm -> residual add (residual read from the f32 input, not the bf16 scratch)
    reflect_pad(h.reshape(H, W, Cp).astype(jnp.bfloat16))
    z = conv3x3_in(w2_ref).reshape(H, W, Cp)
    o_ref[0] = (x_ref[0] + z).astype(o_ref.dtype)


def resnet_block_forward(x_nchw, w1, b1, w2, b2):
    """x_nchw: (B, C, H, W) f32; w*: (C, C, 3, 3) OIHW; b*: (C,). Returns (B, C, H, W).

    b1/b2 are accepted for parity with the PyTorch module but are not used: a per-channel
    conv bias is exactly cancelled by the following no-affine InstanceNorm.
    """
    del b1, b2  # mathematically a no-op under no-affine InstanceNorm
    B, C, H, W = x_nchw.shape
    Cp = ((C + 127) // 128) * 128  # lane-dense channel count (no-op when C % 128 == 0)

    # NOTE: in a full generator keep activations NHWC (and channel-padded) end-to-end;
    # the NCHW<->NHWC transposes here exist only for the PyTorch-layout boundary of this demo.
    x = jnp.transpose(x_nchw, (0, 2, 3, 1))                       # NHWC
    if Cp != C:
        x = jnp.pad(x, ((0, 0), (0, 0), (0, 0), (0, Cp - C)))

    def prep_w(w):
        wk = jnp.transpose(w, (2, 3, 1, 0))                        # (kh, kw, Cin, Cout)
        if Cp != C:
            wk = jnp.pad(wk, ((0, 0), (0, 0), (0, Cp - C), (0, Cp - C)))
        return wk.reshape(9, Cp, Cp).astype(jnp.bfloat16)          # per-tap, bf16

    out = pl.pallas_call(
        _resnet_block_kernel,
        out_shape=jax.ShapeDtypeStruct((B, H, W, Cp), x.dtype),
        grid_spec=pltpu.PrefetchScalarGridSpec(
            num_scalar_prefetch=0,
            grid=(B,),
            in_specs=[
                pl.BlockSpec((1, H, W, Cp), lambda b: (b, 0, 0, 0)),   # x (single copy)
                pl.BlockSpec((9, Cp, Cp), lambda b: (0, 0, 0)),        # w1 (per-tap, bf16)
                pl.BlockSpec((9, Cp, Cp), lambda b: (0, 0, 0)),        # w2
            ],
            out_specs=pl.BlockSpec((1, H, W, Cp), lambda b: (b, 0, 0, 0)),
            scratch_shapes=[pltpu.VMEM((H + 2, W + 2, Cp), jnp.bfloat16)],
        ),
        compiler_params=pltpu.CompilerParams(
            dimension_semantics=("parallel",),
            # >= whole-image working set at CycleGAN scale (~26-30 MiB after removing
            # the im2col patch), <= v7x's 64 MiB physical VMEM per TensorCore.
            vmem_limit_bytes=48 * 1024 * 1024,
        ),
    )(x, prep_w(w1), prep_w(w2))

    out = out[..., :C]                            # drop channel padding
    return jnp.transpose(out, (0, 3, 1, 2))       # back to NCHW


def _reference_forward(x, w1, b1, w2, b2):
    """Pure-JAX f32 reference (NCHW), semantically identical to the PyTorch module."""
    def refpad(t):
        return jnp.pad(t, ((0, 0), (0, 0), (1, 1), (1, 1)), mode="reflect")

    def conv(t, w, b):
        y = jax.lax.conv_general_dilated(
            t, w, window_strides=(1, 1), padding="VALID",
            dimension_numbers=("NCHW", "OIHW", "NCHW"))
        return y + b[None, :, None, None]

    def inorm(t):
        m = jnp.mean(t, axis=(2, 3), keepdims=True)
        v = jnp.var(t, axis=(2, 3), keepdims=True)
        return (t - m) * jax.lax.rsqrt(v + EPS)

    h = jnp.maximum(inorm(conv(refpad(x), w1, b1)), 0.0)
    h = inorm(conv(refpad(h), w2, b2))
    return x + h


if __name__ == "__main__":
    B, C, H, W = 2, 4, 16, 16
    key = jax.random.PRNGKey(0)
    kx, kw1, kb1, kw2, kb2 = jax.random.split(key, 5)

    x = jax.random.normal(kx, (B, C, H, W), dtype=jnp.float32)
    fan_in = C * 3 * 3
    w1 = jax.random.normal(kw1, (C, C, 3, 3), dtype=jnp.float32) / jnp.sqrt(fan_in)
    b1 = jax.random.normal(kb1, (C,), dtype=jnp.float32) * 0.1
    w2 = jax.random.normal(kw2, (C, C, 3, 3), dtype=jnp.float32) / jnp.sqrt(fan_in)
    b2 = jax.random.normal(kb2, (C,), dtype=jnp.float32) * 0.1

    out = jax.block_until_ready(resnet_block_forward(x, w1, b1, w2, b2))
    ref = jax.block_until_ready(_reference_forward(x, w1, b1, w2, b2))

    assert out.shape == (B, C, H, W)
    # bf16 MXU operands (f32 accumulation / IN stats / residual) => looser tolerance than pure f32.
    assert jnp.allclose(out, ref, atol=5e-2, rtol=5e-2), "mismatch vs JAX reference"

    print("KERNEL_OK")
</pallas_src>

<mosaic_0001>
module attributes {stable_mosaic.version = 11 : i64} {
  func.func @_resnet_block_kernel(%arg0: i32, %arg1: memref<1x16x16x128xf32, #tpu.memory_space<vmem>>, %arg2: memref<9x128x128xbf16, #tpu.memory_space<vmem>>, %arg3: memref<9x128x128xbf16, #tpu.memory_space<vmem>>, %arg4: memref<1x16x16x128xf32, #tpu.memory_space<vmem>>, %arg5: memref<18x18x128xbf16, #tpu.memory_space<vmem>>) attributes {dimension_semantics = [#tpu.dimension_semantics<parallel>], iteration_bounds = array<i64: 2>, scalar_prefetch = 0 : i64, scratch_operands = 1 : i64, tpu.core_type = #tpu.core_type<tc>, window_params = [{transform_indices = @transform_0, window_bounds = array<i64: 1, 16, 16, 128>}, {pipeline_mode = #tpu.pipeline_mode<synchronous>, transform_indices = @transform_1, window_bounds = array<i64: 9, 128, 128>}, {pipeline_mode = #tpu.pipeline_mode<synchronous>, transform_indices = @transform_2, window_bounds = array<i64: 9, 128, 128>}, {transform_indices = @transform_3, window_bounds = array<i64: 1, 16, 16, 128>}]} {
    %c0 = arith.constant 0 : index
    %c0_0 = arith.constant 0 : index
    %c0_1 = arith.constant 0 : index
    %c0_2 = arith.constant 0 : index
    %0 = vector.load %arg1[%c0, %c0_0, %c0_1, %c0_2] : memref<1x16x16x128xf32, #tpu.memory_space<vmem>>, vector<1x16x16x128xf32>
    %1 = vector.shape_cast %0 : vector<1x16x16x128xf32> to vector<16x16x128xf32>
    %2 = arith.truncf %1 : vector<16x16x128xf32> to vector<16x16x128xbf16>
    %c1 = arith.constant 1 : index
    %c1_3 = arith.constant 1 : index
    %c0_4 = arith.constant 0 : index
    %3 = vector.load %arg5[%c1, %c1_3, %c0_4] : memref<18x18x128xbf16, #tpu.memory_space<vmem>>, vector<16x16x128xbf16>
    tpu.vector_store %arg5[%c1, %c1_3, %c0_4], %2 {strides = array<i32>} : memref<18x18x128xbf16, #tpu.memory_space<vmem>>, vector<16x16x128xbf16>,
    %4 = vector.extract_strided_slice %2 {offsets = [1, 0, 0], sizes = [1, 16, 128], strides = [1, 1, 1]} : vector<16x16x128xbf16> to vector<1x16x128xbf16>
    %c0_5 = arith.constant 0 : index
    %c1_6 = arith.constant 1 : index
    %c0_7 = arith.constant 0 : index
    %5 = vector.load %arg5[%c0_5, %c1_6, %c0_7] : memref<18x18x128xbf16, #tpu.memory_space<vmem>>, vector<1x16x128xbf16>
    tpu.vector_store %arg5[%c0_5, %c1_6, %c0_7], %4 {strides = array<i32>} : memref<18x18x128xbf16, #tpu.memory_space<vmem>>, vector<1x16x128xbf16>,
    %6 = vector.extract_strided_slice %2 {offsets = [14, 0, 0], sizes = [1, 16, 128], strides = [1, 1, 1]} : vector<16x16x128xbf16> to vector<1x16x128xbf16>
    %c17 = arith.constant 17 : index
    %c1_8 = arith.constant 1 : index
    %c0_9 = arith.constant 0 : index
    %7 = vector.load %arg5[%c17, %c1_8, %c0_9] : memref<18x18x128xbf16, #tpu.memory_space<vmem>>, vector<1x16x128xbf16>
    tpu.vector_store %arg5[%c17, %c1_8, %c0_9], %6 {strides = array<i32>} : memref<18x18x128xbf16, #tpu.memory_space<vmem>>, vector<1x16x128xbf16>,
    %c0_10 = arith.constant 0 : index
    %c2 = arith.constant 2 : index
    %c0_11 = arith.constant 0 : index
    %8 = vector.load %arg5[%c0_10, %c2, %c0_11] : memref<18x18x128xbf16, #tpu.memory_space<vmem>>, vector<18x1x128xbf16>
    %c0_12 = arith.constant 0 : index
    %c0_13 = arith.constant 0 : index
    %c0_14 = arith.constant 0 : index
    %9 = vector.load %arg5[%c0_12, %c0_13, %c0_14] : memref<18x18x128xbf16, #tpu.memory_space<vmem>>, vector<18x1x128xbf16>
    tpu.vector_store %arg5[%c0_12, %c0_13, %c0_14], %8 {strides = array<i32>} : memref<18x18x128xbf16, #tpu.memory_space<vmem>>, vector<18x1x128xbf16>,
    %c0_15 = arith.constant 0 : index
    %c15 = arith.constant 15 : index
    %c0_16 = arith.constant 0 : index
    %10 = vector.load %arg5[%c0_15, %c15, %c0_16] : memref<18x18x128xbf16, #tpu.memory_space<vmem>>, vector<18x1x128xbf16>
    %c0_17 = arith.constant 0 : index
    %c17_18 = arith.constant 17 : index
    %c0_19 = arith.constant 0 : index
    %11 = vector.load %arg5[%c0_17, %c17_18, %c0_19] : memref<18x18x128xbf16, #tpu.memory_space<vmem>>, vector<18x1x128xbf16>
    tpu.vector_store %arg5[%c0_17, %c17_18, %c0_19], %10 {strides = array<i32>} : memref<18x18x128xbf16, #tpu.memory_space<vmem>>, vector<18x1x128xbf16>,
    %c0_20 = arith.constant 0 : index
    %c0_21 = arith.constant 0 : index
    %c0_22 = arith.constant 0 : index
    %12 = vector.load %arg5[%c0_20, %c0_21, %c0_22] : memref<18x18x128xbf16, #tpu.memory_space<vmem>>, vector<16x16x128xbf16>
    %13 = vector.shape_cast %12 : vector<16x16x128xbf16> to vector<256x128xbf16>
    %c0_23 = arith.constant 0 : index
    %c0_24 = arith.constant 0 : index
    %c0_25 = arith.constant 0 : index
    %14 = vector.load %arg2[%c0_23, %c0_24, %c0_25] : memref<9x128x128xbf16, #tpu.memory_space<vmem>>, vector<1x128x128xbf16>
    %15 = vector.shape_cast %14 : vector<1x128x128xbf16> to vector<128x128xbf16>
    %cst = arith.constant dense<0.000000e+00> : vector<256x128xf32>
    %16 = tpu.matmul %13, %15, %cst {dimension_numbers = #tpu.dot_dimension_numbers<[1], [0], [0], [1], [0, 0, 1, 1], [], []>} : vector<256x128xbf16>, vector<128x128xbf16>, vector<256x128xf32> -> vector<256x128xf32>
    %c0_26 = arith.constant 0 : index
    %c1_27 = arith.constant 1 : index
    %c0_28 = arith.constant 0 : index
    %17 = vector.load %arg5[%c0_26, %c1_27, %c0_28] : memref<18x18x128xbf16, #tpu.memory_space<vmem>>, vector<16x16x128xbf16>
    %18 = vector.shape_cast %17 : vector<16x16x128xbf16> to vector<256x128xbf16>
    %c1_29 = arith.constant 1 : index
    %c0_30 = arith.constant 0 : index
    %c0_31 = arith.constant 0 : index
    %19 = vector.load %arg2[%c1_29, %c0_30, %c0_31] : memref<9x128x128xbf16, #tpu.memory_space<vmem>>, vector<1x128x128xbf16>
    %20 = vector.shape_cast %19 : vector<1x128x128xbf16> to vector<128x128xbf16>
    %cst_32 = arith.constant dense<0.000000e+00> : vector<256x128xf32>
    %21 = tpu.matmul %18, %20, %cst_32 {dimension_numbers = #tpu.dot_dimension_numbers<[1], [0], [0], [1], [0, 0, 1, 1], [], []>} : vector<256x128xbf16>, vector<128x128xbf16>, vector<256x128xf32> -> vector<256x128xf32>
    %22 = arith.addf %16, %21 : vector<256x128xf32>
    %c0_33 = arith.constant 0 : index
    %c2_34 = arith.constant 2 : index
    %c0_35 = arith.constant 0 : index
    %23 = vector.load %arg5[%c0_33, %c2_34, %c0_35] : memref<18x18x128xbf16, #tpu.memory_space<vmem>>, vector<16x16x128xbf16>
    %24 = vector.shape_cast %23 : vector<16x16x128xbf16> to vector<256x128xbf16>
    %c2_36 = arith.constant 2 : index
    %c0_37 = arith.constant 0 : index
    %c0_38 = arith.constant 0 : index
    %25 = vector.load %arg2[%c2_36, %c0_37, %c0_38] : memref<9x128x128xbf16, #tpu.memory_space<vmem>>, vector<1x128x128xbf16>
    %26 = vector.shape_cast %25 : vector<1x128x128xbf16> to vector<128x128xbf16>
    %cst_39 = arith.constant dense<0.000000e+00> : vector<256x128xf32>
    %27 = tpu.matmul %24, %26, %cst_39 {dimension_numbers = #tpu.dot_dimension_numbers<[1], [0], [0], [1], [0, 0, 1, 1], [], []>} : vector<256x128xbf16>, vector<128x128xbf16>, vector<256x128xf32> -> vector<256x128xf32>
    %28 = arith.addf %22, %27 : vector<256x128xf32>
    %c1_40 = arith.constant 1 : index
    %c0_41 = arith.constant 0 : index
    %c0_42 = arith.constant 0 : index
    %29 = vector.load %arg5[%c1_40, %c0_41, %c0_42] : memref<18x18x128xbf16, #tpu.memory_space<vmem>>, vector<16x16x128xbf16>
    %30 = vector.shape_cast %29 : vector<16x16x128xbf16> to vector<256x128xbf16>
    %c3 = arith.constant 3 : index
    %c0_43 = arith.constant 0 : index
    %c0_44 = arith.constant 0 : index
    %31 = vector.load %arg2[%c3, %c0_43, %c0_44] : memref<9x128x128xbf16, #tpu.memory_space<vmem>>, vector<1x128x128xbf16>
    %32 = vector.shape_cast %31 : vector<1x128x128xbf16> to vector<128x128xbf16>
    %cst_45 = arith.constant dense<0.000000e+00> : vector<256x128xf32>
    %33 = tpu.matmul %30, %32, %cst_45 {dimension_numbers = #tpu.dot_dimension_numbers<[1], [0], [0], [1], [0, 0, 1, 1], [], []>} : vector<256x128xbf16>, vector<128x128xbf16>, vector<256x128xf32> -> vector<256x128xf32>
    %34 = arith.addf %28, %33 : vector<256x128xf32>
    %c1_46 = arith.constant 1 : index
    %c1_47 = arith.constant 1 : index
    %c0_48 = arith.constant 0 : index
    %35 = vector.load %arg5[%c1_46, %c1_47, %c0_48] : memref<18x18x128xbf16, #tpu.memory_space<vmem>>, vector<16x16x128xbf16>
    %36 = vector.shape_cast %35 : vector<16x16x128xbf16> to vector<256x128xbf16>
    %c4 = arith.constant 4 : index
    %c0_49 = arith.constant 0 : index
    %c0_50 = arith.constant 0 : index
    %37 = vector.load %arg2[%c4, %c0_49, %c0_50] : memref<9x128x128xbf16, #tpu.memory_space<vmem>>, vector<1x128x128xbf16>
    %38 = vector.shape_cast %37 : vector<1x128x128xbf16> to vector<128x128xbf16>
    %cst_51 = arith.constant dense<0.000000e+00> : vector<256x128xf32>
    %39 = tpu.matmul %36, %38, %cst_51 {dimension_numbers = #tpu.dot_dimension_numbers<[1], [0], [0], [1], [0, 0, 1, 1], [], []>} : vector<256x128xbf16>, vector<128x128xbf16>, vector<256x128xf32> -> vector<256x128xf32>
    %40 = arith.addf %34, %39 : vector<256x128xf32>
    %c1_52 = arith.constant 1 : index
    %c2_53 = arith.constant 2 : index
    %c0_54 = arith.constant 0 : index
    %41 = vector.load %arg5[%c1_52, %c2_53, %c0_54] : memref<18x18x128xbf16, #tpu.memory_space<vmem>>, vector<16x16x128xbf16>
    %42 = vector.shape_cast %41 : vector<16x16x128xbf16> to vector<256x128xbf16>
    %c5 = arith.constant 5 : index
    %c0_55 = arith.constant 0 : index
    %c0_56 = arith.constant 0 : index
    %43 = vector.load %arg2[%c5, %c0_55, %c0_56] : memref<9x128x128xbf16, #tpu.memory_space<vmem>>, vector<1x128x128xbf16>
    %44 = vector.shape_cast %43 : vector<1x128x128xbf16> to vector<128x128xbf16>
    %cst_57 = arith.constant dense<0.000000e+00> : vector<256x128xf32>
    %45 = tpu.matmul %42, %44, %cst_57 {dimension_numbers = #tpu.dot_dimension_numbers<[1], [0], [0], [1], [0, 0, 1, 1], [], []>} : vector<256x128xbf16>, vector<128x128xbf16>, vector<256x128xf32> -> vector<256x128xf32>
    %46 = arith.addf %40, %45 : vector<256x128xf32>
    %c2_58 = arith.constant 2 : index
    %c0_59 = arith.constant 0 : index
    %c0_60 = arith.constant 0 : index
    %47 = vector.load %arg5[%c2_58, %c0_59, %c0_60] : memref<18x18x128xbf16, #tpu.memory_space<vmem>>, vector<16x16x128xbf16>
    %48 = vector.shape_cast %47 : vector<16x16x128xbf16> to vector<256x128xbf16>
    %c6 = arith.constant 6 : index
    %c0_61 = arith.constant 0 : index
    %c0_62 = arith.constant 0 : index
    %49 = vector.load %arg2[%c6, %c0_61, %c0_62] : memref<9x128x128xbf16, #tpu.memory_space<vmem>>, vector<1x128x128xbf16>
    %50 = vector.shape_cast %49 : vector<1x128x128xbf16> to vector<128x128xbf16>
    %cst_63 = arith.constant dense<0.000000e+00> : vector<256x128xf32>
    %51 = tpu.matmul %48, %50, %cst_63 {dimension_numbers = #tpu.dot_dimension_numbers<[1], [0], [0], [1], [0, 0, 1, 1], [], []>} : vector<256x128xbf16>, vector<128x128xbf16>, vector<256x128xf32> -> vector<256x128xf32>
    %52 = arith.addf %46, %51 : vector<256x128xf32>
    %c2_64 = arith.constant 2 : index
    %c1_65 = arith.constant 1 : index
    %c0_66 = arith.constant 0 : index
    %53 = vector.load %arg5[%c2_64, %c1_65, %c0_66] : memref<18x18x128xbf16, #tpu.memory_space<vmem>>, vector<16x16x128xbf16>
    %54 = vector.shape_cast %53 : vector<16x16x128xbf16> to vector<256x128xbf16>
    %c7 = arith.constant 7 : index
    %c0_67 = arith.constant 0 : index
    %c0_68 = arith.constant 0 : index
    %55 = vector.load %arg2[%c7, %c0_67, %c0_68] : memref<9x128x128xbf16, #tpu.memory_space<vmem>>, vector<1x128x128xbf16>
    %56 = vector.shape_cast %55 : vector<1x128x128xbf16> to vector<128x128xbf16>
    %cst_69 = arith.constant dense<0.000000e+00> : vector<256x128xf32>
    %57 = tpu.matmul %54, %56, %cst_69 {dimension_numbers = #tpu.dot_dimension_numbers<[1], [0], [0], [1], [0, 0, 1, 1], [], []>} : vector<256x128xbf16>, vector<128x128xbf16>, vector<256x128xf32> -> vector<256x128xf32>
    %58 = arith.addf %52, %57 : vector<256x128xf32>
    %c2_70 = arith.constant 2 : index
    %c2_71 = arith.constant 2 : index
    %c0_72 = arith.constant 0 : index
    %59 = vector.load %arg5[%c2_70, %c2_71, %c0_72] : memref<18x18x128xbf16, #tpu.memory_space<vmem>>, vector<16x16x128xbf16>
    %60 = vector.shape_cast %59 : vector<16x16x128xbf16> to vector<256x128xbf16>
    %c8 = arith.constant 8 : index
    %c0_73 = arith.constant 0 : index
    %c0_74 = arith.constant 0 : index
    %61 = vector.load %arg2[%c8, %c0_73, %c0_74] : memref<9x128x128xbf16, #tpu.memory_space<vmem>>, vector<1x128x128xbf16>
    %62 = vector.shape_cast %61 : vector<1x128x128xbf16> to vector<128x128xbf16>
    %cst_75 = arith.constant dense<0.000000e+00> : vector<256x128xf32>
    %63 = tpu.matmul %60, %62, %cst_75 {dimension_numbers = #tpu.dot_dimension_numbers<[1], [0], [0], [1], [0, 0, 1, 1], [], []>} : vector<256x128xbf16>, vector<128x128xbf16>, vector<256x128xf32> -> vector<256x128xf32>
    %64 = arith.addf %58, %63 : vector<256x128xf32>
    %cst_76 = arith.constant dense<0.000000e+00> : vector<128xf32>
    %65 = vector.multi_reduction <add>, %64, %cst_76 [0] : vector<256x128xf32> to vector<128xf32>
    %66 = vector.shape_cast %65 : vector<128xf32> to vector<1x128xf32>
    %cst_77 = arith.constant 3.906250e-03 : f32
    %67 = vector.broadcast %cst_77 : f32 to vector<1x128xf32>
    %68 = arith.mulf %66, %67 : vector<1x128xf32>
    %69 = vector.broadcast %68 : vector<1x128xf32> to vector<256x128xf32>
    %70 = arith.subf %64, %69 : vector<256x128xf32>
    %71 = arith.mulf %70, %70 : vector<256x128xf32>
    %cst_78 = arith.constant dense<0.000000e+00> : vector<128xf32>
    %72 = vector.multi_reduction <add>, %71, %cst_78 [0] : vector<256x128xf32> to vector<128xf32>
    %73 = vector.shape_cast %72 : vector<128xf32> to vector<1x128xf32>
    %cst_79 = arith.constant 3.906250e-03 : f32
    %74 = vector.broadcast %cst_79 : f32 to vector<1x128xf32>
    %75 = arith.mulf %73, %74 : vector<1x128xf32>
    %cst_80 = arith.constant 9.99999974E-6 : f32
    %76 = vector.broadcast %cst_80 : f32 to vector<1x128xf32>
    %77 = arith.addf %75, %76 : vector<1x128xf32>
    %78 = math.rsqrt %77 : vector<1x128xf32>
    %79 = vector.broadcast %78 : vector<1x128xf32> to vector<256x128xf32>
    %80 = arith.mulf %70, %79 : vector<256x128xf32>
    %cst_81 = arith.constant 0.000000e+00 : f32
    %81 = vector.broadcast %cst_81 : f32 to vector<256x128xf32>
    %82 = arith.maximumf %80, %81 : vector<256x128xf32>
    %83 = vector.shape_cast %82 : vector<256x128xf32> to vector<16x16x128xf32>
    %84 = arith.truncf %83 : vector<16x16x128xf32> to vector<16x16x128xbf16>
    %c1_82 = arith.constant 1 : index
    %c1_83 = arith.constant 1 : index
    %c0_84 = arith.constant 0 : index
    %85 = vector.load %arg5[%c1_82, %c1_83, %c0_84] : memref<18x18x128xbf16, #tpu.memory_space<vmem>>, vector<16x16x128xbf16>
    tpu.vector_store %arg5[%c1_82, %c1_83, %c0_84], %84 {strides = array<i32>} : memref<18x18x128xbf16, #tpu.memory_space<vmem>>, vector<16x16x128xbf16>,
    %86 = vector.extract_strided_slice %84 {offsets = [1, 0, 0], sizes = [1, 16, 128], strides = [1, 1, 1]} : vector<16x16x128xbf16> to vector<1x16x128xbf16>
    %c0_85 = arith.constant 0 : index
    %c1_86 = arith.constant 1 : index
    %c0_87 = arith.constant 0 : index
    %87 = vector.load %arg5[%c0_85, %c1_86, %c0_87] : memref<18x18x128xbf16, #tpu.memory_space<vmem>>, vector<1x16x128xbf16>
    tpu.vector_store %arg5[%c0_85, %c1_86, %c0_87], %86 {strides = array<i32>} : memref<18x18x128xbf16, #tpu.memory_space<vmem>>, vector<1x16x128xbf16>,
    %88 = vector.extract_strided_slice %84 {offsets = [14, 0, 0], sizes = [1, 16, 128], strides = [1, 1, 1]} : vector<16x16x128xbf16> to vector<1x16x128xbf16>
    %c17_88 = arith.constant 17 : index
    %c1_89 = arith.constant 1 : index
    %c0_90 = arith.constant 0 : index
    %89 = vector.load %arg5[%c17_88, %c1_89, %c0_90] : memref<18x18x128xbf16, #tpu.memory_space<vmem>>, vector<1x16x128xbf16>
    tpu.vector_store %arg5[%c17_88, %c1_89, %c0_90], %88 {strides = array<i32>} : memref<18x18x128xbf16, #tpu.memory_space<vmem>>, vector<1x16x128xbf16>,
    %c0_91 = arith.constant 0 : index
    %c2_92 = arith.constant 2 : index
    %c0_93 = arith.constant 0 : index
    %90 = vector.load %arg5[%c0_91, %c2_92, %c0_93] : memref<18x18x128xbf16, #tpu.memory_space<vmem>>, vector<18x1x128xbf16>
    %c0_94 = arith.constant 0 : index
    %c0_95 = arith.constant 0 : index
    %c0_96 = arith.constant 0 : index
    %91 = vector.load %arg5[%c0_94, %c0_95, %c0_96] : memref<18x18x128xbf16, #tpu.memory_space<vmem>>, vector<18x1x128xbf16>
    tpu.vector_store %arg5[%c0_94, %c0_95, %c0_96], %90 {strides = array<i32>} : memref<18x18x128xbf16, #tpu.memory_space<vmem>>, vector<18x1x128xbf16>,
    %c0_97 = arith.constant 0 : index
    %c15_98 = arith.constant 15 : index
    %c0_99 = arith.constant 0 : index
    %92 = vector.load %arg5[%c0_97, %c15_98, %c0_99] : memref<18x18x128xbf16, #tpu.memory_space<vmem>>, vector<18x1x128xbf16>
    %c0_100 = arith.constant 0 : index
    %c17_101 = arith.constant 17 : index
    %c0_102 = arith.constant 0 : index
    %93 = vector.load %arg5[%c0_100, %c17_101, %c0_102] : memref<18x18x128xbf16, #tpu.memory_space<vmem>>, vector<18x1x128xbf16>
    tpu.vector_store %arg5[%c0_100, %c17_101, %c0_102], %92 {strides = array<i32>} : memref<18x18x128xbf16, #tpu.memory_space<vmem>>, vector<18x1x128xbf16>,
    %c0_103 = arith.constant 0 : index
    %c0_104 = arith.constant 0 : index
    %c0_105 = arith.constant 0 : index
    %94 = vector.load %arg5[%c0_103, %c0_104, %c0_105] : memref<18x18x128xbf16, #tpu.memory_space<vmem>>, vector<16x16x128xbf16>
    %95 = vector.shape_cast %94 : vector<16x16x128xbf16> to vector<256x128xbf16>
    %c0_106 = arith.constant 0 : index
    %c0_107 = arith.constant 0 : index
    %c0_108 = arith.constant 0 : index
    %96 = vector.load %arg3[%c0_106, %c0_107, %c0_108] : memref<9x128x128xbf16, #tpu.memory_space<vmem>>, vector<1x128x128xbf16>
    %97 = vector.shape_cast %96 : vector<1x128x128xbf16> to vector<128x128xbf16>
    %cst_109 = arith.constant dense<0.000000e+00> : vector<256x128xf32>
    %98 = tpu.matmul %95, %97, %cst_109 {dimension_numbers = #tpu.dot_dimension_numbers<[1], [0], [0], [1], [0, 0, 1, 1], [], []>} : vector<256x128xbf16>, vector<128x128xbf16>, vector<256x128xf32> -> vector<256x128xf32>
    %c0_110 = arith.constant 0 : index
    %c1_111 = arith.constant 1 : index
    %c0_112 = arith.constant 0 : index
    %99 = vector.load %arg5[%c0_110, %c1_111, %c0_112] : memref<18x18x128xbf16, #tpu.memory_space<vmem>>, vector<16x16x128xbf16>
    %100 = vector.shape_cast %99 : vector<16x16x128xbf16> to vector<256x128xbf16>
    %c1_113 = arith.constant 1 : index
    %c0_114 = arith.constant 0 : index
    %c0_115 = arith.constant 0 : index
    %101 = vector.load %arg3[%c1_113, %c0_114, %c0_115] : memref<9x128x128xbf16, #tpu.memory_space<vmem>>, vector<1x128x128xbf16>
    %102 = vector.shape_cast %101 : vector<1x128x128xbf16> to vector<128x128xbf16>
    %cst_116 = arith.constant dense<0.000000e+00> : vector<256x128xf32>
    %103 = tpu.matmul %100, %102, %cst_116 {dimension_numbers = #tpu.dot_dimension_numbers<[1], [0], [0], [1], [0, 0, 1, 1], [], []>} : vector<256x128xbf16>, vector<128x128xbf16>, vector<256x128xf32> -> vector<256x128xf32>
    %104 = arith.addf %98, %103 : vector<256x128xf32>
    %c0_117 = arith.constant 0 : index
    %c2_118 = arith.constant 2 : index
    %c0_119 = arith.constant 0 : index
    %105 = vector.load %arg5[%c0_117, %c2_118, %c0_119] : memref<18x18x128xbf16, #tpu.memory_space<vmem>>, vector<16x16x128xbf16>
    %106 = vector.shape_cast %105 : vector<16x16x128xbf16> to vector<256x128xbf16>
    %c2_120 = arith.constant 2 : index
    %c0_121 = arith.constant 0 : index
    %c0_122 = arith.constant 0 : index
    %107 = vector.load %arg3[%c2_120, %c0_121, %c0_122] : memref<9x128x128xbf16, #tpu.memory_space<vmem>>, vector<1x128x128xbf16>
    %108 = vector.shape_cast %107 : vector<1x128x128xbf16> to vector<128x128xbf16>
    %cst_123 = arith.constant dense<0.000000e+00> : vector<256x128xf32>
    %109 = tpu.matmul %106, %108, %cst_123 {dimension_numbers = #tpu.dot_dimension_numbers<[1], [0], [0], [1], [0, 0, 1, 1], [], []>} : vector<256x128xbf16>, vector<128x128xbf16>, vector<256x128xf32> -> vector<256x128xf32>
    %110 = arith.addf %104, %109 : vector<256x128xf32>
    %c1_124 = arith.constant 1 : index
    %c0_125 = arith.constant 0 : index
    %c0_126 = arith.constant 0 : index
    %111 = vector.load %arg5[%c1_124, %c0_125, %c0_126] : memref<18x18x128xbf16, #tpu.memory_space<vmem>>, vector<16x16x128xbf16>
    %112 = vector.shape_cast %111 : vector<16x16x128xbf16> to vector<256x128xbf16>
    %c3_127 = arith.constant 3 : index
    %c0_128 = arith.constant 0 : index
    %c0_129 = arith.constant 0 : index
    %113 = vector.load %arg3[%c3_127, %c0_128, %c0_129] : memref<9x128x128xbf16, #tpu.memory_space<vmem>>, vector<1x128x128xbf16>
    %114 = vector.shape_cast %113 : vector<1x128x128xbf16> to vector<128x128xbf16>
    %cst_130 = arith.constant dense<0.000000e+00> : vector<256x128xf32>
    %115 = tpu.matmul %112, %114, %cst_130 {dimension_numbers = #tpu.dot_dimension_numbers<[1], [0], [0], [1], [0, 0, 1, 1], [], []>} : vector<256x128xbf16>, vector<128x128xbf16>, vector<256x128xf32> -> vector<256x128xf32>
    %116 = arith.addf %110, %115 : vector<256x128xf32>
    %c1_131 = arith.constant 1 : index
    %c1_132 = arith.constant 1 : index
    %c0_133 = arith.constant 0 : index
    %117 = vector.load %arg5[%c1_131, %c1_132, %c0_133] : memref<18x18x128xbf16, #tpu.memory_space<vmem>>, vector<16x16x128xbf16>
    %118 = vector.shape_cast %117 : vector<16x16x128xbf16> to vector<256x128xbf16>
    %c4_134 = arith.constant 4 : index
    %c0_135 = arith.constant 0 : index
    %c0_136 = arith.constant 0 : index
    %119 = vector.load %arg3[%c4_134, %c0_135, %c0_136] : memref<9x128x128xbf16, #tpu.memory_space<vmem>>, vector<1x128x128xbf16>
    %120 = vector.shape_cast %119 : vector<1x128x128xbf16> to vector<128x128xbf16>
    %cst_137 = arith.constant dense<0.000000e+00> : vector<256x128xf32>
    %121 = tpu.matmul %118, %120, %cst_137 {dimension_numbers = #tpu.dot_dimension_numbers<[1], [0], [0], [1], [0, 0, 1, 1], [], []>} : vector<256x128xbf16>, vector<128x128xbf16>, vector<256x128xf32> -> vector<256x128xf32>
    %122 = arith.addf %116, %121 : vector<256x128xf32>
    %c1_138 = arith.constant 1 : index
    %c2_139 = arith.constant 2 : index
    %c0_140 = arith.constant 0 : index
    %123 = vector.load %arg5[%c1_138, %c2_139, %c0_140] : memref<18x18x128xbf16, #tpu.memory_space<vmem>>, vector<16x16x128xbf16>
    %124 = vector.shape_cast %123 : vector<16x16x128xbf16> to vector<256x128xbf16>
    %c5_141 = arith.constant 5 : index
    %c0_142 = arith.constant 0 : index
    %c0_143 = arith.constant 0 : index
    %125 = vector.load %arg3[%c5_141, %c0_142, %c0_143] : memref<9x128x128xbf16, #tpu.memory_space<vmem>>, vector<1x128x128xbf16>
    %126 = vector.shape_cast %125 : vector<1x128x128xbf16> to vector<128x128xbf16>
    %cst_144 = arith.constant dense<0.000000e+00> : vector<256x128xf32>
    %127 = tpu.matmul %124, %126, %cst_144 {dimension_numbers = #tpu.dot_dimension_numbers<[1], [0], [0], [1], [0, 0, 1, 1], [], []>} : vector<256x128xbf16>, vector<128x128xbf16>, vector<256x128xf32> -> vector<256x128xf32>
    %128 = arith.addf %122, %127 : vector<256x128xf32>
    %c2_145 = arith.constant 2 : index
    %c0_146 = arith.constant 0 : index
    %c0_147 = arith.constant 0 : index
    %129 = vector.load %arg5[%c2_145, %c0_146, %c0_147] : memref<18x18x128xbf16, #tpu.memory_space<vmem>>, vector<16x16x128xbf16>
    %130 = vector.shape_cast %129 : vector<16x16x128xbf16> to vector<256x128xbf16>
    %c6_148 = arith.constant 6 : index
    %c0_149 = arith.constant 0 : index
    %c0_150 = arith.constant 0 : index
    %131 = vector.load %arg3[%c6_148, %c0_149, %c0_150] : memref<9x128x128xbf16, #tpu.memory_space<vmem>>, vector<1x128x128xbf16>
    %132 = vector.shape_cast %131 : vector<1x128x128xbf16> to vector<128x128xbf16>
    %cst_151 = arith.constant dense<0.000000e+00> : vector<256x128xf32>
    %133 = tpu.matmul %130, %132, %cst_151 {dimension_numbers = #tpu.dot_dimension_numbers<[1], [0], [0], [1], [0, 0, 1, 1], [], []>} : vector<256x128xbf16>, vector<128x128xbf16>, vector<256x128xf32> -> vector<256x128xf32>
    %134 = arith.addf %128, %133 : vector<256x128xf32>
    %c2_152 = arith.constant 2 : index
    %c1_153 = arith.constant 1 : index
    %c0_154 = arith.constant 0 : index
    %135 = vector.load %arg5[%c2_152, %c1_153, %c0_154] : memref<18x18x128xbf16, #tpu.memory_space<vmem>>, vector<16x16x128xbf16>
    %136 = vector.shape_cast %135 : vector<16x16x128xbf16> to vector<256x128xbf16>
    %c7_155 = arith.constant 7 : index
    %c0_156 = arith.constant 0 : index
    %c0_157 = arith.constant 0 : index
    %137 = vector.load %arg3[%c7_155, %c0_156, %c0_157] : memref<9x128x128xbf16, #tpu.memory_space<vmem>>, vector<1x128x128xbf16>
    %138 = vector.shape_cast %137 : vector<1x128x128xbf16> to vector<128x128xbf16>
    %cst_158 = arith.constant dense<0.000000e+00> : vector<256x128xf32>
    %139 = tpu.matmul %136, %138, %cst_158 {dimension_numbers = #tpu.dot_dimension_numbers<[1], [0], [0], [1], [0, 0, 1, 1], [], []>} : vector<256x128xbf16>, vector<128x128xbf16>, vector<256x128xf32> -> vector<256x128xf32>
    %140 = arith.addf %134, %139 : vector<256x128xf32>
    %c2_159 = arith.constant 2 : index
    %c2_160 = arith.constant 2 : index
    %c0_161 = arith.constant 0 : index
    %141 = vector.load %arg5[%c2_159, %c2_160, %c0_161] : memref<18x18x128xbf16, #tpu.memory_space<vmem>>, vector<16x16x128xbf16>
    %142 = vector.shape_cast %141 : vector<16x16x128xbf16> to vector<256x128xbf16>
    %c8_162 = arith.constant 8 : index
    %c0_163 = arith.constant 0 : index
    %c0_164 = arith.constant 0 : index
    %143 = vector.load %arg3[%c8_162, %c0_163, %c0_164] : memref<9x128x128xbf16, #tpu.memory_space<vmem>>, vector<1x128x128xbf16>
    %144 = vector.shape_cast %143 : vector<1x128x128xbf16> to vector<128x128xbf16>
    %cst_165 = arith.constant dense<0.000000e+00> : vector<256x128xf32>
    %145 = tpu.matmul %142, %144, %cst_165 {dimension_numbers = #tpu.dot_dimension_numbers<[1], [0], [0], [1], [0, 0, 1, 1], [], []>} : vector<256x128xbf16>, vector<128x128xbf16>, vector<256x128xf32> -> vector<256x128xf32>
    %146 = arith.addf %140, %145 : vector<256x128xf32>
    %cst_166 = arith.constant dense<0.000000e+00> : vector<128xf32>
    %147 = vector.multi_reduction <add>, %146, %cst_166 [0] : vector<256x128xf32> to vector<128xf32>
    %148 = vector.shape_cast %147 : vector<128xf32> to vector<1x128xf32>
    %cst_167 = arith.constant 3.906250e-03 : f32
    %149 = vector.broadcast %cst_167 : f32 to vector<1x128xf32>
    %150 = arith.mulf %148, %149 : vector<1x128xf32>
    %151 = vector.broadcast %150 : vector<1x128xf32> to vector<256x128xf32>
    %152 = arith.subf %146, %151 : vector<256x128xf32>
    %153 = arith.mulf %152, %152 : vector<256x128xf32>
    %cst_168 = arith.constant dense<0.000000e+00> : vector<128xf32>
    %154 = vector.multi_reduction <add>, %153, %cst_168 [0] : vector<256x128xf32> to vector<128xf32>
    %155 = vector.shape_cast %154 : vector<128xf32> to vector<1x128xf32>
    %cst_169 = arith.constant 3.906250e-03 : f32
    %156 = vector.broadcast %cst_169 : f32 to vector<1x128xf32>
    %157 = arith.mulf %155, %156 : vector<1x128xf32>
    %cst_170 = arith.constant 9.99999974E-6 : f32
    %158 = vector.broadcast %cst_170 : f32 to vector<1x128xf32>
    %159 = arith.addf %157, %158 : vector<1x128xf32>
    %160 = math.rsqrt %159 : vector<1x128xf32>
    %161 = vector.broadcast %160 : vector<1x128xf32> to vector<256x128xf32>
    %162 = arith.mulf %152, %161 : vector<256x128xf32>
    %163 = vector.shape_cast %162 : vector<256x128xf32> to vector<16x16x128xf32>
    %c0_171 = arith.constant 0 : index
    %c0_172 = arith.constant 0 : index
    %c0_173 = arith.constant 0 : index
    %c0_174 = arith.constant 0 : index
    %164 = vector.load %arg1[%c0_171, %c0_172, %c0_173, %c0_174] : memref<1x16x16x128xf32, #tpu.memory_space<vmem>>, vector<1x16x16x128xf32>
    %165 = vector.shape_cast %164 : vector<1x16x16x128xf32> to vector<16x16x128xf32>
    %166 = arith.addf %165, %163 : vector<16x16x128xf32>
    %c0_175 = arith.constant 0 : index
    %c0_176 = arith.constant 0 : index
    %c0_177 = arith.constant 0 : index
    %c0_178 = arith.constant 0 : index
    %167 = vector.load %arg4[%c0_175, %c0_176, %c0_177, %c0_178] : memref<1x16x16x128xf32, #tpu.memory_space<vmem>>, vector<1x16x16x128xf32>
    %168 = vector.shape_cast %167 : vector<1x16x16x128xf32> to vector<16x16x128xf32>
    %169 = vector.shape_cast %166 : vector<16x16x128xf32> to vector<1x16x16x128xf32>
    tpu.vector_store %arg4[%c0_175, %c0_176, %c0_177, %c0_178], %169 {strides = array<i32>} : memref<1x16x16x128xf32, #tpu.memory_space<vmem>>, vector<1x16x16x128xf32>,
    return
  }
  func.func @transform_0(%arg0: i32) -> (i32, i32, i32, i32) {
    %c0_i32 = arith.constant 0 : i32
    %c0_i32_0 = arith.constant 0 : i32
    %c0_i32_1 = arith.constant 0 : i32
    %c0_i32_2 = arith.constant 0 : i32
    return %arg0, %c0_i32, %c0_i32_0, %c0_i32_1 : i32, i32, i32, i32
  }
  func.func @transform_1(%arg0: i32) -> (i32, i32, i32) {
    %c0_i32 = arith.constant 0 : i32
    %c0_i32_0 = arith.constant 0 : i32
    %c0_i32_1 = arith.constant 0 : i32
    %c0_i32_2 = arith.constant 0 : i32
    return %c0_i32, %c0_i32_0, %c0_i32_1 : i32, i32, i32
  }
  func.func @transform_2(%arg0: i32) -> (i32, i32, i32) {
    %c0_i32 = arith.constant 0 : i32
    %c0_i32_0 = arith.constant 0 : i32
    %c0_i32_1 = arith.constant 0 : i32
    %c0_i32_2 = arith.constant 0 : i32
    return %c0_i32, %c0_i32_0, %c0_i32_1 : i32, i32, i32
  }
  func.func @transform_3(%arg0: i32) -> (i32, i32, i32, i32) {
    %c0_i32 = arith.constant 0 : i32
    %c0_i32_0 = arith.constant 0 : i32
    %c0_i32_1 = arith.constant 0 : i32
    %c0_i32_2 = arith.constant 0 : i32
    return %arg0, %c0_i32, %c0_i32_0, %c0_i32_1 : i32, i32, i32, i32
  }
}

</mosaic_0001>

<llo_original>
// kernel: tpu_custom_call.1
$region0: #{tpu_custom_call.1}
  #allocation0 [shape = 'u32[]', space=smem, size = 0x4, offset = 0x4, fixed_abs, tag = 'smem constant byte address 0x4 - core index']
  #allocation1 [shape = 'u32[144,128]{1,0:T(1,128)}', space=vmem, size = 0x12000, scoped, tag = 'internal scratch']
  #allocation2 [shape = 'bf16[18,18,128]{2,1,0:T(8,128)(2,1)}', space=vmem, size = 0x1b000, scoped, tag = 'scratch operand']
  %s0 = inlined_call_operand.hbm [shape: f32[2,16,16,128], index: 0, kind: input, shape index: {}]
  %s1 = inlined_call_operand.hbm [shape: bf16[9,128,128], index: 1, kind: input, shape index: {}]
  %s2 = inlined_call_operand.hbm [shape: bf16[9,128,128], index: 2, kind: input, shape index: {}]
  %s3 = inlined_call_operand.hbm [shape: f32[2,16,16,128], index: 3, kind: output, shape index: {}]
  %s4 = sld [smem:[#allocation0]]
  $region57: #{tpu_custom_call.1} parent=0
    _
  %s6 = ssub.s32 1, %s4
  %s7 = scalar_select 0, %s6, %s4
  $region1: #{tpu_custom_call.1} parent=0
    #allocation3 [shape = 'u8[262144]{0}', space=vmem, size = 0x40000, scoped, tag = 'input window, operand 0']
    #allocation4 [shape = 's32[2]{0}', space=sflag, size = 0x8, scoped, tag = 'scoped memory for tpu_custom_call.1']
    #allocation5 [shape = 's32[2]{0}', space=sflag, size = 0x8, scoped, tag = 'scoped memory for tpu_custom_call.1']
    #allocation6 [shape = 'u8[294912]{0}', space=vmem, size = 0x48000, scoped, tag = 'input window, operand 1, single buffered']
    #allocation7 [shape = 's32[1]{0}', space=sflag, size = 0x4, scoped, tag = 'scoped memory for tpu_custom_call.1']
    #allocation8 [shape = 'u8[294912]{0}', space=vmem, size = 0x48000, scoped, tag = 'input window, operand 2, single buffered']
    #allocation9 [shape = 'u8[262144]{0}', space=vmem, size = 0x40000, scoped, tag = 'output window, operand 0']
    %8 = vsyncpa [#allocation4], 0
    %s9 = scalar_lea.sflag [#allocation4], 1
    %10 = vsyncpa %s9, 0
    %11 = vsyncpa [#allocation7], 0
    %12 = vsyncpa [#allocation5], 0
    %s13 = scalar_lea.sflag [#allocation5], 1
    %14 = vsyncpa %s13, 0
    loop: start=0, step=1, limit=4
    $region2: #{tpu_custom_call.1} parent=1 // loop_pre_header
      _
    $region3: #{tpu_custom_call.1} parent=1 // loop_header
      %s16 = sphi 0, %s20
      %p17 = scmp.ge.s32.totalorder %s16, 4
      %s26 = sphi 0, %s28
      %s29 = sphi 0, %s26
      %s30 = sphi 0, %s29
      %s46 = sphi 0, %s30
      %s50 = sphi 0, %s50
      %s52 = sphi 0, %s50
      %s53 = sphi 0, %s52
      %s67 = sphi 0, %s53
      %s71 = sphi 0, %s71
      %s73 = sphi 0, %s71
      %s74 = sphi 0, %s73
      %s88 = sphi 0, %s74
      %s94 = sphi 0, %s96
      %s97 = sphi 0, %s94
      %s98 = sphi 0, %s97
      %s114 = sphi 0, %s98
    $region4: #{tpu_custom_call.1} parent=1 // loop_header_branch
      %19 = sbr.rel (%p17) target = $region8
    $region5: #{tpu_custom_call.1} parent=1 // loop_body
      %s21 = ssub.s32 %s16, 1
      %s22 = ssub.s32 %s16, 2
      %s23 = sadd.s32 %s16, 1
      %s24 = ssub.s32 %s16, %s23
      %p25 = scmp.eq.s32.totalorder %s24, 0
      %s27 = sadd.s32 %s26, 1
      %s28 = scalar_select %p25, %s26, %s27
      %p31 = pneg %p25
      %p32 = scmp.eq.s32.totalorder %s16, 1
      %p33 = por %p31, %p32
      %p34 = scmp.ne.s32.totalorder %s26, %s29
      %p35 = scmp.eq.s32.totalorder %s16, 0
      %p36 = por %p34, %p35
      %p37 = scmp.ne.s32.totalorder %s26, %s29
      %p38 = scmp.eq.s32.totalorder %s21, 1
      %p39 = por %p37, %p38
      %p40 = scmp.ne.s32.totalorder %s29, %s30
      %p41 = scmp.eq.s32.totalorder %s21, 0
      %p42 = por %p40, %p41
      %p43 = scmp.ne.s32.totalorder %s29, %s30
      %p44 = scmp.eq.s32.totalorder %s22, 1
      %p45 = por %p43, %p44
      %p47 = scmp.ne.s32.totalorder %s30, %s46
      %p48 = scmp.eq.s32.totalorder %s22, 0
      %p49 = por %p47, %p48
      %s51 = sadd.s32 %s50, 1
      %p54 = scmp.eq.s32.totalorder %s16, 1
      %p55 = scmp.ne.s32.totalorder %s50, %s52
      %p56 = scmp.eq.s32.totalorder %s16, 0
      %p57 = por %p55, %p56
      %p58 = scmp.ne.s32.totalorder %s50, %s52
      %p59 = scmp.eq.s32.totalorder %s21, 1
      %p60 = por %p58, %p59
      %p61 = scmp.ne.s32.totalorder %s52, %s53
      %p62 = scmp.eq.s32.totalorder %s21, 0
      %p63 = por %p61, %p62
      %p64 = scmp.ne.s32.totalorder %s52, %s53
      %p65 = scmp.eq.s32.totalorder %s22, 1
      %p66 = por %p64, %p65
      %p68 = scmp.ne.s32.totalorder %s53, %s67
      %p69 = scmp.eq.s32.totalorder %s22, 0
      %p70 = por %p68, %p69
      %s72 = sadd.s32 %s71, 1
      %p75 = scmp.eq.s32.totalorder %s16, 1
      %p76 = scmp.ne.s32.totalorder %s71, %s73
      %p77 = scmp.eq.s32.totalorder %s16, 0
      %p78 = por %p76, %p77
      %p79 = scmp.ne.s32.totalorder %s71, %s73
      %p80 = scmp.eq.s32.totalorder %s21, 1
      %p81 = por %p79, %p80
      %p82 = scmp.ne.s32.totalorder %s73, %s74
      %p83 = scmp.eq.s32.totalorder %s21, 0
      %p84 = por %p82, %p83
      %p85 = scmp.ne.s32.totalorder %s73, %s74
      %p86 = scmp.eq.s32.totalorder %s22, 1
      %p87 = por %p85, %p86
      %p89 = scmp.ne.s32.totalorder %s74, %s88
      %p90 = scmp.eq.s32.totalorder %s22, 0
      %p91 = por %p89, %p90
      %s92 = ssub.s32 %s16, %s23
      %p93 = scmp.eq.s32.totalorder %s92, 0
      %s95 = sadd.s32 %s94, 1
      %s96 = scalar_select %p93, %s94, %s95
      %p99 = pneg %p93
      %p100 = scmp.eq.s32.totalorder %s16, 1
      %p101 = por %p99, %p100
      %p102 = scmp.ne.s32.totalorder %s94, %s97
      %p103 = scmp.eq.s32.totalorder %s16, 0
      %p104 = por %p102, %p103
      %p105 = scmp.ne.s32.totalorder %s94, %s97
      %p106 = scmp.eq.s32.totalorder %s21, 1
      %p107 = por %p105, %p106
      %p108 = scmp.ne.s32.totalorder %s97, %s98
      %p109 = scmp.eq.s32.totalorder %s21, 0
      %p110 = por %p108, %p109
      %p111 = scmp.ne.s32.totalorder %s97, %s98
      %p112 = scmp.eq.s32.totalorder %s22, 1
      %p113 = por %p111, %p112
      %p115 = scmp.ne.s32.totalorder %s98, %s114
      %p116 = scmp.eq.s32.totalorder %s22, 0
      %p117 = por %p115, %p116
      %p118 = scmp.le.s32.totalorder 1, %s16
      %p119 = scmp.lt.s32.totalorder %s16, 3
      %p120 = pnand %p118, %p119
      %p121 = pneg %p120
      // Predicated region
      $region9: #{tpu_custom_call.1} parent=5 // pred_check
        _
      $region10: #{tpu_custom_call.1} parent=5 // pred_check_branch
        %123 = sbr.rel (%p120) target = $region12
      $region11: #{tpu_custom_call.1} parent=5 // pred_region
        %s124 = ssub.s32 %s16, 1
        // Predicated region
        $region13: #{tpu_custom_call.1} parent=11 // pred_check
          %p125 = pneg %p63
        $region14: #{tpu_custom_call.1} parent=11 // pred_check_branch
          %127 = sbr.rel (%p125) target = $region16
        $region15: #{tpu_custom_call.1} parent=11 // pred_region
          %s129 = ssub.s32 9216, 9216
          %130 = vsyncadd [#allocation7], %s129
          %s131 = sshll.u32 [#allocation6], 4
          %s132 = int_to_ptr.vmem [resolvable:$true] %s131
          %137 = dma.hbm_to_vmem [thread:$0]  %s1, 9216, %s132, [#allocation7], 64, 64, 4
        $region16: #{tpu_custom_call.1} parent=11 // pred_fallthru
          _
        // Predicated region
        $region17: #{tpu_custom_call.1} parent=11 // pred_check
          %p138 = pneg %p84
        $region18: #{tpu_custom_call.1} parent=11 // pred_check_branch
          %140 = sbr.rel (%p138) target = $region20
        $region19: #{tpu_custom_call.1} parent=11 // pred_region
          %s142 = ssub.s32 9216, 9216
          %143 = vsyncadd [#allocation7], %s142
          %s144 = sshll.u32 [#allocation8], 4
          %s145 = int_to_ptr.vmem [resolvable:$true] %s144
          %150 = dma.hbm_to_vmem [thread:$0]  %s2, 9216, %s145, [#allocation7], 64, 64, 4
        $region20: #{tpu_custom_call.1} parent=11 // pred_fallthru
          _
      $region12: #{tpu_custom_call.1} parent=5 // pred_fallthru
        _
      %p151 = scmp.lt.s32.totalorder %s16, 2
      // Predicated region
      $region21: #{tpu_custom_call.1} parent=5 // pred_check
        %p152 = pneg %p151
      $region22: #{tpu_custom_call.1} parent=5 // pred_check_branch
        %154 = sbr.rel (%p152) target = $region24
      $region23: #{tpu_custom_call.1} parent=5 // pred_region
        // Predicated region
        $region25: #{tpu_custom_call.1} parent=23 // pred_check
          %p155 = pneg %p36
        $region26: #{tpu_custom_call.1} parent=23 // pred_check_branch
          %157 = sbr.rel (%p155) target = $region28
        $region27: #{tpu_custom_call.1} parent=23 // pred_region
          %s158 = sand.u32 %s26, 1
          %s159 = scalar_lea.sflag [#allocation4], %s158
          %s160 = sand.u32 %s26, 1
          %s161 = smul.addr %s160, 256
          %s162 = scalar_lea.vmem [#allocation3], %s161
          %s164 = ssub.s32 4096, 4096
          %165 = vsyncadd %s159, %s164
          %s166 = smul.addr %s16, 32
          %s167 = smul.addr %s166, 128
          %s168 = scalar_lea.hbm %s0, %s167
          %s169 = sshll.u32 %s162, 4
          %s170 = int_to_ptr.vmem [resolvable:$true] %s169
          %175 = dma.hbm_to_vmem [thread:$0]  %s168, 4096, %s170, %s159, 128, 128, 8
        $region28: #{tpu_custom_call.1} parent=23 // pred_fallthru
          _
      $region24: #{tpu_custom_call.1} parent=5 // pred_fallthru
        _
      %p176 = scmp.le.s32.totalorder 1, %s16
      %p177 = scmp.lt.s32.totalorder %s16, 3
      %p178 = pnand %p176, %p177
      %p179 = pneg %p178
      // Predicated region
      $region29: #{tpu_custom_call.1} parent=5 // pred_check
        _
      $region30: #{tpu_custom_call.1} parent=5 // pred_check_branch
        %181 = sbr.rel (%p178) target = $region32
      $region31: #{tpu_custom_call.1} parent=5 // pred_region
        %s182 = ssub.s32 %s16, 1
        %s183 = sand.u32 %s29, 1
        %s184 = scalar_lea.sflag [#allocation4], %s183
        %s185 = sand.u32 %s29, 1
        %s186 = smul.addr %s185, 256
        %s187 = scalar_lea.vmem [#allocation3], %s186
        // Predicated region
        $region33: #{tpu_custom_call.1} parent=31 // pred_check
          %p188 = pneg %p42
        $region34: #{tpu_custom_call.1} parent=31 // pred_check_branch
          %190 = sbr.rel (%p188) target = $region36
        $region35: #{tpu_custom_call.1} parent=31 // pred_region
          %191 = dma.done %s184, 4096
        $region36: #{tpu_custom_call.1} parent=31 // pred_fallthru
          _
        // Predicated region
        $region37: #{tpu_custom_call.1} parent=31 // pred_check
          %p192 = pneg %p63
        $region38: #{tpu_custom_call.1} parent=31 // pred_check_branch
          %194 = sbr.rel (%p192) target = $region40
        $region39: #{tpu_custom_call.1} parent=31 // pred_region
          %195 = dma.done [#allocation7], 9216
        $region40: #{tpu_custom_call.1} parent=31 // pred_fallthru
          _
        // Predicated region
        $region41: #{tpu_custom_call.1} parent=31 // pred_check
          %p196 = pneg %p84
        $region42: #{tpu_custom_call.1} parent=31 // pred_check_branch
          %198 = sbr.rel (%p196) target = $region44
        $region43: #{tpu_custom_call.1} parent=31 // pred_region
          %199 = dma.done [#allocation7], 9216
        $region44: #{tpu_custom_call.1} parent=31 // pred_fallthru
          _
        %s200 = sand.u32 %s29, 1
        %s201 = scalar_lea.sflag [#allocation4], %s200
        %s202 = sand.u32 %s29, 1
        %s203 = smul.addr %s202, 256
        %s204 = scalar_lea.vmem [#allocation3], %s203
        %p205 = pneg %p42
        %p206 = pneg %p39
        %p207 = pneg %p63
        %p208 = pneg %p60
        %p209 = pneg %p84
        %p210 = pneg %p81
        %p211 = pneg %p110
        %p212 = pneg %p107
        %s213 = sand.u32 %s97, 1
        %s214 = scalar_lea.sflag [#allocation5], %s213
        %s215 = sand.u32 %s97, 1
        %s216 = smul.addr %s215, 256
        %s217 = scalar_lea.vmem [#allocation9], %s216
        %v219 = vld [vmem:[%s187] sm:$0xff]
        %v220 = vld [vmem:[%s187 + $0x8] sm:$0xff]
        %v221 = vld [vmem:[%s187 + $0x10] sm:$0xff]
        %v222 = vld [vmem:[%s187 + $0x18] sm:$0xff]
        %v223 = vld [vmem:[%s187 + $0x20] sm:$0xff]
        %v224 = vld [vmem:[%s187 + $0x28] sm:$0xff]
        %v225 = vld [vmem:[%s187 + $0x30] sm:$0xff]
        %v226 = vld [vmem:[%s187 + $0x38] sm:$0xff]
        %v227 = vld [vmem:[%s187 + $0x40] sm:$0xff]
        %v228 = vld [vmem:[%s187 + $0x48] sm:$0xff]
        %v229 = vld [vmem:[%s187 + $0x50] sm:$0xff]
        %v230 = vld [vmem:[%s187 + $0x58] sm:$0xff]
        %v231 = vld [vmem:[%s187 + $0x60] sm:$0xff]
        %v232 = vld [vmem:[%s187 + $0x68] sm:$0xff]
        %v233 = vld [vmem:[%s187 + $0x70] sm:$0xff]
        %v234 = vld [vmem:[%s187 + $0x78] sm:$0xff]
        %v235 = vld [vmem:[%s187 + $0x80] sm:$0xff]
        %v236 = vld [vmem:[%s187 + $0x88] sm:$0xff]
        %v237 = vld [vmem:[%s187 + $0x90] sm:$0xff]
        %v238 = vld [vmem:[%s187 + $0x98] sm:$0xff]
        %v239 = vld [vmem:[%s187 + $0xa0] sm:$0xff]
        %v240 = vld [vmem:[%s187 + $0xa8] sm:$0xff]
        %v241 = vld [vmem:[%s187 + $0xb0] sm:$0xff]
        %v242 = vld [vmem:[%s187 + $0xb8] sm:$0xff]
        %v243 = vld [vmem:[%s187 + $0xc0] sm:$0xff]
        %v244 = vld [vmem:[%s187 + $0xc8] sm:$0xff]
        %v245 = vld [vmem:[%s187 + $0xd0] sm:$0xff]
        %v246 = vld [vmem:[%s187 + $0xd8] sm:$0xff]
        %v247 = vld [vmem:[%s187 + $0xe0] sm:$0xff]
        %v248 = vld [vmem:[%s187 + $0xe8] sm:$0xff]
        %v249 = vld [vmem:[%s187 + $0xf0] sm:$0xff]
        %v250 = vld [vmem:[%s187 + $0xf8] sm:$0xff]
        %v251 = vpack.c.bf16 %v220, %v219
        %v252 = vpack.c.bf16 %v222, %v221
        %v253 = vpack.c.bf16 %v224, %v223
        %v254 = vpack.c.bf16 %v226, %v225
        %v255 = vpack.c.bf16 %v228, %v227
        %v256 = vpack.c.bf16 %v230, %v229
        %v257 = vpack.c.bf16 %v232, %v231
        %v258 = vpack.c.bf16 %v234, %v233
        %v259 = vpack.c.bf16 %v236, %v235
        %v260 = vpack.c.bf16 %v238, %v237
        %v261 = vpack.c.bf16 %v240, %v239
        %v262 = vpack.c.bf16 %v242, %v241
        %v263 = vpack.c.bf16 %v244, %v243
        %v264 = vpack.c.bf16 %v246, %v245
        %v265 = vpack.c.bf16 %v248, %v247
        %v266 = vpack.c.bf16 %v250, %v249
        %v283 = vunpack.c.l.b16 %v251
        %v284 = vunpack.c.h.b16 %v251
        %v285 = vunpack.c.l.b16 %v252
        %v286 = vunpack.c.h.b16 %v252
        %v287 = vunpack.c.l.b16 %v253
        %v288 = vunpack.c.h.b16 %v253
        %v289 = vunpack.c.l.b16 %v254
        %v290 = vunpack.c.h.b16 %v254
        %v291 = vunpack.c.l.b16 %v255
        %v292 = vunpack.c.h.b16 %v255
        %v293 = vunpack.c.l.b16 %v256
        %v294 = vunpack.c.h.b16 %v256
        %v295 = vunpack.c.l.b16 %v257
        %v296 = vunpack.c.h.b16 %v257
        %v297 = vunpack.c.l.b16 %v258
        %v298 = vunpack.c.h.b16 %v258
        %v299 = vunpack.c.l.b16 %v259
        %v300 = vunpack.c.h.b16 %v259
        %v301 = vunpack.c.l.b16 %v260
        %v302 = vunpack.c.h.b16 %v260
        %v303 = vunpack.c.l.b16 %v261
        %v304 = vunpack.c.h.b16 %v261
        %v305 = vunpack.c.l.b16 %v262
        %v306 = vunpack.c.h.b16 %v262
        %v307 = vunpack.c.l.b16 %v263
        %v308 = vunpack.c.h.b16 %v263
        %v309 = vunpack.c.l.b16 %v264
        %v310 = vunpack.c.h.b16 %v264
        %v311 = vunpack.c.l.b16 %v265
        %v312 = vunpack.c.h.b16 %v265
        %v313 = vunpack.c.l.b16 %v266
        %v314 = vunpack.c.h.b16 %v266
        %v315 = vpack.c.b16 %v283, %v283
        %v316 = vpack.c.b16 %v284, %v284
        %v317 = vpack.c.b16 %v285, %v285
        %v318 = vpack.c.b16 %v286, %v286
        %v319 = vpack.c.b16 %v287, %v287
        %v320 = vpack.c.b16 %v288, %v288
        %v321 = vpack.c.b16 %v289, %v289
        %v322 = vpack.c.b16 %v290, %v290
        %v323 = vpack.c.b16 %v291, %v291
        %v324 = vpack.c.b16 %v292, %v292
        %v325 = vpack.c.b16 %v293, %v293
        %v326 = vpack.c.b16 %v294, %v294
        %v327 = vpack.c.b16 %v295, %v295
        %v328 = vpack.c.b16 %v296, %v296
        %v329 = vpack.c.b16 %v297, %v297
        %v330 = vpack.c.b16 %v298, %v298
        %v331 = vpack.c.b16 %v299, %v299
        %v332 = vpack.c.b16 %v300, %v300
        %v333 = vpack.c.b16 %v301, %v301
        %v334 = vpack.c.b16 %v302, %v302
        %v335 = vpack.c.b16 %v303, %v303
        %v336 = vpack.c.b16 %v304, %v304
        %v337 = vpack.c.b16 %v305, %v305
        %v338 = vpack.c.b16 %v306, %v306
        %v339 = vpack.c.b16 %v307, %v307
        %v340 = vpack.c.b16 %v308, %v308
        %v341 = vpack.c.b16 %v309, %v309
        %v342 = vpack.c.b16 %v310, %v310
        %v343 = vpack.c.b16 %v311, %v311
        %v344 = vpack.c.b16 %v312, %v312
        %v345 = vpack.c.b16 %v313, %v313
        %v346 = vpack.c.b16 %v314, %v314
        %vm347 = vsmask.f32 256
        %vm348 = vsmask.f32 4368
        %vm349 = vmor %vm347, %vm348
        %v351 = vshrl.u32 %v315, 16
        %v353 = vrot.slane %v351, 7
        %v354 = vshll.u32 %v315, 16
        %v356 = vor.u32 %v353, %v354
        %v357 = vrot.slane %v353, 4
        %v359 = vshrl.u32 %v316, 16
        %v361 = vrot.slane %v359, 7
        %v362 = vshll.u32 %v316, 16
        %v364 = vor.u32 %v361, %v362
        %v365 = vsel %vm349, %v357, %v364
        %v366 = vrot.slane %v361, 4
        %v368 = vshrl.u32 %v317, 16
        %v370 = vrot.slane %v368, 7
        %v371 = vshll.u32 %v317, 16
        %v373 = vor.u32 %v370, %v371
        %v374 = vrot.slane %v370, 4
        %v376 = vshrl.u32 %v318, 16
        %v378 = vrot.slane %v376, 7
        %v379 = vshll.u32 %v318, 16
        %v381 = vor.u32 %v378, %v379
        %v382 = vsel %vm349, %v374, %v381
        %v383 = vrot.slane %v378, 4
        %v385 = vshrl.u32 %v319, 16
        %v387 = vrot.slane %v385, 7
        %v388 = vshll.u32 %v319, 16
        %v390 = vor.u32 %v387, %v388
        %v391 = vrot.slane %v387, 4
        %v393 = vshrl.u32 %v320, 16
        %v395 = vrot.slane %v393, 7
        %v396 = vshll.u32 %v320, 16
        %v398 = vor.u32 %v395, %v396
        %v399 = vsel %vm349, %v391, %v398
        %v400 = vrot.slane %v395, 4
        %v402 = vshrl.u32 %v321, 16
        %v404 = vrot.slane %v402, 7
        %v405 = vshll.u32 %v321, 16
        %v407 = vor.u32 %v404, %v405
        %v408 = vrot.slane %v404, 4
        %v410 = vshrl.u32 %v322, 16
        %v412 = vrot.slane %v410, 7
        %v413 = vshll.u32 %v322, 16
        %v415 = vor.u32 %v412, %v413
        %v416 = vsel %vm349, %v408, %v415
        %v417 = vrot.slane %v412, 4
        %v419 = vshrl.u32 %v323, 16
        %v421 = vrot.slane %v419, 7
        %v422 = vshll.u32 %v323, 16
        %v424 = vor.u32 %v421, %v422
        %v425 = vrot.slane %v421, 4
        %v427 = vshrl.u32 %v324, 16
        %v429 = vrot.slane %v427, 7
        %v430 = vshll.u32 %v324, 16
        %v432 = vor.u32 %v429, %v430
        %v433 = vsel %vm349, %v425, %v432
        %v434 = vrot.slane %v429, 4
        %v436 = vshrl.u32 %v325, 16
        %v438 = vrot.slane %v436, 7
        %v439 = vshll.u32 %v325, 16
        %v441 = vor.u32 %v438, %v439
        %v442 = vrot.slane %v438, 4
        %v444 = vshrl.u32 %v326, 16
        %v446 = vrot.slane %v444, 7
        %v447 = vshll.u32 %v326, 16
        %v449 = vor.u32 %v446, %v447
        %v450 = vsel %vm349, %v442, %v449
        %v451 = vrot.slane %v446, 4
        %v453 = vshrl.u32 %v327, 16
        %v455 = vrot.slane %v453, 7
        %v456 = vshll.u32 %v327, 16
        %v458 = vor.u32 %v455, %v456
        %v459 = vrot.slane %v455, 4
        %v461 = vshrl.u32 %v328, 16
        %v463 = vrot.slane %v461, 7
        %v464 = vshll.u32 %v328, 16
        %v466 = vor.u32 %v463, %v464
        %v467 = vsel %vm349, %v459, %v466
        %v468 = vrot.slane %v463, 4
        %v470 = vshrl.u32 %v329, 16
        %v472 = vrot.slane %v470, 7
        %v473 = vshll.u32 %v329, 16
        %v475 = vor.u32 %v472, %v473
        %v476 = vrot.slane %v472, 4
        %v478 = vshrl.u32 %v330, 16
        %v480 = vrot.slane %v478, 7
        %v481 = vshll.u32 %v330, 16
        %v483 = vor.u32 %v480, %v481
        %v484 = vsel %vm349, %v476, %v483
        %v485 = vrot.slane %v480, 4
        %v487 = vshrl.u32 %v331, 16
        %v489 = vrot.slane %v487, 7
        %v490 = vshll.u32 %v331, 16
        %v492 = vor.u32 %v489, %v490
        %v493 = vrot.slane %v489, 4
        %v495 = vshrl.u32 %v332, 16
        %v497 = vrot.slane %v495, 7
        %v498 = vshll.u32 %v332, 16
        %v500 = vor.u32 %v497, %v498
        %v501 = vsel %vm349, %v493, %v500
        %v502 = vrot.slane %v497, 4
        %v504 = vshrl.u32 %v333, 16
        %v506 = vrot.slane %v504, 7
        %v507 = vshll.u32 %v333, 16
        %v509 = vor.u32 %v506, %v507
        %v510 = vrot.slane %v506, 4
        %v512 = vshrl.u32 %v334, 16
        %v514 = vrot.slane %v512, 7
        %v515 = vshll.u32 %v334, 16
        %v517 = vor.u32 %v514, %v515
        %v518 = vsel %vm349, %v510, %v517
        %v519 = vrot.slane %v514, 4
        %v521 = vshrl.u32 %v335, 16
        %v523 = vrot.slane %v521, 7
        %v524 = vshll.u32 %v335, 16
        %v526 = vor.u32 %v523, %v524
        %v527 = vrot.slane %v523, 4
        %v529 = vshrl.u32 %v336, 16
        %v531 = vrot.slane %v529, 7
        %v532 = vshll.u32 %v336, 16
        %v534 = vor.u32 %v531, %v532
        %v535 = vsel %vm349, %v527, %v534
        %v536 = vrot.slane %v531, 4
        %v538 = vshrl.u32 %v337, 16
        %v540 = vrot.slane %v538, 7
        %v541 = vshll.u32 %v337, 16
        %v543 = vor.u32 %v540, %v541
        %v544 = vrot.slane %v540, 4
        %v546 = vshrl.u32 %v338, 16
        %v548 = vrot.slane %v546, 7
        %v549 = vshll.u32 %v338, 16
        %v551 = vor.u32 %v548, %v549
        %v552 = vsel %vm349, %v544, %v551
        %v553 = vrot.slane %v548, 4
        %v555 = vshrl.u32 %v339, 16
        %v557 = vrot.slane %v555, 7
        %v558 = vshll.u32 %v339, 16
        %v560 = vor.u32 %v557, %v558
        %v561 = vrot.slane %v557, 4
        %v563 = vshrl.u32 %v340, 16
        %v565 = vrot.slane %v563, 7
        %v566 = vshll.u32 %v340, 16
        %v568 = vor.u32 %v565, %v566
        %v569 = vsel %vm349, %v561, %v568
        %v570 = vrot.slane %v565, 4
        %v572 = vshrl.u32 %v341, 16
        %v574 = vrot.slane %v572, 7
        %v575 = vshll.u32 %v341, 16
        %v577 = vor.u32 %v574, %v575
        %v578 = vrot.slane %v574, 4
        %v580 = vshrl.u32 %v342, 16
        %v582 = vrot.slane %v580, 7
        %v583 = vshll.u32 %v342, 16
        %v585 = vor.u32 %v582, %v583
        %v586 = vsel %vm349, %v578, %v585
        %v587 = vrot.slane %v582, 4
        %v589 = vshrl.u32 %v343, 16
        %v591 = vrot.slane %v589, 7
        %v592 = vshll.u32 %v343, 16
        %v594 = vor.u32 %v591, %v592
        %v595 = vrot.slane %v591, 4
        %v597 = vshrl.u32 %v344, 16
        %v599 = vrot.slane %v597, 7
        %v600 = vshll.u32 %v344, 16
        %v602 = vor.u32 %v599, %v600
        %v603 = vsel %vm349, %v595, %v602
        %v604 = vrot.slane %v599, 4
        %v606 = vshrl.u32 %v345, 16
        %v608 = vrot.slane %v606, 7
        %v609 = vshll.u32 %v345, 16
        %v611 = vor.u32 %v608, %v609
        %v612 = vrot.slane %v608, 4
        %v614 = vshrl.u32 %v346, 16
        %v616 = vrot.slane %v614, 7
        %v617 = vshll.u32 %v346, 16
        %v619 = vor.u32 %v616, %v617
        %v620 = vsel %vm349, %v612, %v619
        %v621 = vrot.slane %v616, 4
        %s670 = scalar_lea.vmem [#allocation2], 12
        %vm671 = vcmask 1043456
        %vm672 = vsmask.f32 7938
        %vm673 = vmand %vm671, %vm672
        %v674 = vld [vmem:[%s670] sm:$0xf]
        %v675 = vsel %vm673, %v356, %v674
        %676 = vst [vmem:[%s670] sm:$0xf] %v675
        %677 = vst [vmem:[%s670 + $0x4] sm:$0xf] %v365
        %vm678 = vcmask 1040384
        %vm679 = vmand %vm678, %vm347
        %v680 = vld [vmem:[%s670 + $0x8] sm:$0x1]
        %v681 = vsel %vm679, %v366, %v680
        %682 = vst [vmem:[%s670 + $0x8] sm:$0x1] %v681
        %v683 = vld [vmem:[%s670 + $0xc] sm:$0xf]
        %v684 = vsel %vm673, %v373, %v683
        %685 = vst [vmem:[%s670 + $0xc] sm:$0xf] %v684
        %686 = vst [vmem:[%s670 + $0x10] sm:$0xf] %v382
        %v687 = vld [vmem:[%s670 + $0x14] sm:$0x1]
        %v688 = vsel %vm679, %v383, %v687
        %689 = vst [vmem:[%s670 + $0x14] sm:$0x1] %v688
        %v690 = vld [vmem:[%s670 + $0x18] sm:$0xf]
        %v691 = vsel %vm673, %v390, %v690
        %692 = vst [vmem:[%s670 + $0x18] sm:$0xf] %v691
        %693 = vst [vmem:[%s670 + $0x1c] sm:$0xf] %v399
        %v694 = vld [vmem:[%s670 + $0x20] sm:$0x1]
        %v695 = vsel %vm679, %v400, %v694
        %696 = vst [vmem:[%s670 + $0x20] sm:$0x1] %v695
        %v697 = vld [vmem:[%s670 + $0x24] sm:$0xf]
        %v698 = vsel %vm673, %v407, %v697
        %699 = vst [vmem:[%s670 + $0x24] sm:$0xf] %v698
        %700 = vst [vmem:[%s670 + $0x28] sm:$0xf] %v416
        %v701 = vld [vmem:[%s670 + $0x2c] sm:$0x1]
        %v702 = vsel %vm679, %v417, %v701
        %703 = vst [vmem:[%s670 + $0x2c] sm:$0x1] %v702
        %v704 = vld [vmem:[%s670 + $0x30] sm:$0xf]
        %v705 = vsel %vm673, %v424, %v704
        %706 = vst [vmem:[%s670 + $0x30] sm:$0xf] %v705
        %707 = vst [vmem:[%s670 + $0x34] sm:$0xf] %v433
        %v708 = vld [vmem:[%s670 + $0x38] sm:$0x1]
        %v709 = vsel %vm679, %v434, %v708
        %710 = vst [vmem:[%s670 + $0x38] sm:$0x1] %v709
        %v711 = vld [vmem:[%s670 + $0x3c] sm:$0xf]
        %v712 = vsel %vm673, %v441, %v711
        %713 = vst [vmem:[%s670 + $0x3c] sm:$0xf] %v712
        %714 = vst [vmem:[%s670 + $0x40] sm:$0xf] %v450
        %v715 = vld [vmem:[%s670 + $0x44] sm:$0x1]
        %v716 = vsel %vm679, %v451, %v715
        %717 = vst [vmem:[%s670 + $0x44] sm:$0x1] %v716
        %v718 = vld [vmem:[%s670 + $0x48] sm:$0xf]
        %v719 = vsel %vm673, %v458, %v718
        %720 = vst [vmem:[%s670 + $0x48] sm:$0xf] %v719
        %721 = vst [vmem:[%s670 + $0x4c] sm:$0xf] %v467
        %v722 = vld [vmem:[%s670 + $0x50] sm:$0x1]
        %v723 = vsel %vm679, %v468, %v722
        %724 = vst [vmem:[%s670 + $0x50] sm:$0x1] %v723
        %v725 = vld [vmem:[%s670 + $0x54] sm:$0xf]
        %v726 = vsel %vm673, %v475, %v725
        %727 = vst [vmem:[%s670 + $0x54] sm:$0xf] %v726
        %728 = vst [vmem:[%s670 + $0x58] sm:$0xf] %v484
        %v729 = vld [vmem:[%s670 + $0x5c] sm:$0x1]
        %v730 = vsel %vm679, %v485, %v729
        %731 = vst [vmem:[%s670 + $0x5c] sm:$0x1] %v730
        %v732 = vld [vmem:[%s670 + $0x60] sm:$0xf]
        %v733 = vsel %vm673, %v492, %v732
        %734 = vst [vmem:[%s670 + $0x60] sm:$0xf] %v733
        %735 = vst [vmem:[%s670 + $0x64] sm:$0xf] %v501
        %v736 = vld [vmem:[%s670 + $0x68] sm:$0x1]
        %v737 = vsel %vm679, %v502, %v736
        %738 = vst [vmem:[%s670 + $0x68] sm:$0x1] %v737
        %v739 = vld [vmem:[%s670 + $0x6c] sm:$0xf]
        %v740 = vsel %vm673, %v509, %v739
        %741 = vst [vmem:[%s670 + $0x6c] sm:$0xf] %v740
        %742 = vst [vmem:[%s670 + $0x70] sm:$0xf] %v518
        %v743 = vld [vmem:[%s670 + $0x74] sm:$0x1]
        %v744 = vsel %vm679, %v519, %v743
        %745 = vst [vmem:[%s670 + $0x74] sm:$0x1] %v744
        %v746 = vld [vmem:[%s670 + $0x78] sm:$0xf]
        %v747 = vsel %vm673, %v526, %v746
        %748 = vst [vmem:[%s670 + $0x78] sm:$0xf] %v747
        %749 = vst [vmem:[%s670 + $0x7c] sm:$0xf] %v535
        %v750 = vld [vmem:[%s670 + $0x80] sm:$0x1]
        %v751 = vsel %vm679, %v536, %v750
        %752 = vst [vmem:[%s670 + $0x80] sm:$0x1] %v751
        %v753 = vld [vmem:[%s670 + $0x84] sm:$0xf]
        %v754 = vsel %vm673, %v543, %v753
        %755 = vst [vmem:[%s670 + $0x84] sm:$0xf] %v754
        %756 = vst [vmem:[%s670 + $0x88] sm:$0xf] %v552
        %v757 = vld [vmem:[%s670 + $0x8c] sm:$0x1]
        %v758 = vsel %vm679, %v553, %v757
        %759 = vst [vmem:[%s670 + $0x8c] sm:$0x1] %v758
        %v760 = vld [vmem:[%s670 + $0x90] sm:$0xf]
        %v761 = vsel %vm673, %v560, %v760
        %762 = vst [vmem:[%s670 + $0x90] sm:$0xf] %v761
        %763 = vst [vmem:[%s670 + $0x94] sm:$0xf] %v569
        %v764 = vld [vmem:[%s670 + $0x98] sm:$0x1]
        %v765 = vsel %vm679, %v570, %v764
        %766 = vst [vmem:[%s670 + $0x98] sm:$0x1] %v765
        %v767 = vld [vmem:[%s670 + $0x9c] sm:$0xf]
        %v768 = vsel %vm673, %v577, %v767
        %769 = vst [vmem:[%s670 + $0x9c] sm:$0xf] %v768
        %770 = vst [vmem:[%s670 + $0xa0] sm:$0xf] %v586
        %v771 = vld [vmem:[%s670 + $0xa4] sm:$0x1]
        %v772 = vsel %vm679, %v587, %v771
        %773 = vst [vmem:[%s670 + $0xa4] sm:$0x1] %v772
        %v774 = vld [vmem:[%s670 + $0xa8] sm:$0xf]
        %v775 = vsel %vm673, %v594, %v774
        %776 = vst [vmem:[%s670 + $0xa8] sm:$0xf] %v775
        %777 = vst [vmem:[%s670 + $0xac] sm:$0xf] %v603
        %v778 = vld [vmem:[%s670 + $0xb0] sm:$0x1]
        %v779 = vsel %vm679, %v604, %v778
        %780 = vst [vmem:[%s670 + $0xb0] sm:$0x1] %v779
        %v781 = vld [vmem:[%s670 + $0xb4] sm:$0xf]
        %v782 = vsel %vm673, %v611, %v781
        %783 = vst [vmem:[%s670 + $0xb4] sm:$0xf] %v782
        %784 = vst [vmem:[%s670 + $0xb8] sm:$0xf] %v620
        %v785 = vld [vmem:[%s670 + $0xbc] sm:$0x1]
        %v786 = vsel %vm679, %v621, %v785
        %787 = vst [vmem:[%s670 + $0xbc] sm:$0x1] %v786
        %v788 = vld [vmem:[#allocation2] sm:$0xf]
        %v789 = vsel %vm673, %v373, %v788
        %790 = vst [vmem:[#allocation2] sm:$0xf] %v789
        %791 = vst [vmem:[#allocation2 + $0x4] sm:$0xf] %v382
        %v792 = vld [vmem:[#allocation2 + $0x8] sm:$0x1]
        %v793 = vsel %vm679, %v383, %v792
        %794 = vst [vmem:[#allocation2 + $0x8] sm:$0x1] %v793
        %s795 = scalar_lea.vmem [#allocation2], 204
        %v796 = vld [vmem:[%s795] sm:$0xf]
        %v797 = vsel %vm673, %v594, %v796
        %798 = vst [vmem:[%s795] sm:$0xf] %v797
        %799 = vst [vmem:[%s795 + $0x4] sm:$0xf] %v603
        %v800 = vld [vmem:[%s795 + $0x8] sm:$0x1]
        %v801 = vsel %vm679, %v604, %v800
        %802 = vst [vmem:[%s795 + $0x8] sm:$0x1] %v801
        %v803 = vld [vmem:[#allocation2] sm:$0x2]
        %v804 = vld [vmem:[#allocation2 + $0xc] sm:$0x2]
        %v805 = vld [vmem:[#allocation2 + $0x18] sm:$0x2]
        %v806 = vld [vmem:[#allocation2 + $0x24] sm:$0x2]
        %v807 = vld [vmem:[#allocation2 + $0x30] sm:$0x2]
        %v808 = vld [vmem:[#allocation2 + $0x3c] sm:$0x2]
        %v809 = vld [vmem:[#allocation2 + $0x48] sm:$0x2]
        %v810 = vld [vmem:[#allocation2 + $0x54] sm:$0x2]
        %v811 = vld [vmem:[#allocation2 + $0x60] sm:$0x2]
        %v812 = vld [vmem:[#allocation2 + $0x6c] sm:$0x2]
        %v813 = vld [vmem:[#allocation2 + $0x78] sm:$0x2]
        %v814 = vld [vmem:[#allocation2 + $0x84] sm:$0x2]
        %v815 = vld [vmem:[#allocation2 + $0x90] sm:$0x2]
        %v816 = vld [vmem:[#allocation2 + $0x9c] sm:$0x2]
        %v817 = vld [vmem:[#allocation2 + $0xa8] sm:$0x2]
        %v818 = vld [vmem:[#allocation2 + $0xb4] sm:$0x2]
        %v819 = vld [vmem:[#allocation2 + $0xc0] sm:$0x2]
        %v820 = vld [vmem:[#allocation2 + $0xcc] sm:$0x2]
        %v839 = vrot.slane %v803, 5
        %v840 = vrot.slane %v839, 4
        %v841 = vrot.slane %v804, 5
        %v842 = vrot.slane %v841, 4
        %v843 = vrot.slane %v805, 5
        %v844 = vrot.slane %v843, 4
        %v845 = vrot.slane %v806, 5
        %v846 = vrot.slane %v845, 4
        %v847 = vrot.slane %v807, 5
        %v848 = vrot.slane %v847, 4
        %v849 = vrot.slane %v808, 5
        %v850 = vrot.slane %v849, 4
        %v851 = vrot.slane %v809, 5
        %v852 = vrot.slane %v851, 4
        %v853 = vrot.slane %v810, 5
        %v854 = vrot.slane %v853, 4
        %v855 = vrot.slane %v811, 5
        %v856 = vrot.slane %v855, 4
        %v857 = vrot.slane %v812, 5
        %v858 = vrot.slane %v857, 4
        %v859 = vrot.slane %v813, 5
        %v860 = vrot.slane %v859, 4
        %v861 = vrot.slane %v814, 5
        %v862 = vrot.slane %v861, 4
        %v863 = vrot.slane %v815, 5
        %v864 = vrot.slane %v863, 4
        %v865 = vrot.slane %v816, 5
        %v866 = vrot.slane %v865, 4
        %v867 = vrot.slane %v817, 5
        %v868 = vrot.slane %v867, 4
        %v869 = vrot.slane %v818, 5
        %v870 = vrot.slane %v869, 4
        %v871 = vrot.slane %v819, 5
        %v872 = vrot.slane %v871, 4
        %v873 = vrot.slane %v820, 5
        %v874 = vrot.slane %v873, 4
        %v893 = vld [vmem:[#allocation2] sm:$0x1]
        %v894 = vsel %vm679, %v840, %v893
        %895 = vst [vmem:[#allocation2] sm:$0x1] %v894
        %v896 = vld [vmem:[#allocation2 + $0xc] sm:$0x1]
        %v897 = vsel %vm679, %v842, %v896
        %898 = vst [vmem:[#allocation2 + $0xc] sm:$0x1] %v897
        %v899 = vld [vmem:[#allocation2 + $0x18] sm:$0x1]
        %v900 = vsel %vm679, %v844, %v899
        %901 = vst [vmem:[#allocation2 + $0x18] sm:$0x1] %v900
        %v902 = vld [vmem:[#allocation2 + $0x24] sm:$0x1]
        %v903 = vsel %vm679, %v846, %v902
        %904 = vst [vmem:[#allocation2 + $0x24] sm:$0x1] %v903
        %v905 = vld [vmem:[#allocation2 + $0x30] sm:$0x1]
        %v906 = vsel %vm679, %v848, %v905
        %907 = vst [vmem:[#allocation2 + $0x30] sm:$0x1] %v906
        %v908 = vld [vmem:[#allocation2 + $0x3c] sm:$0x1]
        %v909 = vsel %vm679, %v850, %v908
        %910 = vst [vmem:[#allocation2 + $0x3c] sm:$0x1] %v909
        %v911 = vld [vmem:[#allocation2 + $0x48] sm:$0x1]
        %v912 = vsel %vm679, %v852, %v911
        %913 = vst [vmem:[#allocation2 + $0x48] sm:$0x1] %v912
        %v914 = vld [vmem:[#allocation2 + $0x54] sm:$0x1]
        %v915 = vsel %vm679, %v854, %v914
        %916 = vst [vmem:[#allocation2 + $0x54] sm:$0x1] %v915
        %v917 = vld [vmem:[#allocation2 + $0x60] sm:$0x1]
        %v918 = vsel %vm679, %v856, %v917
        %919 = vst [vmem:[#allocation2 + $0x60] sm:$0x1] %v918
        %v920 = vld [vmem:[#allocation2 + $0x6c] sm:$0x1]
        %v921 = vsel %vm679, %v858, %v920
        %922 = vst [vmem:[#allocation2 + $0x6c] sm:$0x1] %v921
        %v923 = vld [vmem:[#allocation2 + $0x78] sm:$0x1]
        %v924 = vsel %vm679, %v860, %v923
        %925 = vst [vmem:[#allocation2 + $0x78] sm:$0x1] %v924
        %v926 = vld [vmem:[#allocation2 + $0x84] sm:$0x1]
        %v927 = vsel %vm679, %v862, %v926
        %928 = vst [vmem:[#allocation2 + $0x84] sm:$0x1] %v927
        %v929 = vld [vmem:[#allocation2 + $0x90] sm:$0x1]
        %v930 = vsel %vm679, %v864, %v929
        %931 = vst [vmem:[#allocation2 + $0x90] sm:$0x1] %v930
        %v932 = vld [vmem:[#allocation2 + $0x9c] sm:$0x1]
        %v933 = vsel %vm679, %v866, %v932
        %934 = vst [vmem:[#allocation2 + $0x9c] sm:$0x1] %v933
        %v935 = vld [vmem:[#allocation2 + $0xa8] sm:$0x1]
        %v936 = vsel %vm679, %v868, %v935
        %937 = vst [vmem:[#allocation2 + $0xa8] sm:$0x1] %v936
        %v938 = vld [vmem:[#allocation2 + $0xb4] sm:$0x1]
        %v939 = vsel %vm679, %v870, %v938
        %940 = vst [vmem:[#allocation2 + $0xb4] sm:$0x1] %v939
        %v941 = vld [vmem:[#allocation2 + $0xc0] sm:$0x1]
        %v942 = vsel %vm679, %v872, %v941
        %943 = vst [vmem:[#allocation2 + $0xc0] sm:$0x1] %v942
        %v944 = vld [vmem:[#allocation2 + $0xcc] sm:$0x1]
        %v945 = vsel %vm679, %v874, %v944
        %946 = vst [vmem:[#allocation2 + $0xcc] sm:$0x1] %v945
        %v947 = vld [vmem:[#allocation2 + $0x4] sm:$0x8]
        %v948 = vld [vmem:[#allocation2 + $0x10] sm:$0x8]
        %v949 = vld [vmem:[#allocation2 + $0x1c] sm:$0x8]
        %v950 = vld [vmem:[#allocation2 + $0x28] sm:$0x8]
        %v951 = vld [vmem:[#allocation2 + $0x34] sm:$0x8]
        %v952 = vld [vmem:[#allocation2 + $0x40] sm:$0x8]
        %v953 = vld [vmem:[#allocation2 + $0x4c] sm:$0x8]
        %v954 = vld [vmem:[#allocation2 + $0x58] sm:$0x8]
        %v955 = vld [vmem:[#allocation2 + $0x64] sm:$0x8]
        %v956 = vld [vmem:[#allocation2 + $0x70] sm:$0x8]
        %v957 = vld [vmem:[#allocation2 + $0x7c] sm:$0x8]
        %v958 = vld [vmem:[#allocation2 + $0x88] sm:$0x8]
        %v959 = vld [vmem:[#allocation2 + $0x94] sm:$0x8]
        %v960 = vld [vmem:[#allocation2 + $0xa0] sm:$0x8]
        %v961 = vld [vmem:[#allocation2 + $0xac] sm:$0x8]
        %v962 = vld [vmem:[#allocation2 + $0xb8] sm:$0x8]
        %v963 = vld [vmem:[#allocation2 + $0xc4] sm:$0x8]
        %v964 = vld [vmem:[#allocation2 + $0xd0] sm:$0x8]
        %v983 = vrot.slane %v947, 7
        %v984 = vrot.slane %v983, 4
        %v985 = vrot.slane %v948, 7
        %v986 = vrot.slane %v985, 4
        %v987 = vrot.slane %v949, 7
        %v988 = vrot.slane %v987, 4
        %v989 = vrot.slane %v950, 7
        %v990 = vrot.slane %v989, 4
        %v991 = vrot.slane %v951, 7
        %v992 = vrot.slane %v991, 4
        %v993 = vrot.slane %v952, 7
        %v994 = vrot.slane %v993, 4
        %v995 = vrot.slane %v953, 7
        %v996 = vrot.slane %v995, 4
        %v997 = vrot.slane %v954, 7
        %v998 = vrot.slane %v997, 4
        %v999 = vrot.slane %v955, 7
        %v1000 = vrot.slane %v999, 4
        %v1001 = vrot.slane %v956, 7
        %v1002 = vrot.slane %v1001, 4
        %v1003 = vrot.slane %v957, 7
        %v1004 = vrot.slane %v1003, 4
        %v1005 = vrot.slane %v958, 7
        %v1006 = vrot.slane %v1005, 4
        %v1007 = vrot.slane %v959, 7
        %v1008 = vrot.slane %v1007, 4
        %v1009 = vrot.slane %v960, 7
        %v1010 = vrot.slane %v1009, 4
        %v1011 = vrot.slane %v961, 7
        %v1012 = vrot.slane %v1011, 4
        %v1013 = vrot.slane %v962, 7
        %v1014 = vrot.slane %v1013, 4
        %v1015 = vrot.slane %v963, 7
        %v1016 = vrot.slane %v1015, 4
        %v1017 = vrot.slane %v964, 7
        %v1018 = vrot.slane %v1017, 4
        %vm1037 = vmand %vm678, %vm672
        %v1038 = vld [vmem:[#allocation2 + $0x8] sm:$0x1]
        %v1039 = vsel %vm1037, %v984, %v1038
        %1040 = vst [vmem:[#allocation2 + $0x8] sm:$0x1] %v1039
        %v1041 = vld [vmem:[#allocation2 + $0x14] sm:$0x1]
        %v1042 = vsel %vm1037, %v986, %v1041
        %1043 = vst [vmem:[#allocation2 + $0x14] sm:$0x1] %v1042
        %v1044 = vld [vmem:[#allocation2 + $0x20] sm:$0x1]
        %v1045 = vsel %vm1037, %v988, %v1044
        %1046 = vst [vmem:[#allocation2 + $0x20] sm:$0x1] %v1045
        %v1047 = vld [vmem:[#allocation2 + $0x2c] sm:$0x1]
        %v1048 = vsel %vm1037, %v990, %v1047
        %1049 = vst [vmem:[#allocation2 + $0x2c] sm:$0x1] %v1048
        %v1050 = vld [vmem:[#allocation2 + $0x38] sm:$0x1]
        %v1051 = vsel %vm1037, %v992, %v1050
        %1052 = vst [vmem:[#allocation2 + $0x38] sm:$0x1] %v1051
        %v1053 = vld [vmem:[#allocation2 + $0x44] sm:$0x1]
        %v1054 = vsel %vm1037, %v994, %v1053
        %1055 = vst [vmem:[#allocation2 + $0x44] sm:$0x1] %v1054
        %v1056 = vld [vmem:[#allocation2 + $0x50] sm:$0x1]
        %v1057 = vsel %vm1037, %v996, %v1056
        %1058 = vst [vmem:[#allocation2 + $0x50] sm:$0x1] %v1057
        %v1059 = vld [vmem:[#allocation2 + $0x5c] sm:$0x1]
        %v1060 = vsel %vm1037, %v998, %v1059
        %1061 = vst [vmem:[#allocation2 + $0x5c] sm:$0x1] %v1060
        %v1062 = vld [vmem:[#allocation2 + $0x68] sm:$0x1]
        %v1063 = vsel %vm1037, %v1000, %v1062
        %1064 = vst [vmem:[#allocation2 + $0x68] sm:$0x1] %v1063
        %v1065 = vld [vmem:[#allocation2 + $0x74] sm:$0x1]
        %v1066 = vsel %vm1037, %v1002, %v1065
        %1067 = vst [vmem:[#allocation2 + $0x74] sm:$0x1] %v1066
        %v1068 = vld [vmem:[#allocation2 + $0x80] sm:$0x1]
        %v1069 = vsel %vm1037, %v1004, %v1068
        %1070 = vst [vmem:[#allocation2 + $0x80] sm:$0x1] %v1069
        %v1071 = vld [vmem:[#allocation2 + $0x8c] sm:$0x1]
        %v1072 = vsel %vm1037, %v1006, %v1071
        %1073 = vst [vmem:[#allocation2 + $0x8c] sm:$0x1] %v1072
        %v1074 = vld [vmem:[#allocation2 + $0x98] sm:$0x1]
        %v1075 = vsel %vm1037, %v1008, %v1074
        %1076 = vst [vmem:[#allocation2 + $0x98] sm:$0x1] %v1075
        %v1077 = vld [vmem:[#allocation2 + $0xa4] sm:$0x1]
        %v1078 = vsel %vm1037, %v1010, %v1077
        %1079 = vst [vmem:[#allocation2 + $0xa4] sm:$0x1] %v1078
        %v1080 = vld [vmem:[#allocation2 + $0xb0] sm:$0x1]
        %v1081 = vsel %vm1037, %v1012, %v1080
        %1082 = vst [vmem:[#allocation2 + $0xb0] sm:$0x1] %v1081
        %v1083 = vld [vmem:[#allocation2 + $0xbc] sm:$0x1]
        %v1084 = vsel %vm1037, %v1014, %v1083
        %1085 = vst [vmem:[#allocation2 + $0xbc] sm:$0x1] %v1084
        %v1086 = vld [vmem:[#allocation2 + $0xc8] sm:$0x1]
        %v1087 = vsel %vm1037, %v1016, %v1086
        %1088 = vst [vmem:[#allocation2 + $0xc8] sm:$0x1] %v1087
        %v1089 = vld [vmem:[#allocation2 + $0xd4] sm:$0x1]
        %v1090 = vsel %vm1037, %v1018, %v1089
        %1091 = vst [vmem:[#allocation2 + $0xd4] sm:$0x1] %v1090
        %v1092 = vld [vmem:[#allocation2] sm:$0xf]
        %v1093 = vld [vmem:[#allocation2 + $0x4] sm:$0xf]
        %v1094 = vld [vmem:[#allocation2 + $0xc] sm:$0xf]
        %v1095 = vld [vmem:[#allocation2 + $0x10] sm:$0xf]
        %v1096 = vld [vmem:[#allocation2 + $0x18] sm:$0xf]
        %v1097 = vld [vmem:[#allocation2 + $0x1c] sm:$0xf]
        %v1098 = vld [vmem:[#allocation2 + $0x24] sm:$0xf]
        %v1099 = vld [vmem:[#allocation2 + $0x28] sm:$0xf]
        %v1100 = vld [vmem:[#allocation2 + $0x30] sm:$0xf]
        %v1101 = vld [vmem:[#allocation2 + $0x34] sm:$0xf]
        %v1102 = vld [vmem:[#allocation2 + $0x3c] sm:$0xf]
        %v1103 = vld [vmem:[#allocation2 + $0x40] sm:$0xf]
        %v1104 = vld [vmem:[#allocation2 + $0x48] sm:$0xf]
        %v1105 = vld [vmem:[#allocation2 + $0x4c] sm:$0xf]
        %v1106 = vld [vmem:[#allocation2 + $0x54] sm:$0xf]
        %v1107 = vld [vmem:[#allocation2 + $0x58] sm:$0xf]
        %v1108 = vld [vmem:[#allocation2 + $0x60] sm:$0xf]
        %v1109 = vld [vmem:[#allocation2 + $0x64] sm:$0xf]
        %v1110 = vld [vmem:[#allocation2 + $0x6c] sm:$0xf]
        %v1111 = vld [vmem:[#allocation2 + $0x70] sm:$0xf]
        %v1112 = vld [vmem:[#allocation2 + $0x78] sm:$0xf]
        %v1113 = vld [vmem:[#allocation2 + $0x7c] sm:$0xf]
        %v1114 = vld [vmem:[#allocation2 + $0x84] sm:$0xf]
        %v1115 = vld [vmem:[#allocation2 + $0x88] sm:$0xf]
        %v1116 = vld [vmem:[#allocation2 + $0x90] sm:$0xf]
        %v1117 = vld [vmem:[#allocation2 + $0x94] sm:$0xf]
        %v1118 = vld [vmem:[#allocation2 + $0x9c] sm:$0xf]
        %v1119 = vld [vmem:[#allocation2 + $0xa0] sm:$0xf]
        %v1120 = vld [vmem:[#allocation2 + $0xa8] sm:$0xf]
        %v1121 = vld [vmem:[#allocation2 + $0xac] sm:$0xf]
        %v1122 = vld [vmem:[#allocation2 + $0xb4] sm:$0xf]
        %v1123 = vld [vmem:[#allocation2 + $0xb8] sm:$0xf]
        %v1124 = vld [vmem:[#allocation6] sm:$0xf]
        %v1125 = vld [vmem:[#allocation6 + $0x4] sm:$0xf]
        %v1126 = vld [vmem:[#allocation6 + $0x8] sm:$0xf]
        %v1127 = vld [vmem:[#allocation6 + $0xc] sm:$0xf]
        %v1128 = vld [vmem:[#allocation6 + $0x10] sm:$0xf]
        %v1129 = vld [vmem:[#allocation6 + $0x14] sm:$0xf]
        %v1130 = vld [vmem:[#allocation6 + $0x18] sm:$0xf]
        %v1131 = vld [vmem:[#allocation6 + $0x1c] sm:$0xf]
        %v1132 = vld [vmem:[#allocation6 + $0x20] sm:$0xf]
        %v1133 = vld [vmem:[#allocation6 + $0x24] sm:$0xf]
        %v1134 = vld [vmem:[#allocation6 + $0x28] sm:$0xf]
        %v1135 = vld [vmem:[#allocation6 + $0x2c] sm:$0xf]
        %v1136 = vld [vmem:[#allocation6 + $0x30] sm:$0xf]
        %v1137 = vld [vmem:[#allocation6 + $0x34] sm:$0xf]
        %v1138 = vld [vmem:[#allocation6 + $0x38] sm:$0xf]
        %v1139 = vld [vmem:[#allocation6 + $0x3c] sm:$0xf]
        %v1140 = vld [vmem:[#allocation2 + $0x8] sm:$0x1]
        %v1141 = vld [vmem:[#allocation2 + $0x14] sm:$0x1]
        %v1142 = vld [vmem:[#allocation2 + $0x20] sm:$0x1]
        %v1143 = vld [vmem:[#allocation2 + $0x2c] sm:$0x1]
        %v1144 = vld [vmem:[#allocation2 + $0x38] sm:$0x1]
        %v1145 = vld [vmem:[#allocation2 + $0x44] sm:$0x1]
        %v1146 = vld [vmem:[#allocation2 + $0x50] sm:$0x1]
        %v1147 = vld [vmem:[#allocation2 + $0x5c] sm:$0x1]
        %v1148 = vld [vmem:[#allocation2 + $0x68] sm:$0x1]
        %v1149 = vld [vmem:[#allocation2 + $0x74] sm:$0x1]
        %v1150 = vld [vmem:[#allocation2 + $0x80] sm:$0x1]
        %v1151 = vld [vmem:[#allocation2 + $0x8c] sm:$0x1]
        %v1152 = vld [vmem:[#allocation2 + $0x98] sm:$0x1]
        %v1153 = vld [vmem:[#allocation2 + $0xa4] sm:$0x1]
        %v1154 = vld [vmem:[#allocation2 + $0xb0] sm:$0x1]
        %v1155 = vld [vmem:[#allocation2 + $0xbc] sm:$0x1]
        %vm1156 = vsmask.f32 3328
        %vm1157 = vsmask.f32 7440
        %vm1158 = vmor %vm1156, %vm1157
        %v1160 = vshrl.u32 %v1092, 16
        %v1162 = vrot.slane %v1160, 4
        %v1163 = vshll.u32 %v1092, 16
        %v1165 = vrot.slane %v1163, 5
        %v1166 = vor.u32 %v1162, %v1165
        %v1167 = vrot.slane %v1166, 4
        %v1169 = vshll.u32 %v1093, 16
        %v1171 = vrot.slane %v1169, 5
        %v1172 = vsel %vm1158, %v1167, %v1171
        %v1173 = vshrl.u32 %v1093, 16
        %v1175 = vrot.slane %v1173, 4
        %v1176 = vor.u32 %v1175, %v1171
        %v1177 = vrot.slane %v1176, 4
        %v1179 = vshll.u32 %v1140, 16
        %v1181 = vrot.slane %v1179, 5
        %v1182 = vsel %vm1158, %v1177, %v1181
        %v1184 = vshrl.u32 %v1094, 16
        %v1186 = vrot.slane %v1184, 4
        %v1187 = vshll.u32 %v1094, 16
        %v1189 = vrot.slane %v1187, 5
        %v1190 = vor.u32 %v1186, %v1189
        %v1191 = vrot.slane %v1190, 4
        %v1193 = vshll.u32 %v1095, 16
        %v1195 = vrot.slane %v1193, 5
        %v1196 = vsel %vm1158, %v1191, %v1195
        %v1197 = vshrl.u32 %v1095, 16
        %v1199 = vrot.slane %v1197, 4
        %v1200 = vor.u32 %v1199, %v1195
        %v1201 = vrot.slane %v1200, 4
        %v1203 = vshll.u32 %v1141, 16
        %v1205 = vrot.slane %v1203, 5
        %v1206 = vsel %vm1158, %v1201, %v1205
        %v1208 = vshrl.u32 %v1096, 16
        %v1210 = vrot.slane %v1208, 4
        %v1211 = vshll.u32 %v1096, 16
        %v1213 = vrot.slane %v1211, 5
        %v1214 = vor.u32 %v1210, %v1213
        %v1215 = vrot.slane %v1214, 4
        %v1217 = vshll.u32 %v1097, 16
        %v1219 = vrot.slane %v1217, 5
        %v1220 = vsel %vm1158, %v1215, %v1219
        %v1221 = vshrl.u32 %v1097, 16
        %v1223 = vrot.slane %v1221, 4
        %v1224 = vor.u32 %v1223, %v1219
        %v1225 = vrot.slane %v1224, 4
        %v1227 = vshll.u32 %v1142, 16
        %v1229 = vrot.slane %v1227, 5
        %v1230 = vsel %vm1158, %v1225, %v1229
        %v1232 = vshrl.u32 %v1098, 16
        %v1234 = vrot.slane %v1232, 4
        %v1235 = vshll.u32 %v1098, 16
        %v1237 = vrot.slane %v1235, 5
        %v1238 = vor.u32 %v1234, %v1237
        %v1239 = vrot.slane %v1238, 4
        %v1241 = vshll.u32 %v1099, 16
        %v1243 = vrot.slane %v1241, 5
        %v1244 = vsel %vm1158, %v1239, %v1243
        %v1245 = vshrl.u32 %v1099, 16
        %v1247 = vrot.slane %v1245, 4
        %v1248 = vor.u32 %v1247, %v1243
        %v1249 = vrot.slane %v1248, 4
        %v1251 = vshll.u32 %v1143, 16
        %v1253 = vrot.slane %v1251, 5
        %v1254 = vsel %vm1158, %v1249, %v1253
        %v1256 = vshrl.u32 %v1100, 16
        %v1258 = vrot.slane %v1256, 4
        %v1259 = vshll.u32 %v1100, 16
        %v1261 = vrot.slane %v1259, 5
        %v1262 = vor.u32 %v1258, %v1261
        %v1263 = vrot.slane %v1262, 4
        %v1265 = vshll.u32 %v1101, 16
        %v1267 = vrot.slane %v1265, 5
        %v1268 = vsel %vm1158, %v1263, %v1267
        %v1269 = vshrl.u32 %v1101, 16
        %v1271 = vrot.slane %v1269, 4
        %v1272 = vor.u32 %v1271, %v1267
        %v1273 = vrot.slane %v1272, 4
        %v1275 = vshll.u32 %v1144, 16
        %v1277 = vrot.slane %v1275, 5
        %v1278 = vsel %vm1158, %v1273, %v1277
        %v1280 = vshrl.u32 %v1102, 16
        %v1282 = vrot.slane %v1280, 4
        %v1283 = vshll.u32 %v1102, 16
        %v1285 = vrot.slane %v1283, 5
        %v1286 = vor.u32 %v1282, %v1285
        %v1287 = vrot.slane %v1286, 4
        %v1289 = vshll.u32 %v1103, 16
        %v1291 = vrot.slane %v1289, 5
        %v1292 = vsel %vm1158, %v1287, %v1291
        %v1293 = vshrl.u32 %v1103, 16
        %v1295 = vrot.slane %v1293, 4
        %v1296 = vor.u32 %v1295, %v1291
        %v1297 = vrot.slane %v1296, 4
        %v1299 = vshll.u32 %v1145, 16
        %v1301 = vrot.slane %v1299, 5
        %v1302 = vsel %vm1158, %v1297, %v1301
        %v1304 = vshrl.u32 %v1104, 16
        %v1306 = vrot.slane %v1304, 4
        %v1307 = vshll.u32 %v1104, 16
        %v1309 = vrot.slane %v1307, 5
        %v1310 = vor.u32 %v1306, %v1309
        %v1311 = vrot.slane %v1310, 4
        %v1313 = vshll.u32 %v1105, 16
        %v1315 = vrot.slane %v1313, 5
        %v1316 = vsel %vm1158, %v1311, %v1315
        %v1317 = vshrl.u32 %v1105, 16
        %v1319 = vrot.slane %v1317, 4
        %v1320 = vor.u32 %v1319, %v1315
        %v1321 = vrot.slane %v1320, 4
        %v1323 = vshll.u32 %v1146, 16
        %v1325 = vrot.slane %v1323, 5
        %v1326 = vsel %vm1158, %v1321, %v1325
        %v1328 = vshrl.u32 %v1106, 16
        %v1330 = vrot.slane %v1328, 4
        %v1331 = vshll.u32 %v1106, 16
        %v1333 = vrot.slane %v1331, 5
        %v1334 = vor.u32 %v1330, %v1333
        %v1335 = vrot.slane %v1334, 4
        %v1337 = vshll.u32 %v1107, 16
        %v1339 = vrot.slane %v1337, 5
        %v1340 = vsel %vm1158, %v1335, %v1339
        %v1341 = vshrl.u32 %v1107, 16
        %v1343 = vrot.slane %v1341, 4
        %v1344 = vor.u32 %v1343, %v1339
        %v1345 = vrot.slane %v1344, 4
        %v1347 = vshll.u32 %v1147, 16
        %v1349 = vrot.slane %v1347, 5
        %v1350 = vsel %vm1158, %v1345, %v1349
        %v1352 = vshrl.u32 %v1108, 16
        %v1354 = vrot.slane %v1352, 4
        %v1355 = vshll.u32 %v1108, 16
        %v1357 = vrot.slane %v1355, 5
        %v1358 = vor.u32 %v1354, %v1357
        %v1359 = vrot.slane %v1358, 4
        %v1361 = vshll.u32 %v1109, 16
        %v1363 = vrot.slane %v1361, 5
        %v1364 = vsel %vm1158, %v1359, %v1363
        %v1365 = vshrl.u32 %v1109, 16
        %v1367 = vrot.slane %v1365, 4
        %v1368 = vor.u32 %v1367, %v1363
        %v1369 = vrot.slane %v1368, 4
        %v1371 = vshll.u32 %v1148, 16
        %v1373 = vrot.slane %v1371, 5
        %v1374 = vsel %vm1158, %v1369, %v1373
        %v1376 = vshrl.u32 %v1110, 16
        %v1378 = vrot.slane %v1376, 4
        %v1379 = vshll.u32 %v1110, 16
        %v1381 = vrot.slane %v1379, 5
        %v1382 = vor.u32 %v1378, %v1381
        %v1383 = vrot.slane %v1382, 4
        %v1385 = vshll.u32 %v1111, 16
        %v1387 = vrot.slane %v1385, 5
        %v1388 = vsel %vm1158, %v1383, %v1387
        %v1389 = vshrl.u32 %v1111, 16
        %v1391 = vrot.slane %v1389, 4
        %v1392 = vor.u32 %v1391, %v1387
        %v1393 = vrot.slane %v1392, 4
        %v1395 = vshll.u32 %v1149, 16
        %v1397 = vrot.slane %v1395, 5
        %v1398 = vsel %vm1158, %v1393, %v1397
        %v1400 = vshrl.u32 %v1112, 16
        %v1402 = vrot.slane %v1400, 4
        %v1403 = vshll.u32 %v1112, 16
        %v1405 = vrot.slane %v1403, 5
        %v1406 = vor.u32 %v1402, %v1405
        %v1407 = vrot.slane %v1406, 4
        %v1409 = vshll.u32 %v1113, 16
        %v1411 = vrot.slane %v1409, 5
        %v1412 = vsel %vm1158, %v1407, %v1411
        %v1413 = vshrl.u32 %v1113, 16
        %v1415 = vrot.slane %v1413, 4
        %v1416 = vor.u32 %v1415, %v1411
        %v1417 = vrot.slane %v1416, 4
        %v1419 = vshll.u32 %v1150, 16
        %v1421 = vrot.slane %v1419, 5
        %v1422 = vsel %vm1158, %v1417, %v1421
        %v1424 = vshrl.u32 %v1114, 16
        %v1426 = vrot.slane %v1424, 4
        %v1427 = vshll.u32 %v1114, 16
        %v1429 = vrot.slane %v1427, 5
        %v1430 = vor.u32 %v1426, %v1429
        %v1431 = vrot.slane %v1430, 4
        %v1433 = vshll.u32 %v1115, 16
        %v1435 = vrot.slane %v1433, 5
        %v1436 = vsel %vm1158, %v1431, %v1435
        %v1437 = vshrl.u32 %v1115, 16
        %v1439 = vrot.slane %v1437, 4
        %v1440 = vor.u32 %v1439, %v1435
        %v1441 = vrot.slane %v1440, 4
        %v1443 = vshll.u32 %v1151, 16
        %v1445 = vrot.slane %v1443, 5
        %v1446 = vsel %vm1158, %v1441, %v1445
        %v1448 = vshrl.u32 %v1116, 16
        %v1450 = vrot.slane %v1448, 4
        %v1451 = vshll.u32 %v1116, 16
        %v1453 = vrot.slane %v1451, 5
        %v1454 = vor.u32 %v1450, %v1453
        %v1455 = vrot.slane %v1454, 4
        %v1457 = vshll.u32 %v1117, 16
        %v1459 = vrot.slane %v1457, 5
        %v1460 = vsel %vm1158, %v1455, %v1459
        %v1461 = vshrl.u32 %v1117, 16
        %v1463 = vrot.slane %v1461, 4
        %v1464 = vor.u32 %v1463, %v1459
        %v1465 = vrot.slane %v1464, 4
        %v1467 = vshll.u32 %v1152, 16
        %v1469 = vrot.slane %v1467, 5
        %v1470 = vsel %vm1158, %v1465, %v1469
        %v1472 = vshrl.u32 %v1118, 16
        %v1474 = vrot.slane %v1472, 4
        %v1475 = vshll.u32 %v1118, 16
        %v1477 = vrot.slane %v1475, 5
        %v1478 = vor.u32 %v1474, %v1477
        %v1479 = vrot.slane %v1478, 4
        %v1481 = vshll.u32 %v1119, 16
        %v1483 = vrot.slane %v1481, 5
        %v1484 = vsel %vm1158, %v1479, %v1483
        %v1485 = vshrl.u32 %v1119, 16
        %v1487 = vrot.slane %v1485, 4
        %v1488 = vor.u32 %v1487, %v1483
        %v1489 = vrot.slane %v1488, 4
        %v1491 = vshll.u32 %v1153, 16
        %v1493 = vrot.slane %v1491, 5
        %v1494 = vsel %vm1158, %v1489, %v1493
        %v1496 = vshrl.u32 %v1120, 16
        %v1498 = vrot.slane %v1496, 4
        %v1499 = vshll.u32 %v1120, 16
        %v1501 = vrot.slane %v1499, 5
        %v1502 = vor.u32 %v1498, %v1501
        %v1503 = vrot.slane %v1502, 4
        %v1505 = vshll.u32 %v1121, 16
        %v1507 = vrot.slane %v1505, 5
        %v1508 = vsel %vm1158, %v1503, %v1507
        %v1509 = vshrl.u32 %v1121, 16
        %v1511 = vrot.slane %v1509, 4
        %v1512 = vor.u32 %v1511, %v1507
        %v1513 = vrot.slane %v1512, 4
        %v1515 = vshll.u32 %v1154, 16
        %v1517 = vrot.slane %v1515, 5
        %v1518 = vsel %vm1158, %v1513, %v1517
        %v1520 = vshrl.u32 %v1122, 16
        %v1522 = vrot.slane %v1520, 4
        %v1523 = vshll.u32 %v1122, 16
        %v1525 = vrot.slane %v1523, 5
        %v1526 = vor.u32 %v1522, %v1525
        %v1527 = vrot.slane %v1526, 4
        %v1529 = vshll.u32 %v1123, 16
        %v1531 = vrot.slane %v1529, 5
        %v1532 = vsel %vm1158, %v1527, %v1531
        %v1533 = vshrl.u32 %v1123, 16
        %v1535 = vrot.slane %v1533, 4
        %v1536 = vor.u32 %v1535, %v1531
        %v1537 = vrot.slane %v1536, 4
        %v1539 = vshll.u32 %v1155, 16
        %v1541 = vrot.slane %v1539, 5
        %v1542 = vsel %vm1158, %v1537, %v1541
        %s1543 = scalar_lea.vmem [#allocation6], 64
        %v1544 = vld [vmem:[%s1543] sm:$0xf]
        %v1545 = vld [vmem:[%s1543 + $0x4] sm:$0xf]
        %v1546 = vld [vmem:[%s1543 + $0x8] sm:$0xf]
        %v1547 = vld [vmem:[%s1543 + $0xc] sm:$0xf]
        %v1548 = vld [vmem:[%s1543 + $0x10] sm:$0xf]
        %v1549 = vld [vmem:[%s1543 + $0x14] sm:$0xf]
        %v1550 = vld [vmem:[%s1543 + $0x18] sm:$0xf]
        %v1551 = vld [vmem:[%s1543 + $0x1c] sm:$0xf]
        %v1552 = vld [vmem:[%s1543 + $0x20] sm:$0xf]
        %v1553 = vld [vmem:[%s1543 + $0x24] sm:$0xf]
        %v1554 = vld [vmem:[%s1543 + $0x28] sm:$0xf]
        %v1555 = vld [vmem:[%s1543 + $0x2c] sm:$0xf]
        %v1556 = vld [vmem:[%s1543 + $0x30] sm:$0xf]
        %v1557 = vld [vmem:[%s1543 + $0x34] sm:$0xf]
        %v1558 = vld [vmem:[%s1543 + $0x38] sm:$0xf]
        %v1559 = vld [vmem:[%s1543 + $0x3c] sm:$0xf]
        %v1560 = vunpack.c.l.b16 %v1172
        %v1561 = vunpack.c.l.b16 %v1182
        %v1562 = vunpack.c.l.b16 %v1196
        %v1563 = vunpack.c.l.b16 %v1206
        %v1564 = vunpack.c.l.b16 %v1220
        %v1565 = vunpack.c.l.b16 %v1230
        %v1566 = vunpack.c.l.b16 %v1244
        %v1567 = vunpack.c.l.b16 %v1254
        %v1568 = vunpack.c.l.b16 %v1268
        %v1569 = vunpack.c.l.b16 %v1278
        %v1570 = vunpack.c.l.b16 %v1292
        %v1571 = vunpack.c.l.b16 %v1302
        %v1572 = vunpack.c.l.b16 %v1316
        %v1573 = vunpack.c.l.b16 %v1326
        %v1574 = vunpack.c.l.b16 %v1340
        %v1575 = vunpack.c.l.b16 %v1350
        %v1576 = vunpack.c.l.b16 %v1364
        %v1577 = vunpack.c.l.b16 %v1374
        %v1578 = vunpack.c.l.b16 %v1388
        %v1579 = vunpack.c.l.b16 %v1398
        %v1580 = vunpack.c.l.b16 %v1412
        %v1581 = vunpack.c.l.b16 %v1422
        %v1582 = vunpack.c.l.b16 %v1436
        %v1583 = vunpack.c.l.b16 %v1446
        %v1584 = vunpack.c.l.b16 %v1460
        %v1585 = vunpack.c.l.b16 %v1470
        %v1586 = vunpack.c.l.b16 %v1484
        %v1587 = vunpack.c.l.b16 %v1494
        %v1588 = vunpack.c.l.b16 %v1508
        %v1589 = vunpack.c.l.b16 %v1518
        %v1590 = vunpack.c.l.b16 %v1532
        %v1591 = vunpack.c.l.b16 %v1542
        %v1592 = vpack.c.b16 %v1561, %v1560
        %v1593 = vpack.c.b16 %v1563, %v1562
        %v1594 = vpack.c.b16 %v1565, %v1564
        %v1595 = vpack.c.b16 %v1567, %v1566
        %v1596 = vpack.c.b16 %v1569, %v1568
        %v1597 = vpack.c.b16 %v1571, %v1570
        %v1598 = vpack.c.b16 %v1573, %v1572
        %v1599 = vpack.c.b16 %v1575, %v1574
        %v1600 = vpack.c.b16 %v1577, %v1576
        %v1601 = vpack.c.b16 %v1579, %v1578
        %v1602 = vpack.c.b16 %v1581, %v1580
        %v1603 = vpack.c.b16 %v1583, %v1582
        %v1604 = vpack.c.b16 %v1585, %v1584
        %v1605 = vpack.c.b16 %v1587, %v1586
        %v1606 = vpack.c.b16 %v1589, %v1588
        %v1607 = vpack.c.b16 %v1591, %v1590
        %v1640 = vunpack.c.l.b16 %v1544
        %v1641 = vunpack.c.l.b16 %v1545
        %v1642 = vunpack.c.l.b16 %v1546
        %v1643 = vunpack.c.l.b16 %v1547
        %v1644 = vunpack.c.l.b16 %v1548
        %v1645 = vunpack.c.l.b16 %v1549
        %v1646 = vunpack.c.l.b16 %v1550
        %v1647 = vunpack.c.l.b16 %v1551
        %v1648 = vunpack.c.l.b16 %v1552
        %v1649 = vunpack.c.l.b16 %v1553
        %v1650 = vunpack.c.l.b16 %v1554
        %v1651 = vunpack.c.l.b16 %v1555
        %v1652 = vunpack.c.l.b16 %v1556
        %v1653 = vunpack.c.l.b16 %v1557
        %v1654 = vunpack.c.l.b16 %v1558
        %v1655 = vunpack.c.l.b16 %v1559
        %v1656 = vpack.c.b16 %v1641, %v1640
        %v1657 = vpack.c.b16 %v1643, %v1642
        %v1658 = vpack.c.b16 %v1645, %v1644
        %v1659 = vpack.c.b16 %v1647, %v1646
        %v1660 = vpack.c.b16 %v1649, %v1648
        %v1661 = vpack.c.b16 %v1651, %v1650
        %v1662 = vpack.c.b16 %v1653, %v1652
        %v1663 = vpack.c.b16 %v1655, %v1654
        %1672 = vmatprep.subr.bf16.mxu0 0
        %1673 = vmatpush1.bf16.msra.mxu0 %v1656
        %1674 = vmatprep.subr.bf16.mxu0 0
        %1675 = vmatpush1.bf16.msra.mxu0 %v1657
        %1676 = vmatprep.subr.bf16.mxu0 0
        %1677 = vmatpush1.bf16.msra.mxu0 %v1658
        %1678 = vmatprep.subr.bf16.mxu0 0
        %1679 = vmatpush1.bf16.msra.mxu0 %v1659
        %1680 = vmatprep.subr.bf16.mxu0 0
        %1681 = vmatpush1.bf16.msra.mxu0 %v1660
        %1682 = vmatprep.subr.bf16.mxu0 0
        %1683 = vmatpush1.bf16.msra.mxu0 %v1661
        %1684 = vmatprep.subr.bf16.mxu0 0
        %1685 = vmatpush1.bf16.msra.mxu0 %v1662
        %1686 = vmatprep.subr.bf16.mxu0 0
        %1687 = vmatpush1.bf16.msra.mxu0 %v1663
        %1688 = vmatprep.subr.bf16.mxu0 0
        %1689 = vmatpush1.bf16.msra.mxu0 0
        %1690 = vmatprep.subr.bf16.mxu0 0
        %1691 = vmatpush1.bf16.msra.mxu0 0
        %1692 = vmatprep.subr.bf16.mxu0 0
        %1693 = vmatpush1.bf16.msra.mxu0 0
        %1694 = vmatprep.subr.bf16.mxu0 0
        %1695 = vmatpush1.bf16.msra.mxu0 0
        %1696 = vmatprep.subr.bf16.mxu0 0
        %1697 = vmatpush1.bf16.msra.mxu0 0
        %1698 = vmatprep.subr.bf16.mxu0 0
        %1699 = vmatpush1.bf16.msra.mxu0 0
        %1700 = vmatprep.subr.bf16.mxu0 0
        %1701 = vmatpush1.bf16.msra.mxu0 0
        %1702 = vmatprep.subr.bf16.mxu0 0
        %1703 = vmatpush1.bf16.msra.mxu0 0
        %1704 = vmatprep.mubr.bf16.mxu0 0
        %1705 = vmatmul.mubr.bf16.gmra.mrb[0].mxu0 %v1592
        %v1706 = vpop.f32.mrb[0].mxu0
        %v1707 = vadd.f32 0.0, %v1706
        %v1708 = vpop.f32.mrb[0].mxu0
        %v1709 = vpop.f32.mrb[0].mxu0
        %v1710 = vadd.f32 0.0, %v1709
        %v1711 = vpop.f32.mrb[0].mxu0
        %1712 = vmatprep.mubr.bf16.mxu0 0
        %1713 = vmatmul.mubr.bf16.gmra.mrb[0].mxu0 %v1593
        %v1714 = vpop.f32.mrb[0].mxu0
        %v1715 = vadd.f32 0.0, %v1714
        %v1716 = vpop.f32.mrb[0].mxu0
        %v1717 = vpop.f32.mrb[0].mxu0
        %v1718 = vadd.f32 0.0, %v1717
        %v1719 = vpop.f32.mrb[0].mxu0
        %1720 = vmatprep.mubr.bf16.mxu0 0
        %1721 = vmatmul.mubr.bf16.gmra.mrb[0].mxu0 %v1594
        %v1722 = vpop.f32.mrb[0].mxu0
        %v1723 = vadd.f32 0.0, %v1722
        %v1724 = vpop.f32.mrb[0].mxu0
        %v1725 = vpop.f32.mrb[0].mxu0
        %v1726 = vadd.f32 0.0, %v1725
        %v1727 = vpop.f32.mrb[0].mxu0
        %1728 = vmatprep.mubr.bf16.mxu0 0
        %1729 = vmatmul.mubr.bf16.gmra.mrb[0].mxu0 %v1595
        %v1730 = vpop.f32.mrb[0].mxu0
        %v1731 = vadd.f32 0.0, %v1730
        %v1732 = vpop.f32.mrb[0].mxu0
        %v1733 = vpop.f32.mrb[0].mxu0
        %v1734 = vadd.f32 0.0, %v1733
        %v1735 = vpop.f32.mrb[0].mxu0
        %1736 = vmatprep.mubr.bf16.mxu0 0
        %1737 = vmatmul.mubr.bf16.gmra.mrb[0].mxu0 %v1596
        %v1738 = vpop.f32.mrb[0].mxu0
        %v1739 = vadd.f32 0.0, %v1738
        %v1740 = vpop.f32.mrb[0].mxu0
        %v1741 = vpop.f32.mrb[0].mxu0
        %v1742 = vadd.f32 0.0, %v1741
        %v1743 = vpop.f32.mrb[0].mxu0
        %1744 = vmatprep.mubr.bf16.mxu0 0
        %1745 = vmatmul.mubr.bf16.gmra.mrb[0].mxu0 %v1597
        %v1746 = vpop.f32.mrb[0].mxu0
        %v1747 = vadd.f32 0.0, %v1746
        %v1748 = vpop.f32.mrb[0].mxu0
        %v1749 = vpop.f32.mrb[0].mxu0
        %v1750 = vadd.f32 0.0, %v1749
        %v1751 = vpop.f32.mrb[0].mxu0
        %1752 = vmatprep.mubr.bf16.mxu0 0
        %1753 = vmatmul.mubr.bf16.gmra.mrb[0].mxu0 %v1598
        %v1754 = vpop.f32.mrb[0].mxu0
        %v1755 = vadd.f32 0.0, %v1754
        %v1756 = vpop.f32.mrb[0].mxu0
        %v1757 = vpop.f32.mrb[0].mxu0
        %v1758 = vadd.f32 0.0, %v1757
        %v1759 = vpop.f32.mrb[0].mxu0
        %1760 = vmatprep.mubr.bf16.mxu0 0
        %1761 = vmatmul.mubr.bf16.gmra.mrb[0].mxu0 %v1599
        %v1762 = vpop.f32.mrb[0].mxu0
        %v1763 = vadd.f32 0.0, %v1762
        %v1764 = vpop.f32.mrb[0].mxu0
        %v1765 = vpop.f32.mrb[0].mxu0
        %v1766 = vadd.f32 0.0, %v1765
        %v1767 = vpop.f32.mrb[0].mxu0
        %1768 = vmatprep.mubr.bf16.mxu0 0
        %1769 = vmatmul.mubr.bf16.gmra.mrb[0].mxu0 %v1600
        %v1770 = vpop.f32.mrb[0].mxu0
        %v1771 = vadd.f32 0.0, %v1770
        %v1772 = vpop.f32.mrb[0].mxu0
        %v1773 = vpop.f32.mrb[0].mxu0
        %v1774 = vadd.f32 0.0, %v1773
        %v1775 = vpop.f32.mrb[0].mxu0
        %1776 = vmatprep.mubr.bf16.mxu0 0
        %1777 = vmatmul.mubr.bf16.gmra.mrb[0].mxu0 %v1601
        %v1778 = vpop.f32.mrb[0].mxu0
        %v1779 = vadd.f32 0.0, %v1778
        %v1780 = vpop.f32.mrb[0].mxu0
        %v1781 = vpop.f32.mrb[0].mxu0
        %v1782 = vadd.f32 0.0, %v1781
        %v1783 = vpop.f32.mrb[0].mxu0
        %1784 = vmatprep.mubr.bf16.mxu0 0
        %1785 = vmatmul.mubr.bf16.gmra.mrb[0].mxu0 %v1602
        %v1786 = vpop.f32.mrb[0].mxu0
        %v1787 = vadd.f32 0.0, %v1786
        %v1788 = vpop.f32.mrb[0].mxu0
        %v1789 = vpop.f32.mrb[0].mxu0
        %v1790 = vadd.f32 0.0, %v1789
        %v1791 = vpop.f32.mrb[0].mxu0
        %1792 = vmatprep.mubr.bf16.mxu0 0
        %1793 = vmatmul.mubr.bf16.gmra.mrb[0].mxu0 %v1603
        %v1794 = vpop.f32.mrb[0].mxu0
        %v1795 = vadd.f32 0.0, %v1794
        %v1796 = vpop.f32.mrb[0].mxu0
        %v1797 = vpop.f32.mrb[0].mxu0
        %v1798 = vadd.f32 0.0, %v1797
        %v1799 = vpop.f32.mrb[0].mxu0
        %1800 = vmatprep.mubr.bf16.mxu0 0
        %1801 = vmatmul.mubr.bf16.gmra.mrb[0].mxu0 %v1604
        %v1802 = vpop.f32.mrb[0].mxu0
        %v1803 = vadd.f32 0.0, %v1802
        %v1804 = vpop.f32.mrb[0].mxu0
        %v1805 = vpop.f32.mrb[0].mxu0
        %v1806 = vadd.f32 0.0, %v1805
        %v1807 = vpop.f32.mrb[0].mxu0
        %1808 = vmatprep.mubr.bf16.mxu0 0
        %1809 = vmatmul.mubr.bf16.gmra.mrb[0].mxu0 %v1605
        %v1810 = vpop.f32.mrb[0].mxu0
        %v1811 = vadd.f32 0.0, %v1810
        %v1812 = vpop.f32.mrb[0].mxu0
        %v1813 = vpop.f32.mrb[0].mxu0
        %v1814 = vadd.f32 0.0, %v1813
        %v1815 = vpop.f32.mrb[0].mxu0
        %1816 = vmatprep.mubr.bf16.mxu0 0
        %1817 = vmatmul.mubr.bf16.gmra.mrb[0].mxu0 %v1606
        %v1818 = vpop.f32.mrb[0].mxu0
        %v1819 = vadd.f32 0.0, %v1818
        %v1820 = vpop.f32.mrb[0].mxu0
        %v1821 = vpop.f32.mrb[0].mxu0
        %v1822 = vadd.f32 0.0, %v1821
        %v1823 = vpop.f32.mrb[0].mxu0
        %1824 = vmatprep.mubr.bf16.mxu0 0
        %1825 = vmatmul.mubr.bf16.gmra.mrb[0].mxu0 %v1607
        %v1826 = vpop.f32.mrb[0].mxu0
        %v1827 = vadd.f32 0.0, %v1826
        %v1828 = vpop.f32.mrb[0].mxu0
        %v1829 = vpop.f32.mrb[0].mxu0
        %v1830 = vadd.f32 0.0, %v1829
        %v1831 = vpop.f32.mrb[0].mxu0
        %1832 = vdwg.mxu0
        %v1865 = vunpack.c.l.b16 %v1092
        %v1866 = vunpack.c.l.b16 %v1093
        %v1867 = vunpack.c.l.b16 %v1094
        %v1868 = vunpack.c.l.b16 %v1095
        %v1869 = vunpack.c.l.b16 %v1096
        %v1870 = vunpack.c.l.b16 %v1097
        %v1871 = vunpack.c.l.b16 %v1098
        %v1872 = vunpack.c.l.b16 %v1099
        %v1873 = vunpack.c.l.b16 %v1100
        %v1874 = vunpack.c.l.b16 %v1101
        %v1875 = vunpack.c.l.b16 %v1102
        %v1876 = vunpack.c.l.b16 %v1103
        %v1877 = vunpack.c.l.b16 %v1104
        %v1878 = vunpack.c.l.b16 %v1105
        %v1879 = vunpack.c.l.b16 %v1106
        %v1880 = vunpack.c.l.b16 %v1107
        %v1881 = vunpack.c.l.b16 %v1108
        %v1882 = vunpack.c.l.b16 %v1109
        %v1883 = vunpack.c.l.b16 %v1110
        %v1884 = vunpack.c.l.b16 %v1111
        %v1885 = vunpack.c.l.b16 %v1112
        %v1886 = vunpack.c.l.b16 %v1113
        %v1887 = vunpack.c.l.b16 %v1114
        %v1888 = vunpack.c.l.b16 %v1115
        %v1889 = vunpack.c.l.b16 %v1116
        %v1890 = vunpack.c.l.b16 %v1117
        %v1891 = vunpack.c.l.b16 %v1118
        %v1892 = vunpack.c.l.b16 %v1119
        %v1893 = vunpack.c.l.b16 %v1120
        %v1894 = vunpack.c.l.b16 %v1121
        %v1895 = vunpack.c.l.b16 %v1122
        %v1896 = vunpack.c.l.b16 %v1123
        %v1897 = vpack.c.b16 %v1866, %v1865
        %v1898 = vpack.c.b16 %v1868, %v1867
        %v1899 = vpack.c.b16 %v1870, %v1869
        %v1900 = vpack.c.b16 %v1872, %v1871
        %v1901 = vpack.c.b16 %v1874, %v1873
        %v1902 = vpack.c.b16 %v1876, %v1875
        %v1903 = vpack.c.b16 %v1878, %v1877
        %v1904 = vpack.c.b16 %v1880, %v1879
        %v1905 = vpack.c.b16 %v1882, %v1881
        %v1906 = vpack.c.b16 %v1884, %v1883
        %v1907 = vpack.c.b16 %v1886, %v1885
        %v1908 = vpack.c.b16 %v1888, %v1887
        %v1909 = vpack.c.b16 %v1890, %v1889
        %v1910 = vpack.c.b16 %v1892, %v1891
        %v1911 = vpack.c.b16 %v1894, %v1893
        %v1912 = vpack.c.b16 %v1896, %v1895
        %v1945 = vunpack.c.l.b16 %v1124
        %v1946 = vunpack.c.l.b16 %v1125
        %v1947 = vunpack.c.l.b16 %v1126
        %v1948 = vunpack.c.l.b16 %v1127
        %v1949 = vunpack.c.l.b16 %v1128
        %v1950 = vunpack.c.l.b16 %v1129
        %v1951 = vunpack.c.l.b16 %v1130
        %v1952 = vunpack.c.l.b16 %v1131
        %v1953 = vunpack.c.l.b16 %v1132
        %v1954 = vunpack.c.l.b16 %v1133
        %v1955 = vunpack.c.l.b16 %v1134
        %v1956 = vunpack.c.l.b16 %v1135
        %v1957 = vunpack.c.l.b16 %v1136
        %v1958 = vunpack.c.l.b16 %v1137
        %v1959 = vunpack.c.l.b16 %v1138
        %v1960 = vunpack.c.l.b16 %v1139
        %v1961 = vpack.c.b16 %v1946, %v1945
        %v1962 = vpack.c.b16 %v1948, %v1947
        %v1963 = vpack.c.b16 %v1950, %v1949
        %v1964 = vpack.c.b16 %v1952, %v1951
        %v1965 = vpack.c.b16 %v1954, %v1953
        %v1966 = vpack.c.b16 %v1956, %v1955
        %v1967 = vpack.c.b16 %v1958, %v1957
        %v1968 = vpack.c.b16 %v1960, %v1959
        %1977 = vmatprep.subr.bf16.mxu0 0
        %1978 = vmatpush1.bf16.msra.mxu0 %v1961
        %1979 = vmatprep.subr.bf16.mxu0 0
        %1980 = vmatpush1.bf16.msra.mxu0 %v1962
        %1981 = vmatprep.subr.bf16.mxu0 0
        %1982 = vmatpush1.bf16.msra.mxu0 %v1963
        %1983 = vmatprep.subr.bf16.mxu0 0
        %1984 = vmatpush1.bf16.msra.mxu0 %v1964
        %1985 = vmatprep.subr.bf16.mxu0 0
        %1986 = vmatpush1.bf16.msra.mxu0 %v1965
        %1987 = vmatprep.subr.bf16.mxu0 0
        %1988 = vmatpush1.bf16.msra.mxu0 %v1966
        %1989 = vmatprep.subr.bf16.mxu0 0
        %1990 = vmatpush1.bf16.msra.mxu0 %v1967
        %1991 = vmatprep.subr.bf16.mxu0 0
        %1992 = vmatpush1.bf16.msra.mxu0 %v1968
        %1993 = vmatprep.subr.bf16.mxu0 0
        %1994 = vmatpush1.bf16.msra.mxu0 0
        %1995 = vmatprep.subr.bf16.mxu0 0
        %1996 = vmatpush1.bf16.msra.mxu0 0
        %1997 = vmatprep.subr.bf16.mxu0 0
        %1998 = vmatpush1.bf16.msra.mxu0 0
        %1999 = vmatprep.subr.bf16.mxu0 0
        %2000 = vmatpush1.bf16.msra.mxu0 0
        %2001 = vmatprep.subr.bf16.mxu0 0
        %2002 = vmatpush1.bf16.msra.mxu0 0
        %2003 = vmatprep.subr.bf16.mxu0 0
        %2004 = vmatpush1.bf16.msra.mxu0 0
        %2005 = vmatprep.subr.bf16.mxu0 0
        %2006 = vmatpush1.bf16.msra.mxu0 0
        %2007 = vmatprep.subr.bf16.mxu0 0
        %2008 = vmatpush1.bf16.msra.mxu0 0
        %2009 = vmatprep.mubr.bf16.mxu0 0
        %2010 = vmatmul.mubr.bf16.gmra.mrb[0].mxu0 %v1897
        %v2011 = vpop.f32.mrb[0].mxu0
        %v2012 = vadd.f32 %v1707, %v2011
        %v2013 = vpop.f32.mrb[0].mxu0
        %v2014 = vpop.f32.mrb[0].mxu0
        %v2015 = vadd.f32 %v1710, %v2014
        %v2016 = vpop.f32.mrb[0].mxu0
        %2017 = vmatprep.mubr.bf16.mxu0 0
        %2018 = vmatmul.mubr.bf16.gmra.mrb[0].mxu0 %v1898
        %v2019 = vpop.f32.mrb[0].mxu0
        %v2020 = vadd.f32 %v1715, %v2019
        %v2021 = vpop.f32.mrb[0].mxu0
        %v2022 = vpop.f32.mrb[0].mxu0
        %v2023 = vadd.f32 %v1718, %v2022
        %v2024 = vpop.f32.mrb[0].mxu0
        %2025 = vmatprep.mubr.bf16.mxu0 0
        %2026 = vmatmul.mubr.bf16.gmra.mrb[0].mxu0 %v1899
        %v2027 = vpop.f32.mrb[0].mxu0
        %v2028 = vadd.f32 %v1723, %v2027
        %v2029 = vpop.f32.mrb[0].mxu0
        %v2030 = vpop.f32.mrb[0].mxu0
        %v2031 = vadd.f32 %v1726, %v2030
        %v2032 = vpop.f32.mrb[0].mxu0
        %2033 = vmatprep.mubr.bf16.mxu0 0
        %2034 = vmatmul.mubr.bf16.gmra.mrb[0].mxu0 %v1900
        %v2035 = vpop.f32.mrb[0].mxu0
        %v2036 = vadd.f32 %v1731, %v2035
        %v2037 = vpop.f32.mrb[0].mxu0
        %v2038 = vpop.f32.mrb[0].mxu0
        %v2039 = vadd.f32 %v1734, %v2038
        %v2040 = vpop.f32.mrb[0].mxu0
        %2041 = vmatprep.mubr.bf16.mxu0 0
        %2042 = vmatmul.mubr.bf16.gmra.mrb[0].mxu0 %v1901
        %v2043 = vpop.f32.mrb[0].mxu0
        %v2044 = vadd.f32 %v1739, %v2043
        %v2045 = vpop.f32.mrb[0].mxu0
        %v2046 = vpop.f32.mrb[0].mxu0
        %v2047 = vadd.f32 %v1742, %v2046
        %v2048 = vpop.f32.mrb[0].mxu0
        %2049 = vmatprep.mubr.bf16.mxu0 0
        %2050 = vmatmul.mubr.bf16.gmra.mrb[0].mxu0 %v1902
        %v2051 = vpop.f32.mrb[0].mxu0
        %v2052 = vadd.f32 %v1747, %v2051
        %v2053 = vpop.f32.mrb[0].mxu0
        %v2054 = vpop.f32.mrb[0].mxu0
        %v2055 = vadd.f32 %v1750, %v2054
        %v2056 = vpop.f32.mrb[0].mxu0
        %2057 = vmatprep.mubr.bf16.mxu0 0
        %2058 = vmatmul.mubr.bf16.gmra.mrb[0].mxu0 %v1903
        %v2059 = vpop.f32.mrb[0].mxu0
        %v2060 = vadd.f32 %v1755, %v2059
        %v2061 = vpop.f32.mrb[0].mxu0
        %v2062 = vpop.f32.mrb[0].mxu0
        %v2063 = vadd.f32 %v1758, %v2062
        %v2064 = vpop.f32.mrb[0].mxu0
        %2065 = vmatprep.mubr.bf16.mxu0 0
        %2066 = vmatmul.mubr.bf16.gmra.mrb[0].mxu0 %v1904
        %v2067 = vpop.f32.mrb[0].mxu0
        %v2068 = vadd.f32 %v1763, %v2067
        %v2069 = vpop.f32.mrb[0].mxu0
        %v2070 = vpop.f32.mrb[0].mxu0
        %v2071 = vadd.f32 %v1766, %v2070
        %v2072 = vpop.f32.mrb[0].mxu0
        %2073 = vmatprep.mubr.bf16.mxu0 0
        %2074 = vmatmul.mubr.bf16.gmra.mrb[0].mxu0 %v1905
        %v2075 = vpop.f32.mrb[0].mxu0
        %v2076 = vadd.f32 %v1771, %v2075
        %v2077 = vpop.f32.mrb[0].mxu0
        %v2078 = vpop.f32.mrb[0].mxu0
        %v2079 = vadd.f32 %v1774, %v2078
        %v2080 = vpop.f32.mrb[0].mxu0
        %2081 = vmatprep.mubr.bf16.mxu0 0
        %2082 = vmatmul.mubr.bf16.gmra.mrb[0].mxu0 %v1906
        %v2083 = vpop.f32.mrb[0].mxu0
        %v2084 = vadd.f32 %v1779, %v2083
        %v2085 = vpop.f32.mrb[0].mxu0
        %v2086 = vpop.f32.mrb[0].mxu0
        %v2087 = vadd.f32 %v1782, %v2086
        %v2088 = vpop.f32.mrb[0].mxu0
        %2089 = vmatprep.mubr.bf16.mxu0 0
        %2090 = vmatmul.mubr.bf16.gmra.mrb[0].mxu0 %v1907
        %v2091 = vpop.f32.mrb[0].mxu0
        %v2092 = vadd.f32 %v1787, %v2091
        %v2093 = vpop.f32.mrb[0].mxu0
        %v2094 = vpop.f32.mrb[0].mxu0
        %v2095 = vadd.f32 %v1790, %v2094
        %v2096 = vpop.f32.mrb[0].mxu0
        %2097 = vmatprep.mubr.bf16.mxu0 0
        %2098 = vmatmul.mubr.bf16.gmra.mrb[0].mxu0 %v1908
        %v2099 = vpop.f32.mrb[0].mxu0
        %v2100 = vadd.f32 %v1795, %v2099
        %v2101 = vpop.f32.mrb[0].mxu0
        %v2102 = vpop.f32.mrb[0].mxu0
        %v2103 = vadd.f32 %v1798, %v2102
        %v2104 = vpop.f32.mrb[0].mxu0
        %2105 = vmatprep.mubr.bf16.mxu0 0
        %2106 = vmatmul.mubr.bf16.gmra.mrb[0].mxu0 %v1909
        %v2107 = vpop.f32.mrb[0].mxu0
        %v2108 = vadd.f32 %v1803, %v2107
        %v2109 = vpop.f32.mrb[0].mxu0
        %v2110 = vpop.f32.mrb[0].mxu0
        %v2111 = vadd.f32 %v1806, %v2110
        %v2112 = vpop.f32.mrb[0].mxu0
        %2113 = vmatprep.mubr.bf16.mxu0 0
        %2114 = vmatmul.mubr.bf16.gmra.mrb[0].mxu0 %v1910
        %v2115 = vpop.f32.mrb[0].mxu0
        %v2116 = vadd.f32 %v1811, %v2115
        %v2117 = vpop.f32.mrb[0].mxu0
        %v2118 = vpop.f32.mrb[0].mxu0
        %v2119 = vadd.f32 %v1814, %v2118
        %v2120 = vpop.f32.mrb[0].mxu0
        %2121 = vmatprep.mubr.bf16.mxu0 0
        %2122 = vmatmul.mubr.bf16.gmra.mrb[0].mxu0 %v1911
        %v2123 = vpop.f32.mrb[0].mxu0
        %v2124 = vadd.f32 %v1819, %v2123
        %v2125 = vpop.f32.mrb[0].mxu0
        %v2126 = vpop.f32.mrb[0].mxu0
        %v2127 = vadd.f32 %v1822, %v2126
        %v2128 = vpop.f32.mrb[0].mxu0
        %2129 = vmatprep.mubr.bf16.mxu0 0
        %2130 = vmatmul.mubr.bf16.gmra.mrb[0].mxu0 %v1912
        %v2131 = vpop.f32.mrb[0].mxu0
        %v2132 = vadd.f32 %v1827, %v2131
        %v2133 = vpop.f32.mrb[0].mxu0
        %v2134 = vpop.f32.mrb[0].mxu0
        %v2135 = vadd.f32 %v1830, %v2134
        %v2136 = vpop.f32.mrb[0].mxu0
        %2137 = vdwg.mxu0
        %v2138 = vld [vmem:[#allocation2] sm:$0xe]
        %v2139 = vld [vmem:[#allocation2 + $0xc] sm:$0xe]
        %v2140 = vld [vmem:[#allocation2 + $0x18] sm:$0xe]
        %v2141 = vld [vmem:[#allocation2 + $0x24] sm:$0xe]
        %v2142 = vld [vmem:[#allocation2 + $0x30] sm:$0xe]
        %v2143 = vld [vmem:[#allocation2 + $0x3c] sm:$0xe]
        %v2144 = vld [vmem:[#allocation2 + $0x48] sm:$0xe]
        %v2145 = vld [vmem:[#allocation2 + $0x54] sm:$0xe]
        %v2146 = vld [vmem:[#allocation2 + $0x60] sm:$0xe]
        %v2147 = vld [vmem:[#allocation2 + $0x6c] sm:$0xe]
        %v2148 = vld [vmem:[#allocation2 + $0x78] sm:$0xe]
        %v2149 = vld [vmem:[#allocation2 + $0x84] sm:$0xe]
        %v2150 = vld [vmem:[#allocation2 + $0x90] sm:$0xe]
        %v2151 = vld [vmem:[#allocation2 + $0x9c] sm:$0xe]
        %v2152 = vld [vmem:[#allocation2 + $0xa8] sm:$0xe]
        %v2153 = vld [vmem:[#allocation2 + $0xb4] sm:$0xe]
        %vm2186 = vcmask 1042432
        %vm2187 = vcmask 1046532
        %vm2188 = vmor %vm2186, %vm2187
        %v2189 = vrot.slane %v2138, 5
        %v2190 = vrot.slane %v2189, 4
        %v2191 = vrot.slane %v1093, 5
        %v2192 = vsel %vm2188, %v2190, %v2191
        %v2193 = vrot.slane %v2191, 4
        %v2194 = vrot.slane %v1140, 5
        %v2195 = vsel %vm2188, %v2193, %v2194
        %v2196 = vrot.slane %v2139, 5
        %v2197 = vrot.slane %v2196, 4
        %v2198 = vrot.slane %v1095, 5
        %v2199 = vsel %vm2188, %v2197, %v2198
        %v2200 = vrot.slane %v2198, 4
        %v2201 = vrot.slane %v1141, 5
        %v2202 = vsel %vm2188, %v2200, %v2201
        %v2203 = vrot.slane %v2140, 5
        %v2204 = vrot.slane %v2203, 4
        %v2205 = vrot.slane %v1097, 5
        %v2206 = vsel %vm2188, %v2204, %v2205
        %v2207 = vrot.slane %v2205, 4
        %v2208 = vrot.slane %v1142, 5
        %v2209 = vsel %vm2188, %v2207, %v2208
        %v2210 = vrot.slane %v2141, 5
        %v2211 = vrot.slane %v2210, 4
        %v2212 = vrot.slane %v1099, 5
        %v2213 = vsel %vm2188, %v2211, %v2212
        %v2214 = vrot.slane %v2212, 4
        %v2215 = vrot.slane %v1143, 5
        %v2216 = vsel %vm2188, %v2214, %v2215
        %v2217 = vrot.slane %v2142, 5
        %v2218 = vrot.slane %v2217, 4
        %v2219 = vrot.slane %v1101, 5
        %v2220 = vsel %vm2188, %v2218, %v2219
        %v2221 = vrot.slane %v2219, 4
        %v2222 = vrot.slane %v1144, 5
        %v2223 = vsel %vm2188, %v2221, %v2222
        %v2224 = vrot.slane %v2143, 5
        %v2225 = vrot.slane %v2224, 4
        %v2226 = vrot.slane %v1103, 5
        %v2227 = vsel %vm2188, %v2225, %v2226
        %v2228 = vrot.slane %v2226, 4
        %v2229 = vrot.slane %v1145, 5
        %v2230 = vsel %vm2188, %v2228, %v2229
        %v2231 = vrot.slane %v2144, 5
        %v2232 = vrot.slane %v2231, 4
        %v2233 = vrot.slane %v1105, 5
        %v2234 = vsel %vm2188, %v2232, %v2233
        %v2235 = vrot.slane %v2233, 4
        %v2236 = vrot.slane %v1146, 5
        %v2237 = vsel %vm2188, %v2235, %v2236
        %v2238 = vrot.slane %v2145, 5
        %v2239 = vrot.slane %v2238, 4
        %v2240 = vrot.slane %v1107, 5
        %v2241 = vsel %vm2188, %v2239, %v2240
        %v2242 = vrot.slane %v2240, 4
        %v2243 = vrot.slane %v1147, 5
        %v2244 = vsel %vm2188, %v2242, %v2243
        %v2245 = vrot.slane %v2146, 5
        %v2246 = vrot.slane %v2245, 4
        %v2247 = vrot.slane %v1109, 5
        %v2248 = vsel %vm2188, %v2246, %v2247
        %v2249 = vrot.slane %v2247, 4
        %v2250 = vrot.slane %v1148, 5
        %v2251 = vsel %vm2188, %v2249, %v2250
        %v2252 = vrot.slane %v2147, 5
        %v2253 = vrot.slane %v2252, 4
        %v2254 = vrot.slane %v1111, 5
        %v2255 = vsel %vm2188, %v2253, %v2254
        %v2256 = vrot.slane %v2254, 4
        %v2257 = vrot.slane %v1149, 5
        %v2258 = vsel %vm2188, %v2256, %v2257
        %v2259 = vrot.slane %v2148, 5
        %v2260 = vrot.slane %v2259, 4
        %v2261 = vrot.slane %v1113, 5
        %v2262 = vsel %vm2188, %v2260, %v2261
        %v2263 = vrot.slane %v2261, 4
        %v2264 = vrot.slane %v1150, 5
        %v2265 = vsel %vm2188, %v2263, %v2264
        %v2266 = vrot.slane %v2149, 5
        %v2267 = vrot.slane %v2266, 4
        %v2268 = vrot.slane %v1115, 5
        %v2269 = vsel %vm2188, %v2267, %v2268
        %v2270 = vrot.slane %v2268, 4
        %v2271 = vrot.slane %v1151, 5
        %v2272 = vsel %vm2188, %v2270, %v2271
        %v2273 = vrot.slane %v2150, 5
        %v2274 = vrot.slane %v2273, 4
        %v2275 = vrot.slane %v1117, 5
        %v2276 = vsel %vm2188, %v2274, %v2275
        %v2277 = vrot.slane %v2275, 4
        %v2278 = vrot.slane %v1152, 5
        %v2279 = vsel %vm2188, %v2277, %v2278
        %v2280 = vrot.slane %v2151, 5
        %v2281 = vrot.slane %v2280, 4
        %v2282 = vrot.slane %v1119, 5
        %v2283 = vsel %vm2188, %v2281, %v2282
        %v2284 = vrot.slane %v2282, 4
        %v2285 = vrot.slane %v1153, 5
        %v2286 = vsel %vm2188, %v2284, %v2285
        %v2287 = vrot.slane %v2152, 5
        %v2288 = vrot.slane %v2287, 4
        %v2289 = vrot.slane %v1121, 5
        %v2290 = vsel %vm2188, %v2288, %v2289
        %v2291 = vrot.slane %v2289, 4
        %v2292 = vrot.slane %v1154, 5
        %v2293 = vsel %vm2188, %v2291, %v2292
        %v2294 = vrot.slane %v2153, 5
        %v2295 = vrot.slane %v2294, 4
        %v2296 = vrot.slane %v1123, 5
        %v2297 = vsel %vm2188, %v2295, %v2296
        %v2298 = vrot.slane %v2296, 4
        %v2299 = vrot.slane %v1155, 5
        %v2300 = vsel %vm2188, %v2298, %v2299
        %s2301 = scalar_lea.vmem [#allocation6], 128
        %v2302 = vld [vmem:[%s2301] sm:$0xf]
        %v2303 = vld [vmem:[%s2301 + $0x4] sm:$0xf]
        %v2304 = vld [vmem:[%s2301 + $0x8] sm:$0xf]
        %v2305 = vld [vmem:[%s2301 + $0xc] sm:$0xf]
        %v2306 = vld [vmem:[%s2301 + $0x10] sm:$0xf]
        %v2307 = vld [vmem:[%s2301 + $0x14] sm:$0xf]
        %v2308 = vld [vmem:[%s2301 + $0x18] sm:$0xf]
        %v2309 = vld [vmem:[%s2301 + $0x1c] sm:$0xf]
        %v2310 = vld [vmem:[%s2301 + $0x20] sm:$0xf]
        %v2311 = vld [vmem:[%s2301 + $0x24] sm:$0xf]
        %v2312 = vld [vmem:[%s2301 + $0x28] sm:$0xf]
        %v2313 = vld [vmem:[%s2301 + $0x2c] sm:$0xf]
        %v2314 = vld [vmem:[%s2301 + $0x30] sm:$0xf]
        %v2315 = vld [vmem:[%s2301 + $0x34] sm:$0xf]
        %v2316 = vld [vmem:[%s2301 + $0x38] sm:$0xf]
        %v2317 = vld [vmem:[%s2301 + $0x3c] sm:$0xf]
        %v2318 = vunpack.c.l.b16 %v2192
        %v2319 = vunpack.c.l.b16 %v2195
        %v2320 = vunpack.c.l.b16 %v2199
        %v2321 = vunpack.c.l.b16 %v2202
        %v2322 = vunpack.c.l.b16 %v2206
        %v2323 = vunpack.c.l.b16 %v2209
        %v2324 = vunpack.c.l.b16 %v2213
        %v2325 = vunpack.c.l.b16 %v2216
        %v2326 = vunpack.c.l.b16 %v2220
        %v2327 = vunpack.c.l.b16 %v2223
        %v2328 = vunpack.c.l.b16 %v2227
        %v2329 = vunpack.c.l.b16 %v2230
        %v2330 = vunpack.c.l.b16 %v2234
        %v2331 = vunpack.c.l.b16 %v2237
        %v2332 = vunpack.c.l.b16 %v2241
        %v2333 = vunpack.c.l.b16 %v2244
        %v2334 = vunpack.c.l.b16 %v2248
        %v2335 = vunpack.c.l.b16 %v2251
        %v2336 = vunpack.c.l.b16 %v2255
        %v2337 = vunpack.c.l.b16 %v2258
        %v2338 = vunpack.c.l.b16 %v2262
        %v2339 = vunpack.c.l.b16 %v2265
        %v2340 = vunpack.c.l.b16 %v2269
        %v2341 = vunpack.c.l.b16 %v2272
        %v2342 = vunpack.c.l.b16 %v2276
        %v2343 = vunpack.c.l.b16 %v2279
        %v2344 = vunpack.c.l.b16 %v2283
        %v2345 = vunpack.c.l.b16 %v2286
        %v2346 = vunpack.c.l.b16 %v2290
        %v2347 = vunpack.c.l.b16 %v2293
        %v2348 = vunpack.c.l.b16 %v2297
        %v2349 = vunpack.c.l.b16 %v2300
        %v2350 = vpack.c.b16 %v2319, %v2318
        %v2351 = vpack.c.b16 %v2321, %v2320
        %v2352 = vpack.c.b16 %v2323, %v2322
        %v2353 = vpack.c.b16 %v2325, %v2324
        %v2354 = vpack.c.b16 %v2327, %v2326
        %v2355 = vpack.c.b16 %v2329, %v2328
        %v2356 = vpack.c.b16 %v2331, %v2330
        %v2357 = vpack.c.b16 %v2333, %v2332
        %v2358 = vpack.c.b16 %v2335, %v2334
        %v2359 = vpack.c.b16 %v2337, %v2336
        %v2360 = vpack.c.b16 %v2339, %v2338
        %v2361 = vpack.c.b16 %v2341, %v2340
        %v2362 = vpack.c.b16 %v2343, %v2342
        %v2363 = vpack.c.b16 %v2345, %v2344
        %v2364 = vpack.c.b16 %v2347, %v2346
        %v2365 = vpack.c.b16 %v2349, %v2348
        %v2398 = vunpack.c.l.b16 %v2302
        %v2399 = vunpack.c.l.b16 %v2303
        %v2400 = vunpack.c.l.b16 %v2304
        %v2401 = vunpack.c.l.b16 %v2305
        %v2402 = vunpack.c.l.b16 %v2306
        %v2403 = vunpack.c.l.b16 %v2307
        %v2404 = vunpack.c.l.b16 %v2308
        %v2405 = vunpack.c.l.b16 %v2309
        %v2406 = vunpack.c.l.b16 %v2310
        %v2407 = vunpack.c.l.b16 %v2311
        %v2408 = vunpack.c.l.b16 %v2312
        %v2409 = vunpack.c.l.b16 %v2313
        %v2410 = vunpack.c.l.b16 %v2314
        %v2411 = vunpack.c.l.b16 %v2315
        %v2412 = vunpack.c.l.b16 %v2316
        %v2413 = vunpack.c.l.b16 %v2317
        %v2414 = vpack.c.b16 %v2399, %v2398
        %v2415 = vpack.c.b16 %v2401, %v2400
        %v2416 = vpack.c.b16 %v2403, %v2402
        %v2417 = vpack.c.b16 %v2405, %v2404
        %v2418 = vpack.c.b16 %v2407, %v2406
        %v2419 = vpack.c.b16 %v2409, %v2408
        %v2420 = vpack.c.b16 %v2411, %v2410
        %v2421 = vpack.c.b16 %v2413, %v2412
        %2430 = vmatprep.subr.bf16.mxu0 0
        %2431 = vmatpush1.bf16.msra.mxu0 %v2414
        %2432 = vmatprep.subr.bf16.mxu0 0
        %2433 = vmatpush1.bf16.msra.mxu0 %v2415
        %2434 = vmatprep.subr.bf16.mxu0 0
        %2435 = vmatpush1.bf16.msra.mxu0 %v2416
        %2436 = vmatprep.subr.bf16.mxu0 0
        %2437 = vmatpush1.bf16.msra.mxu0 %v2417
        %2438 = vmatprep.subr.bf16.mxu0 0
        %2439 = vmatpush1.bf16.msra.mxu0 %v2418
        %2440 = vmatprep.subr.bf16.mxu0 0
        %2441 = vmatpush1.bf16.msra.mxu0 %v2419
        %2442 = vmatprep.subr.bf16.mxu0 0
        %2443 = vmatpush1.bf16.msra.mxu0 %v2420
        %2444 = vmatprep.subr.bf16.mxu0 0
        %2445 = vmatpush1.bf16.msra.mxu0 %v2421
        %2446 = vmatprep.subr.bf16.mxu0 0
        %2447 = vmatpush1.bf16.msra.mxu0 0
        %2448 = vmatprep.subr.bf16.mxu0 0
        %2449 = vmatpush1.bf16.msra.mxu0 0
        %2450 = vmatprep.subr.bf16.mxu0 0
        %2451 = vmatpush1.bf16.msra.mxu0 0
        %2452 = vmatprep.subr.bf16.mxu0 0
        %2453 = vmatpush1.bf16.msra.mxu0 0
        %2454 = vmatprep.subr.bf16.mxu0 0
        %2455 = vmatpush1.bf16.msra.mxu0 0
        %2456 = vmatprep.subr.bf16.mxu0 0
        %2457 = vmatpush1.bf16.msra.mxu0 0
        %2458 = vmatprep.subr.bf16.mxu0 0
        %2459 = vmatpush1.bf16.msra.mxu0 0
        %2460 = vmatprep.subr.bf16.mxu0 0
        %2461 = vmatpush1.bf16.msra.mxu0 0
        %2462 = vmatprep.mubr.bf16.mxu0 0
        %2463 = vmatmul.mubr.bf16.gmra.mrb[0].mxu0 %v2350
        %v2464 = vpop.f32.mrb[0].mxu0
        %v2465 = vadd.f32 0.0, %v2464
        %v2466 = vpop.f32.mrb[0].mxu0
        %v2467 = vpop.f32.mrb[0].mxu0
        %v2468 = vadd.f32 0.0, %v2467
        %v2469 = vpop.f32.mrb[0].mxu0
        %2470 = vmatprep.mubr.bf16.mxu0 0
        %2471 = vmatmul.mubr.bf16.gmra.mrb[0].mxu0 %v2351
        %v2472 = vpop.f32.mrb[0].mxu0
        %v2473 = vadd.f32 0.0, %v2472
        %v2474 = vpop.f32.mrb[0].mxu0
        %v2475 = vpop.f32.mrb[0].mxu0
        %v2476 = vadd.f32 0.0, %v2475
        %v2477 = vpop.f32.mrb[0].mxu0
        %2478 = vmatprep.mubr.bf16.mxu0 0
        %2479 = vmatmul.mubr.bf16.gmra.mrb[0].mxu0 %v2352
        %v2480 = vpop.f32.mrb[0].mxu0
        %v2481 = vadd.f32 0.0, %v2480
        %v2482 = vpop.f32.mrb[0].mxu0
        %v2483 = vpop.f32.mrb[0].mxu0
        %v2484 = vadd.f32 0.0, %v2483
        %v2485 = vpop.f32.mrb[0].mxu0
        %2486 = vmatprep.mubr.bf16.mxu0 0
        %2487 = vmatmul.mubr.bf16.gmra.mrb[0].mxu0 %v2353
        %v2488 = vpop.f32.mrb[0].mxu0
        %v2489 = vadd.f32 0.0, %v2488
        %v2490 = vpop.f32.mrb[0].mxu0
        %v2491 = vpop.f32.mrb[0].mxu0
        %v2492 = vadd.f32 0.0, %v2491
        %v2493 = vpop.f32.mrb[0].mxu0
        %2494 = vmatprep.mubr.bf16.mxu0 0
        %2495 = vmatmul.mubr.bf16.gmra.mrb[0].mxu0 %v2354
        %v2496 = vpop.f32.mrb[0].mxu0
        %v2497 = vadd.f32 0.0, %v2496
        %v2498 = vpop.f32.mrb[0].mxu0
        %v2499 = vpop.f32.mrb[0].mxu0
        %v2500 = vadd.f32 0.0, %v2499
        %v2501 = vpop.f32.mrb[0].mxu0
        %2502 = vmatprep.mubr.bf16.mxu0 0
        %2503 = vmatmul.mubr.bf16.gmra.mrb[0].mxu0 %v2355
        %v2504 = vpop.f32.mrb[0].mxu0
        %v2505 = vadd.f32 0.0, %v2504
        %v2506 = vpop.f32.mrb[0].mxu0
        %v2507 = vpop.f32.mrb[0].mxu0
        %v2508 = vadd.f32 0.0, %v2507
        %v2509 = vpop.f32.mrb[0].mxu0
        %2510 = vmatprep.mubr.bf16.mxu0 0
        %2511 = vmatmul.mubr.bf16.gmra.mrb[0].mxu0 %v2356
        %v2512 = vpop.f32.mrb[0].mxu0
        %v2513 = vadd.f32 0.0, %v2512
        %v2514 = vpop.f32.mrb[0].mxu0
        %v2515 = vpop.f32.mrb[0].mxu0
        %v2516 = vadd.f32 0.0, %v2515
        %v2517 = vpop.f32.mrb[0].mxu0
        %2518 = vmatprep.mubr.bf16.mxu0 0
        %2519 = vmatmul.mubr.bf16.gmra.mrb[0].mxu0 %v2357
        %v2520 = vpop.f32.mrb[0].mxu0
        %v2521 = vadd.f32 0.0, %v2520
        %v2522 = vpop.f32.mrb[0].mxu0
        %v2523 = vpop.f32.mrb[0].mxu0
        %v2524 = vadd.f32 0.0, %v2523
        %v2525 = vpop.f32.mrb[0].mxu0
        %2526 = vmatprep.mubr.bf16.mxu0 0
        %2527 = vmatmul.mubr.bf16.gmra.mrb[0].mxu0 %v2358
        %v2528 = vpop.f32.mrb[0].mxu0
        %v2529 = vadd.f32 0.0, %v2528
        %v2530 = vpop.f32.mrb[0].mxu0
        %v2531 = vpop.f32.mrb[0].mxu0
        %v2532 = vadd.f32 0.0, %v2531
        %v2533 = vpop.f32.mrb[0].mxu0
        %2534 = vmatprep.mubr.bf16.mxu0 0
        %2535 = vmatmul.mubr.bf16.gmra.mrb[0].mxu0 %v2359
        %v2536 = vpop.f32.mrb[0].mxu0
        %v2537 = vadd.f32 0.0, %v2536
        %v2538 = vpop.f32.mrb[0].mxu0
        %v2539 = vpop.f32.mrb[0].mxu0
        %v2540 = vadd.f32 0.0, %v2539
        %v2541 = vpop.f32.mrb[0].mxu0
        %2542 = vmatprep.mubr.bf16.mxu0 0
        %2543 = vmatmul.mubr.bf16.gmra.mrb[0].mxu0 %v2360
        %v2544 = vpop.f32.mrb[0].mxu0
        %v2545 = vadd.f32 0.0, %v2544
        %v2546 = vpop.f32.mrb[0].mxu0
        %v2547 = vpop.f32.mrb[0].mxu0
        %v2548 = vadd.f32 0.0, %v2547
        %v2549 = vpop.f32.mrb[0].mxu0
        %2550 = vmatprep.mubr.bf16.mxu0 0
        %2551 = vmatmul.mubr.bf16.gmra.mrb[0].mxu0 %v2361
        %v2552 = vpop.f32.mrb[0].mxu0
        %v2553 = vadd.f32 0.0, %v2552
        %v2554 = vpop.f32.mrb[0].mxu0
        %v2555 = vpop.f32.mrb[0].mxu0
        %v2556 = vadd.f32 0.0, %v2555
        %v2557 = vpop.f32.mrb[0].mxu0
        %2558 = vmatprep.mubr.bf16.mxu0 0
        %2559 = vmatmul.mubr.bf16.gmra.mrb[0].mxu0 %v2362
        %v2560 = vpop.f32.mrb[0].mxu0
        %v2561 = vadd.f32 0.0, %v2560
        %v2562 = vpop.f32.mrb[0].mxu0
        %v2563 = vpop.f32.mrb[0].mxu0
        %v2564 = vadd.f32 0.0, %v2563
        %v2565 = vpop.f32.mrb[0].mxu0
        %2566 = vmatprep.mubr.bf16.mxu0 0
        %2567 = vmatmul.mubr.bf16.gmra.mrb[0].mxu0 %v2363
        %v2568 = vpop.f32.mrb[0].mxu0
        %v2569 = vadd.f32 0.0, %v2568
        %v2570 = vpop.f32.mrb[0].mxu0
        %v2571 = vpop.f32.mrb[0].mxu0
        %v2572 = vadd.f32 0.0, %v2571
        %v2573 = vpop.f32.mrb[0].mxu0
        %2574 = vmatprep.mubr.bf16.mxu0 0
        %2575 = vmatmul.mubr.bf16.gmra.mrb[0].mxu0 %v2364
        %v2576 = vpop.f32.mrb[0].mxu0
        %v2577 = vadd.f32 0.0, %v2576
        %v2578 = vpop.f32.mrb[0].mxu0
        %v2579 = vpop.f32.mrb[0].mxu0
        %v2580 = vadd.f32 0.0, %v2579
        %v2581 = vpop.f32.mrb[0].mxu0
        %2582 = vmatprep.mubr.bf16.mxu0 0
        %2583 = vmatmul.mubr.bf16.gmra.mrb[0].mxu0 %v2365
        %v2584 = vpop.f32.mrb[0].mxu0
        %v2585 = vadd.f32 0.0, %v2584
        %v2586 = vpop.f32.mrb[0].mxu0
        %v2587 = vpop.f32.mrb[0].mxu0
        %v2588 = vadd.f32 0.0, %v2587
        %v2589 = vpop.f32.mrb[0].mxu0
        %2590 = vdwg.mxu0
        %v2591 = vadd.f32 %v2012, %v2465
        %v2592 = vadd.f32 %v2015, %v2468
        %v2593 = vadd.f32 %v2020, %v2473
        %v2594 = vadd.f32 %v2023, %v2476
        %v2595 = vadd.f32 %v2028, %v2481
        %v2596 = vadd.f32 %v2031, %v2484
        %v2597 = vadd.f32 %v2036, %v2489
        %v2598 = vadd.f32 %v2039, %v2492
        %v2599 = vadd.f32 %v2044, %v2497
        %v2600 = vadd.f32 %v2047, %v2500
        %v2601 = vadd.f32 %v2052, %v2505
        %v2602 = vadd.f32 %v2055, %v2508
        %v2603 = vadd.f32 %v2060, %v2513
        %v2604 = vadd.f32 %v2063, %v2516
        %v2605 = vadd.f32 %v2068, %v2521
        %v2606 = vadd.f32 %v2071, %v2524
        %v2607 = vadd.f32 %v2076, %v2529
        %v2608 = vadd.f32 %v2079, %v2532
        %v2609 = vadd.f32 %v2084, %v2537
        %v2610 = vadd.f32 %v2087, %v2540
        %v2611 = vadd.f32 %v2092, %v2545
        %v2612 = vadd.f32 %v2095, %v2548
        %v2613 = vadd.f32 %v2100, %v2553
        %v2614 = vadd.f32 %v2103, %v2556
        %v2615 = vadd.f32 %v2108, %v2561
        %v2616 = vadd.f32 %v2111, %v2564
        %v2617 = vadd.f32 %v2116, %v2569
        %v2618 = vadd.f32 %v2119, %v2572
        %v2619 = vadd.f32 %v2124, %v2577
        %v2620 = vadd.f32 %v2127, %v2580
        %v2621 = vadd.f32 %v2132, %v2585
        %v2622 = vadd.f32 %v2135, %v2588
        %v2623 = vld [vmem:[%s670] sm:$0xf]
        %v2624 = vld [vmem:[%s670 + $0x4] sm:$0xf]
        %v2625 = vld [vmem:[%s670 + $0xc] sm:$0xf]
        %v2626 = vld [vmem:[%s670 + $0x10] sm:$0xf]
        %v2627 = vld [vmem:[%s670 + $0x18] sm:$0xf]
        %v2628 = vld [vmem:[%s670 + $0x1c] sm:$0xf]
        %v2629 = vld [vmem:[%s670 + $0x24] sm:$0xf]
        %v2630 = vld [vmem:[%s670 + $0x28] sm:$0xf]
        %v2631 = vld [vmem:[%s670 + $0x30] sm:$0xf]
        %v2632 = vld [vmem:[%s670 + $0x34] sm:$0xf]
        %v2633 = vld [vmem:[%s670 + $0x3c] sm:$0xf]
        %v2634 = vld [vmem:[%s670 + $0x40] sm:$0xf]
        %v2635 = vld [vmem:[%s670 + $0x48] sm:$0xf]
        %v2636 = vld [vmem:[%s670 + $0x4c] sm:$0xf]
        %v2637 = vld [vmem:[%s670 + $0x54] sm:$0xf]
        %v2638 = vld [vmem:[%s670 + $0x58] sm:$0xf]
        %v2639 = vld [vmem:[%s670 + $0x60] sm:$0xf]
        %v2640 = vld [vmem:[%s670 + $0x64] sm:$0xf]
        %v2641 = vld [vmem:[%s670 + $0x6c] sm:$0xf]
        %v2642 = vld [vmem:[%s670 + $0x70] sm:$0xf]
        %v2643 = vld [vmem:[%s670 + $0x78] sm:$0xf]
        %v2644 = vld [vmem:[%s670 + $0x7c] sm:$0xf]
        %v2645 = vld [vmem:[%s670 + $0x84] sm:$0xf]
        %v2646 = vld [vmem:[%s670 + $0x88] sm:$0xf]
        %v2647 = vld [vmem:[%s670 + $0x90] sm:$0xf]
        %v2648 = vld [vmem:[%s670 + $0x94] sm:$0xf]
        %v2649 = vld [vmem:[%s670 + $0x9c] sm:$0xf]
        %v2650 = vld [vmem:[%s670 + $0xa0] sm:$0xf]
        %v2651 = vld [vmem:[%s670 + $0xa8] sm:$0xf]
        %v2652 = vld [vmem:[%s670 + $0xac] sm:$0xf]
        %v2653 = vld [vmem:[%s670 + $0xb4] sm:$0xf]
        %v2654 = vld [vmem:[%s670 + $0xb8] sm:$0xf]
        %s2655 = scalar_lea.vmem [#allocation6], 192
        %v2656 = vld [vmem:[%s2655] sm:$0xf]
        %v2657 = vld [vmem:[%s2655 + $0x4] sm:$0xf]
        %v2658 = vld [vmem:[%s2655 + $0x8] sm:$0xf]
        %v2659 = vld [vmem:[%s2655 + $0xc] sm:$0xf]
        %v2660 = vld [vmem:[%s2655 + $0x10] sm:$0xf]
        %v2661 = vld [vmem:[%s2655 + $0x14] sm:$0xf]
        %v2662 = vld [vmem:[%s2655 + $0x18] sm:$0xf]
        %v2663 = vld [vmem:[%s2655 + $0x1c] sm:$0xf]
        %v2664 = vld [vmem:[%s2655 + $0x20] sm:$0xf]
        %v2665 = vld [vmem:[%s2655 + $0x24] sm:$0xf]
        %v2666 = vld [vmem:[%s2655 + $0x28] sm:$0xf]
        %v2667 = vld [vmem:[%s2655 + $0x2c] sm:$0xf]
        %v2668 = vld [vmem:[%s2655 + $0x30] sm:$0xf]
        %v2669 = vld [vmem:[%s2655 + $0x34] sm:$0xf]
        %v2670 = vld [vmem:[%s2655 + $0x38] sm:$0xf]
        %v2671 = vld [vmem:[%s2655 + $0x3c] sm:$0xf]
        %v2704 = vunpack.c.l.b16 %v2623
        %v2705 = vunpack.c.l.b16 %v2624
        %v2706 = vunpack.c.l.b16 %v2625
        %v2707 = vunpack.c.l.b16 %v2626
        %v2708 = vunpack.c.l.b16 %v2627
        %v2709 = vunpack.c.l.b16 %v2628
        %v2710 = vunpack.c.l.b16 %v2629
        %v2711 = vunpack.c.l.b16 %v2630
        %v2712 = vunpack.c.l.b16 %v2631
        %v2713 = vunpack.c.l.b16 %v2632
        %v2714 = vunpack.c.l.b16 %v2633
        %v2715 = vunpack.c.l.b16 %v2634
        %v2716 = vunpack.c.l.b16 %v2635
        %v2717 = vunpack.c.l.b16 %v2636
        %v2718 = vunpack.c.l.b16 %v2637
        %v2719 = vunpack.c.l.b16 %v2638
        %v2720 = vunpack.c.l.b16 %v2639
        %v2721 = vunpack.c.l.b16 %v2640
        %v2722 = vunpack.c.l.b16 %v2641
        %v2723 = vunpack.c.l.b16 %v2642
        %v2724 = vunpack.c.l.b16 %v2643
        %v2725 = vunpack.c.l.b16 %v2644
        %v2726 = vunpack.c.l.b16 %v2645
        %v2727 = vunpack.c.l.b16 %v2646
        %v2728 = vunpack.c.l.b16 %v2647
        %v2729 = vunpack.c.l.b16 %v2648
        %v2730 = vunpack.c.l.b16 %v2649
        %v2731 = vunpack.c.l.b16 %v2650
        %v2732 = vunpack.c.l.b16 %v2651
        %v2733 = vunpack.c.l.b16 %v2652
        %v2734 = vunpack.c.l.b16 %v2653
        %v2735 = vunpack.c.l.b16 %v2654
        %v2736 = vpack.c.b16 %v2705, %v2704
        %v2737 = vpack.c.b16 %v2707, %v2706
        %v2738 = vpack.c.b16 %v2709, %v2708
        %v2739 = vpack.c.b16 %v2711, %v2710
        %v2740 = vpack.c.b16 %v2713, %v2712
        %v2741 = vpack.c.b16 %v2715, %v2714
        %v2742 = vpack.c.b16 %v2717, %v2716
        %v2743 = vpack.c.b16 %v2719, %v2718
        %v2744 = vpack.c.b16 %v2721, %v2720
        %v2745 = vpack.c.b16 %v2723, %v2722
        %v2746 = vpack.c.b16 %v2725, %v2724
        %v2747 = vpack.c.b16 %v2727, %v2726
        %v2748 = vpack.c.b16 %v2729, %v2728
        %v2749 = vpack.c.b16 %v2731, %v2730
        %v2750 = vpack.c.b16 %v2733, %v2732
        %v2751 = vpack.c.b16 %v2735, %v2734
        %v2784 = vunpack.c.l.b16 %v2656
        %v2785 = vunpack.c.l.b16 %v2657
        %v2786 = vunpack.c.l.b16 %v2658
        %v2787 = vunpack.c.l.b16 %v2659
        %v2788 = vunpack.c.l.b16 %v2660
        %v2789 = vunpack.c.l.b16 %v2661
        %v2790 = vunpack.c.l.b16 %v2662
        %v2791 = vunpack.c.l.b16 %v2663
        %v2792 = vunpack.c.l.b16 %v2664
        %v2793 = vunpack.c.l.b16 %v2665
        %v2794 = vunpack.c.l.b16 %v2666
        %v2795 = vunpack.c.l.b16 %v2667
        %v2796 = vunpack.c.l.b16 %v2668
        %v2797 = vunpack.c.l.b16 %v2669
        %v2798 = vunpack.c.l.b16 %v2670
        %v2799 = vunpack.c.l.b16 %v2671
        %v2800 = vpack.c.b16 %v2785, %v2784
        %v2801 = vpack.c.b16 %v2787, %v2786
        %v2802 = vpack.c.b16 %v2789, %v2788
        %v2803 = vpack.c.b16 %v2791, %v2790
        %v2804 = vpack.c.b16 %v2793, %v2792
        %v2805 = vpack.c.b16 %v2795, %v2794
        %v2806 = vpack.c.b16 %v2797, %v2796
        %v2807 = vpack.c.b16 %v2799, %v2798
        %2816 = vmatprep.subr.bf16.mxu0 0
        %2817 = vmatpush1.bf16.msra.mxu0 %v2800
        %2818 = vmatprep.subr.bf16.mxu0 0
        %2819 = vmatpush1.bf16.msra.mxu0 %v2801
        %2820 = vmatprep.subr.bf16.mxu0 0
        %2821 = vmatpush1.bf16.msra.mxu0 %v2802
        %2822 = vmatprep.subr.bf16.mxu0 0
        %2823 = vmatpush1.bf16.msra.mxu0 %v2803
        %2824 = vmatprep.subr.bf16.mxu0 0
        %2825 = vmatpush1.bf16.msra.mxu0 %v2804
        %2826 = vmatprep.subr.bf16.mxu0 0
        %2827 = vmatpush1.bf16.msra.mxu0 %v2805
        %2828 = vmatprep.subr.bf16.mxu0 0
        %2829 = vmatpush1.bf16.msra.mxu0 %v2806
        %2830 = vmatprep.subr.bf16.mxu0 0
        %2831 = vmatpush1.bf16.msra.mxu0 %v2807
        %2832 = vmatprep.subr.bf16.mxu0 0
        %2833 = vmatpush1.bf16.msra.mxu0 0
        %2834 = vmatprep.subr.bf16.mxu0 0
        %2835 = vmatpush1.bf16.msra.mxu0 0
        %2836 = vmatprep.subr.bf16.mxu0 0
        %2837 = vmatpush1.bf16.msra.mxu0 0
        %2838 = vmatprep.subr.bf16.mxu0 0
        %2839 = vmatpush1.bf16.msra.mxu0 0
        %2840 = vmatprep.subr.bf16.mxu0 0
        %2841 = vmatpush1.bf16.msra.mxu0 0
        %2842 = vmatprep.subr.bf16.mxu0 0
        %2843 = vmatpush1.bf16.msra.mxu0 0
        %2844 = vmatprep.subr.bf16.mxu0 0
        %2845 = vmatpush1.bf16.msra.mxu0 0
        %2846 = vmatprep.subr.bf16.mxu0 0
        %2847 = vmatpush1.bf16.msra.mxu0 0
        %2848 = vmatprep.mubr.bf16.mxu0 0
        %2849 = vmatmul.mubr.bf16.gmra.mrb[0].mxu0 %v2736
        %v2850 = vpop.f32.mrb[0].mxu0
        %v2851 = vadd.f32 0.0, %v2850
        %v2852 = vpop.f32.mrb[0].mxu0
        %v2853 = vpop.f32.mrb[0].mxu0
        %v2854 = vadd.f32 0.0, %v2853
        %v2855 = vpop.f32.mrb[0].mxu0
        %2856 = vmatprep.mubr.bf16.mxu0 0
        %2857 = vmatmul.mubr.bf16.gmra.mrb[0].mxu0 %v2737
        %v2858 = vpop.f32.mrb[0].mxu0
        %v2859 = vadd.f32 0.0, %v2858
        %v2860 = vpop.f32.mrb[0].mxu0
        %v2861 = vpop.f32.mrb[0].mxu0
        %v2862 = vadd.f32 0.0, %v2861
        %v2863 = vpop.f32.mrb[0].mxu0
        %2864 = vmatprep.mubr.bf16.mxu0 0
        %2865 = vmatmul.mubr.bf16.gmra.mrb[0].mxu0 %v2738
        %v2866 = vpop.f32.mrb[0].mxu0
        %v2867 = vadd.f32 0.0, %v2866
        %v2868 = vpop.f32.mrb[0].mxu0
        %v2869 = vpop.f32.mrb[0].mxu0
        %v2870 = vadd.f32 0.0, %v2869
        %v2871 = vpop.f32.mrb[0].mxu0
        %2872 = vmatprep.mubr.bf16.mxu0 0
        %2873 = vmatmul.mubr.bf16.gmra.mrb[0].mxu0 %v2739
        %v2874 = vpop.f32.mrb[0].mxu0
        %v2875 = vadd.f32 0.0, %v2874
        %v2876 = vpop.f32.mrb[0].mxu0
        %v2877 = vpop.f32.mrb[0].mxu0
        %v2878 = vadd.f32 0.0, %v2877
        %v2879 = vpop.f32.mrb[0].mxu0
        %2880 = vmatprep.mubr.bf16.mxu0 0
        %2881 = vmatmul.mubr.bf16.gmra.mrb[0].mxu0 %v2740
        %v2882 = vpop.f32.mrb[0].mxu0
        %v2883 = vadd.f32 0.0, %v2882
        %v2884 = vpop.f32.mrb[0].mxu0
        %v2885 = vpop.f32.mrb[0].mxu0
        %v2886 = vadd.f32 0.0, %v2885
        %v2887 = vpop.f32.mrb[0].mxu0
        %2888 = vmatprep.mubr.bf16.mxu0 0
        %2889 = vmatmul.mubr.bf16.gmra.mrb[0].mxu0 %v2741
        %v2890 = vpop.f32.mrb[0].mxu0
        %v2891 = vadd.f32 0.0, %v2890
        %v2892 = vpop.f32.mrb[0].mxu0
        %v2893 = vpop.f32.mrb[0].mxu0
        %v2894 = vadd.f32 0.0, %v2893
        %v2895 = vpop.f32.mrb[0].mxu0
        %2896 = vmatprep.mubr.bf16.mxu0 0
        %2897 = vmatmul.mubr.bf16.gmra.mrb[0].mxu0 %v2742
        %v2898 = vpop.f32.mrb[0].mxu0
        %v2899 = vadd.f32 0.0, %v2898
        %v2900 = vpop.f32.mrb[0].mxu0
        %v2901 = vpop.f32.mrb[0].mxu0
        %v2902 = vadd.f32 0.0, %v2901
        %v2903 = vpop.f32.mrb[0].mxu0
        %2904 = vmatprep.mubr.bf16.mxu0 0
        %2905 = vmatmul.mubr.bf16.gmra.mrb[0].mxu0 %v2743
        %v2906 = vpop.f32.mrb[0].mxu0
        %v2907 = vadd.f32 0.0, %v2906
        %v2908 = vpop.f32.mrb[0].mxu0
        %v2909 = vpop.f32.mrb[0].mxu0
        %v2910 = vadd.f32 0.0, %v2909
        %v2911 = vpop.f32.mrb[0].mxu0
        %2912 = vmatprep.mubr.bf16.mxu0 0
        %2913 = vmatmul.mubr.bf16.gmra.mrb[0].mxu0 %v2744
        %v2914 = vpop.f32.mrb[0].mxu0
        %v2915 = vadd.f32 0.0, %v2914
        %v2916 = vpop.f32.mrb[0].mxu0
        %v2917 = vpop.f32.mrb[0].mxu0
        %v2918 = vadd.f32 0.0, %v2917
        %v2919 = vpop.f32.mrb[0].mxu0
        %2920 = vmatprep.mubr.bf16.mxu0 0
        %2921 = vmatmul.mubr.bf16.gmra.mrb[0].mxu0 %v2745
        %v2922 = vpop.f32.mrb[0].mxu0
        %v2923 = vadd.f32 0.0, %v2922
        %v2924 = vpop.f32.mrb[0].mxu0
        %v2925 = vpop.f32.mrb[0].mxu0
        %v2926 = vadd.f32 0.0, %v2925
        %v2927 = vpop.f32.mrb[0].mxu0
        %2928 = vmatprep.mubr.bf16.mxu0 0
        %2929 = vmatmul.mubr.bf16.gmra.mrb[0].mxu0 %v2746
        %v2930 = vpop.f32.mrb[0].mxu0
        %v2931 = vadd.f32 0.0, %v2930
        %v2932 = vpop.f32.mrb[0].mxu0
        %v2933 = vpop.f32.mrb[0].mxu0
        %v2934 = vadd.f32 0.0, %v2933
        %v2935 = vpop.f32.mrb[0].mxu0
        %2936 = vmatprep.mubr.bf16.mxu0 0
        %2937 = vmatmul.mubr.bf16.gmra.mrb[0].mxu0 %v2747
        %v2938 = vpop.f32.mrb[0].mxu0
        %v2939 = vadd.f32 0.0, %v2938
        %v2940 = vpop.f32.mrb[0].mxu0
        %v2941 = vpop.f32.mrb[0].mxu0
        %v2942 = vadd.f32 0.0, %v2941
        %v2943 = vpop.f32.mrb[0].mxu0
        %2944 = vmatprep.mubr.bf16.mxu0 0
        %2945 = vmatmul.mubr.bf16.gmra.mrb[0].mxu0 %v2748
        %v2946 = vpop.f32.mrb[0].mxu0
        %v2947 = vadd.f32 0.0, %v2946
        %v2948 = vpop.f32.mrb[0].mxu0
        %v2949 = vpop.f32.mrb[0].mxu0
        %v2950 = vadd.f32 0.0, %v2949
        %v2951 = vpop.f32.mrb[0].mxu0
        %2952 = vmatprep.mubr.bf16.mxu0 0
        %2953 = vmatmul.mubr.bf16.gmra.mrb[0].mxu0 %v2749
        %v2954 = vpop.f32.mrb[0].mxu0
        %v2955 = vadd.f32 0.0, %v2954
        %v2956 = vpop.f32.mrb[0].mxu0
        %v2957 = vpop.f32.mrb[0].mxu0
        %v2958 = vadd.f32 0.0, %v2957
        %v2959 = vpop.f32.mrb[0].mxu0
        %2960 = vmatprep.mubr.bf16.mxu0 0
        %2961 = vmatmul.mubr.bf16.gmra.mrb[0].mxu0 %v2750
        %v2962 = vpop.f32.mrb[0].mxu0
        %v2963 = vadd.f32 0.0, %v2962
        %v2964 = vpop.f32.mrb[0].mxu0
        %v2965 = vpop.f32.mrb[0].mxu0
        %v2966 = vadd.f32 0.0, %v2965
        %v2967 = vpop.f32.mrb[0].mxu0
        %2968 = vmatprep.mubr.bf16.mxu0 0
        %2969 = vmatmul.mubr.bf16.gmra.mrb[0].mxu0 %v2751
        %v2970 = vpop.f32.mrb[0].mxu0
        %v2971 = vadd.f32 0.0, %v2970
        %v2972 = vpop.f32.mrb[0].mxu0
        %v2973 = vpop.f32.mrb[0].mxu0
        %v2974 = vadd.f32 0.0, %v2973
        %v2975 = vpop.f32.mrb[0].mxu0
        %2976 = vdwg.mxu0
        %v2977 = vadd.f32 %v2591, %v2851
        %v2978 = vadd.f32 %v2592, %v2854
        %v2979 = vadd.f32 %v2593, %v2859
        %v2980 = vadd.f32 %v2594, %v2862
        %v2981 = vadd.f32 %v2595, %v2867
        %v2982 = vadd.f32 %v2596, %v2870
        %v2983 = vadd.f32 %v2597, %v2875
        %v2984 = vadd.f32 %v2598, %v2878
        %v2985 = vadd.f32 %v2599, %v2883
        %v2986 = vadd.f32 %v2600, %v2886
        %v2987 = vadd.f32 %v2601, %v2891
        %v2988 = vadd.f32 %v2602, %v2894
        %v2989 = vadd.f32 %v2603, %v2899
        %v2990 = vadd.f32 %v2604, %v2902
        %v2991 = vadd.f32 %v2605, %v2907
        %v2992 = vadd.f32 %v2606, %v2910
        %v2993 = vadd.f32 %v2607, %v2915
        %v2994 = vadd.f32 %v2608, %v2918
        %v2995 = vadd.f32 %v2609, %v2923
        %v2996 = vadd.f32 %v2610, %v2926
        %v2997 = vadd.f32 %v2611, %v2931
        %v2998 = vadd.f32 %v2612, %v2934
        %v2999 = vadd.f32 %v2613, %v2939
        %v3000 = vadd.f32 %v2614, %v2942
        %v3001 = vadd.f32 %v2615, %v2947
        %v3002 = vadd.f32 %v2616, %v2950
        %v3003 = vadd.f32 %v2617, %v2955
        %v3004 = vadd.f32 %v2618, %v2958
        %v3005 = vadd.f32 %v2619, %v2963
        %v3006 = vadd.f32 %v2620, %v2966
        %v3007 = vadd.f32 %v2621, %v2971
        %v3008 = vadd.f32 %v2622, %v2974
        %v3009 = vld [vmem:[%s670] sm:$0xf]
        %v3010 = vld [vmem:[%s670 + $0x4] sm:$0xf]
        %v3011 = vld [vmem:[%s670 + $0x8] sm:$0x1]
        %v3012 = vld [vmem:[%s670 + $0xc] sm:$0xf]
        %v3013 = vld [vmem:[%s670 + $0x10] sm:$0xf]
        %v3014 = vld [vmem:[%s670 + $0x14] sm:$0x1]
        %v3015 = vld [vmem:[%s670 + $0x18] sm:$0xf]
        %v3016 = vld [vmem:[%s670 + $0x1c] sm:$0xf]
        %v3017 = vld [vmem:[%s670 + $0x20] sm:$0x1]
        %v3018 = vld [vmem:[%s670 + $0x24] sm:$0xf]
        %v3019 = vld [vmem:[%s670 + $0x28] sm:$0xf]
        %v3020 = vld [vmem:[%s670 + $0x2c] sm:$0x1]
        %v3021 = vld [vmem:[%s670 + $0x30] sm:$0xf]
        %v3022 = vld [vmem:[%s670 + $0x34] sm:$0xf]
        %v3023 = vld [vmem:[%s670 + $0x38] sm:$0x1]
        %v3024 = vld [vmem:[%s670 + $0x3c] sm:$0xf]
        %v3025 = vld [vmem:[%s670 + $0x40] sm:$0xf]
        %v3026 = vld [vmem:[%s670 + $0x44] sm:$0x1]
        %v3027 = vld [vmem:[%s670 + $0x48] sm:$0xf]
        %v3028 = vld [vmem:[%s670 + $0x4c] sm:$0xf]
        %v3029 = vld [vmem:[%s670 + $0x50] sm:$0x1]
        %v3030 = vld [vmem:[%s670 + $0x54] sm:$0xf]
        %v3031 = vld [vmem:[%s670 + $0x58] sm:$0xf]
        %v3032 = vld [vmem:[%s670 + $0x5c] sm:$0x1]
        %v3033 = vld [vmem:[%s670 + $0x60] sm:$0xf]
        %v3034 = vld [vmem:[%s670 + $0x64] sm:$0xf]
        %v3035 = vld [vmem:[%s670 + $0x68] sm:$0x1]
        %v3036 = vld [vmem:[%s670 + $0x6c] sm:$0xf]
        %v3037 = vld [vmem:[%s670 + $0x70] sm:$0xf]
        %v3038 = vld [vmem:[%s670 + $0x74] sm:$0x1]
        %v3039 = vld [vmem:[%s670 + $0x78] sm:$0xf]
        %v3040 = vld [vmem:[%s670 + $0x7c] sm:$0xf]
        %v3041 = vld [vmem:[%s670 + $0x80] sm:$0x1]
        %v3042 = vld [vmem:[%s670 + $0x84] sm:$0xf]
        %v3043 = vld [vmem:[%s670 + $0x88] sm:$0xf]
        %v3044 = vld [vmem:[%s670 + $0x8c] sm:$0x1]
        %v3045 = vld [vmem:[%s670 + $0x90] sm:$0xf]
        %v3046 = vld [vmem:[%s670 + $0x94] sm:$0xf]
        %v3047 = vld [vmem:[%s670 + $0x98] sm:$0x1]
        %v3048 = vld [vmem:[%s670 + $0x9c] sm:$0xf]
        %v3049 = vld [vmem:[%s670 + $0xa0] sm:$0xf]
        %v3050 = vld [vmem:[%s670 + $0xa4] sm:$0x1]
        %v3051 = vld [vmem:[%s670 + $0xa8] sm:$0xf]
        %v3052 = vld [vmem:[%s670 + $0xac] sm:$0xf]
        %v3053 = vld [vmem:[%s670 + $0xb0] sm:$0x1]
        %v3054 = vld [vmem:[%s670 + $0xb4] sm:$0xf]
        %v3055 = vld [vmem:[%s670 + $0xb8] sm:$0xf]
        %v3056 = vld [vmem:[%s670 + $0xbc] sm:$0x1]
        %v3058 = vshrl.u32 %v3009, 16
        %v3060 = vrot.slane %v3058, 4
        %v3061 = vshll.u32 %v3009, 16
        %v3063 = vrot.slane %v3061, 5
        %v3064 = vor.u32 %v3060, %v3063
        %v3065 = vrot.slane %v3064, 4
        %v3067 = vshll.u32 %v3010, 16
        %v3069 = vrot.slane %v3067, 5
        %v3070 = vsel %vm1158, %v3065, %v3069
        %v3071 = vshrl.u32 %v3010, 16
        %v3073 = vrot.slane %v3071, 4
        %v3074 = vor.u32 %v3073, %v3069
        %v3075 = vrot.slane %v3074, 4
        %v3077 = vshll.u32 %v3011, 16
        %v3079 = vrot.slane %v3077, 5
        %v3080 = vsel %vm1158, %v3075, %v3079
        %v3082 = vshrl.u32 %v3012, 16
        %v3084 = vrot.slane %v3082, 4
        %v3085 = vshll.u32 %v3012, 16
        %v3087 = vrot.slane %v3085, 5
        %v3088 = vor.u32 %v3084, %v3087
        %v3089 = vrot.slane %v3088, 4
        %v3091 = vshll.u32 %v3013, 16
        %v3093 = vrot.slane %v3091, 5
        %v3094 = vsel %vm1158, %v3089, %v3093
        %v3095 = vshrl.u32 %v3013, 16
        %v3097 = vrot.slane %v3095, 4
        %v3098 = vor.u32 %v3097, %v3093
        %v3099 = vrot.slane %v3098, 4
        %v3101 = vshll.u32 %v3014, 16
        %v3103 = vrot.slane %v3101, 5
        %v3104 = vsel %vm1158, %v3099, %v3103
        %v3106 = vshrl.u32 %v3015, 16
        %v3108 = vrot.slane %v3106, 4
        %v3109 = vshll.u32 %v3015, 16
        %v3111 = vrot.slane %v3109, 5
        %v3112 = vor.u32 %v3108, %v3111
        %v3113 = vrot.slane %v3112, 4
        %v3115 = vshll.u32 %v3016, 16
        %v3117 = vrot.slane %v3115, 5
        %v3118 = vsel %vm1158, %v3113, %v3117
        %v3119 = vshrl.u32 %v3016, 16
        %v3121 = vrot.slane %v3119, 4
        %v3122 = vor.u32 %v3121, %v3117
        %v3123 = vrot.slane %v3122, 4
        %v3125 = vshll.u32 %v3017, 16
        %v3127 = vrot.slane %v3125, 5
        %v3128 = vsel %vm1158, %v3123, %v3127
        %v3130 = vshrl.u32 %v3018, 16
        %v3132 = vrot.slane %v3130, 4
        %v3133 = vshll.u32 %v3018, 16
        %v3135 = vrot.slane %v3133, 5
        %v3136 = vor.u32 %v3132, %v3135
        %v3137 = vrot.slane %v3136, 4
        %v3139 = vshll.u32 %v3019, 16
        %v3141 = vrot.slane %v3139, 5
        %v3142 = vsel %vm1158, %v3137, %v3141
        %v3143 = vshrl.u32 %v3019, 16
        %v3145 = vrot.slane %v3143, 4
        %v3146 = vor.u32 %v3145, %v3141
        %v3147 = vrot.slane %v3146, 4
        %v3149 = vshll.u32 %v3020, 16
        %v3151 = vrot.slane %v3149, 5
        %v3152 = vsel %vm1158, %v3147, %v3151
        %v3154 = vshrl.u32 %v3021, 16
        %v3156 = vrot.slane %v3154, 4
        %v3157 = vshll.u32 %v3021, 16
        %v3159 = vrot.slane %v3157, 5
        %v3160 = vor.u32 %v3156, %v3159
        %v3161 = vrot.slane %v3160, 4
        %v3163 = vshll.u32 %v3022, 16
        %v3165 = vrot.slane %v3163, 5
        %v3166 = vsel %vm1158, %v3161, %v3165
        %v3167 = vshrl.u32 %v3022, 16
        %v3169 = vrot.slane %v3167, 4
        %v3170 = vor.u32 %v3169, %v3165
        %v3171 = vrot.slane %v3170, 4
        %v3173 = vshll.u32 %v3023, 16
        %v3175 = vrot.slane %v3173, 5
        %v3176 = vsel %vm1158, %v3171, %v3175
        %v3178 = vshrl.u32 %v3024, 16
        %v3180 = vrot.slane %v3178, 4
        %v3181 = vshll.u32 %v3024, 16
        %v3183 = vrot.slane %v3181, 5
        %v3184 = vor.u32 %v3180, %v3183
        %v3185 = vrot.slane %v3184, 4
        %v3187 = vshll.u32 %v3025, 16
        %v3189 = vrot.slane %v3187, 5
        %v3190 = vsel %vm1158, %v3185, %v3189
        %v3191 = vshrl.u32 %v3025, 16
        %v3193 = vrot.slane %v3191, 4
        %v3194 = vor.u32 %v3193, %v3189
        %v3195 = vrot.slane %v3194, 4
        %v3197 = vshll.u32 %v3026, 16
        %v3199 = vrot.slane %v3197, 5
        %v3200 = vsel %vm1158, %v3195, %v3199
        %v3202 = vshrl.u32 %v3027, 16
        %v3204 = vrot.slane %v3202, 4
        %v3205 = vshll.u32 %v3027, 16
        %v3207 = vrot.slane %v3205, 5
        %v3208 = vor.u32 %v3204, %v3207
        %v3209 = vrot.slane %v3208, 4
        %v3211 = vshll.u32 %v3028, 16
        %v3213 = vrot.slane %v3211, 5
        %v3214 = vsel %vm1158, %v3209, %v3213
        %v3215 = vshrl.u32 %v3028, 16
        %v3217 = vrot.slane %v3215, 4
        %v3218 = vor.u32 %v3217, %v3213
        %v3219 = vrot.slane %v3218, 4
        %v3221 = vshll.u32 %v3029, 16
        %v3223 = vrot.slane %v3221, 5
        %v3224 = vsel %vm1158, %v3219, %v3223
        %v3226 = vshrl.u32 %v3030, 16
        %v3228 = vrot.slane %v3226, 4
        %v3229 = vshll.u32 %v3030, 16
        %v3231 = vrot.slane %v3229, 5
        %v3232 = vor.u32 %v3228, %v3231
        %v3233 = vrot.slane %v3232, 4
        %v3235 = vshll.u32 %v3031, 16
        %v3237 = vrot.slane %v3235, 5
        %v3238 = vsel %vm1158, %v3233, %v3237
        %v3239 = vshrl.u32 %v3031, 16
        %v3241 = vrot.slane %v3239, 4
        %v3242 = vor.u32 %v3241, %v3237
        %v3243 = vrot.slane %v3242, 4
        %v3245 = vshll.u32 %v3032, 16
        %v3247 = vrot.slane %v3245, 5
        %v3248 = vsel %vm1158, %v3243, %v3247
        %v3250 = vshrl.u32 %v3033, 16
        %v3252 = vrot.slane %v3250, 4
        %v3253 = vshll.u32 %v3033, 16
        %v3255 = vrot.slane %v3253, 5
        %v3256 = vor.u32 %v3252, %v3255
        %v3257 = vrot.slane %v3256, 4
        %v3259 = vshll.u32 %v3034, 16
        %v3261 = vrot.slane %v3259, 5
        %v3262 = vsel %vm1158, %v3257, %v3261
        %v3263 = vshrl.u32 %v3034, 16
        %v3265 = vrot.slane %v3263, 4
        %v3266 = vor.u32 %v3265, %v3261
        %v3267 = vrot.slane %v3266, 4
        %v3269 = vshll.u32 %v3035, 16
        %v3271 = vrot.slane %v3269, 5
        %v3272 = vsel %vm1158, %v3267, %v3271
        %v3274 = vshrl.u32 %v3036, 16
        %v3276 = vrot.slane %v3274, 4
        %v3277 = vshll.u32 %v3036, 16
        %v3279 = vrot.slane %v3277, 5
        %v3280 = vor.u32 %v3276, %v3279
        %v3281 = vrot.slane %v3280, 4
        %v3283 = vshll.u32 %v3037, 16
        %v3285 = vrot.slane %v3283, 5
        %v3286 = vsel %vm1158, %v3281, %v3285
        %v3287 = vshrl.u32 %v3037, 16
        %v3289 = vrot.slane %v3287, 4
        %v3290 = vor.u32 %v3289, %v3285
        %v3291 = vrot.slane %v3290, 4
        %v3293 = vshll.u32 %v3038, 16
        %v3295 = vrot.slane %v3293, 5
        %v3296 = vsel %vm1158, %v3291, %v3295
        %v3298 = vshrl.u32 %v3039, 16
        %v3300 = vrot.slane %v3298, 4
        %v3301 = vshll.u32 %v3039, 16
        %v3303 = vrot.slane %v3301, 5
        %v3304 = vor.u32 %v3300, %v3303
        %v3305 = vrot.slane %v3304, 4
        %v3307 = vshll.u32 %v3040, 16
        %v3309 = vrot.slane %v3307, 5
        %v3310 = vsel %vm1158, %v3305, %v3309
        %v3311 = vshrl.u32 %v3040, 16
        %v3313 = vrot.slane %v3311, 4
        %v3314 = vor.u32 %v3313, %v3309
        %v3315 = vrot.slane %v3314, 4
        %v3317 = vshll.u32 %v3041, 16
        %v3319 = vrot.slane %v3317, 5
        %v3320 = vsel %vm1158, %v3315, %v3319
        %v3322 = vshrl.u32 %v3042, 16
        %v3324 = vrot.slane %v3322, 4
        %v3325 = vshll.u32 %v3042, 16
        %v3327 = vrot.slane %v3325, 5
        %v3328 = vor.u32 %v3324, %v3327
        %v3329 = vrot.slane %v3328, 4
        %v3331 = vshll.u32 %v3043, 16
        %v3333 = vrot.slane %v3331, 5
        %v3334 = vsel %vm1158, %v3329, %v3333
        %v3335 = vshrl.u32 %v3043, 16
        %v3337 = vrot.slane %v3335, 4
        %v3338 = vor.u32 %v3337, %v3333
        %v3339 = vrot.slane %v3338, 4
        %v3341 = vshll.u32 %v3044, 16
        %v3343 = vrot.slane %v3341, 5
        %v3344 = vsel %vm1158, %v3339, %v3343
        %v3346 = vshrl.u32 %v3045, 16
        %v3348 = vrot.slane %v3346, 4
        %v3349 = vshll.u32 %v3045, 16
        %v3351 = vrot.slane %v3349, 5
        %v3352 = vor.u32 %v3348, %v3351
        %v3353 = vrot.slane %v3352, 4
        %v3355 = vshll.u32 %v3046, 16
        %v3357 = vrot.slane %v3355, 5
        %v3358 = vsel %vm1158, %v3353, %v3357
        %v3359 = vshrl.u32 %v3046, 16
        %v3361 = vrot.slane %v3359, 4
        %v3362 = vor.u32 %v3361, %v3357
        %v3363 = vrot.slane %v3362, 4
        %v3365 = vshll.u32 %v3047, 16
        %v3367 = vrot.slane %v3365, 5
        %v3368 = vsel %vm1158, %v3363, %v3367
        %v3370 = vshrl.u32 %v3048, 16
        %v3372 = vrot.slane %v3370, 4
        %v3373 = vshll.u32 %v3048, 16
        %v3375 = vrot.slane %v3373, 5
        %v3376 = vor.u32 %v3372, %v3375
        %v3377 = vrot.slane %v3376, 4
        %v3379 = vshll.u32 %v3049, 16
        %v3381 = vrot.slane %v3379, 5
        %v3382 = vsel %vm1158, %v3377, %v3381
        %v3383 = vshrl.u32 %v3049, 16
        %v3385 = vrot.slane %v3383, 4
        %v3386 = vor.u32 %v3385, %v3381
        %v3387 = vrot.slane %v3386, 4
        %v3389 = vshll.u32 %v3050, 16
        %v3391 = vrot.slane %v3389, 5
        %v3392 = vsel %vm1158, %v3387, %v3391
        %v3394 = vshrl.u32 %v3051, 16
        %v3396 = vrot.slane %v3394, 4
        %v3397 = vshll.u32 %v3051, 16
        %v3399 = vrot.slane %v3397, 5
        %v3400 = vor.u32 %v3396, %v3399
        %v3401 = vrot.slane %v3400, 4
        %v3403 = vshll.u32 %v3052, 16
        %v3405 = vrot.slane %v3403, 5
        %v3406 = vsel %vm1158, %v3401, %v3405
        %v3407 = vshrl.u32 %v3052, 16
        %v3409 = vrot.slane %v3407, 4
        %v3410 = vor.u32 %v3409, %v3405
        %v3411 = vrot.slane %v3410, 4
        %v3413 = vshll.u32 %v3053, 16
        %v3415 = vrot.slane %v3413, 5
        %v3416 = vsel %vm1158, %v3411, %v3415
        %v3418 = vshrl.u32 %v3054, 16
        %v3420 = vrot.slane %v3418, 4
        %v3421 = vshll.u32 %v3054, 16
        %v3423 = vrot.slane %v3421, 5
        %v3424 = vor.u32 %v3420, %v3423
        %v3425 = vrot.slane %v3424, 4
        %v3427 = vshll.u32 %v3055, 16
        %v3429 = vrot.slane %v3427, 5
        %v3430 = vsel %vm1158, %v3425, %v3429
        %v3431 = vshrl.u32 %v3055, 16
        %v3433 = vrot.slane %v3431, 4
        %v3434 = vor.u32 %v3433, %v3429
        %v3435 = vrot.slane %v3434, 4
        %v3437 = vshll.u32 %v3056, 16
        %v3439 = vrot.slane %v3437, 5
        %v3440 = vsel %vm1158, %v3435, %v3439
        %s3441 = scalar_lea.vmem [#allocation6], 256
        %v3442 = vld [vmem:[%s3441] sm:$0xf]
        %v3443 = vld [vmem:[%s3441 + $0x4] sm:$0xf]
        %v3444 = vld [vmem:[%s3441 + $0x8] sm:$0xf]
        %v3445 = vld [vmem:[%s3441 + $0xc] sm:$0xf]
        %v3446 = vld [vmem:[%s3441 + $0x10] sm:$0xf]
        %v3447 = vld [vmem:[%s3441 + $0x14] sm:$0xf]
        %v3448 = vld [vmem:[%s3441 + $0x18] sm:$0xf]
        %v3449 = vld [vmem:[%s3441 + $0x1c] sm:$0xf]
        %v3450 = vld [vmem:[%s3441 + $0x20] sm:$0xf]
        %v3451 = vld [vmem:[%s3441 + $0x24] sm:$0xf]
        %v3452 = vld [vmem:[%s3441 + $0x28] sm:$0xf]
        %v3453 = vld [vmem:[%s3441 + $0x2c] sm:$0xf]
        %v3454 = vld [vmem:[%s3441 + $0x30] sm:$0xf]
        %v3455 = vld [vmem:[%s3441 + $0x34] sm:$0xf]
        %v3456 = vld [vmem:[%s3441 + $0x38] sm:$0xf]
        %v3457 = vld [vmem:[%s3441 + $0x3c] sm:$0xf]
        %v3458 = vunpack.c.l.b16 %v3070
        %v3459 = vunpack.c.l.b16 %v3080
        %v3460 = vunpack.c.l.b16 %v3094
        %v3461 = vunpack.c.l.b16 %v3104
        %v3462 = vunpack.c.l.b16 %v3118
        %v3463 = vunpack.c.l.b16 %v3128
        %v3464 = vunpack.c.l.b16 %v3142
        %v3465 = vunpack.c.l.b16 %v3152
        %v3466 = vunpack.c.l.b16 %v3166
        %v3467 = vunpack.c.l.b16 %v3176
        %v3468 = vunpack.c.l.b16 %v3190
        %v3469 = vunpack.c.l.b16 %v3200
        %v3470 = vunpack.c.l.b16 %v3214
        %v3471 = vunpack.c.l.b16 %v3224
        %v3472 = vunpack.c.l.b16 %v3238
        %v3473 = vunpack.c.l.b16 %v3248
        %v3474 = vunpack.c.l.b16 %v3262
        %v3475 = vunpack.c.l.b16 %v3272
        %v3476 = vunpack.c.l.b16 %v3286
        %v3477 = vunpack.c.l.b16 %v3296
        %v3478 = vunpack.c.l.b16 %v3310
        %v3479 = vunpack.c.l.b16 %v3320
        %v3480 = vunpack.c.l.b16 %v3334
        %v3481 = vunpack.c.l.b16 %v3344
        %v3482 = vunpack.c.l.b16 %v3358
        %v3483 = vunpack.c.l.b16 %v3368
        %v3484 = vunpack.c.l.b16 %v3382
        %v3485 = vunpack.c.l.b16 %v3392
        %v3486 = vunpack.c.l.b16 %v3406
        %v3487 = vunpack.c.l.b16 %v3416
        %v3488 = vunpack.c.l.b16 %v3430
        %v3489 = vunpack.c.l.b16 %v3440
        %v3490 = vpack.c.b16 %v3459, %v3458
        %v3491 = vpack.c.b16 %v3461, %v3460
        %v3492 = vpack.c.b16 %v3463, %v3462
        %v3493 = vpack.c.b16 %v3465, %v3464
        %v3494 = vpack.c.b16 %v3467, %v3466
        %v3495 = vpack.c.b16 %v3469, %v3468
        %v3496 = vpack.c.b16 %v3471, %v3470
        %v3497 = vpack.c.b16 %v3473, %v3472
        %v3498 = vpack.c.b16 %v3475, %v3474
        %v3499 = vpack.c.b16 %v3477, %v3476
        %v3500 = vpack.c.b16 %v3479, %v3478
        %v3501 = vpack.c.b16 %v3481, %v3480
        %v3502 = vpack.c.b16 %v3483, %v3482
        %v3503 = vpack.c.b16 %v3485, %v3484
        %v3504 = vpack.c.b16 %v3487, %v3486
        %v3505 = vpack.c.b16 %v3489, %v3488
        %v3538 = vunpack.c.l.b16 %v3442
        %v3539 = vunpack.c.l.b16 %v3443
        %v3540 = vunpack.c.l.b16 %v3444
        %v3541 = vunpack.c.l.b16 %v3445
        %v3542 = vunpack.c.l.b16 %v3446
        %v3543 = vunpack.c.l.b16 %v3447
        %v3544 = vunpack.c.l.b16 %v3448
        %v3545 = vunpack.c.l.b16 %v3449
        %v3546 = vunpack.c.l.b16 %v3450
        %v3547 = vunpack.c.l.b16 %v3451
        %v3548 = vunpack.c.l.b16 %v3452
        %v3549 = vunpack.c.l.b16 %v3453
        %v3550 = vunpack.c.l.b16 %v3454
        %v3551 = vunpack.c.l.b16 %v3455
        %v3552 = vunpack.c.l.b16 %v3456
        %v3553 = vunpack.c.l.b16 %v3457
        %v3554 = vpack.c.b16 %v3539, %v3538
        %v3555 = vpack.c.b16 %v3541, %v3540
        %v3556 = vpack.c.b16 %v3543, %v3542
        %v3557 = vpack.c.b16 %v3545, %v3544
        %v3558 = vpack.c.b16 %v3547, %v3546
        %v3559 = vpack.c.b16 %v3549, %v3548
        %v3560 = vpack.c.b16 %v3551, %v3550
        %v3561 = vpack.c.b16 %v3553, %v3552
        %3570 = vmatprep.subr.bf16.mxu0 0
        %3571 = vmatpush1.bf16.msra.mxu0 %v3554
        %3572 = vmatprep.subr.bf16.mxu0 0
        %3573 = vmatpush1.bf16.msra.mxu0 %v3555
        %3574 = vmatprep.subr.bf16.mxu0 0
        %3575 = vmatpush1.bf16.msra.mxu0 %v3556
        %3576 = vmatprep.subr.bf16.mxu0 0
        %3577 = vmatpush1.bf16.msra.mxu0 %v3557
        %3578 = vmatprep.subr.bf16.mxu0 0
        %3579 = vmatpush1.bf16.msra.mxu0 %v3558
        %3580 = vmatprep.subr.bf16.mxu0 0
        %3581 = vmatpush1.bf16.msra.mxu0 %v3559
        %3582 = vmatprep.subr.bf16.mxu0 0
        %3583 = vmatpush1.bf16.msra.mxu0 %v3560
        %3584 = vmatprep.subr.bf16.mxu0 0
        %3585 = vmatpush1.bf16.msra.mxu0 %v3561
        %3586 = vmatprep.subr.bf16.mxu0 0
        %3587 = vmatpush1.bf16.msra.mxu0 0
        %3588 = vmatprep.subr.bf16.mxu0 0
        %3589 = vmatpush1.bf16.msra.mxu0 0
        %3590 = vmatprep.subr.bf16.mxu0 0
        %3591 = vmatpush1.bf16.msra.mxu0 0
        %3592 = vmatprep.subr.bf16.mxu0 0
        %3593 = vmatpush1.bf16.msra.mxu0 0
        %3594 = vmatprep.subr.bf16.mxu0 0
        %3595 = vmatpush1.bf16.msra.mxu0 0
        %3596 = vmatprep.subr.bf16.mxu0 0
        %3597 = vmatpush1.bf16.msra.mxu0 0
        %3598 = vmatprep.subr.bf16.mxu0 0
        %3599 = vmatpush1.bf16.msra.mxu0 0
        %3600 = vmatprep.subr.bf16.mxu0 0
        %3601 = vmatpush1.bf16.msra.mxu0 0
        %3602 = vmatprep.mubr.bf16.mxu0 0
        %3603 = vmatmul.mubr.bf16.gmra.mrb[0].mxu0 %v3490
        %v3604 = vpop.f32.mrb[0].mxu0
        %v3605 = vadd.f32 0.0, %v3604
        %v3606 = vpop.f32.mrb[0].mxu0
        %v3607 = vpop.f32.mrb[0].mxu0
        %v3608 = vadd.f32 0.0, %v3607
        %v3609 = vpop.f32.mrb[0].mxu0
        %3610 = vmatprep.mubr.bf16.mxu0 0
        %3611 = vmatmul.mubr.bf16.gmra.mrb[0].mxu0 %v3491
        %v3612 = vpop.f32.mrb[0].mxu0
        %v3613 = vadd.f32 0.0, %v3612
        %v3614 = vpop.f32.mrb[0].mxu0
        %v3615 = vpop.f32.mrb[0].mxu0
        %v3616 = vadd.f32 0.0, %v3615
        %v3617 = vpop.f32.mrb[0].mxu0
        %3618 = vmatprep.mubr.bf16.mxu0 0
        %3619 = vmatmul.mubr.bf16.gmra.mrb[0].mxu0 %v3492
        %v3620 = vpop.f32.mrb[0].mxu0
        %v3621 = vadd.f32 0.0, %v3620
        %v3622 = vpop.f32.mrb[0].mxu0
        %v3623 = vpop.f32.mrb[0].mxu0
        %v3624 = vadd.f32 0.0, %v3623
        %v3625 = vpop.f32.mrb[0].mxu0
        %3626 = vmatprep.mubr.bf16.mxu0 0
        %3627 = vmatmul.mubr.bf16.gmra.mrb[0].mxu0 %v3493
        %v3628 = vpop.f32.mrb[0].mxu0
        %v3629 = vadd.f32 0.0, %v3628
        %v3630 = vpop.f32.mrb[0].mxu0
        %v3631 = vpop.f32.mrb[0].mxu0
        %v3632 = vadd.f32 0.0, %v3631
        %v3633 = vpop.f32.mrb[0].mxu0
        %3634 = vmatprep.mubr.bf16.mxu0 0
        %3635 = vmatmul.mubr.bf16.gmra.mrb[0].mxu0 %v3494
        %v3636 = vpop.f32.mrb[0].mxu0
        %v3637 = vadd.f32 0.0, %v3636
        %v3638 = vpop.f32.mrb[0].mxu0
        %v3639 = vpop.f32.mrb[0].mxu0
        %v3640 = vadd.f32 0.0, %v3639
        %v3641 = vpop.f32.mrb[0].mxu0
        %3642 = vmatprep.mubr.bf16.mxu0 0
        %3643 = vmatmul.mubr.bf16.gmra.mrb[0].mxu0 %v3495
        %v3644 = vpop.f32.mrb[0].mxu0
        %v3645 = vadd.f32 0.0, %v3644
        %v3646 = vpop.f32.mrb[0].mxu0
        %v3647 = vpop.f32.mrb[0].mxu0
        %v3648 = vadd.f32 0.0, %v3647
        %v3649 = vpop.f32.mrb[0].mxu0
        %3650 = vmatprep.mubr.bf16.mxu0 0
        %3651 = vmatmul.mubr.bf16.gmra.mrb[0].mxu0 %v3496
        %v3652 = vpop.f32.mrb[0].mxu0
        %v3653 = vadd.f32 0.0, %v3652
        %v3654 = vpop.f32.mrb[0].mxu0
        %v3655 = vpop.f32.mrb[0].mxu0
        %v3656 = vadd.f32 0.0, %v3655
        %v3657 = vpop.f32.mrb[0].mxu0
        %3658 = vmatprep.mubr.bf16.mxu0 0
        %3659 = vmatmul.mubr.bf16.gmra.mrb[0].mxu0 %v3497
        %v3660 = vpop.f32.mrb[0].mxu0
        %v3661 = vadd.f32 0.0, %v3660
        %v3662 = vpop.f32.mrb[0].mxu0
        %v3663 = vpop.f32.mrb[0].mxu0
        %v3664 = vadd.f32 0.0, %v3663
        %v3665 = vpop.f32.mrb[0].mxu0
        %3666 = vmatprep.mubr.bf16.mxu0 0
        %3667 = vmatmul.mubr.bf16.gmra.mrb[0].mxu0 %v3498
        %v3668 = vpop.f32.mrb[0].mxu0
        %v3669 = vadd.f32 0.0, %v3668
        %v3670 = vpop.f32.mrb[0].mxu0
        %v3671 = vpop.f32.mrb[0].mxu0
        %v3672 = vadd.f32 0.0, %v3671
        %v3673 = vpop.f32.mrb[0].mxu0
        %3674 = vmatprep.mubr.bf16.mxu0 0
        %3675 = vmatmul.mubr.bf16.gmra.mrb[0].mxu0 %v3499
        %v3676 = vpop.f32.mrb[0].mxu0
        %v3677 = vadd.f32 0.0, %v3676
        %v3678 = vpop.f32.mrb[0].mxu0
        %v3679 = vpop.f32.mrb[0].mxu0
        %v3680 = vadd.f32 0.0, %v3679
        %v3681 = vpop.f32.mrb[0].mxu0
        %3682 = vmatprep.mubr.bf16.mxu0 0
        %3683 = vmatmul.mubr.bf16.gmra.mrb[0].mxu0 %v3500
        %v3684 = vpop.f32.mrb[0].mxu0
        %v3685 = vadd.f32 0.0, %v3684
        %v3686 = vpop.f32.mrb[0].mxu0
        %v3687 = vpop.f32.mrb[0].mxu0
        %v3688 = vadd.f32 0.0, %v3687
        %v3689 = vpop.f32.mrb[0].mxu0
        %3690 = vmatprep.mubr.bf16.mxu0 0
        %3691 = vmatmul.mubr.bf16.gmra.mrb[0].mxu0 %v3501
        %v3692 = vpop.f32.mrb[0].mxu0
        %v3693 = vadd.f32 0.0, %v3692
        %v3694 = vpop.f32.mrb[0].mxu0
        %v3695 = vpop.f32.mrb[0].mxu0
        %v3696 = vadd.f32 0.0, %v3695
        %v3697 = vpop.f32.mrb[0].mxu0
        %3698 = vmatprep.mubr.bf16.mxu0 0
        %3699 = vmatmul.mubr.bf16.gmra.mrb[0].mxu0 %v3502
        %v3700 = vpop.f32.mrb[0].mxu0
        %v3701 = vadd.f32 0.0, %v3700
        %v3702 = vpop.f32.mrb[0].mxu0
        %v3703 = vpop.f32.mrb[0].mxu0
        %v3704 = vadd.f32 0.0, %v3703
        %v3705 = vpop.f32.mrb[0].mxu0
        %3706 = vmatprep.mubr.bf16.mxu0 0
        %3707 = vmatmul.mubr.bf16.gmra.mrb[0].mxu0 %v3503
        %v3708 = vpop.f32.mrb[0].mxu0
        %v3709 = vadd.f32 0.0, %v3708
        %v3710 = vpop.f32.mrb[0].mxu0
        %v3711 = vpop.f32.mrb[0].mxu0
        %v3712 = vadd.f32 0.0, %v3711
        %v3713 = vpop.f32.mrb[0].mxu0
        %3714 = vmatprep.mubr.bf16.mxu0 0
        %3715 = vmatmul.mubr.bf16.gmra.mrb[0].mxu0 %v3504
        %v3716 = vpop.f32.mrb[0].mxu0
        %v3717 = vadd.f32 0.0, %v3716
        %v3718 = vpop.f32.mrb[0].mxu0
        %v3719 = vpop.f32.mrb[0].mxu0
        %v3720 = vadd.f32 0.0, %v3719
        %v3721 = vpop.f32.mrb[0].mxu0
        %3722 = vmatprep.mubr.bf16.mxu0 0
        %3723 = vmatmul.mubr.bf16.gmra.mrb[0].mxu0 %v3505
        %v3724 = vpop.f32.mrb[0].mxu0
        %v3725 = vadd.f32 0.0, %v3724
        %v3726 = vpop.f32.mrb[0].mxu0
        %v3727 = vpop.f32.mrb[0].mxu0
        %v3728 = vadd.f32 0.0, %v3727
        %v3729 = vpop.f32.mrb[0].mxu0
        %3730 = vdwg.mxu0
        %v3731 = vadd.f32 %v2977, %v3605
        %v3732 = vadd.f32 %v2978, %v3608
        %v3733 = vadd.f32 %v2979, %v3613
        %v3734 = vadd.f32 %v2980, %v3616
        %v3735 = vadd.f32 %v2981, %v3621
        %v3736 = vadd.f32 %v2982, %v3624
        %v3737 = vadd.f32 %v2983, %v3629
        %v3738 = vadd.f32 %v2984, %v3632
        %v3739 = vadd.f32 %v2985, %v3637
        %v3740 = vadd.f32 %v2986, %v3640
        %v3741 = vadd.f32 %v2987, %v3645
        %v3742 = vadd.f32 %v2988, %v3648
        %v3743 = vadd.f32 %v2989, %v3653
        %v3744 = vadd.f32 %v2990, %v3656
        %v3745 = vadd.f32 %v2991, %v3661
        %v3746 = vadd.f32 %v2992, %v3664
        %v3747 = vadd.f32 %v2993, %v3669
        %v3748 = vadd.f32 %v2994, %v3672
        %v3749 = vadd.f32 %v2995, %v3677
        %v3750 = vadd.f32 %v2996, %v3680
        %v3751 = vadd.f32 %v2997, %v3685
        %v3752 = vadd.f32 %v2998, %v3688
        %v3753 = vadd.f32 %v2999, %v3693
        %v3754 = vadd.f32 %v3000, %v3696
        %v3755 = vadd.f32 %v3001, %v3701
        %v3756 = vadd.f32 %v3002, %v3704
        %v3757 = vadd.f32 %v3003, %v3709
        %v3758 = vadd.f32 %v3004, %v3712
        %v3759 = vadd.f32 %v3005, %v3717
        %v3760 = vadd.f32 %v3006, %v3720
        %v3761 = vadd.f32 %v3007, %v3725
        %v3762 = vadd.f32 %v3008, %v3728
        %v3763 = vld [vmem:[%s670] sm:$0xe]
        %v3764 = vld [vmem:[%s670 + $0xc] sm:$0xe]
        %v3765 = vld [vmem:[%s670 + $0x18] sm:$0xe]
        %v3766 = vld [vmem:[%s670 + $0x24] sm:$0xe]
        %v3767 = vld [vmem:[%s670 + $0x30] sm:$0xe]
        %v3768 = vld [vmem:[%s670 + $0x3c] sm:$0xe]
        %v3769 = vld [vmem:[%s670 + $0x48] sm:$0xe]
        %v3770 = vld [vmem:[%s670 + $0x54] sm:$0xe]
        %v3771 = vld [vmem:[%s670 + $0x60] sm:$0xe]
        %v3772 = vld [vmem:[%s670 + $0x6c] sm:$0xe]
        %v3773 = vld [vmem:[%s670 + $0x78] sm:$0xe]
        %v3774 = vld [vmem:[%s670 + $0x84] sm:$0xe]
        %v3775 = vld [vmem:[%s670 + $0x90] sm:$0xe]
        %v3776 = vld [vmem:[%s670 + $0x9c] sm:$0xe]
        %v3777 = vld [vmem:[%s670 + $0xa8] sm:$0xe]
        %v3778 = vld [vmem:[%s670 + $0xb4] sm:$0xe]
        %v3827 = vrot.slane %v3763, 5
        %v3828 = vrot.slane %v3827, 4
        %v3829 = vrot.slane %v3010, 5
        %v3830 = vsel %vm2188, %v3828, %v3829
        %v3831 = vrot.slane %v3829, 4
        %v3832 = vrot.slane %v3011, 5
        %v3833 = vsel %vm2188, %v3831, %v3832
        %v3834 = vrot.slane %v3764, 5
        %v3835 = vrot.slane %v3834, 4
        %v3836 = vrot.slane %v3013, 5
        %v3837 = vsel %vm2188, %v3835, %v3836
        %v3838 = vrot.slane %v3836, 4
        %v3839 = vrot.slane %v3014, 5
        %v3840 = vsel %vm2188, %v3838, %v3839
        %v3841 = vrot.slane %v3765, 5
        %v3842 = vrot.slane %v3841, 4
        %v3843 = vrot.slane %v3016, 5
        %v3844 = vsel %vm2188, %v3842, %v3843
        %v3845 = vrot.slane %v3843, 4
        %v3846 = vrot.slane %v3017, 5
        %v3847 = vsel %vm2188, %v3845, %v3846
        %v3848 = vrot.slane %v3766, 5
        %v3849 = vrot.slane %v3848, 4
        %v3850 = vrot.slane %v3019, 5
        %v3851 = vsel %vm2188, %v3849, %v3850
        %v3852 = vrot.slane %v3850, 4
        %v3853 = vrot.slane %v3020, 5
        %v3854 = vsel %vm2188, %v3852, %v3853
        %v3855 = vrot.slane %v3767, 5
        %v3856 = vrot.slane %v3855, 4
        %v3857 = vrot.slane %v3022, 5
        %v3858 = vsel %vm2188, %v3856, %v3857
        %v3859 = vrot.slane %v3857, 4
        %v3860 = vrot.slane %v3023, 5
        %v3861 = vsel %vm2188, %v3859, %v3860
        %v3862 = vrot.slane %v3768, 5
        %v3863 = vrot.slane %v3862, 4
        %v3864 = vrot.slane %v3025, 5
        %v3865 = vsel %vm2188, %v3863, %v3864
        %v3866 = vrot.slane %v3864, 4
        %v3867 = vrot.slane %v3026, 5
        %v3868 = vsel %vm2188, %v3866, %v3867
        %v3869 = vrot.slane %v3769, 5
        %v3870 = vrot.slane %v3869, 4
        %v3871 = vrot.slane %v3028, 5
        %v3872 = vsel %vm2188, %v3870, %v3871
        %v3873 = vrot.slane %v3871, 4
        %v3874 = vrot.slane %v3029, 5
        %v3875 = vsel %vm2188, %v3873, %v3874
        %v3876 = vrot.slane %v3770, 5
        %v3877 = vrot.slane %v3876, 4
        %v3878 = vrot.slane %v3031, 5
        %v3879 = vsel %vm2188, %v3877, %v3878
        %v3880 = vrot.slane %v3878, 4
        %v3881 = vrot.slane %v3032, 5
        %v3882 = vsel %vm2188, %v3880, %v3881
        %v3883 = vrot.slane %v3771, 5
        %v3884 = vrot.slane %v3883, 4
        %v3885 = vrot.slane %v3034, 5
        %v3886 = vsel %vm2188, %v3884, %v3885
        %v3887 = vrot.slane %v3885, 4
        %v3888 = vrot.slane %v3035, 5
        %v3889 = vsel %vm2188, %v3887, %v3888
        %v3890 = vrot.slane %v3772, 5
        %v3891 = vrot.slane %v3890, 4
        %v3892 = vrot.slane %v3037, 5
        %v3893 = vsel %vm2188, %v3891, %v3892
        %v3894 = vrot.slane %v3892, 4
        %v3895 = vrot.slane %v3038, 5
        %v3896 = vsel %vm2188, %v3894, %v3895
        %v3897 = vrot.slane %v3773, 5
        %v3898 = vrot.slane %v3897, 4
        %v3899 = vrot.slane %v3040, 5
        %v3900 = vsel %vm2188, %v3898, %v3899
        %v3901 = vrot.slane %v3899, 4
        %v3902 = vrot.slane %v3041, 5
        %v3903 = vsel %vm2188, %v3901, %v3902
        %v3904 = vrot.slane %v3774, 5
        %v3905 = vrot.slane %v3904, 4
        %v3906 = vrot.slane %v3043, 5
        %v3907 = vsel %vm2188, %v3905, %v3906
        %v3908 = vrot.slane %v3906, 4
        %v3909 = vrot.slane %v3044, 5
        %v3910 = vsel %vm2188, %v3908, %v3909
        %v3911 = vrot.slane %v3775, 5
        %v3912 = vrot.slane %v3911, 4
        %v3913 = vrot.slane %v3046, 5
        %v3914 = vsel %vm2188, %v3912, %v3913
        %v3915 = vrot.slane %v3913, 4
        %v3916 = vrot.slane %v3047, 5
        %v3917 = vsel %vm2188, %v3915, %v3916
        %v3918 = vrot.slane %v3776, 5
        %v3919 = vrot.slane %v3918, 4
        %v3920 = vrot.slane %v3049, 5
        %v3921 = vsel %vm2188, %v3919, %v3920
        %v3922 = vrot.slane %v3920, 4
        %v3923 = vrot.slane %v3050, 5
        %v3924 = vsel %vm2188, %v3922, %v3923
        %v3925 = vrot.slane %v3777, 5
        %v3926 = vrot.slane %v3925, 4
        %v3927 = vrot.slane %v3052, 5
        %v3928 = vsel %vm2188, %v3926, %v3927
        %v3929 = vrot.slane %v3927, 4
        %v3930 = vrot.slane %v3053, 5
        %v3931 = vsel %vm2188, %v3929, %v3930
        %v3932 = vrot.slane %v3778, 5
        %v3933 = vrot.slane %v3932, 4
        %v3934 = vrot.slane %v3055, 5
        %v3935 = vsel %vm2188, %v3933, %v3934
        %v3936 = vrot.slane %v3934, 4
        %v3937 = vrot.slane %v3056, 5
        %v3938 = vsel %vm2188, %v3936, %v3937
        %s3939 = scalar_lea.vmem [#allocation6], 320
        %v3940 = vld [vmem:[%s3939] sm:$0xf]
        %v3941 = vld [vmem:[%s3939 + $0x4] sm:$0xf]
        %v3942 = vld [vmem:[%s3939 + $0x8] sm:$0xf]
        %v3943 = vld [vmem:[%s3939 + $0xc] sm:$0xf]
        %v3944 = vld [vmem:[%s3939 + $0x10] sm:$0xf]
        %v3945 = vld [vmem:[%s3939 + $0x14] sm:$0xf]
        %v3946 = vld [vmem:[%s3939 + $0x18] sm:$0xf]
        %v3947 = vld [vmem:[%s3939 + $0x1c] sm:$0xf]
        %v3948 = vld [vmem:[%s3939 + $0x20] sm:$0xf]
        %v3949 = vld [vmem:[%s3939 + $0x24] sm:$0xf]
        %v3950 = vld [vmem:[%s3939 + $0x28] sm:$0xf]
        %v3951 = vld [vmem:[%s3939 + $0x2c] sm:$0xf]
        %v3952 = vld [vmem:[%s3939 + $0x30] sm:$0xf]
        %v3953 = vld [vmem:[%s3939 + $0x34] sm:$0xf]
        %v3954 = vld [vmem:[%s3939 + $0x38] sm:$0xf]
        %v3955 = vld [vmem:[%s3939 + $0x3c] sm:$0xf]
        %v3956 = vunpack.c.l.b16 %v3830
        %v3957 = vunpack.c.l.b16 %v3833
        %v3958 = vunpack.c.l.b16 %v3837
        %v3959 = vunpack.c.l.b16 %v3840
        %v3960 = vunpack.c.l.b16 %v3844
        %v3961 = vunpack.c.l.b16 %v3847
        %v3962 = vunpack.c.l.b16 %v3851
        %v3963 = vunpack.c.l.b16 %v3854
        %v3964 = vunpack.c.l.b16 %v3858
        %v3965 = vunpack.c.l.b16 %v3861
        %v3966 = vunpack.c.l.b16 %v3865
        %v3967 = vunpack.c.l.b16 %v3868
        %v3968 = vunpack.c.l.b16 %v3872
        %v3969 = vunpack.c.l.b16 %v3875
        %v3970 = vunpack.c.l.b16 %v3879
        %v3971 = vunpack.c.l.b16 %v3882
        %v3972 = vunpack.c.l.b16 %v3886
        %v3973 = vunpack.c.l.b16 %v3889
        %v3974 = vunpack.c.l.b16 %v3893
        %v3975 = vunpack.c.l.b16 %v3896
        %v3976 = vunpack.c.l.b16 %v3900
        %v3977 = vunpack.c.l.b16 %v3903
        %v3978 = vunpack.c.l.b16 %v3907
        %v3979 = vunpack.c.l.b16 %v3910
        %v3980 = vunpack.c.l.b16 %v3914
        %v3981 = vunpack.c.l.b16 %v3917
        %v3982 = vunpack.c.l.b16 %v3921
        %v3983 = vunpack.c.l.b16 %v3924
        %v3984 = vunpack.c.l.b16 %v3928
        %v3985 = vunpack.c.l.b16 %v3931
        %v3986 = vunpack.c.l.b16 %v3935
        %v3987 = vunpack.c.l.b16 %v3938
        %v3988 = vpack.c.b16 %v3957, %v3956
        %v3989 = vpack.c.b16 %v3959, %v3958
        %v3990 = vpack.c.b16 %v3961, %v3960
        %v3991 = vpack.c.b16 %v3963, %v3962
        %v3992 = vpack.c.b16 %v3965, %v3964
        %v3993 = vpack.c.b16 %v3967, %v3966
        %v3994 = vpack.c.b16 %v3969, %v3968
        %v3995 = vpack.c.b16 %v3971, %v3970
        %v3996 = vpack.c.b16 %v3973, %v3972
        %v3997 = vpack.c.b16 %v3975, %v3974
        %v3998 = vpack.c.b16 %v3977, %v3976
        %v3999 = vpack.c.b16 %v3979, %v3978
        %v4000 = vpack.c.b16 %v3981, %v3980
        %v4001 = vpack.c.b16 %v3983, %v3982
        %v4002 = vpack.c.b16 %v3985, %v3984
        %v4003 = vpack.c.b16 %v3987, %v3986
        %v4036 = vunpack.c.l.b16 %v3940
        %v4037 = vunpack.c.l.b16 %v3941
        %v4038 = vunpack.c.l.b16 %v3942
        %v4039 = vunpack.c.l.b16 %v3943
        %v4040 = vunpack.c.l.b16 %v3944
        %v4041 = vunpack.c.l.b16 %v3945
        %v4042 = vunpack.c.l.b16 %v3946
        %v4043 = vunpack.c.l.b16 %v3947
        %v4044 = vunpack.c.l.b16 %v3948
        %v4045 = vunpack.c.l.b16 %v3949
        %v4046 = vunpack.c.l.b16 %v3950
        %v4047 = vunpack.c.l.b16 %v3951
        %v4048 = vunpack.c.l.b16 %v3952
        %v4049 = vunpack.c.l.b16 %v3953
        %v4050 = vunpack.c.l.b16 %v3954
        %v4051 = vunpack.c.l.b16 %v3955
        %v4052 = vpack.c.b16 %v4037, %v4036
        %v4053 = vpack.c.b16 %v4039, %v4038
        %v4054 = vpack.c.b16 %v4041, %v4040
        %v4055 = vpack.c.b16 %v4043, %v4042
        %v4056 = vpack.c.b16 %v4045, %v4044
        %v4057 = vpack.c.b16 %v4047, %v4046
        %v4058 = vpack.c.b16 %v4049, %v4048
        %v4059 = vpack.c.b16 %v4051, %v4050
        %4068 = vmatprep.subr.bf16.mxu0 0
        %4069 = vmatpush1.bf16.msra.mxu0 %v4052
        %4070 = vmatprep.subr.bf16.mxu0 0
        %4071 = vmatpush1.bf16.msra.mxu0 %v4053
        %4072 = vmatprep.subr.bf16.mxu0 0
        %4073 = vmatpush1.bf16.msra.mxu0 %v4054
        %4074 = vmatprep.subr.bf16.mxu0 0
        %4075 = vmatpush1.bf16.msra.mxu0 %v4055
        %4076 = vmatprep.subr.bf16.mxu0 0
        %4077 = vmatpush1.bf16.msra.mxu0 %v4056
        %4078 = vmatprep.subr.bf16.mxu0 0
        %4079 = vmatpush1.bf16.msra.mxu0 %v4057
        %4080 = vmatprep.subr.bf16.mxu0 0
        %4081 = vmatpush1.bf16.msra.mxu0 %v4058
        %4082 = vmatprep.subr.bf16.mxu0 0
        %4083 = vmatpush1.bf16.msra.mxu0 %v4059
        %4084 = vmatprep.subr.bf16.mxu0 0
        %4085 = vmatpush1.bf16.msra.mxu0 0
        %4086 = vmatprep.subr.bf16.mxu0 0
        %4087 = vmatpush1.bf16.msra.mxu0 0
        %4088 = vmatprep.subr.bf16.mxu0 0
        %4089 = vmatpush1.bf16.msra.mxu0 0
        %4090 = vmatprep.subr.bf16.mxu0 0
        %4091 = vmatpush1.bf16.msra.mxu0 0
        %4092 = vmatprep.subr.bf16.mxu0 0
        %4093 = vmatpush1.bf16.msra.mxu0 0
        %4094 = vmatprep.subr.bf16.mxu0 0
        %4095 = vmatpush1.bf16.msra.mxu0 0
        %4096 = vmatprep.subr.bf16.mxu0 0
        %4097 = vmatpush1.bf16.msra.mxu0 0
        %4098 = vmatprep.subr.bf16.mxu0 0
        %4099 = vmatpush1.bf16.msra.mxu0 0
        %4100 = vmatprep.mubr.bf16.mxu0 0
        %4101 = vmatmul.mubr.bf16.gmra.mrb[0].mxu0 %v3988
        %v4102 = vpop.f32.mrb[0].mxu0
        %v4103 = vadd.f32 0.0, %v4102
        %v4104 = vpop.f32.mrb[0].mxu0
        %v4105 = vpop.f32.mrb[0].mxu0
        %v4106 = vadd.f32 0.0, %v4105
        %v4107 = vpop.f32.mrb[0].mxu0
        %4108 = vmatprep.mubr.bf16.mxu0 0
        %4109 = vmatmul.mubr.bf16.gmra.mrb[0].mxu0 %v3989
        %v4110 = vpop.f32.mrb[0].mxu0
        %v4111 = vadd.f32 0.0, %v4110
        %v4112 = vpop.f32.mrb[0].mxu0
        %v4113 = vpop.f32.mrb[0].mxu0
        %v4114 = vadd.f32 0.0, %v4113
        %v4115 = vpop.f32.mrb[0].mxu0
        %4116 = vmatprep.mubr.bf16.mxu0 0
        %4117 = vmatmul.mubr.bf16.gmra.mrb[0].mxu0 %v3990
        %v4118 = vpop.f32.mrb[0].mxu0
        %v4119 = vadd.f32 0.0, %v4118
        %v4120 = vpop.f32.mrb[0].mxu0
        %v4121 = vpop.f32.mrb[0].mxu0
        %v4122 = vadd.f32 0.0, %v4121
        %v4123 = vpop.f32.mrb[0].mxu0
        %4124 = vmatprep.mubr.bf16.mxu0 0
        %4125 = vmatmul.mubr.bf16.gmra.mrb[0].mxu0 %v3991
        %v4126 = vpop.f32.mrb[0].mxu0
        %v4127 = vadd.f32 0.0, %v4126
        %v4128 = vpop.f32.mrb[0].mxu0
        %v4129 = vpop.f32.mrb[0].mxu0
        %v4130 = vadd.f32 0.0, %v4129
        %v4131 = vpop.f32.mrb[0].mxu0
        %4132 = vmatprep.mubr.bf16.mxu0 0
        %4133 = vmatmul.mubr.bf16.gmra.mrb[0].mxu0 %v3992
        %v4134 = vpop.f32.mrb[0].mxu0
        %v4135 = vadd.f32 0.0, %v4134
        %v4136 = vpop.f32.mrb[0].mxu0
        %v4137 = vpop.f32.mrb[0].mxu0
        %v4138 = vadd.f32 0.0, %v4137
        %v4139 = vpop.f32.mrb[0].mxu0
        %4140 = vmatprep.mubr.bf16.mxu0 0
        %4141 = vmatmul.mubr.bf16.gmra.mrb[0].mxu0 %v3993
        %v4142 = vpop.f32.mrb[0].mxu0
        %v4143 = vadd.f32 0.0, %v4142
        %v4144 = vpop.f32.mrb[0].mxu0
        %v4145 = vpop.f32.mrb[0].mxu0
        %v4146 = vadd.f32 0.0, %v4145
        %v4147 = vpop.f32.mrb[0].mxu0
        %4148 = vmatprep.mubr.bf16.mxu0 0
        %4149 = vmatmul.mubr.bf16.gmra.mrb[0].mxu0 %v3994
        %v4150 = vpop.f32.mrb[0].mxu0
        %v4151 = vadd.f32 0.0, %v4150
        %v4152 = vpop.f32.mrb[0].mxu0
        %v4153 = vpop.f32.mrb[0].mxu0
        %v4154 = vadd.f32 0.0, %v4153
        %v4155 = vpop.f32.mrb[0].mxu0
        %4156 = vmatprep.mubr.bf16.mxu0 0
        %4157 = vmatmul.mubr.bf16.gmra.mrb[0].mxu0 %v3995
        %v4158 = vpop.f32.mrb[0].mxu0
        %v4159 = vadd.f32 0.0, %v4158
        %v4160 = vpop.f32.mrb[0].mxu0
        %v4161 = vpop.f32.mrb[0].mxu0
        %v4162 = vadd.f32 0.0, %v4161
        %v4163 = vpop.f32.mrb[0].mxu0
        %4164 = vmatprep.mubr.bf16.mxu0 0
        %4165 = vmatmul.mubr.bf16.gmra.mrb[0].mxu0 %v3996
        %v4166 = vpop.f32.mrb[0].mxu0
        %v4167 = vadd.f32 0.0, %v4166
        %v4168 = vpop.f32.mrb[0].mxu0
        %v4169 = vpop.f32.mrb[0].mxu0
        %v4170 = vadd.f32 0.0, %v4169
        %v4171 = vpop.f32.mrb[0].mxu0
        %4172 = vmatprep.mubr.bf16.mxu0 0
        %4173 = vmatmul.mubr.bf16.gmra.mrb[0].mxu0 %v3997
        %v4174 = vpop.f32.mrb[0].mxu0
        %v4175 = vadd.f32 0.0, %v4174
        %v4176 = vpop.f32.mrb[0].mxu0
        %v4177 = vpop.f32.mrb[0].mxu0
        %v4178 = vadd.f32 0.0, %v4177
        %v4179 = vpop.f32.mrb[0].mxu0
        %4180 = vmatprep.mubr.bf16.mxu0 0
        %4181 = vmatmul.mubr.bf16.gmra.mrb[0].mxu0 %v3998
        %v4182 = vpop.f32.mrb[0].mxu0
        %v4183 = vadd.f32 0.0, %v4182
        %v4184 = vpop.f32.mrb[0].mxu0
        %v4185 = vpop.f32.mrb[0].mxu0
        %v4186 = vadd.f32 0.0, %v4185
        %v4187 = vpop.f32.mrb[0].mxu0
        %4188 = vmatprep.mubr.bf16.mxu0 0
        %4189 = vmatmul.mubr.bf16.gmra.mrb[0].mxu0 %v3999
        %v4190 = vpop.f32.mrb[0].mxu0
        %v4191 = vadd.f32 0.0, %v4190
        %v4192 = vpop.f32.mrb[0].mxu0
        %v4193 = vpop.f32.mrb[0].mxu0
        %v4194 = vadd.f32 0.0, %v4193
        %v4195 = vpop.f32.mrb[0].mxu0
        %4196 = vmatprep.mubr.bf16.mxu0 0
        %4197 = vmatmul.mubr.bf16.gmra.mrb[0].mxu0 %v4000
        %v4198 = vpop.f32.mrb[0].mxu0
        %v4199 = vadd.f32 0.0, %v4198
        %v4200 = vpop.f32.mrb[0].mxu0
        %v4201 = vpop.f32.mrb[0].mxu0
        %v4202 = vadd.f32 0.0, %v4201
        %v4203 = vpop.f32.mrb[0].mxu0
        %4204 = vmatprep.mubr.bf16.mxu0 0
        %4205 = vmatmul.mubr.bf16.gmra.mrb[0].mxu0 %v4001
        %v4206 = vpop.f32.mrb[0].mxu0
        %v4207 = vadd.f32 0.0, %v4206
        %v4208 = vpop.f32.mrb[0].mxu0
        %v4209 = vpop.f32.mrb[0].mxu0
        %v4210 = vadd.f32 0.0, %v4209
        %v4211 = vpop.f32.mrb[0].mxu0
        %4212 = vmatprep.mubr.bf16.mxu0 0
        %4213 = vmatmul.mubr.bf16.gmra.mrb[0].mxu0 %v4002
        %v4214 = vpop.f32.mrb[0].mxu0
        %v4215 = vadd.f32 0.0, %v4214
        %v4216 = vpop.f32.mrb[0].mxu0
        %v4217 = vpop.f32.mrb[0].mxu0
        %v4218 = vadd.f32 0.0, %v4217
        %v4219 = vpop.f32.mrb[0].mxu0
        %4220 = vmatprep.mubr.bf16.mxu0 0
        %4221 = vmatmul.mubr.bf16.gmra.mrb[0].mxu0 %v4003
        %v4222 = vpop.f32.mrb[0].mxu0
        %v4223 = vadd.f32 0.0, %v4222
        %v4224 = vpop.f32.mrb[0].mxu0
        %v4225 = vpop.f32.mrb[0].mxu0
        %v4226 = vadd.f32 0.0, %v4225
        %v4227 = vpop.f32.mrb[0].mxu0
        %4228 = vdwg.mxu0
        %v4229 = vadd.f32 %v3731, %v4103
        %v4230 = vadd.f32 %v3732, %v4106
        %v4231 = vadd.f32 %v3733, %v4111
        %v4232 = vadd.f32 %v3734, %v4114
        %v4233 = vadd.f32 %v3735, %v4119
        %v4234 = vadd.f32 %v3736, %v4122
        %v4235 = vadd.f32 %v3737, %v4127
        %v4236 = vadd.f32 %v3738, %v4130
        %v4237 = vadd.f32 %v3739, %v4135
        %v4238 = vadd.f32 %v3740, %v4138
        %v4239 = vadd.f32 %v3741, %v4143
        %v4240 = vadd.f32 %v3742, %v4146
        %v4241 = vadd.f32 %v3743, %v4151
        %v4242 = vadd.f32 %v3744, %v4154
        %v4243 = vadd.f32 %v3745, %v4159
        %v4244 = vadd.f32 %v3746, %v4162
        %v4245 = vadd.f32 %v3747, %v4167
        %v4246 = vadd.f32 %v3748, %v4170
        %v4247 = vadd.f32 %v3749, %v4175
        %v4248 = vadd.f32 %v3750, %v4178
        %v4249 = vadd.f32 %v3751, %v4183
        %v4250 = vadd.f32 %v3752, %v4186
        %v4251 = vadd.f32 %v3753, %v4191
        %v4252 = vadd.f32 %v3754, %v4194
        %v4253 = vadd.f32 %v3755, %v4199
        %v4254 = vadd.f32 %v3756, %v4202
        %v4255 = vadd.f32 %v3757, %v4207
        %v4256 = vadd.f32 %v3758, %v4210
        %v4257 = vadd.f32 %v3759, %v4215
        %v4258 = vadd.f32 %v3760, %v4218
        %v4259 = vadd.f32 %v3761, %v4223
        %v4260 = vadd.f32 %v3762, %v4226
        %s4261 = scalar_lea.vmem [#allocation2], 24
        %v4262 = vld [vmem:[%s4261] sm:$0xf]
        %v4263 = vld [vmem:[%s4261 + $0x4] sm:$0xf]
        %v4264 = vld [vmem:[%s4261 + $0xc] sm:$0xf]
        %v4265 = vld [vmem:[%s4261 + $0x10] sm:$0xf]
        %v4266 = vld [vmem:[%s4261 + $0x18] sm:$0xf]
        %v4267 = vld [vmem:[%s4261 + $0x1c] sm:$0xf]
        %v4268 = vld [vmem:[%s4261 + $0x24] sm:$0xf]
        %v4269 = vld [vmem:[%s4261 + $0x28] sm:$0xf]
        %v4270 = vld [vmem:[%s4261 + $0x30] sm:$0xf]
        %v4271 = vld [vmem:[%s4261 + $0x34] sm:$0xf]
        %v4272 = vld [vmem:[%s4261 + $0x3c] sm:$0xf]
        %v4273 = vld [vmem:[%s4261 + $0x40] sm:$0xf]
        %v4274 = vld [vmem:[%s4261 + $0x48] sm:$0xf]
        %v4275 = vld [vmem:[%s4261 + $0x4c] sm:$0xf]
        %v4276 = vld [vmem:[%s4261 + $0x54] sm:$0xf]
        %v4277 = vld [vmem:[%s4261 + $0x58] sm:$0xf]
        %v4278 = vld [vmem:[%s4261 + $0x60] sm:$0xf]
        %v4279 = vld [vmem:[%s4261 + $0x64] sm:$0xf]
        %v4280 = vld [vmem:[%s4261 + $0x6c] sm:$0xf]
        %v4281 = vld [vmem:[%s4261 + $0x70] sm:$0xf]
        %v4282 = vld [vmem:[%s4261 + $0x78] sm:$0xf]
        %v4283 = vld [vmem:[%s4261 + $0x7c] sm:$0xf]
        %v4284 = vld [vmem:[%s4261 + $0x84] sm:$0xf]
        %v4285 = vld [vmem:[%s4261 + $0x88] sm:$0xf]
        %v4286 = vld [vmem:[%s4261 + $0x90] sm:$0xf]
        %v4287 = vld [vmem:[%s4261 + $0x94] sm:$0xf]
        %v4288 = vld [vmem:[%s4261 + $0x9c] sm:$0xf]
        %v4289 = vld [vmem:[%s4261 + $0xa0] sm:$0xf]
        %v4290 = vld [vmem:[%s4261 + $0xa8] sm:$0xf]
        %v4291 = vld [vmem:[%s4261 + $0xac] sm:$0xf]
        %v4292 = vld [vmem:[%s4261 + $0xb4] sm:$0xf]
        %v4293 = vld [vmem:[%s4261 + $0xb8] sm:$0xf]
        %s4294 = scalar_lea.vmem [#allocation6], 384
        %v4295 = vld [vmem:[%s4294] sm:$0xf]
        %v4296 = vld [vmem:[%s4294 + $0x4] sm:$0xf]
        %v4297 = vld [vmem:[%s4294 + $0x8] sm:$0xf]
        %v4298 = vld [vmem:[%s4294 + $0xc] sm:$0xf]
        %v4299 = vld [vmem:[%s4294 + $0x10] sm:$0xf]
        %v4300 = vld [vmem:[%s4294 + $0x14] sm:$0xf]
        %v4301 = vld [vmem:[%s4294 + $0x18] sm:$0xf]
        %v4302 = vld [vmem:[%s4294 + $0x1c] sm:$0xf]
        %v4303 = vld [vmem:[%s4294 + $0x20] sm:$0xf]
        %v4304 = vld [vmem:[%s4294 + $0x24] sm:$0xf]
        %v4305 = vld [vmem:[%s4294 + $0x28] sm:$0xf]
        %v4306 = vld [vmem:[%s4294 + $0x2c] sm:$0xf]
        %v4307 = vld [vmem:[%s4294 + $0x30] sm:$0xf]
        %v4308 = vld [vmem:[%s4294 + $0x34] sm:$0xf]
        %v4309 = vld [vmem:[%s4294 + $0x38] sm:$0xf]
        %v4310 = vld [vmem:[%s4294 + $0x3c] sm:$0xf]
        %v4343 = vunpack.c.l.b16 %v4262
        %v4344 = vunpack.c.l.b16 %v4263
        %v4345 = vunpack.c.l.b16 %v4264
        %v4346 = vunpack.c.l.b16 %v4265
        %v4347 = vunpack.c.l.b16 %v4266
        %v4348 = vunpack.c.l.b16 %v4267
        %v4349 = vunpack.c.l.b16 %v4268
        %v4350 = vunpack.c.l.b16 %v4269
        %v4351 = vunpack.c.l.b16 %v4270
        %v4352 = vunpack.c.l.b16 %v4271
        %v4353 = vunpack.c.l.b16 %v4272
        %v4354 = vunpack.c.l.b16 %v4273
        %v4355 = vunpack.c.l.b16 %v4274
        %v4356 = vunpack.c.l.b16 %v4275
        %v4357 = vunpack.c.l.b16 %v4276
        %v4358 = vunpack.c.l.b16 %v4277
        %v4359 = vunpack.c.l.b16 %v4278
        %v4360 = vunpack.c.l.b16 %v4279
        %v4361 = vunpack.c.l.b16 %v4280
        %v4362 = vunpack.c.l.b16 %v4281
        %v4363 = vunpack.c.l.b16 %v4282
        %v4364 = vunpack.c.l.b16 %v4283
        %v4365 = vunpack.c.l.b16 %v4284
        %v4366 = vunpack.c.l.b16 %v4285
        %v4367 = vunpack.c.l.b16 %v4286
        %v4368 = vunpack.c.l.b16 %v4287
        %v4369 = vunpack.c.l.b16 %v4288
        %v4370 = vunpack.c.l.b16 %v4289
        %v4371 = vunpack.c.l.b16 %v4290
        %v4372 = vunpack.c.l.b16 %v4291
        %v4373 = vunpack.c.l.b16 %v4292
        %v4374 = vunpack.c.l.b16 %v4293
        %v4375 = vpack.c.b16 %v4344, %v4343
        %v4376 = vpack.c.b16 %v4346, %v4345
        %v4377 = vpack.c.b16 %v4348, %v4347
        %v4378 = vpack.c.b16 %v4350, %v4349
        %v4379 = vpack.c.b16 %v4352, %v4351
        %v4380 = vpack.c.b16 %v4354, %v4353
        %v4381 = vpack.c.b16 %v4356, %v4355
        %v4382 = vpack.c.b16 %v4358, %v4357
        %v4383 = vpack.c.b16 %v4360, %v4359
        %v4384 = vpack.c.b16 %v4362, %v4361
        %v4385 = vpack.c.b16 %v4364, %v4363
        %v4386 = vpack.c.b16 %v4366, %v4365
        %v4387 = vpack.c.b16 %v4368, %v4367
        %v4388 = vpack.c.b16 %v4370, %v4369
        %v4389 = vpack.c.b16 %v4372, %v4371
        %v4390 = vpack.c.b16 %v4374, %v4373
        %v4423 = vunpack.c.l.b16 %v4295
        %v4424 = vunpack.c.l.b16 %v4296
        %v4425 = vunpack.c.l.b16 %v4297
        %v4426 = vunpack.c.l.b16 %v4298
        %v4427 = vunpack.c.l.b16 %v4299
        %v4428 = vunpack.c.l.b16 %v4300
        %v4429 = vunpack.c.l.b16 %v4301
        %v4430 = vunpack.c.l.b16 %v4302
        %v4431 = vunpack.c.l.b16 %v4303
        %v4432 = vunpack.c.l.b16 %v4304
        %v4433 = vunpack.c.l.b16 %v4305
        %v4434 = vunpack.c.l.b16 %v4306
        %v4435 = vunpack.c.l.b16 %v4307
        %v4436 = vunpack.c.l.b16 %v4308
        %v4437 = vunpack.c.l.b16 %v4309
        %v4438 = vunpack.c.l.b16 %v4310
        %v4439 = vpack.c.b16 %v4424, %v4423
        %v4440 = vpack.c.b16 %v4426, %v4425
        %v4441 = vpack.c.b16 %v4428, %v4427
        %v4442 = vpack.c.b16 %v4430, %v4429
        %v4443 = vpack.c.b16 %v4432, %v4431
        %v4444 = vpack.c.b16 %v4434, %v4433
        %v4445 = vpack.c.b16 %v4436, %v4435
        %v4446 = vpack.c.b16 %v4438, %v4437
        %4455 = vmatprep.subr.bf16.mxu0 0
        %4456 = vmatpush1.bf16.msra.mxu0 %v4439
        %4457 = vmatprep.subr.bf16.mxu0 0
        %4458 = vmatpush1.bf16.msra.mxu0 %v4440
        %4459 = vmatprep.subr.bf16.mxu0 0
        %4460 = vmatpush1.bf16.msra.mxu0 %v4441
        %4461 = vmatprep.subr.bf16.mxu0 0
        %4462 = vmatpush1.bf16.msra.mxu0 %v4442
        %4463 = vmatprep.subr.bf16.mxu0 0
        %4464 = vmatpush1.bf16.msra.mxu0 %v4443
        %4465 = vmatprep.subr.bf16.mxu0 0
        %4466 = vmatpush1.bf16.msra.mxu0 %v4444
        %4467 = vmatprep.subr.bf16.mxu0 0
        %4468 = vmatpush1.bf16.msra.mxu0 %v4445
        %4469 = vmatprep.subr.bf16.mxu0 0
        %4470 = vmatpush1.bf16.msra.mxu0 %v4446
        %4471 = vmatprep.subr.bf16.mxu0 0
        %4472 = vmatpush1.bf16.msra.mxu0 0
        %4473 = vmatprep.subr.bf16.mxu0 0
        %4474 = vmatpush1.bf16.msra.mxu0 0
        %4475 = vmatprep.subr.bf16.mxu0 0
        %4476 = vmatpush1.bf16.msra.mxu0 0
        %4477 = vmatprep.subr.bf16.mxu0 0
        %4478 = vmatpush1.bf16.msra.mxu0 0
        %4479 = vmatprep.subr.bf16.mxu0 0
        %4480 = vmatpush1.bf16.msra.mxu0 0
        %4481 = vmatprep.subr.bf16.mxu0 0
        %4482 = vmatpush1.bf16.msra.mxu0 0
        %4483 = vmatprep.subr.bf16.mxu0 0
        %4484 = vmatpush1.bf16.msra.mxu0 0
        %4485 = vmatprep.subr.bf16.mxu0 0
        %4486 = vmatpush1.bf16.msra.mxu0 0
        %4487 = vmatprep.mubr.bf16.mxu0 0
        %4488 = vmatmul.mubr.bf16.gmra.mrb[0].mxu0 %v4375
        %v4489 = vpop.f32.mrb[0].mxu0
        %v4490 = vadd.f32 0.0, %v4489
        %v4491 = vpop.f32.mrb[0].mxu0
        %v4492 = vpop.f32.mrb[0].mxu0
        %v4493 = vadd.f32 0.0, %v4492
        %v4494 = vpop.f32.mrb[0].mxu0
        %4495 = vmatprep.mubr.bf16.mxu0 0
        %4496 = vmatmul.mubr.bf16.gmra.mrb[0].mxu0 %v4376
        %v4497 = vpop.f32.mrb[0].mxu0
        %v4498 = vadd.f32 0.0, %v4497
        %v4499 = vpop.f32.mrb[0].mxu0
        %v4500 = vpop.f32.mrb[0].mxu0
        %v4501 = vadd.f32 0.0, %v4500
        %v4502 = vpop.f32.mrb[0].mxu0
        %4503 = vmatprep.mubr.bf16.mxu0 0
        %4504 = vmatmul.mubr.bf16.gmra.mrb[0].mxu0 %v4377
        %v4505 = vpop.f32.mrb[0].mxu0
        %v4506 = vadd.f32 0.0, %v4505
        %v4507 = vpop.f32.mrb[0].mxu0
        %v4508 = vpop.f32.mrb[0].mxu0
        %v4509 = vadd.f32 0.0, %v4508
        %v4510 = vpop.f32.mrb[0].mxu0
        %4511 = vmatprep.mubr.bf16.mxu0 0
        %4512 = vmatmul.mubr.bf16.gmra.mrb[0].mxu0 %v4378
        %v4513 = vpop.f32.mrb[0].mxu0
        %v4514 = vadd.f32 0.0, %v4513
        %v4515 = vpop.f32.mrb[0].mxu0
        %v4516 = vpop.f32.mrb[0].mxu0
        %v4517 = vadd.f32 0.0, %v4516
        %v4518 = vpop.f32.mrb[0].mxu0
        %4519 = vmatprep.mubr.bf16.mxu0 0
        %4520 = vmatmul.mubr.bf16.gmra.mrb[0].mxu0 %v4379
        %v4521 = vpop.f32.mrb[0].mxu0
        %v4522 = vadd.f32 0.0, %v4521
        %v4523 = vpop.f32.mrb[0].mxu0
        %v4524 = vpop.f32.mrb[0].mxu0
        %v4525 = vadd.f32 0.0, %v4524
        %v4526 = vpop.f32.mrb[0].mxu0
        %4527 = vmatprep.mubr.bf16.mxu0 0
        %4528 = vmatmul.mubr.bf16.gmra.mrb[0].mxu0 %v4380
        %v4529 = vpop.f32.mrb[0].mxu0
        %v4530 = vadd.f32 0.0, %v4529
        %v4531 = vpop.f32.mrb[0].mxu0
        %v4532 = vpop.f32.mrb[0].mxu0
        %v4533 = vadd.f32 0.0, %v4532
        %v4534 = vpop.f32.mrb[0].mxu0
        %4535 = vmatprep.mubr.bf16.mxu0 0
        %4536 = vmatmul.mubr.bf16.gmra.mrb[0].mxu0 %v4381
        %v4537 = vpop.f32.mrb[0].mxu0
        %v4538 = vadd.f32 0.0, %v4537
        %v4539 = vpop.f32.mrb[0].mxu0
        %v4540 = vpop.f32.mrb[0].mxu0
        %v4541 = vadd.f32 0.0, %v4540
        %v4542 = vpop.f32.mrb[0].mxu0
        %4543 = vmatprep.mubr.bf16.mxu0 0
        %4544 = vmatmul.mubr.bf16.gmra.mrb[0].mxu0 %v4382
        %v4545 = vpop.f32.mrb[0].mxu0
        %v4546 = vadd.f32 0.0, %v4545
        %v4547 = vpop.f32.mrb[0].mxu0
        %v4548 = vpop.f32.mrb[0].mxu0
        %v4549 = vadd.f32 0.0, %v4548
        %v4550 = vpop.f32.mrb[0].mxu0
        %4551 = vmatprep.mubr.bf16.mxu0 0
        %4552 = vmatmul.mubr.bf16.gmra.mrb[0].mxu0 %v4383
        %v4553 = vpop.f32.mrb[0].mxu0
        %v4554 = vadd.f32 0.0, %v4553
        %v4555 = vpop.f32.mrb[0].mxu0
        %v4556 = vpop.f32.mrb[0].mxu0
        %v4557 = vadd.f32 0.0, %v4556
        %v4558 = vpop.f32.mrb[0].mxu0
        %4559 = vmatprep.mubr.bf16.mxu0 0
        %4560 = vmatmul.mubr.bf16.gmra.mrb[0].mxu0 %v4384
        %v4561 = vpop.f32.mrb[0].mxu0
        %v4562 = vadd.f32 0.0, %v4561
        %v4563 = vpop.f32.mrb[0].mxu0
        %v4564 = vpop.f32.mrb[0].mxu0
        %v4565 = vadd.f32 0.0, %v4564
        %v4566 = vpop.f32.mrb[0].mxu0
        %4567 = vmatprep.mubr.bf16.mxu0 0
        %4568 = vmatmul.mubr.bf16.gmra.mrb[0].mxu0 %v4385
        %v4569 = vpop.f32.mrb[0].mxu0
        %v4570 = vadd.f32 0.0, %v4569
        %v4571 = vpop.f32.mrb[0].mxu0
        %v4572 = vpop.f32.mrb[0].mxu0
        %v4573 = vadd.f32 0.0, %v4572
        %v4574 = vpop.f32.mrb[0].mxu0
        %4575 = vmatprep.mubr.bf16.mxu0 0
        %4576 = vmatmul.mubr.bf16.gmra.mrb[0].mxu0 %v4386
        %v4577 = vpop.f32.mrb[0].mxu0
        %v4578 = vadd.f32 0.0, %v4577
        %v4579 = vpop.f32.mrb[0].mxu0
        %v4580 = vpop.f32.mrb[0].mxu0
        %v4581 = vadd.f32 0.0, %v4580
        %v4582 = vpop.f32.mrb[0].mxu0
        %4583 = vmatprep.mubr.bf16.mxu0 0
        %4584 = vmatmul.mubr.bf16.gmra.mrb[0].mxu0 %v4387
        %v4585 = vpop.f32.mrb[0].mxu0
        %v4586 = vadd.f32 0.0, %v4585
        %v4587 = vpop.f32.mrb[0].mxu0
        %v4588 = vpop.f32.mrb[0].mxu0
        %v4589 = vadd.f32 0.0, %v4588
        %v4590 = vpop.f32.mrb[0].mxu0
        %4591 = vmatprep.mubr.bf16.mxu0 0
        %4592 = vmatmul.mubr.bf16.gmra.mrb[0].mxu0 %v4388
        %v4593 = vpop.f32.mrb[0].mxu0
        %v4594 = vadd.f32 0.0, %v4593
        %v4595 = vpop.f32.mrb[0].mxu0
        %v4596 = vpop.f32.mrb[0].mxu0
        %v4597 = vadd.f32 0.0, %v4596
        %v4598 = vpop.f32.mrb[0].mxu0
        %4599 = vmatprep.mubr.bf16.mxu0 0
        %4600 = vmatmul.mubr.bf16.gmra.mrb[0].mxu0 %v4389
        %v4601 = vpop.f32.mrb[0].mxu0
        %v4602 = vadd.f32 0.0, %v4601
        %v4603 = vpop.f32.mrb[0].mxu0
        %v4604 = vpop.f32.mrb[0].mxu0
        %v4605 = vadd.f32 0.0, %v4604
        %v4606 = vpop.f32.mrb[0].mxu0
        %4607 = vmatprep.mubr.bf16.mxu0 0
        %4608 = vmatmul.mubr.bf16.gmra.mrb[0].mxu0 %v4390
        %v4609 = vpop.f32.mrb[0].mxu0
        %v4610 = vadd.f32 0.0, %v4609
        %v4611 = vpop.f32.mrb[0].mxu0
        %v4612 = vpop.f32.mrb[0].mxu0
        %v4613 = vadd.f32 0.0, %v4612
        %v4614 = vpop.f32.mrb[0].mxu0
        %4615 = vdwg.mxu0
        %v4616 = vadd.f32 %v4229, %v4490
        %v4617 = vadd.f32 %v4230, %v4493
        %v4618 = vadd.f32 %v4231, %v4498
        %v4619 = vadd.f32 %v4232, %v4501
        %v4620 = vadd.f32 %v4233, %v4506
        %v4621 = vadd.f32 %v4234, %v4509
        %v4622 = vadd.f32 %v4235, %v4514
        %v4623 = vadd.f32 %v4236, %v4517
        %v4624 = vadd.f32 %v4237, %v4522
        %v4625 = vadd.f32 %v4238, %v4525
        %v4626 = vadd.f32 %v4239, %v4530
        %v4627 = vadd.f32 %v4240, %v4533
        %v4628 = vadd.f32 %v4241, %v4538
        %v4629 = vadd.f32 %v4242, %v4541
        %v4630 = vadd.f32 %v4243, %v4546
        %v4631 = vadd.f32 %v4244, %v4549
        %v4632 = vadd.f32 %v4245, %v4554
        %v4633 = vadd.f32 %v4246, %v4557
        %v4634 = vadd.f32 %v4247, %v4562
        %v4635 = vadd.f32 %v4248, %v4565
        %v4636 = vadd.f32 %v4249, %v4570
        %v4637 = vadd.f32 %v4250, %v4573
        %v4638 = vadd.f32 %v4251, %v4578
        %v4639 = vadd.f32 %v4252, %v4581
        %v4640 = vadd.f32 %v4253, %v4586
        %v4641 = vadd.f32 %v4254, %v4589
        %v4642 = vadd.f32 %v4255, %v4594
        %v4643 = vadd.f32 %v4256, %v4597
        %v4644 = vadd.f32 %v4257, %v4602
        %v4645 = vadd.f32 %v4258, %v4605
        %v4646 = vadd.f32 %v4259, %v4610
        %v4647 = vadd.f32 %v4260, %v4613
        %v4648 = vld [vmem:[%s4261] sm:$0xf]
        %v4649 = vld [vmem:[%s4261 + $0x4] sm:$0xf]
        %v4650 = vld [vmem:[%s4261 + $0x8] sm:$0x1]
        %v4651 = vld [vmem:[%s4261 + $0xc] sm:$0xf]
        %v4652 = vld [vmem:[%s4261 + $0x10] sm:$0xf]
        %v4653 = vld [vmem:[%s4261 + $0x14] sm:$0x1]
        %v4654 = vld [vmem:[%s4261 + $0x18] sm:$0xf]
        %v4655 = vld [vmem:[%s4261 + $0x1c] sm:$0xf]
        %v4656 = vld [vmem:[%s4261 + $0x20] sm:$0x1]
        %v4657 = vld [vmem:[%s4261 + $0x24] sm:$0xf]
        %v4658 = vld [vmem:[%s4261 + $0x28] sm:$0xf]
        %v4659 = vld [vmem:[%s4261 + $0x2c] sm:$0x1]
        %v4660 = vld [vmem:[%s4261 + $0x30] sm:$0xf]
        %v4661 = vld [vmem:[%s4261 + $0x34] sm:$0xf]
        %v4662 = vld [vmem:[%s4261 + $0x38] sm:$0x1]
        %v4663 = vld [vmem:[%s4261 + $0x3c] sm:$0xf]
        %v4664 = vld [vmem:[%s4261 + $0x40] sm:$0xf]
        %v4665 = vld [vmem:[%s4261 + $0x44] sm:$0x1]
        %v4666 = vld [vmem:[%s4261 + $0x48] sm:$0xf]
        %v4667 = vld [vmem:[%s4261 + $0x4c] sm:$0xf]
        %v4668 = vld [vmem:[%s4261 + $0x50] sm:$0x1]
        %v4669 = vld [vmem:[%s4261 + $0x54] sm:$0xf]
        %v4670 = vld [vmem:[%s4261 + $0x58] sm:$0xf]
        %v4671 = vld [vmem:[%s4261 + $0x5c] sm:$0x1]
        %v4672 = vld [vmem:[%s4261 + $0x60] sm:$0xf]
        %v4673 = vld [vmem:[%s4261 + $0x64] sm:$0xf]
        %v4674 = vld [vmem:[%s4261 + $0x68] sm:$0x1]
        %v4675 = vld [vmem:[%s4261 + $0x6c] sm:$0xf]
        %v4676 = vld [vmem:[%s4261 + $0x70] sm:$0xf]
        %v4677 = vld [vmem:[%s4261 + $0x74] sm:$0x1]
        %v4678 = vld [vmem:[%s4261 + $0x78] sm:$0xf]
        %v4679 = vld [vmem:[%s4261 + $0x7c] sm:$0xf]
        %v4680 = vld [vmem:[%s4261 + $0x80] sm:$0x1]
        %v4681 = vld [vmem:[%s4261 + $0x84] sm:$0xf]
        %v4682 = vld [vmem:[%s4261 + $0x88] sm:$0xf]
        %v4683 = vld [vmem:[%s4261 + $0x8c] sm:$0x1]
        %v4684 = vld [vmem:[%s4261 + $0x90] sm:$0xf]
        %v4685 = vld [vmem:[%s4261 + $0x94] sm:$0xf]
        %v4686 = vld [vmem:[%s4261 + $0x98] sm:$0x1]
        %v4687 = vld [vmem:[%s4261 + $0x9c] sm:$0xf]
        %v4688 = vld [vmem:[%s4261 + $0xa0] sm:$0xf]
        %v4689 = vld [vmem:[%s4261 + $0xa4] sm:$0x1]
        %v4690 = vld [vmem:[%s4261 + $0xa8] sm:$0xf]
        %v4691 = vld [vmem:[%s4261 + $0xac] sm:$0xf]
        %v4692 = vld [vmem:[%s4261 + $0xb0] sm:$0x1]
        %v4693 = vld [vmem:[%s4261 + $0xb4] sm:$0xf]
        %v4694 = vld [vmem:[%s4261 + $0xb8] sm:$0xf]
        %v4695 = vld [vmem:[%s4261 + $0xbc] sm:$0x1]
        %v4697 = vshrl.u32 %v4648, 16
        %v4699 = vrot.slane %v4697, 4
        %v4700 = vshll.u32 %v4648, 16
        %v4702 = vrot.slane %v4700, 5
        %v4703 = vor.u32 %v4699, %v4702
        %v4704 = vrot.slane %v4703, 4
        %v4706 = vshll.u32 %v4649, 16
        %v4708 = vrot.slane %v4706, 5
        %v4709 = vsel %vm1158, %v4704, %v4708
        %v4710 = vshrl.u32 %v4649, 16
        %v4712 = vrot.slane %v4710, 4
        %v4713 = vor.u32 %v4712, %v4708
        %v4714 = vrot.slane %v4713, 4
        %v4716 = vshll.u32 %v4650, 16
        %v4718 = vrot.slane %v4716, 5
        %v4719 = vsel %vm1158, %v4714, %v4718
        %v4721 = vshrl.u32 %v4651, 16
        %v4723 = vrot.slane %v4721, 4
        %v4724 = vshll.u32 %v4651, 16
        %v4726 = vrot.slane %v4724, 5
        %v4727 = vor.u32 %v4723, %v4726
        %v4728 = vrot.slane %v4727, 4
        %v4730 = vshll.u32 %v4652, 16
        %v4732 = vrot.slane %v4730, 5
        %v4733 = vsel %vm1158, %v4728, %v4732
        %v4734 = vshrl.u32 %v4652, 16
        %v4736 = vrot.slane %v4734, 4
        %v4737 = vor.u32 %v4736, %v4732
        %v4738 = vrot.slane %v4737, 4
        %v4740 = vshll.u32 %v4653, 16
        %v4742 = vrot.slane %v4740, 5
        %v4743 = vsel %vm1158, %v4738, %v4742
        %v4745 = vshrl.u32 %v4654, 16
        %v4747 = vrot.slane %v4745, 4
        %v4748 = vshll.u32 %v4654, 16
        %v4750 = vrot.slane %v4748, 5
        %v4751 = vor.u32 %v4747, %v4750
        %v4752 = vrot.slane %v4751, 4
        %v4754 = vshll.u32 %v4655, 16
        %v4756 = vrot.slane %v4754, 5
        %v4757 = vsel %vm1158, %v4752, %v4756
        %v4758 = vshrl.u32 %v4655, 16
        %v4760 = vrot.slane %v4758, 4
        %v4761 = vor.u32 %v4760, %v4756
        %v4762 = vrot.slane %v4761, 4
        %v4764 = vshll.u32 %v4656, 16
        %v4766 = vrot.slane %v4764, 5
        %v4767 = vsel %vm1158, %v4762, %v4766
        %v4769 = vshrl.u32 %v4657, 16
        %v4771 = vrot.slane %v4769, 4
        %v4772 = vshll.u32 %v4657, 16
        %v4774 = vrot.slane %v4772, 5
        %v4775 = vor.u32 %v4771, %v4774
        %v4776 = vrot.slane %v4775, 4
        %v4778 = vshll.u32 %v4658, 16
        %v4780 = vrot.slane %v4778, 5
        %v4781 = vsel %vm1158, %v4776, %v4780
        %v4782 = vshrl.u32 %v4658, 16
        %v4784 = vrot.slane %v4782, 4
        %v4785 = vor.u32 %v4784, %v4780
        %v4786 = vrot.slane %v4785, 4
        %v4788 = vshll.u32 %v4659, 16
        %v4790 = vrot.slane %v4788, 5
        %v4791 = vsel %vm1158, %v4786, %v4790
        %v4793 = vshrl.u32 %v4660, 16
        %v4795 = vrot.slane %v4793, 4
        %v4796 = vshll.u32 %v4660, 16
        %v4798 = vrot.slane %v4796, 5
        %v4799 = vor.u32 %v4795, %v4798
        %v4800 = vrot.slane %v4799, 4
        %v4802 = vshll.u32 %v4661, 16
        %v4804 = vrot.slane %v4802, 5
        %v4805 = vsel %vm1158, %v4800, %v4804
        %v4806 = vshrl.u32 %v4661, 16
        %v4808 = vrot.slane %v4806, 4
        %v4809 = vor.u32 %v4808, %v4804
        %v4810 = vrot.slane %v4809, 4
        %v4812 = vshll.u32 %v4662, 16
        %v4814 = vrot.slane %v4812, 5
        %v4815 = vsel %vm1158, %v4810, %v4814
        %v4817 = vshrl.u32 %v4663, 16
        %v4819 = vrot.slane %v4817, 4
        %v4820 = vshll.u32 %v4663, 16
        %v4822 = vrot.slane %v4820, 5
        %v4823 = vor.u32 %v4819, %v4822
        %v4824 = vrot.slane %v4823, 4
        %v4826 = vshll.u32 %v4664, 16
        %v4828 = vrot.slane %v4826, 5
        %v4829 = vsel %vm1158, %v4824, %v4828
        %v4830 = vshrl.u32 %v4664, 16
        %v4832 = vrot.slane %v4830, 4
        %v4833 = vor.u32 %v4832, %v4828
        %v4834 = vrot.slane %v4833, 4
        %v4836 = vshll.u32 %v4665, 16
        %v4838 = vrot.slane %v4836, 5
        %v4839 = vsel %vm1158, %v4834, %v4838
        %v4841 = vshrl.u32 %v4666, 16
        %v4843 = vrot.slane %v4841, 4
        %v4844 = vshll.u32 %v4666, 16
        %v4846 = vrot.slane %v4844, 5
        %v4847 = vor.u32 %v4843, %v4846
        %v4848 = vrot.slane %v4847, 4
        %v4850 = vshll.u32 %v4667, 16
        %v4852 = vrot.slane %v4850, 5
        %v4853 = vsel %vm1158, %v4848, %v4852
        %v4854 = vshrl.u32 %v4667, 16
        %v4856 = vrot.slane %v4854, 4
        %v4857 = vor.u32 %v4856, %v4852
        %v4858 = vrot.slane %v4857, 4
        %v4860 = vshll.u32 %v4668, 16
        %v4862 = vrot.slane %v4860, 5
        %v4863 = vsel %vm1158, %v4858, %v4862
        %v4865 = vshrl.u32 %v4669, 16
        %v4867 = vrot.slane %v4865, 4
        %v4868 = vshll.u32 %v4669, 16
        %v4870 = vrot.slane %v4868, 5
        %v4871 = vor.u32 %v4867, %v4870
        %v4872 = vrot.slane %v4871, 4
        %v4874 = vshll.u32 %v4670, 16
        %v4876 = vrot.slane %v4874, 5
        %v4877 = vsel %vm1158, %v4872, %v4876
        %v4878 = vshrl.u32 %v4670, 16
        %v4880 = vrot.slane %v4878, 4
        %v4881 = vor.u32 %v4880, %v4876
        %v4882 = vrot.slane %v4881, 4
        %v4884 = vshll.u32 %v4671, 16
        %v4886 = vrot.slane %v4884, 5
        %v4887 = vsel %vm1158, %v4882, %v4886
        %v4889 = vshrl.u32 %v4672, 16
        %v4891 = vrot.slane %v4889, 4
        %v4892 = vshll.u32 %v4672, 16
        %v4894 = vrot.slane %v4892, 5
        %v4895 = vor.u32 %v4891, %v4894
        %v4896 = vrot.slane %v4895, 4
        %v4898 = vshll.u32 %v4673, 16
        %v4900 = vrot.slane %v4898, 5
        %v4901 = vsel %vm1158, %v4896, %v4900
        %v4902 = vshrl.u32 %v4673, 16
        %v4904 = vrot.slane %v4902, 4
        %v4905 = vor.u32 %v4904, %v4900
        %v4906 = vrot.slane %v4905, 4
        %v4908 = vshll.u32 %v4674, 16
        %v4910 = vrot.slane %v4908, 5
        %v4911 = vsel %vm1158, %v4906, %v4910
        %v4913 = vshrl.u32 %v4675, 16
        %v4915 = vrot.slane %v4913, 4
        %v4916 = vshll.u32 %v4675, 16
        %v4918 = vrot.slane %v4916, 5
        %v4919 = vor.u32 %v4915, %v4918
        %v4920 = vrot.slane %v4919, 4
        %v4922 = vshll.u32 %v4676, 16
        %v4924 = vrot.slane %v4922, 5
        %v4925 = vsel %vm1158, %v4920, %v4924
        %v4926 = vshrl.u32 %v4676, 16
        %v4928 = vrot.slane %v4926, 4
        %v4929 = vor.u32 %v4928, %v4924
        %v4930 = vrot.slane %v4929, 4
        %v4932 = vshll.u32 %v4677, 16
        %v4934 = vrot.slane %v4932, 5
        %v4935 = vsel %vm1158, %v4930, %v4934
        %v4937 = vshrl.u32 %v4678, 16
        %v4939 = vrot.slane %v4937, 4
        %v4940 = vshll.u32 %v4678, 16
        %v4942 = vrot.slane %v4940, 5
        %v4943 = vor.u32 %v4939, %v4942
        %v4944 = vrot.slane %v4943, 4
        %v4946 = vshll.u32 %v4679, 16
        %v4948 = vrot.slane %v4946, 5
        %v4949 = vsel %vm1158, %v4944, %v4948
        %v4950 = vshrl.u32 %v4679, 16
        %v4952 = vrot.slane %v4950, 4
        %v4953 = vor.u32 %v4952, %v4948
        %v4954 = vrot.slane %v4953, 4
        %v4956 = vshll.u32 %v4680, 16
        %v4958 = vrot.slane %v4956, 5
        %v4959 = vsel %vm1158, %v4954, %v4958
        %v4961 = vshrl.u32 %v4681, 16
        %v4963 = vrot.slane %v4961, 4
        %v4964 = vshll.u32 %v4681, 16
        %v4966 = vrot.slane %v4964, 5
        %v4967 = vor.u32 %v4963, %v4966
        %v4968 = vrot.slane %v4967, 4
        %v4970 = vshll.u32 %v4682, 16
        %v4972 = vrot.slane %v4970, 5
        %v4973 = vsel %vm1158, %v4968, %v4972
        %v4974 = vshrl.u32 %v4682, 16
        %v4976 = vrot.slane %v4974, 4
        %v4977 = vor.u32 %v4976, %v4972
        %v4978 = vrot.slane %v4977, 4
        %v4980 = vshll.u32 %v4683, 16
        %v4982 = vrot.slane %v4980, 5
        %v4983 = vsel %vm1158, %v4978, %v4982
        %v4985 = vshrl.u32 %v4684, 16
        %v4987 = vrot.slane %v4985, 4
        %v4988 = vshll.u32 %v4684, 16
        %v4990 = vrot.slane %v4988, 5
        %v4991 = vor.u32 %v4987, %v4990
        %v4992 = vrot.slane %v4991, 4
        %v4994 = vshll.u32 %v4685, 16
        %v4996 = vrot.slane %v4994, 5
        %v4997 = vsel %vm1158, %v4992, %v4996
        %v4998 = vshrl.u32 %v4685, 16
        %v5000 = vrot.slane %v4998, 4
        %v5001 = vor.u32 %v5000, %v4996
        %v5002 = vrot.slane %v5001, 4
        %v5004 = vshll.u32 %v4686, 16
        %v5006 = vrot.slane %v5004, 5
        %v5007 = vsel %vm1158, %v5002, %v5006
        %v5009 = vshrl.u32 %v4687, 16
        %v5011 = vrot.slane %v5009, 4
        %v5012 = vshll.u32 %v4687, 16
        %v5014 = vrot.slane %v5012, 5
        %v5015 = vor.u32 %v5011, %v5014
        %v5016 = vrot.slane %v5015, 4
        %v5018 = vshll.u32 %v4688, 16
        %v5020 = vrot.slane %v5018, 5
        %v5021 = vsel %vm1158, %v5016, %v5020
        %v5022 = vshrl.u32 %v4688, 16
        %v5024 = vrot.slane %v5022, 4
        %v5025 = vor.u32 %v5024, %v5020
        %v5026 = vrot.slane %v5025, 4
        %v5028 = vshll.u32 %v4689, 16
        %v5030 = vrot.slane %v5028, 5
        %v5031 = vsel %vm1158, %v5026, %v5030
        %v5033 = vshrl.u32 %v4690, 16
        %v5035 = vrot.slane %v5033, 4
        %v5036 = vshll.u32 %v4690, 16
        %v5038 = vrot.slane %v5036, 5
        %v5039 = vor.u32 %v5035, %v5038
        %v5040 = vrot.slane %v5039, 4
        %v5042 = vshll.u32 %v4691, 16
        %v5044 = vrot.slane %v5042, 5
        %v5045 = vsel %vm1158, %v5040, %v5044
        %v5046 = vshrl.u32 %v4691, 16
        %v5048 = vrot.slane %v5046, 4
        %v5049 = vor.u32 %v5048, %v5044
        %v5050 = vrot.slane %v5049, 4
        %v5052 = vshll.u32 %v4692, 16
        %v5054 = vrot.slane %v5052, 5
        %v5055 = vsel %vm1158, %v5050, %v5054
        %v5057 = vshrl.u32 %v4693, 16
        %v5059 = vrot.slane %v5057, 4
        %v5060 = vshll.u32 %v4693, 16
        %v5062 = vrot.slane %v5060, 5
        %v5063 = vor.u32 %v5059, %v5062
        %v5064 = vrot.slane %v5063, 4
        %v5066 = vshll.u32 %v4694, 16
        %v5068 = vrot.slane %v5066, 5
        %v5069 = vsel %vm1158, %v5064, %v5068
        %v5070 = vshrl.u32 %v4694, 16
        %v5072 = vrot.slane %v5070, 4
        %v5073 = vor.u32 %v5072, %v5068
        %v5074 = vrot.slane %v5073, 4
        %v5076 = vshll.u32 %v4695, 16
        %v5078 = vrot.slane %v5076, 5
        %v5079 = vsel %vm1158, %v5074, %v5078
        %s5080 = scalar_lea.vmem [#allocation6], 448
        %v5081 = vld [vmem:[%s5080] sm:$0xf]
        %v5082 = vld [vmem:[%s5080 + $0x4] sm:$0xf]
        %v5083 = vld [vmem:[%s5080 + $0x8] sm:$0xf]
        %v5084 = vld [vmem:[%s5080 + $0xc] sm:$0xf]
        %v5085 = vld [vmem:[%s5080 + $0x10] sm:$0xf]
        %v5086 = vld [vmem:[%s5080 + $0x14] sm:$0xf]
        %v5087 = vld [vmem:[%s5080 + $0x18] sm:$0xf]
        %v5088 = vld [vmem:[%s5080 + $0x1c] sm:$0xf]
        %v5089 = vld [vmem:[%s5080 + $0x20] sm:$0xf]
        %v5090 = vld [vmem:[%s5080 + $0x24] sm:$0xf]
        %v5091 = vld [vmem:[%s5080 + $0x28] sm:$0xf]
        %v5092 = vld [vmem:[%s5080 + $0x2c] sm:$0xf]
        %v5093 = vld [vmem:[%s5080 + $0x30] sm:$0xf]
        %v5094 = vld [vmem:[%s5080 + $0x34] sm:$0xf]
        %v5095 = vld [vmem:[%s5080 + $0x38] sm:$0xf]
        %v5096 = vld [vmem:[%s5080 + $0x3c] sm:$0xf]
        %v5097 = vunpack.c.l.b16 %v4709
        %v5098 = vunpack.c.l.b16 %v4719
        %v5099 = vunpack.c.l.b16 %v4733
        %v5100 = vunpack.c.l.b16 %v4743
        %v5101 = vunpack.c.l.b16 %v4757
        %v5102 = vunpack.c.l.b16 %v4767
        %v5103 = vunpack.c.l.b16 %v4781
        %v5104 = vunpack.c.l.b16 %v4791
        %v5105 = vunpack.c.l.b16 %v4805
        %v5106 = vunpack.c.l.b16 %v4815
        %v5107 = vunpack.c.l.b16 %v4829
        %v5108 = vunpack.c.l.b16 %v4839
        %v5109 = vunpack.c.l.b16 %v4853
        %v5110 = vunpack.c.l.b16 %v4863
        %v5111 = vunpack.c.l.b16 %v4877
        %v5112 = vunpack.c.l.b16 %v4887
        %v5113 = vunpack.c.l.b16 %v4901
        %v5114 = vunpack.c.l.b16 %v4911
        %v5115 = vunpack.c.l.b16 %v4925
        %v5116 = vunpack.c.l.b16 %v4935
        %v5117 = vunpack.c.l.b16 %v4949
        %v5118 = vunpack.c.l.b16 %v4959
        %v5119 = vunpack.c.l.b16 %v4973
        %v5120 = vunpack.c.l.b16 %v4983
        %v5121 = vunpack.c.l.b16 %v4997
        %v5122 = vunpack.c.l.b16 %v5007
        %v5123 = vunpack.c.l.b16 %v5021
        %v5124 = vunpack.c.l.b16 %v5031
        %v5125 = vunpack.c.l.b16 %v5045
        %v5126 = vunpack.c.l.b16 %v5055
        %v5127 = vunpack.c.l.b16 %v5069
        %v5128 = vunpack.c.l.b16 %v5079
        %v5129 = vpack.c.b16 %v5098, %v5097
        %v5130 = vpack.c.b16 %v5100, %v5099
        %v5131 = vpack.c.b16 %v5102, %v5101
        %v5132 = vpack.c.b16 %v5104, %v5103
        %v5133 = vpack.c.b16 %v5106, %v5105
        %v5134 = vpack.c.b16 %v5108, %v5107
        %v5135 = vpack.c.b16 %v5110, %v5109
        %v5136 = vpack.c.b16 %v5112, %v5111
        %v5137 = vpack.c.b16 %v5114, %v5113
        %v5138 = vpack.c.b16 %v5116, %v5115
        %v5139 = vpack.c.b16 %v5118, %v5117
        %v5140 = vpack.c.b16 %v5120, %v5119
        %v5141 = vpack.c.b16 %v5122, %v5121
        %v5142 = vpack.c.b16 %v5124, %v5123
        %v5143 = vpack.c.b16 %v5126, %v5125
        %v5144 = vpack.c.b16 %v5128, %v5127
        %v5177 = vunpack.c.l.b16 %v5081
        %v5178 = vunpack.c.l.b16 %v5082
        %v5179 = vunpack.c.l.b16 %v5083
        %v5180 = vunpack.c.l.b16 %v5084
        %v5181 = vunpack.c.l.b16 %v5085
        %v5182 = vunpack.c.l.b16 %v5086
        %v5183 = vunpack.c.l.b16 %v5087
        %v5184 = vunpack.c.l.b16 %v5088
        %v5185 = vunpack.c.l.b16 %v5089
        %v5186 = vunpack.c.l.b16 %v5090
        %v5187 = vunpack.c.l.b16 %v5091
        %v5188 = vunpack.c.l.b16 %v5092
        %v5189 = vunpack.c.l.b16 %v5093
        %v5190 = vunpack.c.l.b16 %v5094
        %v5191 = vunpack.c.l.b16 %v5095
        %v5192 = vunpack.c.l.b16 %v5096
        %v5193 = vpack.c.b16 %v5178, %v5177
        %v5194 = vpack.c.b16 %v5180, %v5179
        %v5195 = vpack.c.b16 %v5182, %v5181
        %v5196 = vpack.c.b16 %v5184, %v5183
        %v5197 = vpack.c.b16 %v5186, %v5185
        %v5198 = vpack.c.b16 %v5188, %v5187
        %v5199 = vpack.c.b16 %v5190, %v5189
        %v5200 = vpack.c.b16 %v5192, %v5191
        %5209 = vmatprep.subr.bf16.mxu0 0
        %5210 = vmatpush1.bf16.msra.mxu0 %v5193
        %5211 = vmatprep.subr.bf16.mxu0 0
        %5212 = vmatpush1.bf16.msra.mxu0 %v5194
        %5213 = vmatprep.subr.bf16.mxu0 0
        %5214 = vmatpush1.bf16.msra.mxu0 %v5195
        %5215 = vmatprep.subr.bf16.mxu0 0
        %5216 = vmatpush1.bf16.msra.mxu0 %v5196
        %5217 = vmatprep.subr.bf16.mxu0 0
        %5218 = vmatpush1.bf16.msra.mxu0 %v5197
        %5219 = vmatprep.subr.bf16.mxu0 0
        %5220 = vmatpush1.bf16.msra.mxu0 %v5198
        %5221 = vmatprep.subr.bf16.mxu0 0
        %5222 = vmatpush1.bf16.msra.mxu0 %v5199
        %5223 = vmatprep.subr.bf16.mxu0 0
        %5224 = vmatpush1.bf16.msra.mxu0 %v5200
        %5225 = vmatprep.subr.bf16.mxu0 0
        %5226 = vmatpush1.bf16.msra.mxu0 0
        %5227 = vmatprep.subr.bf16.mxu0 0
        %5228 = vmatpush1.bf16.msra.mxu0 0
        %5229 = vmatprep.subr.bf16.mxu0 0
        %5230 = vmatpush1.bf16.msra.mxu0 0
        %5231 = vmatprep.subr.bf16.mxu0 0
        %5232 = vmatpush1.bf16.msra.mxu0 0
        %5233 = vmatprep.subr.bf16.mxu0 0
        %5234 = vmatpush1.bf16.msra.mxu0 0
        %5235 = vmatprep.subr.bf16.mxu0 0
        %5236 = vmatpush1.bf16.msra.mxu0 0
        %5237 = vmatprep.subr.bf16.mxu0 0
        %5238 = vmatpush1.bf16.msra.mxu0 0
        %5239 = vmatprep.subr.bf16.mxu0 0
        %5240 = vmatpush1.bf16.msra.mxu0 0
        %5241 = vmatprep.mubr.bf16.mxu0 0
        %5242 = vmatmul.mubr.bf16.gmra.mrb[0].mxu0 %v5129
        %v5243 = vpop.f32.mrb[0].mxu0
        %v5244 = vadd.f32 0.0, %v5243
        %v5245 = vpop.f32.mrb[0].mxu0
        %v5246 = vpop.f32.mrb[0].mxu0
        %v5247 = vadd.f32 0.0, %v5246
        %v5248 = vpop.f32.mrb[0].mxu0
        %5249 = vmatprep.mubr.bf16.mxu0 0
        %5250 = vmatmul.mubr.bf16.gmra.mrb[0].mxu0 %v5130
        %v5251 = vpop.f32.mrb[0].mxu0
        %v5252 = vadd.f32 0.0, %v5251
        %v5253 = vpop.f32.mrb[0].mxu0
        %v5254 = vpop.f32.mrb[0].mxu0
        %v5255 = vadd.f32 0.0, %v5254
        %v5256 = vpop.f32.mrb[0].mxu0
        %5257 = vmatprep.mubr.bf16.mxu0 0
        %5258 = vmatmul.mubr.bf16.gmra.mrb[0].mxu0 %v5131
        %v5259 = vpop.f32.mrb[0].mxu0
        %v5260 = vadd.f32 0.0, %v5259
        %v5261 = vpop.f32.mrb[0].mxu0
        %v5262 = vpop.f32.mrb[0].mxu0
        %v5263 = vadd.f32 0.0, %v5262
        %v5264 = vpop.f32.mrb[0].mxu0
        %5265 = vmatprep.mubr.bf16.mxu0 0
        %5266 = vmatmul.mubr.bf16.gmra.mrb[0].mxu0 %v5132
        %v5267 = vpop.f32.mrb[0].mxu0
        %v5268 = vadd.f32 0.0, %v5267
        %v5269 = vpop.f32.mrb[0].mxu0
        %v5270 = vpop.f32.mrb[0].mxu0
        %v5271 = vadd.f32 0.0, %v5270
        %v5272 = vpop.f32.mrb[0].mxu0
        %5273 = vmatprep.mubr.bf16.mxu0 0
        %5274 = vmatmul.mubr.bf16.gmra.mrb[0].mxu0 %v5133
        %v5275 = vpop.f32.mrb[0].mxu0
        %v5276 = vadd.f32 0.0, %v5275
        %v5277 = vpop.f32.mrb[0].mxu0
        %v5278 = vpop.f32.mrb[0].mxu0
        %v5279 = vadd.f32 0.0, %v5278
        %v5280 = vpop.f32.mrb[0].mxu0
        %5281 = vmatprep.mubr.bf16.mxu0 0
        %5282 = vmatmul.mubr.bf16.gmra.mrb[0].mxu0 %v5134
        %v5283 = vpop.f32.mrb[0].mxu0
        %v5284 = vadd.f32 0.0, %v5283
        %v5285 = vpop.f32.mrb[0].mxu0
        %v5286 = vpop.f32.mrb[0].mxu0
        %v5287 = vadd.f32 0.0, %v5286
        %v5288 = vpop.f32.mrb[0].mxu0
        %5289 = vmatprep.mubr.bf16.mxu0 0
        %5290 = vmatmul.mubr.bf16.gmra.mrb[0].mxu0 %v5135
        %v5291 = vpop.f32.mrb[0].mxu0
        %v5292 = vadd.f32 0.0, %v5291
        %v5293 = vpop.f32.mrb[0].mxu0
        %v5294 = vpop.f32.mrb[0].mxu0
        %v5295 = vadd.f32 0.0, %v5294
        %v5296 = vpop.f32.mrb[0].mxu0
        %5297 = vmatprep.mubr.bf16.mxu0 0
        %5298 = vmatmul.mubr.bf16.gmra.mrb[0].mxu0 %v5136
        %v5299 = vpop.f32.mrb[0].mxu0
        %v5300 = vadd.f32 0.0, %v5299
        %v5301 = vpop.f32.mrb[0].mxu0
        %v5302 = vpop.f32.mrb[0].mxu0
        %v5303 = vadd.f32 0.0, %v5302
        %v5304 = vpop.f32.mrb[0].mxu0
        %5305 = vmatprep.mubr.bf16.mxu0 0
        %5306 = vmatmul.mubr.bf16.gmra.mrb[0].mxu0 %v5137
        %v5307 = vpop.f32.mrb[0].mxu0
        %v5308 = vadd.f32 0.0, %v5307
        %v5309 = vpop.f32.mrb[0].mxu0
        %v5310 = vpop.f32.mrb[0].mxu0
        %v5311 = vadd.f32 0.0, %v5310
        %v5312 = vpop.f32.mrb[0].mxu0
        %5313 = vmatprep.mubr.bf16.mxu0 0
        %5314 = vmatmul.mubr.bf16.gmra.mrb[0].mxu0 %v5138
        %v5315 = vpop.f32.mrb[0].mxu0
        %v5316 = vadd.f32 0.0, %v5315
        %v5317 = vpop.f32.mrb[0].mxu0
        %v5318 = vpop.f32.mrb[0].mxu0
        %v5319 = vadd.f32 0.0, %v5318
        %v5320 = vpop.f32.mrb[0].mxu0
        %5321 = vmatprep.mubr.bf16.mxu0 0
        %5322 = vmatmul.mubr.bf16.gmra.mrb[0].mxu0 %v5139
        %v5323 = vpop.f32.mrb[0].mxu0
        %v5324 = vadd.f32 0.0, %v5323
        %v5325 = vpop.f32.mrb[0].mxu0
        %v5326 = vpop.f32.mrb[0].mxu0
        %v5327 = vadd.f32 0.0, %v5326
        %v5328 = vpop.f32.mrb[0].mxu0
        %5329 = vmatprep.mubr.bf16.mxu0 0
        %5330 = vmatmul.mubr.bf16.gmra.mrb[0].mxu0 %v5140
        %v5331 = vpop.f32.mrb[0].mxu0
        %v5332 = vadd.f32 0.0, %v5331
        %v5333 = vpop.f32.mrb[0].mxu0
        %v5334 = vpop.f32.mrb[0].mxu0
        %v5335 = vadd.f32 0.0, %v5334
        %v5336 = vpop.f32.mrb[0].mxu0
        %5337 = vmatprep.mubr.bf16.mxu0 0
        %5338 = vmatmul.mubr.bf16.gmra.mrb[0].mxu0 %v5141
        %v5339 = vpop.f32.mrb[0].mxu0
        %v5340 = vadd.f32 0.0, %v5339
        %v5341 = vpop.f32.mrb[0].mxu0
        %v5342 = vpop.f32.mrb[0].mxu0
        %v5343 = vadd.f32 0.0, %v5342
        %v5344 = vpop.f32.mrb[0].mxu0
        %5345 = vmatprep.mubr.bf16.mxu0 0
        %5346 = vmatmul.mubr.bf16.gmra.mrb[0].mxu0 %v5142
        %v5347 = vpop.f32.mrb[0].mxu0
        %v5348 = vadd.f32 0.0, %v5347
        %v5349 = vpop.f32.mrb[0].mxu0
        %v5350 = vpop.f32.mrb[0].mxu0
        %v5351 = vadd.f32 0.0, %v5350
        %v5352 = vpop.f32.mrb[0].mxu0
        %5353 = vmatprep.mubr.bf16.mxu0 0
        %5354 = vmatmul.mubr.bf16.gmra.mrb[0].mxu0 %v5143
        %v5355 = vpop.f32.mrb[0].mxu0
        %v5356 = vadd.f32 0.0, %v5355
        %v5357 = vpop.f32.mrb[0].mxu0
        %v5358 = vpop.f32.mrb[0].mxu0
        %v5359 = vadd.f32 0.0, %v5358
        %v5360 = vpop.f32.mrb[0].mxu0
        %5361 = vmatprep.mubr.bf16.mxu0 0
        %5362 = vmatmul.mubr.bf16.gmra.mrb[0].mxu0 %v5144
        %v5363 = vpop.f32.mrb[0].mxu0
        %v5364 = vadd.f32 0.0, %v5363
        %v5365 = vpop.f32.mrb[0].mxu0
        %v5366 = vpop.f32.mrb[0].mxu0
        %v5367 = vadd.f32 0.0, %v5366
        %v5368 = vpop.f32.mrb[0].mxu0
        %5369 = vdwg.mxu0
        %v5370 = vadd.f32 %v4616, %v5244
        %v5371 = vadd.f32 %v4617, %v5247
        %v5372 = vadd.f32 %v4618, %v5252
        %v5373 = vadd.f32 %v4619, %v5255
        %v5374 = vadd.f32 %v4620, %v5260
        %v5375 = vadd.f32 %v4621, %v5263
        %v5376 = vadd.f32 %v4622, %v5268
        %v5377 = vadd.f32 %v4623, %v5271
        %v5378 = vadd.f32 %v4624, %v5276
        %v5379 = vadd.f32 %v4625, %v5279
        %v5380 = vadd.f32 %v4626, %v5284
        %v5381 = vadd.f32 %v4627, %v5287
        %v5382 = vadd.f32 %v4628, %v5292
        %v5383 = vadd.f32 %v4629, %v5295
        %v5384 = vadd.f32 %v4630, %v5300
        %v5385 = vadd.f32 %v4631, %v5303
        %v5386 = vadd.f32 %v4632, %v5308
        %v5387 = vadd.f32 %v4633, %v5311
        %v5388 = vadd.f32 %v4634, %v5316
        %v5389 = vadd.f32 %v4635, %v5319
        %v5390 = vadd.f32 %v4636, %v5324
        %v5391 = vadd.f32 %v4637, %v5327
        %v5392 = vadd.f32 %v4638, %v5332
        %v5393 = vadd.f32 %v4639, %v5335
        %v5394 = vadd.f32 %v4640, %v5340
        %v5395 = vadd.f32 %v4641, %v5343
        %v5396 = vadd.f32 %v4642, %v5348
        %v5397 = vadd.f32 %v4643, %v5351
        %v5398 = vadd.f32 %v4644, %v5356
        %v5399 = vadd.f32 %v4645, %v5359
        %v5400 = vadd.f32 %v4646, %v5364
        %v5401 = vadd.f32 %v4647, %v5367
        %v5402 = vld [vmem:[%s4261] sm:$0xe]
        %v5403 = vld [vmem:[%s4261 + $0xc] sm:$0xe]
        %v5404 = vld [vmem:[%s4261 + $0x18] sm:$0xe]
        %v5405 = vld [vmem:[%s4261 + $0x24] sm:$0xe]
        %v5406 = vld [vmem:[%s4261 + $0x30] sm:$0xe]
        %v5407 = vld [vmem:[%s4261 + $0x3c] sm:$0xe]
        %v5408 = vld [vmem:[%s4261 + $0x48] sm:$0xe]
        %v5409 = vld [vmem:[%s4261 + $0x54] sm:$0xe]
        %v5410 = vld [vmem:[%s4261 + $0x60] sm:$0xe]
        %v5411 = vld [vmem:[%s4261 + $0x6c] sm:$0xe]
        %v5412 = vld [vmem:[%s4261 + $0x78] sm:$0xe]
        %v5413 = vld [vmem:[%s4261 + $0x84] sm:$0xe]
        %v5414 = vld [vmem:[%s4261 + $0x90] sm:$0xe]
        %v5415 = vld [vmem:[%s4261 + $0x9c] sm:$0xe]
        %v5416 = vld [vmem:[%s4261 + $0xa8] sm:$0xe]
        %v5417 = vld [vmem:[%s4261 + $0xb4] sm:$0xe]
        %v5466 = vrot.slane %v5402, 5
        %v5467 = vrot.slane %v5466, 4
        %v5468 = vrot.slane %v4649, 5
        %v5469 = vsel %vm2188, %v5467, %v5468
        %v5470 = vrot.slane %v5468, 4
        %v5471 = vrot.slane %v4650, 5
        %v5472 = vsel %vm2188, %v5470, %v5471
        %v5473 = vrot.slane %v5403, 5
        %v5474 = vrot.slane %v5473, 4
        %v5475 = vrot.slane %v4652, 5
        %v5476 = vsel %vm2188, %v5474, %v5475
        %v5477 = vrot.slane %v5475, 4
        %v5478 = vrot.slane %v4653, 5
        %v5479 = vsel %vm2188, %v5477, %v5478
        %v5480 = vrot.slane %v5404, 5
        %v5481 = vrot.slane %v5480, 4
        %v5482 = vrot.slane %v4655, 5
        %v5483 = vsel %vm2188, %v5481, %v5482
        %v5484 = vrot.slane %v5482, 4
        %v5485 = vrot.slane %v4656, 5
        %v5486 = vsel %vm2188, %v5484, %v5485
        %v5487 = vrot.slane %v5405, 5
        %v5488 = vrot.slane %v5487, 4
        %v5489 = vrot.slane %v4658, 5
        %v5490 = vsel %vm2188, %v5488, %v5489
        %v5491 = vrot.slane %v5489, 4
        %v5492 = vrot.slane %v4659, 5
        %v5493 = vsel %vm2188, %v5491, %v5492
        %v5494 = vrot.slane %v5406, 5
        %v5495 = vrot.slane %v5494, 4
        %v5496 = vrot.slane %v4661, 5
        %v5497 = vsel %vm2188, %v5495, %v5496
        %v5498 = vrot.slane %v5496, 4
        %v5499 = vrot.slane %v4662, 5
        %v5500 = vsel %vm2188, %v5498, %v5499
        %v5501 = vrot.slane %v5407, 5
        %v5502 = vrot.slane %v5501, 4
        %v5503 = vrot.slane %v4664, 5
        %v5504 = vsel %vm2188, %v5502, %v5503
        %v5505 = vrot.slane %v5503, 4
        %v5506 = vrot.slane %v4665, 5
        %v5507 = vsel %vm2188, %v5505, %v5506
        %v5508 = vrot.slane %v5408, 5
        %v5509 = vrot.slane %v5508, 4
        %v5510 = vrot.slane %v4667, 5
        %v5511 = vsel %vm2188, %v5509, %v5510
        %v5512 = vrot.slane %v5510, 4
        %v5513 = vrot.slane %v4668, 5
        %v5514 = vsel %vm2188, %v5512, %v5513
        %v5515 = vrot.slane %v5409, 5
        %v5516 = vrot.slane %v5515, 4
        %v5517 = vrot.slane %v4670, 5
        %v5518 = vsel %vm2188, %v5516, %v5517
        %v5519 = vrot.slane %v5517, 4
        %v5520 = vrot.slane %v4671, 5
        %v5521 = vsel %vm2188, %v5519, %v5520
        %v5522 = vrot.slane %v5410, 5
        %v5523 = vrot.slane %v5522, 4
        %v5524 = vrot.slane %v4673, 5
        %v5525 = vsel %vm2188, %v5523, %v5524
        %v5526 = vrot.slane %v5524, 4
        %v5527 = vrot.slane %v4674, 5
        %v5528 = vsel %vm2188, %v5526, %v5527
        %v5529 = vrot.slane %v5411, 5
        %v5530 = vrot.slane %v5529, 4
        %v5531 = vrot.slane %v4676, 5
        %v5532 = vsel %vm2188, %v5530, %v5531
        %v5533 = vrot.slane %v5531, 4
        %v5534 = vrot.slane %v4677, 5
        %v5535 = vsel %vm2188, %v5533, %v5534
        %v5536 = vrot.slane %v5412, 5
        %v5537 = vrot.slane %v5536, 4
        %v5538 = vrot.slane %v4679, 5
        %v5539 = vsel %vm2188, %v5537, %v5538
        %v5540 = vrot.slane %v5538, 4
        %v5541 = vrot.slane %v4680, 5
        %v5542 = vsel %vm2188, %v5540, %v5541
        %v5543 = vrot.slane %v5413, 5
        %v5544 = vrot.slane %v5543, 4
        %v5545 = vrot.slane %v4682, 5
        %v5546 = vsel %vm2188, %v5544, %v5545
        %v5547 = vrot.slane %v5545, 4
        %v5548 = vrot.slane %v4683, 5
        %v5549 = vsel %vm2188, %v5547, %v5548
        %v5550 = vrot.slane %v5414, 5
        %v5551 = vrot.slane %v5550, 4
        %v5552 = vrot.slane %v4685, 5
        %v5553 = vsel %vm2188, %v5551, %v5552
        %v5554 = vrot.slane %v5552, 4
        %v5555 = vrot.slane %v4686, 5
        %v5556 = vsel %vm2188, %v5554, %v5555
        %v5557 = vrot.slane %v5415, 5
        %v5558 = vrot.slane %v5557, 4
        %v5559 = vrot.slane %v4688, 5
        %v5560 = vsel %vm2188, %v5558, %v5559
        %v5561 = vrot.slane %v5559, 4
        %v5562 = vrot.slane %v4689, 5
        %v5563 = vsel %vm2188, %v5561, %v5562
        %v5564 = vrot.slane %v5416, 5
        %v5565 = vrot.slane %v5564, 4
        %v5566 = vrot.slane %v4691, 5
        %v5567 = vsel %vm2188, %v5565, %v5566
        %v5568 = vrot.slane %v5566, 4
        %v5569 = vrot.slane %v4692, 5
        %v5570 = vsel %vm2188, %v5568, %v5569
        %v5571 = vrot.slane %v5417, 5
        %v5572 = vrot.slane %v5571, 4
        %v5573 = vrot.slane %v4694, 5
        %v5574 = vsel %vm2188, %v5572, %v5573
        %v5575 = vrot.slane %v5573, 4
        %v5576 = vrot.slane %v4695, 5
        %v5577 = vsel %vm2188, %v5575, %v5576
        %s5578 = scalar_lea.vmem [#allocation6], 512
        %v5579 = vld [vmem:[%s5578] sm:$0xf]
        %v5580 = vld [vmem:[%s5578 + $0x4] sm:$0xf]
        %v5581 = vld [vmem:[%s5578 + $0x8] sm:$0xf]
        %v5582 = vld [vmem:[%s5578 + $0xc] sm:$0xf]
        %v5583 = vld [vmem:[%s5578 + $0x10] sm:$0xf]
        %v5584 = vld [vmem:[%s5578 + $0x14] sm:$0xf]
        %v5585 = vld [vmem:[%s5578 + $0x18] sm:$0xf]
        %v5586 = vld [vmem:[%s5578 + $0x1c] sm:$0xf]
        %v5587 = vld [vmem:[%s5578 + $0x20] sm:$0xf]
        %v5588 = vld [vmem:[%s5578 + $0x24] sm:$0xf]
        %v5589 = vld [vmem:[%s5578 + $0x28] sm:$0xf]
        %v5590 = vld [vmem:[%s5578 + $0x2c] sm:$0xf]
        %v5591 = vld [vmem:[%s5578 + $0x30] sm:$0xf]
        %v5592 = vld [vmem:[%s5578 + $0x34] sm:$0xf]
        %v5593 = vld [vmem:[%s5578 + $0x38] sm:$0xf]
        %v5594 = vld [vmem:[%s5578 + $0x3c] sm:$0xf]
        %v5595 = vunpack.c.l.b16 %v5469
        %v5596 = vunpack.c.l.b16 %v5472
        %v5597 = vunpack.c.l.b16 %v5476
        %v5598 = vunpack.c.l.b16 %v5479
        %v5599 = vunpack.c.l.b16 %v5483
        %v5600 = vunpack.c.l.b16 %v5486
        %v5601 = vunpack.c.l.b16 %v5490
        %v5602 = vunpack.c.l.b16 %v5493
        %v5603 = vunpack.c.l.b16 %v5497
        %v5604 = vunpack.c.l.b16 %v5500
        %v5605 = vunpack.c.l.b16 %v5504
        %v5606 = vunpack.c.l.b16 %v5507
        %v5607 = vunpack.c.l.b16 %v5511
        %v5608 = vunpack.c.l.b16 %v5514
        %v5609 = vunpack.c.l.b16 %v5518
        %v5610 = vunpack.c.l.b16 %v5521
        %v5611 = vunpack.c.l.b16 %v5525
        %v5612 = vunpack.c.l.b16 %v5528
        %v5613 = vunpack.c.l.b16 %v5532
        %v5614 = vunpack.c.l.b16 %v5535
        %v5615 = vunpack.c.l.b16 %v5539
        %v5616 = vunpack.c.l.b16 %v5542
        %v5617 = vunpack.c.l.b16 %v5546
        %v5618 = vunpack.c.l.b16 %v5549
        %v5619 = vunpack.c.l.b16 %v5553
        %v5620 = vunpack.c.l.b16 %v5556
        %v5621 = vunpack.c.l.b16 %v5560
        %v5622 = vunpack.c.l.b16 %v5563
        %v5623 = vunpack.c.l.b16 %v5567
        %v5624 = vunpack.c.l.b16 %v5570
        %v5625 = vunpack.c.l.b16 %v5574
        %v5626 = vunpack.c.l.b16 %v5577
        %v5627 = vpack.c.b16 %v5596, %v5595
        %v5628 = vpack.c.b16 %v5598, %v5597
        %v5629 = vpack.c.b16 %v5600, %v5599
        %v5630 = vpack.c.b16 %v5602, %v5601
        %v5631 = vpack.c.b16 %v5604, %v5603
        %v5632 = vpack.c.b16 %v5606, %v5605
        %v5633 = vpack.c.b16 %v5608, %v5607
        %v5634 = vpack.c.b16 %v5610, %v5609
        %v5635 = vpack.c.b16 %v5612, %v5611
        %v5636 = vpack.c.b16 %v5614, %v5613
        %v5637 = vpack.c.b16 %v5616, %v5615
        %v5638 = vpack.c.b16 %v5618, %v5617
        %v5639 = vpack.c.b16 %v5620, %v5619
        %v5640 = vpack.c.b16 %v5622, %v5621
        %v5641 = vpack.c.b16 %v5624, %v5623
        %v5642 = vpack.c.b16 %v5626, %v5625
        %v5675 = vunpack.c.l.b16 %v5579
        %v5676 = vunpack.c.l.b16 %v5580
        %v5677 = vunpack.c.l.b16 %v5581
        %v5678 = vunpack.c.l.b16 %v5582
        %v5679 = vunpack.c.l.b16 %v5583
        %v5680 = vunpack.c.l.b16 %v5584
        %v5681 = vunpack.c.l.b16 %v5585
        %v5682 = vunpack.c.l.b16 %v5586
        %v5683 = vunpack.c.l.b16 %v5587
        %v5684 = vunpack.c.l.b16 %v5588
        %v5685 = vunpack.c.l.b16 %v5589
        %v5686 = vunpack.c.l.b16 %v5590
        %v5687 = vunpack.c.l.b16 %v5591
        %v5688 = vunpack.c.l.b16 %v5592
        %v5689 = vunpack.c.l.b16 %v5593
        %v5690 = vunpack.c.l.b16 %v5594
        %v5691 = vpack.c.b16 %v5676, %v5675
        %v5692 = vpack.c.b16 %v5678, %v5677
        %v5693 = vpack.c.b16 %v5680, %v5679
        %v5694 = vpack.c.b16 %v5682, %v5681
        %v5695 = vpack.c.b16 %v5684, %v5683
        %v5696 = vpack.c.b16 %v5686, %v5685
        %v5697 = vpack.c.b16 %v5688, %v5687
        %v5698 = vpack.c.b16 %v5690, %v5689
        %5707 = vmatprep.subr.bf16.mxu0 0
        %5708 = vmatpush1.bf16.msra.mxu0 %v5691
        %5709 = vmatprep.subr.bf16.mxu0 0
        %5710 = vmatpush1.bf16.msra.mxu0 %v5692
        %5711 = vmatprep.subr.bf16.mxu0 0
        %5712 = vmatpush1.bf16.msra.mxu0 %v5693
        %5713 = vmatprep.subr.bf16.mxu0 0
        %5714 = vmatpush1.bf16.msra.mxu0 %v5694
        %5715 = vmatprep.subr.bf16.mxu0 0
        %5716 = vmatpush1.bf16.msra.mxu0 %v5695
        %5717 = vmatprep.subr.bf16.mxu0 0
        %5718 = vmatpush1.bf16.msra.mxu0 %v5696
        %5719 = vmatprep.subr.bf16.mxu0 0
        %5720 = vmatpush1.bf16.msra.mxu0 %v5697
        %5721 = vmatprep.subr.bf16.mxu0 0
        %5722 = vmatpush1.bf16.msra.mxu0 %v5698
        %5723 = vmatprep.subr.bf16.mxu0 0
        %5724 = vmatpush1.bf16.msra.mxu0 0
        %5725 = vmatprep.subr.bf16.mxu0 0
        %5726 = vmatpush1.bf16.msra.mxu0 0
        %5727 = vmatprep.subr.bf16.mxu0 0
        %5728 = vmatpush1.bf16.msra.mxu0 0
        %5729 = vmatprep.subr.bf16.mxu0 0
        %5730 = vmatpush1.bf16.msra.mxu0 0
        %5731 = vmatprep.subr.bf16.mxu0 0
        %5732 = vmatpush1.bf16.msra.mxu0 0
        %5733 = vmatprep.subr.bf16.mxu0 0
        %5734 = vmatpush1.bf16.msra.mxu0 0
        %5735 = vmatprep.subr.bf16.mxu0 0
        %5736 = vmatpush1.bf16.msra.mxu0 0
        %5737 = vmatprep.subr.bf16.mxu0 0
        %5738 = vmatpush1.bf16.msra.mxu0 0
        %5739 = vmatprep.mubr.bf16.mxu0 0
        %5740 = vmatmul.mubr.bf16.gmra.mrb[0].mxu0 %v5627
        %v5741 = vpop.f32.mrb[0].mxu0
        %v5742 = vadd.f32 0.0, %v5741
        %v5743 = vpop.f32.mrb[0].mxu0
        %v5744 = vpop.f32.mrb[0].mxu0
        %v5745 = vadd.f32 0.0, %v5744
        %v5746 = vpop.f32.mrb[0].mxu0
        %5747 = vmatprep.mubr.bf16.mxu0 0
        %5748 = vmatmul.mubr.bf16.gmra.mrb[0].mxu0 %v5628
        %v5749 = vpop.f32.mrb[0].mxu0
        %v5750 = vadd.f32 0.0, %v5749
        %v5751 = vpop.f32.mrb[0].mxu0
        %v5752 = vpop.f32.mrb[0].mxu0
        %v5753 = vadd.f32 0.0, %v5752
        %v5754 = vpop.f32.mrb[0].mxu0
        %5755 = vmatprep.mubr.bf16.mxu0 0
        %5756 = vmatmul.mubr.bf16.gmra.mrb[0].mxu0 %v5629
        %v5757 = vpop.f32.mrb[0].mxu0
        %v5758 = vadd.f32 0.0, %v5757
        %v5759 = vpop.f32.mrb[0].mxu0
        %v5760 = vpop.f32.mrb[0].mxu0
        %v5761 = vadd.f32 0.0, %v5760
        %v5762 = vpop.f32.mrb[0].mxu0
        %5763 = vmatprep.mubr.bf16.mxu0 0
        %5764 = vmatmul.mubr.bf16.gmra.mrb[0].mxu0 %v5630
        %v5765 = vpop.f32.mrb[0].mxu0
        %v5766 = vadd.f32 0.0, %v5765
        %v5767 = vpop.f32.mrb[0].mxu0
        %v5768 = vpop.f32.mrb[0].mxu0
        %v5769 = vadd.f32 0.0, %v5768
        %v5770 = vpop.f32.mrb[0].mxu0
        %5771 = vmatprep.mubr.bf16.mxu0 0
        %5772 = vmatmul.mubr.bf16.gmra.mrb[0].mxu0 %v5631
        %v5773 = vpop.f32.mrb[0].mxu0
        %v5774 = vadd.f32 0.0, %v5773
        %v5775 = vpop.f32.mrb[0].mxu0
        %v5776 = vpop.f32.mrb[0].mxu0
        %v5777 = vadd.f32 0.0, %v5776
        %v5778 = vpop.f32.mrb[0].mxu0
        %5779 = vmatprep.mubr.bf16.mxu0 0
        %5780 = vmatmul.mubr.bf16.gmra.mrb[0].mxu0 %v5632
        %v5781 = vpop.f32.mrb[0].mxu0
        %v5782 = vadd.f32 0.0, %v5781
        %v5783 = vpop.f32.mrb[0].mxu0
        %v5784 = vpop.f32.mrb[0].mxu0
        %v5785 = vadd.f32 0.0, %v5784
        %v5786 = vpop.f32.mrb[0].mxu0
        %5787 = vmatprep.mubr.bf16.mxu0 0
        %5788 = vmatmul.mubr.bf16.gmra.mrb[0].mxu0 %v5633
        %v5789 = vpop.f32.mrb[0].mxu0
        %v5790 = vadd.f32 0.0, %v5789
        %v5791 = vpop.f32.mrb[0].mxu0
        %v5792 = vpop.f32.mrb[0].mxu0
        %v5793 = vadd.f32 0.0, %v5792
        %v5794 = vpop.f32.mrb[0].mxu0
        %5795 = vmatprep.mubr.bf16.mxu0 0
        %5796 = vmatmul.mubr.bf16.gmra.mrb[0].mxu0 %v5634
        %v5797 = vpop.f32.mrb[0].mxu0
        %v5798 = vadd.f32 0.0, %v5797
        %v5799 = vpop.f32.mrb[0].mxu0
        %v5800 = vpop.f32.mrb[0].mxu0
        %v5801 = vadd.f32 0.0, %v5800
        %v5802 = vpop.f32.mrb[0].mxu0
        %5803 = vmatprep.mubr.bf16.mxu0 0
        %5804 = vmatmul.mubr.bf16.gmra.mrb[0].mxu0 %v5635
        %v5805 = vpop.f32.mrb[0].mxu0
        %v5806 = vadd.f32 0.0, %v5805
        %v5807 = vpop.f32.mrb[0].mxu0
        %v5808 = vpop.f32.mrb[0].mxu0
        %v5809 = vadd.f32 0.0, %v5808
        %v5810 = vpop.f32.mrb[0].mxu0
        %5811 = vmatprep.mubr.bf16.mxu0 0
        %5812 = vmatmul.mubr.bf16.gmra.mrb[0].mxu0 %v5636
        %v5813 = vpop.f32.mrb[0].mxu0
        %v5814 = vadd.f32 0.0, %v5813
        %v5815 = vpop.f32.mrb[0].mxu0
        %v5816 = vpop.f32.mrb[0].mxu0
        %v5817 = vadd.f32 0.0, %v5816
        %v5818 = vpop.f32.mrb[0].mxu0
        %5819 = vmatprep.mubr.bf16.mxu0 0
        %5820 = vmatmul.mubr.bf16.gmra.mrb[0].mxu0 %v5637
        %v5821 = vpop.f32.mrb[0].mxu0
        %v5822 = vadd.f32 0.0, %v5821
        %v5823 = vpop.f32.mrb[0].mxu0
        %v5824 = vpop.f32.mrb[0].mxu0
        %v5825 = vadd.f32 0.0, %v5824
        %v5826 = vpop.f32.mrb[0].mxu0
        %5827 = vmatprep.mubr.bf16.mxu0 0
        %5828 = vmatmul.mubr.bf16.gmra.mrb[0].mxu0 %v5638
        %v5829 = vpop.f32.mrb[0].mxu0
        %v5830 = vadd.f32 0.0, %v5829
        %v5831 = vpop.f32.mrb[0].mxu0
        %v5832 = vpop.f32.mrb[0].mxu0
        %v5833 = vadd.f32 0.0, %v5832
        %v5834 = vpop.f32.mrb[0].mxu0
        %5835 = vmatprep.mubr.bf16.mxu0 0
        %5836 = vmatmul.mubr.bf16.gmra.mrb[0].mxu0 %v5639
        %v5837 = vpop.f32.mrb[0].mxu0
        %v5838 = vadd.f32 0.0, %v5837
        %v5839 = vpop.f32.mrb[0].mxu0
        %v5840 = vpop.f32.mrb[0].mxu0
        %v5841 = vadd.f32 0.0, %v5840
        %v5842 = vpop.f32.mrb[0].mxu0
        %5843 = vmatprep.mubr.bf16.mxu0 0
        %5844 = vmatmul.mubr.bf16.gmra.mrb[0].mxu0 %v5640
        %v5845 = vpop.f32.mrb[0].mxu0
        %v5846 = vadd.f32 0.0, %v5845
        %v5847 = vpop.f32.mrb[0].mxu0
        %v5848 = vpop.f32.mrb[0].mxu0
        %v5849 = vadd.f32 0.0, %v5848
        %v5850 = vpop.f32.mrb[0].mxu0
        %5851 = vmatprep.mubr.bf16.mxu0 0
        %5852 = vmatmul.mubr.bf16.gmra.mrb[0].mxu0 %v5641
        %v5853 = vpop.f32.mrb[0].mxu0
        %v5854 = vadd.f32 0.0, %v5853
        %v5855 = vpop.f32.mrb[0].mxu0
        %v5856 = vpop.f32.mrb[0].mxu0
        %v5857 = vadd.f32 0.0, %v5856
        %v5858 = vpop.f32.mrb[0].mxu0
        %5859 = vmatprep.mubr.bf16.mxu0 0
        %5860 = vmatmul.mubr.bf16.gmra.mrb[0].mxu0 %v5642
        %v5861 = vpop.f32.mrb[0].mxu0
        %v5862 = vadd.f32 0.0, %v5861
        %v5863 = vpop.f32.mrb[0].mxu0
        %v5864 = vpop.f32.mrb[0].mxu0
        %v5865 = vadd.f32 0.0, %v5864
        %v5866 = vpop.f32.mrb[0].mxu0
        %5867 = vdwg.mxu0
        %v5868 = vadd.f32 %v5370, %v5742
        %v5869 = vadd.f32 %v5371, %v5745
        %v5870 = vadd.f32 %v5372, %v5750
        %v5871 = vadd.f32 %v5373, %v5753
        %v5872 = vadd.f32 %v5374, %v5758
        %v5873 = vadd.f32 %v5375, %v5761
        %v5874 = vadd.f32 %v5376, %v5766
        %v5875 = vadd.f32 %v5377, %v5769
        %v5876 = vadd.f32 %v5378, %v5774
        %v5877 = vadd.f32 %v5379, %v5777
        %v5878 = vadd.f32 %v5380, %v5782
        %v5879 = vadd.f32 %v5381, %v5785
        %v5880 = vadd.f32 %v5382, %v5790
        %v5881 = vadd.f32 %v5383, %v5793
        %v5882 = vadd.f32 %v5384, %v5798
        %v5883 = vadd.f32 %v5385, %v5801
        %v5884 = vadd.f32 %v5386, %v5806
        %v5885 = vadd.f32 %v5387, %v5809
        %v5886 = vadd.f32 %v5388, %v5814
        %v5887 = vadd.f32 %v5389, %v5817
        %v5888 = vadd.f32 %v5390, %v5822
        %v5889 = vadd.f32 %v5391, %v5825
        %v5890 = vadd.f32 %v5392, %v5830
        %v5891 = vadd.f32 %v5393, %v5833
        %v5892 = vadd.f32 %v5394, %v5838
        %v5893 = vadd.f32 %v5395, %v5841
        %v5894 = vadd.f32 %v5396, %v5846
        %v5895 = vadd.f32 %v5397, %v5849
        %v5896 = vadd.f32 %v5398, %v5854
        %v5897 = vadd.f32 %v5399, %v5857
        %v5898 = vadd.f32 %v5400, %v5862
        %v5899 = vadd.f32 %v5401, %v5865
        %v5900 = vadd.f32 %v5868, %v5869
        %v5901 = vadd.f32 %v5900, %v5870
        %v5902 = vadd.f32 %v5901, %v5871
        %v5903 = vadd.f32 %v5902, %v5872
        %v5904 = vadd.f32 %v5903, %v5873
        %v5905 = vadd.f32 %v5904, %v5874
        %v5906 = vadd.f32 %v5905, %v5875
        %v5907 = vadd.f32 %v5906, %v5876
        %v5908 = vadd.f32 %v5907, %v5877
        %v5909 = vadd.f32 %v5908, %v5878
        %v5910 = vadd.f32 %v5909, %v5879
        %v5911 = vadd.f32 %v5910, %v5880
        %v5912 = vadd.f32 %v5911, %v5881
        %v5913 = vadd.f32 %v5912, %v5882
        %v5914 = vadd.f32 %v5913, %v5883
        %v5915 = vadd.f32 %v5914, %v5884
        %v5916 = vadd.f32 %v5915, %v5885
        %v5917 = vadd.f32 %v5916, %v5886
        %v5918 = vadd.f32 %v5917, %v5887
        %v5919 = vadd.f32 %v5918, %v5888
        %v5920 = vadd.f32 %v5919, %v5889
        %v5921 = vadd.f32 %v5920, %v5890
        %v5922 = vadd.f32 %v5921, %v5891
        %v5923 = vadd.f32 %v5922, %v5892
        %v5924 = vadd.f32 %v5923, %v5893
        %v5925 = vadd.f32 %v5924, %v5894
        %v5926 = vadd.f32 %v5925, %v5895
        %v5927 = vadd.f32 %v5926, %v5896
        %v5928 = vadd.f32 %v5927, %v5897
        %v5929 = vadd.f32 %v5928, %v5898
        %v5930 = vadd.f32 %v5929, %v5899
        %v5931 = vrot.slane %v5930, 4
        %v5932 = vadd.f32 %v5930, %v5931
        %v5933 = vrot.slane %v5932, 2
        %v5934 = vadd.f32 %v5932, %v5933
        %v5935 = vrot.slane %v5934, 1
        %v5936 = vadd.f32 %v5934, %v5935
        %v5937 = vmul.f32 %v5936, 0.00390625
        %v5938 = vsub.f32 %v5868, %v5937
        %v5939 = vsub.f32 %v5869, %v5937
        %v5940 = vsub.f32 %v5870, %v5937
        %v5941 = vsub.f32 %v5871, %v5937
        %v5942 = vsub.f32 %v5872, %v5937
        %v5943 = vsub.f32 %v5873, %v5937
        %v5944 = vsub.f32 %v5874, %v5937
        %v5945 = vsub.f32 %v5875, %v5937
        %v5946 = vsub.f32 %v5876, %v5937
        %v5947 = vsub.f32 %v5877, %v5937
        %v5948 = vsub.f32 %v5878, %v5937
        %v5949 = vsub.f32 %v5879, %v5937
        %v5950 = vsub.f32 %v5880, %v5937
        %v5951 = vsub.f32 %v5881, %v5937
        %v5952 = vsub.f32 %v5882, %v5937
        %v5953 = vsub.f32 %v5883, %v5937
        %v5954 = vsub.f32 %v5884, %v5937
        %v5955 = vsub.f32 %v5885, %v5937
        %v5956 = vsub.f32 %v5886, %v5937
        %v5957 = vsub.f32 %v5887, %v5937
        %v5958 = vsub.f32 %v5888, %v5937
        %v5959 = vsub.f32 %v5889, %v5937
        %v5960 = vsub.f32 %v5890, %v5937
        %v5961 = vsub.f32 %v5891, %v5937
        %v5962 = vsub.f32 %v5892, %v5937
        %v5963 = vsub.f32 %v5893, %v5937
        %v5964 = vsub.f32 %v5894, %v5937
        %v5965 = vsub.f32 %v5895, %v5937
        %v5966 = vsub.f32 %v5896, %v5937
        %v5967 = vsub.f32 %v5897, %v5937
        %v5968 = vsub.f32 %v5898, %v5937
        %v5969 = vsub.f32 %v5899, %v5937
        %v5970 = vmul.f32 %v5938, %v5938
        %v5971 = vmul.f32 %v5939, %v5939
        %v5972 = vmul.f32 %v5940, %v5940
        %v5973 = vmul.f32 %v5941, %v5941
        %v5974 = vmul.f32 %v5942, %v5942
        %v5975 = vmul.f32 %v5943, %v5943
        %v5976 = vmul.f32 %v5944, %v5944
        %v5977 = vmul.f32 %v5945, %v5945
        %v5978 = vmul.f32 %v5946, %v5946
        %v5979 = vmul.f32 %v5947, %v5947
        %v5980 = vmul.f32 %v5948, %v5948
        %v5981 = vmul.f32 %v5949, %v5949
        %v5982 = vmul.f32 %v5950, %v5950
        %v5983 = vmul.f32 %v5951, %v5951
        %v5984 = vmul.f32 %v5952, %v5952
        %v5985 = vmul.f32 %v5953, %v5953
        %v5986 = vmul.f32 %v5954, %v5954
        %v5987 = vmul.f32 %v5955, %v5955
        %v5988 = vmul.f32 %v5956, %v5956
        %v5989 = vmul.f32 %v5957, %v5957
        %v5990 = vmul.f32 %v5958, %v5958
        %v5991 = vmul.f32 %v5959, %v5959
        %v5992 = vmul.f32 %v5960, %v5960
        %v5993 = vmul.f32 %v5961, %v5961
        %v5994 = vmul.f32 %v5962, %v5962
        %v5995 = vmul.f32 %v5963, %v5963
        %v5996 = vmul.f32 %v5964, %v5964
        %v5997 = vmul.f32 %v5965, %v5965
        %v5998 = vmul.f32 %v5966, %v5966
        %v5999 = vmul.f32 %v5967, %v5967
        %v6000 = vmul.f32 %v5968, %v5968
        %v6001 = vmul.f32 %v5969, %v5969
        %v6002 = vadd.f32 %v5970, %v5971
        %v6003 = vadd.f32 %v6002, %v5972
        %v6004 = vadd.f32 %v6003, %v5973
        %v6005 = vadd.f32 %v6004, %v5974
        %v6006 = vadd.f32 %v6005, %v5975
        %v6007 = vadd.f32 %v6006, %v5976
        %v6008 = vadd.f32 %v6007, %v5977
        %v6009 = vadd.f32 %v6008, %v5978
        %v6010 = vadd.f32 %v6009, %v5979
        %v6011 = vadd.f32 %v6010, %v5980
        %v6012 = vadd.f32 %v6011, %v5981
        %v6013 = vadd.f32 %v6012, %v5982
        %v6014 = vadd.f32 %v6013, %v5983
        %v6015 = vadd.f32 %v6014, %v5984
        %v6016 = vadd.f32 %v6015, %v5985
        %v6017 = vadd.f32 %v6016, %v5986
        %v6018 = vadd.f32 %v6017, %v5987
        %v6019 = vadd.f32 %v6018, %v5988
        %v6020 = vadd.f32 %v6019, %v5989
        %v6021 = vadd.f32 %v6020, %v5990
        %v6022 = vadd.f32 %v6021, %v5991
        %v6023 = vadd.f32 %v6022, %v5992
        %v6024 = vadd.f32 %v6023, %v5993
        %v6025 = vadd.f32 %v6024, %v5994
        %v6026 = vadd.f32 %v6025, %v5995
        %v6027 = vadd.f32 %v6026, %v5996
        %v6028 = vadd.f32 %v6027, %v5997
        %v6029 = vadd.f32 %v6028, %v5998
        %v6030 = vadd.f32 %v6029, %v5999
        %v6031 = vadd.f32 %v6030, %v6000
        %v6032 = vadd.f32 %v6031, %v6001
        %v6033 = vrot.slane %v6032, 4
        %v6034 = vadd.f32 %v6032, %v6033
        %v6035 = vrot.slane %v6034, 2
        %v6036 = vadd.f32 %v6034, %v6035
        %v6037 = vrot.slane %v6036, 1
        %v6038 = vadd.f32 %v6036, %v6037
        %v6039 = vmul.f32 %v6038, 0.00390625
        %v6040 = vadd.f32 %v6039, 1e-05
        %v6041 = vrsqrt.pop %v6040
        %v6042 = vmul.f32 %v5938, %v6041
        %v6043 = vmul.f32 %v5939, %v6041
        %v6044 = vmul.f32 %v5940, %v6041
        %v6045 = vmul.f32 %v5941, %v6041
        %v6046 = vmul.f32 %v5942, %v6041
        %v6047 = vmul.f32 %v5943, %v6041
        %v6048 = vmul.f32 %v5944, %v6041
        %v6049 = vmul.f32 %v5945, %v6041
        %v6050 = vmul.f32 %v5946, %v6041
        %v6051 = vmul.f32 %v5947, %v6041
        %v6052 = vmul.f32 %v5948, %v6041
        %v6053 = vmul.f32 %v5949, %v6041
        %v6054 = vmul.f32 %v5950, %v6041
        %v6055 = vmul.f32 %v5951, %v6041
        %v6056 = vmul.f32 %v5952, %v6041
        %v6057 = vmul.f32 %v5953, %v6041
        %v6058 = vmul.f32 %v5954, %v6041
        %v6059 = vmul.f32 %v5955, %v6041
        %v6060 = vmul.f32 %v5956, %v6041
        %v6061 = vmul.f32 %v5957, %v6041
        %v6062 = vmul.f32 %v5958, %v6041
        %v6063 = vmul.f32 %v5959, %v6041
        %v6064 = vmul.f32 %v5960, %v6041
        %v6065 = vmul.f32 %v5961, %v6041
        %v6066 = vmul.f32 %v5962, %v6041
        %v6067 = vmul.f32 %v5963, %v6041
        %v6068 = vmul.f32 %v5964, %v6041
        %v6069 = vmul.f32 %v5965, %v6041
        %v6070 = vmul.f32 %v5966, %v6041
        %v6071 = vmul.f32 %v5967, %v6041
        %v6072 = vmul.f32 %v5968, %v6041
        %v6073 = vmul.f32 %v5969, %v6041
        %v6074 = vmax.f32 %v6042, 0.0
        %v6075 = vmax.f32 %v6043, 0.0
        %v6076 = vmax.f32 %v6044, 0.0
        %v6077 = vmax.f32 %v6045, 0.0
        %v6078 = vmax.f32 %v6046, 0.0
        %v6079 = vmax.f32 %v6047, 0.0
        %v6080 = vmax.f32 %v6048, 0.0
        %v6081 = vmax.f32 %v6049, 0.0
        %v6082 = vmax.f32 %v6050, 0.0
        %v6083 = vmax.f32 %v6051, 0.0
        %v6084 = vmax.f32 %v6052, 0.0
        %v6085 = vmax.f32 %v6053, 0.0
        %v6086 = vmax.f32 %v6054, 0.0
        %v6087 = vmax.f32 %v6055, 0.0
        %v6088 = vmax.f32 %v6056, 0.0
        %v6089 = vmax.f32 %v6057, 0.0
        %v6090 = vmax.f32 %v6058, 0.0
        %v6091 = vmax.f32 %v6059, 0.0
        %v6092 = vmax.f32 %v6060, 0.0
        %v6093 = vmax.f32 %v6061, 0.0
        %v6094 = vmax.f32 %v6062, 0.0
        %v6095 = vmax.f32 %v6063, 0.0
        %v6096 = vmax.f32 %v6064, 0.0
        %v6097 = vmax.f32 %v6065, 0.0
        %v6098 = vmax.f32 %v6066, 0.0
        %v6099 = vmax.f32 %v6067, 0.0
        %v6100 = vmax.f32 %v6068, 0.0
        %v6101 = vmax.f32 %v6069, 0.0
        %v6102 = vmax.f32 %v6070, 0.0
        %v6103 = vmax.f32 %v6071, 0.0
        %v6104 = vmax.f32 %v6072, 0.0
        %v6105 = vmax.f32 %v6073, 0.0
        %v6106 = vpack.c.bf16 %v6075, %v6074
        %v6107 = vpack.c.bf16 %v6077, %v6076
        %v6108 = vpack.c.bf16 %v6079, %v6078
        %v6109 = vpack.c.bf16 %v6081, %v6080
        %v6110 = vpack.c.bf16 %v6083, %v6082
        %v6111 = vpack.c.bf16 %v6085, %v6084
        %v6112 = vpack.c.bf16 %v6087, %v6086
        %v6113 = vpack.c.bf16 %v6089, %v6088
        %v6114 = vpack.c.bf16 %v6091, %v6090
        %v6115 = vpack.c.bf16 %v6093, %v6092
        %v6116 = vpack.c.bf16 %v6095, %v6094
        %v6117 = vpack.c.bf16 %v6097, %v6096
        %v6118 = vpack.c.bf16 %v6099, %v6098
        %v6119 = vpack.c.bf16 %v6101, %v6100
        %v6120 = vpack.c.bf16 %v6103, %v6102
        %v6121 = vpack.c.bf16 %v6105, %v6104
        %v6138 = vunpack.c.l.b16 %v6106
        %v6139 = vunpack.c.h.b16 %v6106
        %v6140 = vunpack.c.l.b16 %v6107
        %v6141 = vunpack.c.h.b16 %v6107
        %v6142 = vunpack.c.l.b16 %v6108
        %v6143 = vunpack.c.h.b16 %v6108
        %v6144 = vunpack.c.l.b16 %v6109
        %v6145 = vunpack.c.h.b16 %v6109
        %v6146 = vunpack.c.l.b16 %v6110
        %v6147 = vunpack.c.h.b16 %v6110
        %v6148 = vunpack.c.l.b16 %v6111
        %v6149 = vunpack.c.h.b16 %v6111
        %v6150 = vunpack.c.l.b16 %v6112
        %v6151 = vunpack.c.h.b16 %v6112
        %v6152 = vunpack.c.l.b16 %v6113
        %v6153 = vunpack.c.h.b16 %v6113
        %v6154 = vunpack.c.l.b16 %v6114
        %v6155 = vunpack.c.h.b16 %v6114
        %v6156 = vunpack.c.l.b16 %v6115
        %v6157 = vunpack.c.h.b16 %v6115
        %v6158 = vunpack.c.l.b16 %v6116
        %v6159 = vunpack.c.h.b16 %v6116
        %v6160 = vunpack.c.l.b16 %v6117
        %v6161 = vunpack.c.h.b16 %v6117
        %v6162 = vunpack.c.l.b16 %v6118
        %v6163 = vunpack.c.h.b16 %v6118
        %v6164 = vunpack.c.l.b16 %v6119
        %v6165 = vunpack.c.h.b16 %v6119
        %v6166 = vunpack.c.l.b16 %v6120
        %v6167 = vunpack.c.h.b16 %v6120
        %v6168 = vunpack.c.l.b16 %v6121
        %v6169 = vunpack.c.h.b16 %v6121
        %v6170 = vpack.c.b16 %v6138, %v6138
        %v6171 = vpack.c.b16 %v6139, %v6139
        %v6172 = vpack.c.b16 %v6140, %v6140
        %v6173 = vpack.c.b16 %v6141, %v6141
        %v6174 = vpack.c.b16 %v6142, %v6142
        %v6175 = vpack.c.b16 %v6143, %v6143
        %v6176 = vpack.c.b16 %v6144, %v6144
        %v6177 = vpack.c.b16 %v6145, %v6145
        %v6178 = vpack.c.b16 %v6146, %v6146
        %v6179 = vpack.c.b16 %v6147, %v6147
        %v6180 = vpack.c.b16 %v6148, %v6148
        %v6181 = vpack.c.b16 %v6149, %v6149
        %v6182 = vpack.c.b16 %v6150, %v6150
        %v6183 = vpack.c.b16 %v6151, %v6151
        %v6184 = vpack.c.b16 %v6152, %v6152
        %v6185 = vpack.c.b16 %v6153, %v6153
        %v6186 = vpack.c.b16 %v6154, %v6154
        %v6187 = vpack.c.b16 %v6155, %v6155
        %v6188 = vpack.c.b16 %v6156, %v6156
        %v6189 = vpack.c.b16 %v6157, %v6157
        %v6190 = vpack.c.b16 %v6158, %v6158
        %v6191 = vpack.c.b16 %v6159, %v6159
        %v6192 = vpack.c.b16 %v6160, %v6160
        %v6193 = vpack.c.b16 %v6161, %v6161
        %v6194 = vpack.c.b16 %v6162, %v6162
        %v6195 = vpack.c.b16 %v6163, %v6163
        %v6196 = vpack.c.b16 %v6164, %v6164
        %v6197 = vpack.c.b16 %v6165, %v6165
        %v6198 = vpack.c.b16 %v6166, %v6166
        %v6199 = vpack.c.b16 %v6167, %v6167
        %v6200 = vpack.c.b16 %v6168, %v6168
        %v6201 = vpack.c.b16 %v6169, %v6169
        %v6203 = vshrl.u32 %v6170, 16
        %v6205 = vrot.slane %v6203, 7
        %v6206 = vshll.u32 %v6170, 16
        %v6208 = vor.u32 %v6205, %v6206
        %v6209 = vrot.slane %v6205, 4
        %v6211 = vshrl.u32 %v6171, 16
        %v6213 = vrot.slane %v6211, 7
        %v6214 = vshll.u32 %v6171, 16
        %v6216 = vor.u32 %v6213, %v6214
        %v6217 = vsel %vm349, %v6209, %v6216
        %v6218 = vrot.slane %v6213, 4
        %v6220 = vshrl.u32 %v6172, 16
        %v6222 = vrot.slane %v6220, 7
        %v6223 = vshll.u32 %v6172, 16
        %v6225 = vor.u32 %v6222, %v6223
        %v6226 = vrot.slane %v6222, 4
        %v6228 = vshrl.u32 %v6173, 16
        %v6230 = vrot.slane %v6228, 7
        %v6231 = vshll.u32 %v6173, 16
        %v6233 = vor.u32 %v6230, %v6231
        %v6234 = vsel %vm349, %v6226, %v6233
        %v6235 = vrot.slane %v6230, 4
        %v6237 = vshrl.u32 %v6174, 16
        %v6239 = vrot.slane %v6237, 7
        %v6240 = vshll.u32 %v6174, 16
        %v6242 = vor.u32 %v6239, %v6240
        %v6243 = vrot.slane %v6239, 4
        %v6245 = vshrl.u32 %v6175, 16
        %v6247 = vrot.slane %v6245, 7
        %v6248 = vshll.u32 %v6175, 16
        %v6250 = vor.u32 %v6247, %v6248
        %v6251 = vsel %vm349, %v6243, %v6250
        %v6252 = vrot.slane %v6247, 4
        %v6254 = vshrl.u32 %v6176, 16
        %v6256 = vrot.slane %v6254, 7
        %v6257 = vshll.u32 %v6176, 16
        %v6259 = vor.u32 %v6256, %v6257
        %v6260 = vrot.slane %v6256, 4
        %v6262 = vshrl.u32 %v6177, 16
        %v6264 = vrot.slane %v6262, 7
        %v6265 = vshll.u32 %v6177, 16
        %v6267 = vor.u32 %v6264, %v6265
        %v6268 = vsel %vm349, %v6260, %v6267
        %v6269 = vrot.slane %v6264, 4
        %v6271 = vshrl.u32 %v6178, 16
        %v6273 = vrot.slane %v6271, 7
        %v6274 = vshll.u32 %v6178, 16
        %v6276 = vor.u32 %v6273, %v6274
        %v6277 = vrot.slane %v6273, 4
        %v6279 = vshrl.u32 %v6179, 16
        %v6281 = vrot.slane %v6279, 7
        %v6282 = vshll.u32 %v6179, 16
        %v6284 = vor.u32 %v6281, %v6282
        %v6285 = vsel %vm349, %v6277, %v6284
        %v6286 = vrot.slane %v6281, 4
        %v6288 = vshrl.u32 %v6180, 16
        %v6290 = vrot.slane %v6288, 7
        %v6291 = vshll.u32 %v6180, 16
        %v6293 = vor.u32 %v6290, %v6291
        %v6294 = vrot.slane %v6290, 4
        %v6296 = vshrl.u32 %v6181, 16
        %v6298 = vrot.slane %v6296, 7
        %v6299 = vshll.u32 %v6181, 16
        %v6301 = vor.u32 %v6298, %v6299
        %v6302 = vsel %vm349, %v6294, %v6301
        %v6303 = vrot.slane %v6298, 4
        %v6305 = vshrl.u32 %v6182, 16
        %v6307 = vrot.slane %v6305, 7
        %v6308 = vshll.u32 %v6182, 16
        %v6310 = vor.u32 %v6307, %v6308
        %v6311 = vrot.slane %v6307, 4
        %v6313 = vshrl.u32 %v6183, 16
        %v6315 = vrot.slane %v6313, 7
        %v6316 = vshll.u32 %v6183, 16
        %v6318 = vor.u32 %v6315, %v6316
        %v6319 = vsel %vm349, %v6311, %v6318
        %v6320 = vrot.slane %v6315, 4
        %v6322 = vshrl.u32 %v6184, 16
        %v6324 = vrot.slane %v6322, 7
        %v6325 = vshll.u32 %v6184, 16
        %v6327 = vor.u32 %v6324, %v6325
        %v6328 = vrot.slane %v6324, 4
        %v6330 = vshrl.u32 %v6185, 16
        %v6332 = vrot.slane %v6330, 7
        %v6333 = vshll.u32 %v6185, 16
        %v6335 = vor.u32 %v6332, %v6333
        %v6336 = vsel %vm349, %v6328, %v6335
        %v6337 = vrot.slane %v6332, 4
        %v6339 = vshrl.u32 %v6186, 16
        %v6341 = vrot.slane %v6339, 7
        %v6342 = vshll.u32 %v6186, 16
        %v6344 = vor.u32 %v6341, %v6342
        %v6345 = vrot.slane %v6341, 4
        %v6347 = vshrl.u32 %v6187, 16
        %v6349 = vrot.slane %v6347, 7
        %v6350 = vshll.u32 %v6187, 16
        %v6352 = vor.u32 %v6349, %v6350
        %v6353 = vsel %vm349, %v6345, %v6352
        %v6354 = vrot.slane %v6349, 4
        %v6356 = vshrl.u32 %v6188, 16
        %v6358 = vrot.slane %v6356, 7
        %v6359 = vshll.u32 %v6188, 16
        %v6361 = vor.u32 %v6358, %v6359
        %v6362 = vrot.slane %v6358, 4
        %v6364 = vshrl.u32 %v6189, 16
        %v6366 = vrot.slane %v6364, 7
        %v6367 = vshll.u32 %v6189, 16
        %v6369 = vor.u32 %v6366, %v6367
        %v6370 = vsel %vm349, %v6362, %v6369
        %v6371 = vrot.slane %v6366, 4
        %v6373 = vshrl.u32 %v6190, 16
        %v6375 = vrot.slane %v6373, 7
        %v6376 = vshll.u32 %v6190, 16
        %v6378 = vor.u32 %v6375, %v6376
        %v6379 = vrot.slane %v6375, 4
        %v6381 = vshrl.u32 %v6191, 16
        %v6383 = vrot.slane %v6381, 7
        %v6384 = vshll.u32 %v6191, 16
        %v6386 = vor.u32 %v6383, %v6384
        %v6387 = vsel %vm349, %v6379, %v6386
        %v6388 = vrot.slane %v6383, 4
        %v6390 = vshrl.u32 %v6192, 16
        %v6392 = vrot.slane %v6390, 7
        %v6393 = vshll.u32 %v6192, 16
        %v6395 = vor.u32 %v6392, %v6393
        %v6396 = vrot.slane %v6392, 4
        %v6398 = vshrl.u32 %v6193, 16
        %v6400 = vrot.slane %v6398, 7
        %v6401 = vshll.u32 %v6193, 16
        %v6403 = vor.u32 %v6400, %v6401
        %v6404 = vsel %vm349, %v6396, %v6403
        %v6405 = vrot.slane %v6400, 4
        %v6407 = vshrl.u32 %v6194, 16
        %v6409 = vrot.slane %v6407, 7
        %v6410 = vshll.u32 %v6194, 16
        %v6412 = vor.u32 %v6409, %v6410
        %v6413 = vrot.slane %v6409, 4
        %v6415 = vshrl.u32 %v6195, 16
        %v6417 = vrot.slane %v6415, 7
        %v6418 = vshll.u32 %v6195, 16
        %v6420 = vor.u32 %v6417, %v6418
        %v6421 = vsel %vm349, %v6413, %v6420
        %v6422 = vrot.slane %v6417, 4
        %v6424 = vshrl.u32 %v6196, 16
        %v6426 = vrot.slane %v6424, 7
        %v6427 = vshll.u32 %v6196, 16
        %v6429 = vor.u32 %v6426, %v6427
        %v6430 = vrot.slane %v6426, 4
        %v6432 = vshrl.u32 %v6197, 16
        %v6434 = vrot.slane %v6432, 7
        %v6435 = vshll.u32 %v6197, 16
        %v6437 = vor.u32 %v6434, %v6435
        %v6438 = vsel %vm349, %v6430, %v6437
        %v6439 = vrot.slane %v6434, 4
        %v6441 = vshrl.u32 %v6198, 16
        %v6443 = vrot.slane %v6441, 7
        %v6444 = vshll.u32 %v6198, 16
        %v6446 = vor.u32 %v6443, %v6444
        %v6447 = vrot.slane %v6443, 4
        %v6449 = vshrl.u32 %v6199, 16
        %v6451 = vrot.slane %v6449, 7
        %v6452 = vshll.u32 %v6199, 16
        %v6454 = vor.u32 %v6451, %v6452
        %v6455 = vsel %vm349, %v6447, %v6454
        %v6456 = vrot.slane %v6451, 4
        %v6458 = vshrl.u32 %v6200, 16
        %v6460 = vrot.slane %v6458, 7
        %v6461 = vshll.u32 %v6200, 16
        %v6463 = vor.u32 %v6460, %v6461
        %v6464 = vrot.slane %v6460, 4
        %v6466 = vshrl.u32 %v6201, 16
        %v6468 = vrot.slane %v6466, 7
        %v6469 = vshll.u32 %v6201, 16
        %v6471 = vor.u32 %v6468, %v6469
        %v6472 = vsel %vm349, %v6464, %v6471
        %v6473 = vrot.slane %v6468, 4
        %v6522 = vsel %vm673, %v6208, %v3009
        %6523 = vst [vmem:[%s670] sm:$0xf] %v6522
        %6524 = vst [vmem:[%s670 + $0x4] sm:$0xf] %v6217
        %v6525 = vld [vmem:[%s670 + $0x8] sm:$0x1]
        %v6526 = vsel %vm679, %v6218, %v6525
        %6527 = vst [vmem:[%s670 + $0x8] sm:$0x1] %v6526
        %v6528 = vld [vmem:[%s670 + $0xc] sm:$0xf]
        %v6529 = vsel %vm673, %v6225, %v6528
        %6530 = vst [vmem:[%s670 + $0xc] sm:$0xf] %v6529
        %6531 = vst [vmem:[%s670 + $0x10] sm:$0xf] %v6234
        %v6532 = vld [vmem:[%s670 + $0x14] sm:$0x1]
        %v6533 = vsel %vm679, %v6235, %v6532
        %6534 = vst [vmem:[%s670 + $0x14] sm:$0x1] %v6533
        %v6535 = vld [vmem:[%s670 + $0x18] sm:$0xf]
        %v6536 = vsel %vm673, %v6242, %v6535
        %6537 = vst [vmem:[%s670 + $0x18] sm:$0xf] %v6536
        %6538 = vst [vmem:[%s670 + $0x1c] sm:$0xf] %v6251
        %v6539 = vld [vmem:[%s670 + $0x20] sm:$0x1]
        %v6540 = vsel %vm679, %v6252, %v6539
        %6541 = vst [vmem:[%s670 + $0x20] sm:$0x1] %v6540
        %v6542 = vld [vmem:[%s670 + $0x24] sm:$0xf]
        %v6543 = vsel %vm673, %v6259, %v6542
        %6544 = vst [vmem:[%s670 + $0x24] sm:$0xf] %v6543
        %6545 = vst [vmem:[%s670 + $0x28] sm:$0xf] %v6268
        %v6546 = vld [vmem:[%s670 + $0x2c] sm:$0x1]
        %v6547 = vsel %vm679, %v6269, %v6546
        %6548 = vst [vmem:[%s670 + $0x2c] sm:$0x1] %v6547
        %v6549 = vld [vmem:[%s670 + $0x30] sm:$0xf]
        %v6550 = vsel %vm673, %v6276, %v6549
        %6551 = vst [vmem:[%s670 + $0x30] sm:$0xf] %v6550
        %6552 = vst [vmem:[%s670 + $0x34] sm:$0xf] %v6285
        %v6553 = vld [vmem:[%s670 + $0x38] sm:$0x1]
        %v6554 = vsel %vm679, %v6286, %v6553
        %6555 = vst [vmem:[%s670 + $0x38] sm:$0x1] %v6554
        %v6556 = vld [vmem:[%s670 + $0x3c] sm:$0xf]
        %v6557 = vsel %vm673, %v6293, %v6556
        %6558 = vst [vmem:[%s670 + $0x3c] sm:$0xf] %v6557
        %6559 = vst [vmem:[%s670 + $0x40] sm:$0xf] %v6302
        %v6560 = vld [vmem:[%s670 + $0x44] sm:$0x1]
        %v6561 = vsel %vm679, %v6303, %v6560
        %6562 = vst [vmem:[%s670 + $0x44] sm:$0x1] %v6561
        %v6563 = vld [vmem:[%s670 + $0x48] sm:$0xf]
        %v6564 = vsel %vm673, %v6310, %v6563
        %6565 = vst [vmem:[%s670 + $0x48] sm:$0xf] %v6564
        %6566 = vst [vmem:[%s670 + $0x4c] sm:$0xf] %v6319
        %v6567 = vld [vmem:[%s670 + $0x50] sm:$0x1]
        %v6568 = vsel %vm679, %v6320, %v6567
        %6569 = vst [vmem:[%s670 + $0x50] sm:$0x1] %v6568
        %v6570 = vld [vmem:[%s670 + $0x54] sm:$0xf]
        %v6571 = vsel %vm673, %v6327, %v6570
        %6572 = vst [vmem:[%s670 + $0x54] sm:$0xf] %v6571
        %6573 = vst [vmem:[%s670 + $0x58] sm:$0xf] %v6336
        %v6574 = vld [vmem:[%s670 + $0x5c] sm:$0x1]
        %v6575 = vsel %vm679, %v6337, %v6574
        %6576 = vst [vmem:[%s670 + $0x5c] sm:$0x1] %v6575
        %v6577 = vld [vmem:[%s670 + $0x60] sm:$0xf]
        %v6578 = vsel %vm673, %v6344, %v6577
        %6579 = vst [vmem:[%s670 + $0x60] sm:$0xf] %v6578
        %6580 = vst [vmem:[%s670 + $0x64] sm:$0xf] %v6353
        %v6581 = vld [vmem:[%s670 + $0x68] sm:$0x1]
        %v6582 = vsel %vm679, %v6354, %v6581
        %6583 = vst [vmem:[%s670 + $0x68] sm:$0x1] %v6582
        %v6584 = vld [vmem:[%s670 + $0x6c] sm:$0xf]
        %v6585 = vsel %vm673, %v6361, %v6584
        %6586 = vst [vmem:[%s670 + $0x6c] sm:$0xf] %v6585
        %6587 = vst [vmem:[%s670 + $0x70] sm:$0xf] %v6370
        %v6588 = vld [vmem:[%s670 + $0x74] sm:$0x1]
        %v6589 = vsel %vm679, %v6371, %v6588
        %6590 = vst [vmem:[%s670 + $0x74] sm:$0x1] %v6589
        %v6591 = vld [vmem:[%s670 + $0x78] sm:$0xf]
        %v6592 = vsel %vm673, %v6378, %v6591
        %6593 = vst [vmem:[%s670 + $0x78] sm:$0xf] %v6592
        %6594 = vst [vmem:[%s670 + $0x7c] sm:$0xf] %v6387
        %v6595 = vld [vmem:[%s670 + $0x80] sm:$0x1]
        %v6596 = vsel %vm679, %v6388, %v6595
        %6597 = vst [vmem:[%s670 + $0x80] sm:$0x1] %v6596
        %v6598 = vld [vmem:[%s670 + $0x84] sm:$0xf]
        %v6599 = vsel %vm673, %v6395, %v6598
        %6600 = vst [vmem:[%s670 + $0x84] sm:$0xf] %v6599
        %6601 = vst [vmem:[%s670 + $0x88] sm:$0xf] %v6404
        %v6602 = vld [vmem:[%s670 + $0x8c] sm:$0x1]
        %v6603 = vsel %vm679, %v6405, %v6602
        %6604 = vst [vmem:[%s670 + $0x8c] sm:$0x1] %v6603
        %v6605 = vld [vmem:[%s670 + $0x90] sm:$0xf]
        %v6606 = vsel %vm673, %v6412, %v6605
        %6607 = vst [vmem:[%s670 + $0x90] sm:$0xf] %v6606
        %6608 = vst [vmem:[%s670 + $0x94] sm:$0xf] %v6421
        %v6609 = vld [vmem:[%s670 + $0x98] sm:$0x1]
        %v6610 = vsel %vm679, %v6422, %v6609
        %6611 = vst [vmem:[%s670 + $0x98] sm:$0x1] %v6610
        %v6612 = vld [vmem:[%s670 + $0x9c] sm:$0xf]
        %v6613 = vsel %vm673, %v6429, %v6612
        %6614 = vst [vmem:[%s670 + $0x9c] sm:$0xf] %v6613
        %6615 = vst [vmem:[%s670 + $0xa0] sm:$0xf] %v6438
        %v6616 = vld [vmem:[%s670 + $0xa4] sm:$0x1]
        %v6617 = vsel %vm679, %v6439, %v6616
        %6618 = vst [vmem:[%s670 + $0xa4] sm:$0x1] %v6617
        %v6619 = vld [vmem:[%s670 + $0xa8] sm:$0xf]
        %v6620 = vsel %vm673, %v6446, %v6619
        %6621 = vst [vmem:[%s670 + $0xa8] sm:$0xf] %v6620
        %6622 = vst [vmem:[%s670 + $0xac] sm:$0xf] %v6455
        %v6623 = vld [vmem:[%s670 + $0xb0] sm:$0x1]
        %v6624 = vsel %vm679, %v6456, %v6623
        %6625 = vst [vmem:[%s670 + $0xb0] sm:$0x1] %v6624
        %v6626 = vld [vmem:[%s670 + $0xb4] sm:$0xf]
        %v6627 = vsel %vm673, %v6463, %v6626
        %6628 = vst [vmem:[%s670 + $0xb4] sm:$0xf] %v6627
        %6629 = vst [vmem:[%s670 + $0xb8] sm:$0xf] %v6472
        %v6630 = vld [vmem:[%s670 + $0xbc] sm:$0x1]
        %v6631 = vsel %vm679, %v6473, %v6630
        %6632 = vst [vmem:[%s670 + $0xbc] sm:$0x1] %v6631
        %v6633 = vld [vmem:[#allocation2] sm:$0xf]
        %v6634 = vsel %vm673, %v6225, %v6633
        %6635 = vst [vmem:[#allocation2] sm:$0xf] %v6634
        %6636 = vst [vmem:[#allocation2 + $0x4] sm:$0xf] %v6234
        %v6637 = vld [vmem:[#allocation2 + $0x8] sm:$0x1]
        %v6638 = vsel %vm679, %v6235, %v6637
        %6639 = vst [vmem:[#allocation2 + $0x8] sm:$0x1] %v6638
        %v6640 = vld [vmem:[%s795] sm:$0xf]
        %v6641 = vsel %vm673, %v6446, %v6640
        %6642 = vst [vmem:[%s795] sm:$0xf] %v6641
        %6643 = vst [vmem:[%s795 + $0x4] sm:$0xf] %v6455
        %v6644 = vld [vmem:[%s795 + $0x8] sm:$0x1]
        %v6645 = vsel %vm679, %v6456, %v6644
        %6646 = vst [vmem:[%s795 + $0x8] sm:$0x1] %v6645
        %v6647 = vld [vmem:[#allocation2] sm:$0x2]
        %v6648 = vld [vmem:[#allocation2 + $0xc] sm:$0x2]
        %v6649 = vld [vmem:[#allocation2 + $0x18] sm:$0x2]
        %v6650 = vld [vmem:[#allocation2 + $0x24] sm:$0x2]
        %v6651 = vld [vmem:[#allocation2 + $0x30] sm:$0x2]
        %v6652 = vld [vmem:[#allocation2 + $0x3c] sm:$0x2]
        %v6653 = vld [vmem:[#allocation2 + $0x48] sm:$0x2]
        %v6654 = vld [vmem:[#allocation2 + $0x54] sm:$0x2]
        %v6655 = vld [vmem:[#allocation2 + $0x60] sm:$0x2]
        %v6656 = vld [vmem:[#allocation2 + $0x6c] sm:$0x2]
        %v6657 = vld [vmem:[#allocation2 + $0x78] sm:$0x2]
        %v6658 = vld [vmem:[#allocation2 + $0x84] sm:$0x2]
        %v6659 = vld [vmem:[#allocation2 + $0x90] sm:$0x2]
        %v6660 = vld [vmem:[#allocation2 + $0x9c] sm:$0x2]
        %v6661 = vld [vmem:[#allocation2 + $0xa8] sm:$0x2]
        %v6662 = vld [vmem:[#allocation2 + $0xb4] sm:$0x2]
        %v6663 = vld [vmem:[#allocation2 + $0xc0] sm:$0x2]
        %v6664 = vld [vmem:[#allocation2 + $0xcc] sm:$0x2]
        %v6683 = vrot.slane %v6647, 5
        %v6684 = vrot.slane %v6683, 4
        %v6685 = vrot.slane %v6648, 5
        %v6686 = vrot.slane %v6685, 4
        %v6687 = vrot.slane %v6649, 5
        %v6688 = vrot.slane %v6687, 4
        %v6689 = vrot.slane %v6650, 5
        %v6690 = vrot.slane %v6689, 4
        %v6691 = vrot.slane %v6651, 5
        %v6692 = vrot.slane %v6691, 4
        %v6693 = vrot.slane %v6652, 5
        %v6694 = vrot.slane %v6693, 4
        %v6695 = vrot.slane %v6653, 5
        %v6696 = vrot.slane %v6695, 4
        %v6697 = vrot.slane %v6654, 5
        %v6698 = vrot.slane %v6697, 4
        %v6699 = vrot.slane %v6655, 5
        %v6700 = vrot.slane %v6699, 4
        %v6701 = vrot.slane %v6656, 5
        %v6702 = vrot.slane %v6701, 4
        %v6703 = vrot.slane %v6657, 5
        %v6704 = vrot.slane %v6703, 4
        %v6705 = vrot.slane %v6658, 5
        %v6706 = vrot.slane %v6705, 4
        %v6707 = vrot.slane %v6659, 5
        %v6708 = vrot.slane %v6707, 4
        %v6709 = vrot.slane %v6660, 5
        %v6710 = vrot.slane %v6709, 4
        %v6711 = vrot.slane %v6661, 5
        %v6712 = vrot.slane %v6711, 4
        %v6713 = vrot.slane %v6662, 5
        %v6714 = vrot.slane %v6713, 4
        %v6715 = vrot.slane %v6663, 5
        %v6716 = vrot.slane %v6715, 4
        %v6717 = vrot.slane %v6664, 5
        %v6718 = vrot.slane %v6717, 4
        %v6737 = vld [vmem:[#allocation2] sm:$0x1]
        %v6738 = vsel %vm679, %v6684, %v6737
        %6739 = vst [vmem:[#allocation2] sm:$0x1] %v6738
        %v6740 = vld [vmem:[#allocation2 + $0xc] sm:$0x1]
        %v6741 = vsel %vm679, %v6686, %v6740
        %6742 = vst [vmem:[#allocation2 + $0xc] sm:$0x1] %v6741
        %v6743 = vld [vmem:[#allocation2 + $0x18] sm:$0x1]
        %v6744 = vsel %vm679, %v6688, %v6743
        %6745 = vst [vmem:[#allocation2 + $0x18] sm:$0x1] %v6744
        %v6746 = vld [vmem:[#allocation2 + $0x24] sm:$0x1]
        %v6747 = vsel %vm679, %v6690, %v6746
        %6748 = vst [vmem:[#allocation2 + $0x24] sm:$0x1] %v6747
        %v6749 = vld [vmem:[#allocation2 + $0x30] sm:$0x1]
        %v6750 = vsel %vm679, %v6692, %v6749
        %6751 = vst [vmem:[#allocation2 + $0x30] sm:$0x1] %v6750
        %v6752 = vld [vmem:[#allocation2 + $0x3c] sm:$0x1]
        %v6753 = vsel %vm679, %v6694, %v6752
        %6754 = vst [vmem:[#allocation2 + $0x3c] sm:$0x1] %v6753
        %v6755 = vld [vmem:[#allocation2 + $0x48] sm:$0x1]
        %v6756 = vsel %vm679, %v6696, %v6755
        %6757 = vst [vmem:[#allocation2 + $0x48] sm:$0x1] %v6756
        %v6758 = vld [vmem:[#allocation2 + $0x54] sm:$0x1]
        %v6759 = vsel %vm679, %v6698, %v6758
        %6760 = vst [vmem:[#allocation2 + $0x54] sm:$0x1] %v6759
        %v6761 = vld [vmem:[#allocation2 + $0x60] sm:$0x1]
        %v6762 = vsel %vm679, %v6700, %v6761
        %6763 = vst [vmem:[#allocation2 + $0x60] sm:$0x1] %v6762
        %v6764 = vld [vmem:[#allocation2 + $0x6c] sm:$0x1]
        %v6765 = vsel %vm679, %v6702, %v6764
        %6766 = vst [vmem:[#allocation2 + $0x6c] sm:$0x1] %v6765
        %v6767 = vld [vmem:[#allocation2 + $0x78] sm:$0x1]
        %v6768 = vsel %vm679, %v6704, %v6767
        %6769 = vst [vmem:[#allocation2 + $0x78] sm:$0x1] %v6768
        %v6770 = vld [vmem:[#allocation2 + $0x84] sm:$0x1]
        %v6771 = vsel %vm679, %v6706, %v6770
        %6772 = vst [vmem:[#allocation2 + $0x84] sm:$0x1] %v6771
        %v6773 = vld [vmem:[#allocation2 + $0x90] sm:$0x1]
        %v6774 = vsel %vm679, %v6708, %v6773
        %6775 = vst [vmem:[#allocation2 + $0x90] sm:$0x1] %v6774
        %v6776 = vld [vmem:[#allocation2 + $0x9c] sm:$0x1]
        %v6777 = vsel %vm679, %v6710, %v6776
        %6778 = vst [vmem:[#allocation2 + $0x9c] sm:$0x1] %v6777
        %v6779 = vld [vmem:[#allocation2 + $0xa8] sm:$0x1]
        %v6780 = vsel %vm679, %v6712, %v6779
        %6781 = vst [vmem:[#allocation2 + $0xa8] sm:$0x1] %v6780
        %v6782 = vld [vmem:[#allocation2 + $0xb4] sm:$0x1]
        %v6783 = vsel %vm679, %v6714, %v6782
        %6784 = vst [vmem:[#allocation2 + $0xb4] sm:$0x1] %v6783
        %v6785 = vld [vmem:[#allocation2 + $0xc0] sm:$0x1]
        %v6786 = vsel %vm679, %v6716, %v6785
        %6787 = vst [vmem:[#allocation2 + $0xc0] sm:$0x1] %v6786
        %v6788 = vld [vmem:[#allocation2 + $0xcc] sm:$0x1]
        %v6789 = vsel %vm679, %v6718, %v6788
        %6790 = vst [vmem:[#allocation2 + $0xcc] sm:$0x1] %v6789
        %v6791 = vld [vmem:[#allocation2 + $0x4] sm:$0x8]
        %v6792 = vld [vmem:[#allocation2 + $0x10] sm:$0x8]
        %v6793 = vld [vmem:[#allocation2 + $0x1c] sm:$0x8]
        %v6794 = vld [vmem:[#allocation2 + $0x28] sm:$0x8]
        %v6795 = vld [vmem:[#allocation2 + $0x34] sm:$0x8]
        %v6796 = vld [vmem:[#allocation2 + $0x40] sm:$0x8]
        %v6797 = vld [vmem:[#allocation2 + $0x4c] sm:$0x8]
        %v6798 = vld [vmem:[#allocation2 + $0x58] sm:$0x8]
        %v6799 = vld [vmem:[#allocation2 + $0x64] sm:$0x8]
        %v6800 = vld [vmem:[#allocation2 + $0x70] sm:$0x8]
        %v6801 = vld [vmem:[#allocation2 + $0x7c] sm:$0x8]
        %v6802 = vld [vmem:[#allocation2 + $0x88] sm:$0x8]
        %v6803 = vld [vmem:[#allocation2 + $0x94] sm:$0x8]
        %v6804 = vld [vmem:[#allocation2 + $0xa0] sm:$0x8]
        %v6805 = vld [vmem:[#allocation2 + $0xac] sm:$0x8]
        %v6806 = vld [vmem:[#allocation2 + $0xb8] sm:$0x8]
        %v6807 = vld [vmem:[#allocation2 + $0xc4] sm:$0x8]
        %v6808 = vld [vmem:[#allocation2 + $0xd0] sm:$0x8]
        %v6827 = vrot.slane %v6791, 7
        %v6828 = vrot.slane %v6827, 4
        %v6829 = vrot.slane %v6792, 7
        %v6830 = vrot.slane %v6829, 4
        %v6831 = vrot.slane %v6793, 7
        %v6832 = vrot.slane %v6831, 4
        %v6833 = vrot.slane %v6794, 7
        %v6834 = vrot.slane %v6833, 4
        %v6835 = vrot.slane %v6795, 7
        %v6836 = vrot.slane %v6835, 4
        %v6837 = vrot.slane %v6796, 7
        %v6838 = vrot.slane %v6837, 4
        %v6839 = vrot.slane %v6797, 7
        %v6840 = vrot.slane %v6839, 4
        %v6841 = vrot.slane %v6798, 7
        %v6842 = vrot.slane %v6841, 4
        %v6843 = vrot.slane %v6799, 7
        %v6844 = vrot.slane %v6843, 4
        %v6845 = vrot.slane %v6800, 7
        %v6846 = vrot.slane %v6845, 4
        %v6847 = vrot.slane %v6801, 7
        %v6848 = vrot.slane %v6847, 4
        %v6849 = vrot.slane %v6802, 7
        %v6850 = vrot.slane %v6849, 4
        %v6851 = vrot.slane %v6803, 7
        %v6852 = vrot.slane %v6851, 4
        %v6853 = vrot.slane %v6804, 7
        %v6854 = vrot.slane %v6853, 4
        %v6855 = vrot.slane %v6805, 7
        %v6856 = vrot.slane %v6855, 4
        %v6857 = vrot.slane %v6806, 7
        %v6858 = vrot.slane %v6857, 4
        %v6859 = vrot.slane %v6807, 7
        %v6860 = vrot.slane %v6859, 4
        %v6861 = vrot.slane %v6808, 7
        %v6862 = vrot.slane %v6861, 4
        %v6881 = vld [vmem:[#allocation2 + $0x8] sm:$0x1]
        %v6882 = vsel %vm1037, %v6828, %v6881
        %6883 = vst [vmem:[#allocation2 + $0x8] sm:$0x1] %v6882
        %v6884 = vld [vmem:[#allocation2 + $0x14] sm:$0x1]
        %v6885 = vsel %vm1037, %v6830, %v6884
        %6886 = vst [vmem:[#allocation2 + $0x14] sm:$0x1] %v6885
        %v6887 = vld [vmem:[#allocation2 + $0x20] sm:$0x1]
        %v6888 = vsel %vm1037, %v6832, %v6887
        %6889 = vst [vmem:[#allocation2 + $0x20] sm:$0x1] %v6888
        %v6890 = vld [vmem:[#allocation2 + $0x2c] sm:$0x1]
        %v6891 = vsel %vm1037, %v6834, %v6890
        %6892 = vst [vmem:[#allocation2 + $0x2c] sm:$0x1] %v6891
        %v6893 = vld [vmem:[#allocation2 + $0x38] sm:$0x1]
        %v6894 = vsel %vm1037, %v6836, %v6893
        %6895 = vst [vmem:[#allocation2 + $0x38] sm:$0x1] %v6894
        %v6896 = vld [vmem:[#allocation2 + $0x44] sm:$0x1]
        %v6897 = vsel %vm1037, %v6838, %v6896
        %6898 = vst [vmem:[#allocation2 + $0x44] sm:$0x1] %v6897
        %v6899 = vld [vmem:[#allocation2 + $0x50] sm:$0x1]
        %v6900 = vsel %vm1037, %v6840, %v6899
        %6901 = vst [vmem:[#allocation2 + $0x50] sm:$0x1] %v6900
        %v6902 = vld [vmem:[#allocation2 + $0x5c] sm:$0x1]
        %v6903 = vsel %vm1037, %v6842, %v6902
        %6904 = vst [vmem:[#allocation2 + $0x5c] sm:$0x1] %v6903
        %v6905 = vld [vmem:[#allocation2 + $0x68] sm:$0x1]
        %v6906 = vsel %vm1037, %v6844, %v6905
        %6907 = vst [vmem:[#allocation2 + $0x68] sm:$0x1] %v6906
        %v6908 = vld [vmem:[#allocation2 + $0x74] sm:$0x1]
        %v6909 = vsel %vm1037, %v6846, %v6908
        %6910 = vst [vmem:[#allocation2 + $0x74] sm:$0x1] %v6909
        %v6911 = vld [vmem:[#allocation2 + $0x80] sm:$0x1]
        %v6912 = vsel %vm1037, %v6848, %v6911
        %6913 = vst [vmem:[#allocation2 + $0x80] sm:$0x1] %v6912
        %v6914 = vld [vmem:[#allocation2 + $0x8c] sm:$0x1]
        %v6915 = vsel %vm1037, %v6850, %v6914
        %6916 = vst [vmem:[#allocation2 + $0x8c] sm:$0x1] %v6915
        %v6917 = vld [vmem:[#allocation2 + $0x98] sm:$0x1]
        %v6918 = vsel %vm1037, %v6852, %v6917
        %6919 = vst [vmem:[#allocation2 + $0x98] sm:$0x1] %v6918
        %v6920 = vld [vmem:[#allocation2 + $0xa4] sm:$0x1]
        %v6921 = vsel %vm1037, %v6854, %v6920
        %6922 = vst [vmem:[#allocation2 + $0xa4] sm:$0x1] %v6921
        %v6923 = vld [vmem:[#allocation2 + $0xb0] sm:$0x1]
        %v6924 = vsel %vm1037, %v6856, %v6923
        %6925 = vst [vmem:[#allocation2 + $0xb0] sm:$0x1] %v6924
        %v6926 = vld [vmem:[#allocation2 + $0xbc] sm:$0x1]
        %v6927 = vsel %vm1037, %v6858, %v6926
        %6928 = vst [vmem:[#allocation2 + $0xbc] sm:$0x1] %v6927
        %v6929 = vld [vmem:[#allocation2 + $0xc8] sm:$0x1]
        %v6930 = vsel %vm1037, %v6860, %v6929
        %6931 = vst [vmem:[#allocation2 + $0xc8] sm:$0x1] %v6930
        %v6932 = vld [vmem:[#allocation2 + $0xd4] sm:$0x1]
        %v6933 = vsel %vm1037, %v6862, %v6932
        %6934 = vst [vmem:[#allocation2 + $0xd4] sm:$0x1] %v6933
        %v6935 = vld [vmem:[#allocation2] sm:$0xf]
        %v6936 = vld [vmem:[#allocation2 + $0x4] sm:$0xf]
        %v6937 = vld [vmem:[#allocation2 + $0xc] sm:$0xf]
        %v6938 = vld [vmem:[#allocation2 + $0x10] sm:$0xf]
        %v6939 = vld [vmem:[#allocation2 + $0x18] sm:$0xf]
        %v6940 = vld [vmem:[#allocation2 + $0x1c] sm:$0xf]
        %v6941 = vld [vmem:[#allocation2 + $0x24] sm:$0xf]
        %v6942 = vld [vmem:[#allocation2 + $0x28] sm:$0xf]
        %v6943 = vld [vmem:[#allocation2 + $0x30] sm:$0xf]
        %v6944 = vld [vmem:[#allocation2 + $0x34] sm:$0xf]
        %v6945 = vld [vmem:[#allocation2 + $0x3c] sm:$0xf]
        %v6946 = vld [vmem:[#allocation2 + $0x40] sm:$0xf]
        %v6947 = vld [vmem:[#allocation2 + $0x48] sm:$0xf]
        %v6948 = vld [vmem:[#allocation2 + $0x4c] sm:$0xf]
        %v6949 = vld [vmem:[#allocation2 + $0x54] sm:$0xf]
        %v6950 = vld [vmem:[#allocation2 + $0x58] sm:$0xf]
        %v6951 = vld [vmem:[#allocation2 + $0x60] sm:$0xf]
        %v6952 = vld [vmem:[#allocation2 + $0x64] sm:$0xf]
        %v6953 = vld [vmem:[#allocation2 + $0x6c] sm:$0xf]
        %v6954 = vld [vmem:[#allocation2 + $0x70] sm:$0xf]
        %v6955 = vld [vmem:[#allocation2 + $0x78] sm:$0xf]
        %v6956 = vld [vmem:[#allocation2 + $0x7c] sm:$0xf]
        %v6957 = vld [vmem:[#allocation2 + $0x84] sm:$0xf]
        %v6958 = vld [vmem:[#allocation2 + $0x88] sm:$0xf]
        %v6959 = vld [vmem:[#allocation2 + $0x90] sm:$0xf]
        %v6960 = vld [vmem:[#allocation2 + $0x94] sm:$0xf]
        %v6961 = vld [vmem:[#allocation2 + $0x9c] sm:$0xf]
        %v6962 = vld [vmem:[#allocation2 + $0xa0] sm:$0xf]
        %v6963 = vld [vmem:[#allocation2 + $0xa8] sm:$0xf]
        %v6964 = vld [vmem:[#allocation2 + $0xac] sm:$0xf]
        %v6965 = vld [vmem:[#allocation2 + $0xb4] sm:$0xf]
        %v6966 = vld [vmem:[#allocation2 + $0xb8] sm:$0xf]
        %v6967 = vld [vmem:[#allocation8] sm:$0xf]
        %v6968 = vld [vmem:[#allocation8 + $0x4] sm:$0xf]
        %v6969 = vld [vmem:[#allocation8 + $0x8] sm:$0xf]
        %v6970 = vld [vmem:[#allocation8 + $0xc] sm:$0xf]
        %v6971 = vld [vmem:[#allocation8 + $0x10] sm:$0xf]
        %v6972 = vld [vmem:[#allocation8 + $0x14] sm:$0xf]
        %v6973 = vld [vmem:[#allocation8 + $0x18] sm:$0xf]
        %v6974 = vld [vmem:[#allocation8 + $0x1c] sm:$0xf]
        %v6975 = vld [vmem:[#allocation8 + $0x20] sm:$0xf]
        %v6976 = vld [vmem:[#allocation8 + $0x24] sm:$0xf]
        %v6977 = vld [vmem:[#allocation8 + $0x28] sm:$0xf]
        %v6978 = vld [vmem:[#allocation8 + $0x2c] sm:$0xf]
        %v6979 = vld [vmem:[#allocation8 + $0x30] sm:$0xf]
        %v6980 = vld [vmem:[#allocation8 + $0x34] sm:$0xf]
        %v6981 = vld [vmem:[#allocation8 + $0x38] sm:$0xf]
        %v6982 = vld [vmem:[#allocation8 + $0x3c] sm:$0xf]
        %v6983 = vld [vmem:[#allocation2 + $0x8] sm:$0x1]
        %v6984 = vld [vmem:[#allocation2 + $0x14] sm:$0x1]
        %v6985 = vld [vmem:[#allocation2 + $0x20] sm:$0x1]
        %v6986 = vld [vmem:[#allocation2 + $0x2c] sm:$0x1]
        %v6987 = vld [vmem:[#allocation2 + $0x38] sm:$0x1]
        %v6988 = vld [vmem:[#allocation2 + $0x44] sm:$0x1]
        %v6989 = vld [vmem:[#allocation2 + $0x50] sm:$0x1]
        %v6990 = vld [vmem:[#allocation2 + $0x5c] sm:$0x1]
        %v6991 = vld [vmem:[#allocation2 + $0x68] sm:$0x1]
        %v6992 = vld [vmem:[#allocation2 + $0x74] sm:$0x1]
        %v6993 = vld [vmem:[#allocation2 + $0x80] sm:$0x1]
        %v6994 = vld [vmem:[#allocation2 + $0x8c] sm:$0x1]
        %v6995 = vld [vmem:[#allocation2 + $0x98] sm:$0x1]
        %v6996 = vld [vmem:[#allocation2 + $0xa4] sm:$0x1]
        %v6997 = vld [vmem:[#allocation2 + $0xb0] sm:$0x1]
        %v6998 = vld [vmem:[#allocation2 + $0xbc] sm:$0x1]
        %v7000 = vshrl.u32 %v6935, 16
        %v7002 = vrot.slane %v7000, 4
        %v7003 = vshll.u32 %v6935, 16
        %v7005 = vrot.slane %v7003, 5
        %v7006 = vor.u32 %v7002, %v7005
        %v7007 = vrot.slane %v7006, 4
        %v7009 = vshll.u32 %v6936, 16
        %v7011 = vrot.slane %v7009, 5
        %v7012 = vsel %vm1158, %v7007, %v7011
        %v7013 = vshrl.u32 %v6936, 16
        %v7015 = vrot.slane %v7013, 4
        %v7016 = vor.u32 %v7015, %v7011
        %v7017 = vrot.slane %v7016, 4
        %v7019 = vshll.u32 %v6983, 16
        %v7021 = vrot.slane %v7019, 5
        %v7022 = vsel %vm1158, %v7017, %v7021
        %v7024 = vshrl.u32 %v6937, 16
        %v7026 = vrot.slane %v7024, 4
        %v7027 = vshll.u32 %v6937, 16
        %v7029 = vrot.slane %v7027, 5
        %v7030 = vor.u32 %v7026, %v7029
        %v7031 = vrot.slane %v7030, 4
        %v7033 = vshll.u32 %v6938, 16
        %v7035 = vrot.slane %v7033, 5
        %v7036 = vsel %vm1158, %v7031, %v7035
        %v7037 = vshrl.u32 %v6938, 16
        %v7039 = vrot.slane %v7037, 4
        %v7040 = vor.u32 %v7039, %v7035
        %v7041 = vrot.slane %v7040, 4
        %v7043 = vshll.u32 %v6984, 16
        %v7045 = vrot.slane %v7043, 5
        %v7046 = vsel %vm1158, %v7041, %v7045
        %v7048 = vshrl.u32 %v6939, 16
        %v7050 = vrot.slane %v7048, 4
        %v7051 = vshll.u32 %v6939, 16
        %v7053 = vrot.slane %v7051, 5
        %v7054 = vor.u32 %v7050, %v7053
        %v7055 = vrot.slane %v7054, 4
        %v7057 = vshll.u32 %v6940, 16
        %v7059 = vrot.slane %v7057, 5
        %v7060 = vsel %vm1158, %v7055, %v7059
        %v7061 = vshrl.u32 %v6940, 16
        %v7063 = vrot.slane %v7061, 4
        %v7064 = vor.u32 %v7063, %v7059
        %v7065 = vrot.slane %v7064, 4
        %v7067 = vshll.u32 %v6985, 16
        %v7069 = vrot.slane %v7067, 5
        %v7070 = vsel %vm1158, %v7065, %v7069
        %v7072 = vshrl.u32 %v6941, 16
        %v7074 = vrot.slane %v7072, 4
        %v7075 = vshll.u32 %v6941, 16
        %v7077 = vrot.slane %v7075, 5
        %v7078 = vor.u32 %v7074, %v7077
        %v7079 = vrot.slane %v7078, 4
        %v7081 = vshll.u32 %v6942, 16
        %v7083 = vrot.slane %v7081, 5
        %v7084 = vsel %vm1158, %v7079, %v7083
        %v7085 = vshrl.u32 %v6942, 16
        %v7087 = vrot.slane %v7085, 4
        %v7088 = vor.u32 %v7087, %v7083
        %v7089 = vrot.slane %v7088, 4
        %v7091 = vshll.u32 %v6986, 16
        %v7093 = vrot.slane %v7091, 5
        %v7094 = vsel %vm1158, %v7089, %v7093
        %v7096 = vshrl.u32 %v6943, 16
        %v7098 = vrot.slane %v7096, 4
        %v7099 = vshll.u32 %v6943, 16
        %v7101 = vrot.slane %v7099, 5
        %v7102 = vor.u32 %v7098, %v7101
        %v7103 = vrot.slane %v7102, 4
        %v7105 = vshll.u32 %v6944, 16
        %v7107 = vrot.slane %v7105, 5
        %v7108 = vsel %vm1158, %v7103, %v7107
        %v7109 = vshrl.u32 %v6944, 16
        %v7111 = vrot.slane %v7109, 4
        %v7112 = vor.u32 %v7111, %v7107
        %v7113 = vrot.slane %v7112, 4
        %v7115 = vshll.u32 %v6987, 16
        %v7117 = vrot.slane %v7115, 5
        %v7118 = vsel %vm1158, %v7113, %v7117
        %v7120 = vshrl.u32 %v6945, 16
        %v7122 = vrot.slane %v7120, 4
        %v7123 = vshll.u32 %v6945, 16
        %v7125 = vrot.slane %v7123, 5
        %v7126 = vor.u32 %v7122, %v7125
        %v7127 = vrot.slane %v7126, 4
        %v7129 = vshll.u32 %v6946, 16
        %v7131 = vrot.slane %v7129, 5
        %v7132 = vsel %vm1158, %v7127, %v7131
        %v7133 = vshrl.u32 %v6946, 16
        %v7135 = vrot.slane %v7133, 4
        %v7136 = vor.u32 %v7135, %v7131
        %v7137 = vrot.slane %v7136, 4
        %v7139 = vshll.u32 %v6988, 16
        %v7141 = vrot.slane %v7139, 5
        %v7142 = vsel %vm1158, %v7137, %v7141
        %v7144 = vshrl.u32 %v6947, 16
        %v7146 = vrot.slane %v7144, 4
        %v7147 = vshll.u32 %v6947, 16
        %v7149 = vrot.slane %v7147, 5
        %v7150 = vor.u32 %v7146, %v7149
        %v7151 = vrot.slane %v7150, 4
        %v7153 = vshll.u32 %v6948, 16
        %v7155 = vrot.slane %v7153, 5
        %v7156 = vsel %vm1158, %v7151, %v7155
        %v7157 = vshrl.u32 %v6948, 16
        %v7159 = vrot.slane %v7157, 4
        %v7160 = vor.u32 %v7159, %v7155
        %v7161 = vrot.slane %v7160, 4
        %v7163 = vshll.u32 %v6989, 16
        %v7165 = vrot.slane %v7163, 5
        %v7166 = vsel %vm1158, %v7161, %v7165
        %v7168 = vshrl.u32 %v6949, 16
        %v7170 = vrot.slane %v7168, 4
        %v7171 = vshll.u32 %v6949, 16
        %v7173 = vrot.slane %v7171, 5
        %v7174 = vor.u32 %v7170, %v7173
        %v7175 = vrot.slane %v7174, 4
        %v7177 = vshll.u32 %v6950, 16
        %v7179 = vrot.slane %v7177, 5
        %v7180 = vsel %vm1158, %v7175, %v7179
        %v7181 = vshrl.u32 %v6950, 16
        %v7183 = vrot.slane %v7181, 4
        %v7184 = vor.u32 %v7183, %v7179
        %v7185 = vrot.slane %v7184, 4
        %v7187 = vshll.u32 %v6990, 16
        %v7189 = vrot.slane %v7187, 5
        %v7190 = vsel %vm1158, %v7185, %v7189
        %v7192 = vshrl.u32 %v6951, 16
        %v7194 = vrot.slane %v7192, 4
        %v7195 = vshll.u32 %v6951, 16
        %v7197 = vrot.slane %v7195, 5
        %v7198 = vor.u32 %v7194, %v7197
        %v7199 = vrot.slane %v7198, 4
        %v7201 = vshll.u32 %v6952, 16
        %v7203 = vrot.slane %v7201, 5
        %v7204 = vsel %vm1158, %v7199, %v7203
        %v7205 = vshrl.u32 %v6952, 16
        %v7207 = vrot.slane %v7205, 4
        %v7208 = vor.u32 %v7207, %v7203
        %v7209 = vrot.slane %v7208, 4
        %v7211 = vshll.u32 %v6991, 16
        %v7213 = vrot.slane %v7211, 5
        %v7214 = vsel %vm1158, %v7209, %v7213
        %v7216 = vshrl.u32 %v6953, 16
        %v7218 = vrot.slane %v7216, 4
        %v7219 = vshll.u32 %v6953, 16
        %v7221 = vrot.slane %v7219, 5
        %v7222 = vor.u32 %v7218, %v7221
        %v7223 = vrot.slane %v7222, 4
        %v7225 = vshll.u32 %v6954, 16
        %v7227 = vrot.slane %v7225, 5
        %v7228 = vsel %vm1158, %v7223, %v7227
        %v7229 = vshrl.u32 %v6954, 16
        %v7231 = vrot.slane %v7229, 4
        %v7232 = vor.u32 %v7231, %v7227
        %v7233 = vrot.slane %v7232, 4
        %v7235 = vshll.u32 %v6992, 16
        %v7237 = vrot.slane %v7235, 5
        %v7238 = vsel %vm1158, %v7233, %v7237
        %v7240 = vshrl.u32 %v6955, 16
        %v7242 = vrot.slane %v7240, 4
        %v7243 = vshll.u32 %v6955, 16
        %v7245 = vrot.slane %v7243, 5
        %v7246 = vor.u32 %v7242, %v7245
        %v7247 = vrot.slane %v7246, 4
        %v7249 = vshll.u32 %v6956, 16
        %v7251 = vrot.slane %v7249, 5
        %v7252 = vsel %vm1158, %v7247, %v7251
        %v7253 = vshrl.u32 %v6956, 16
        %v7255 = vrot.slane %v7253, 4
        %v7256 = vor.u32 %v7255, %v7251
        %v7257 = vrot.slane %v7256, 4
        %v7259 = vshll.u32 %v6993, 16
        %v7261 = vrot.slane %v7259, 5
        %v7262 = vsel %vm1158, %v7257, %v7261
        %v7264 = vshrl.u32 %v6957, 16
        %v7266 = vrot.slane %v7264, 4
        %v7267 = vshll.u32 %v6957, 16
        %v7269 = vrot.slane %v7267, 5
        %v7270 = vor.u32 %v7266, %v7269
        %v7271 = vrot.slane %v7270, 4
        %v7273 = vshll.u32 %v6958, 16
        %v7275 = vrot.slane %v7273, 5
        %v7276 = vsel %vm1158, %v7271, %v7275
        %v7277 = vshrl.u32 %v6958, 16
        %v7279 = vrot.slane %v7277, 4
        %v7280 = vor.u32 %v7279, %v7275
        %v7281 = vrot.slane %v7280, 4
        %v7283 = vshll.u32 %v6994, 16
        %v7285 = vrot.slane %v7283, 5
        %v7286 = vsel %vm1158, %v7281, %v7285
        %v7288 = vshrl.u32 %v6959, 16
        %v7290 = vrot.slane %v7288, 4
        %v7291 = vshll.u32 %v6959, 16
        %v7293 = vrot.slane %v7291, 5
        %v7294 = vor.u32 %v7290, %v7293
        %v7295 = vrot.slane %v7294, 4
        %v7297 = vshll.u32 %v6960, 16
        %v7299 = vrot.slane %v7297, 5
        %v7300 = vsel %vm1158, %v7295, %v7299
        %v7301 = vshrl.u32 %v6960, 16
        %v7303 = vrot.slane %v7301, 4
        %v7304 = vor.u32 %v7303, %v7299
        %v7305 = vrot.slane %v7304, 4
        %v7307 = vshll.u32 %v6995, 16
        %v7309 = vrot.slane %v7307, 5
        %v7310 = vsel %vm1158, %v7305, %v7309
        %v7312 = vshrl.u32 %v6961, 16
        %v7314 = vrot.slane %v7312, 4
        %v7315 = vshll.u32 %v6961, 16
        %v7317 = vrot.slane %v7315, 5
        %v7318 = vor.u32 %v7314, %v7317
        %v7319 = vrot.slane %v7318, 4
        %v7321 = vshll.u32 %v6962, 16
        %v7323 = vrot.slane %v7321, 5
        %v7324 = vsel %vm1158, %v7319, %v7323
        %v7325 = vshrl.u32 %v6962, 16
        %v7327 = vrot.slane %v7325, 4
        %v7328 = vor.u32 %v7327, %v7323
        %v7329 = vrot.slane %v7328, 4
        %v7331 = vshll.u32 %v6996, 16
        %v7333 = vrot.slane %v7331, 5
        %v7334 = vsel %vm1158, %v7329, %v7333
        %v7336 = vshrl.u32 %v6963, 16
        %v7338 = vrot.slane %v7336, 4
        %v7339 = vshll.u32 %v6963, 16
        %v7341 = vrot.slane %v7339, 5
        %v7342 = vor.u32 %v7338, %v7341
        %v7343 = vrot.slane %v7342, 4
        %v7345 = vshll.u32 %v6964, 16
        %v7347 = vrot.slane %v7345, 5
        %v7348 = vsel %vm1158, %v7343, %v7347
        %v7349 = vshrl.u32 %v6964, 16
        %v7351 = vrot.slane %v7349, 4
        %v7352 = vor.u32 %v7351, %v7347
        %v7353 = vrot.slane %v7352, 4
        %v7355 = vshll.u32 %v6997, 16
        %v7357 = vrot.slane %v7355, 5
        %v7358 = vsel %vm1158, %v7353, %v7357
        %v7360 = vshrl.u32 %v6965, 16
        %v7362 = vrot.slane %v7360, 4
        %v7363 = vshll.u32 %v6965, 16
        %v7365 = vrot.slane %v7363, 5
        %v7366 = vor.u32 %v7362, %v7365
        %v7367 = vrot.slane %v7366, 4
        %v7369 = vshll.u32 %v6966, 16
        %v7371 = vrot.slane %v7369, 5
        %v7372 = vsel %vm1158, %v7367, %v7371
        %v7373 = vshrl.u32 %v6966, 16
        %v7375 = vrot.slane %v7373, 4
        %v7376 = vor.u32 %v7375, %v7371
        %v7377 = vrot.slane %v7376, 4
        %v7379 = vshll.u32 %v6998, 16
        %v7381 = vrot.slane %v7379, 5
        %v7382 = vsel %vm1158, %v7377, %v7381
        %s7383 = scalar_lea.vmem [#allocation8], 64
        %v7384 = vld [vmem:[%s7383] sm:$0xf]
        %v7385 = vld [vmem:[%s7383 + $0x4] sm:$0xf]
        %v7386 = vld [vmem:[%s7383 + $0x8] sm:$0xf]
        %v7387 = vld [vmem:[%s7383 + $0xc] sm:$0xf]
        %v7388 = vld [vmem:[%s7383 + $0x10] sm:$0xf]
        %v7389 = vld [vmem:[%s7383 + $0x14] sm:$0xf]
        %v7390 = vld [vmem:[%s7383 + $0x18] sm:$0xf]
        %v7391 = vld [vmem:[%s7383 + $0x1c] sm:$0xf]
        %v7392 = vld [vmem:[%s7383 + $0x20] sm:$0xf]
        %v7393 = vld [vmem:[%s7383 + $0x24] sm:$0xf]
        %v7394 = vld [vmem:[%s7383 + $0x28] sm:$0xf]
        %v7395 = vld [vmem:[%s7383 + $0x2c] sm:$0xf]
        %v7396 = vld [vmem:[%s7383 + $0x30] sm:$0xf]
        %v7397 = vld [vmem:[%s7383 + $0x34] sm:$0xf]
        %v7398 = vld [vmem:[%s7383 + $0x38] sm:$0xf]
        %v7399 = vld [vmem:[%s7383 + $0x3c] sm:$0xf]
        %v7400 = vunpack.c.l.b16 %v7012
        %v7401 = vunpack.c.l.b16 %v7022
        %v7402 = vunpack.c.l.b16 %v7036
        %v7403 = vunpack.c.l.b16 %v7046
        %v7404 = vunpack.c.l.b16 %v7060
        %v7405 = vunpack.c.l.b16 %v7070
        %v7406 = vunpack.c.l.b16 %v7084
        %v7407 = vunpack.c.l.b16 %v7094
        %v7408 = vunpack.c.l.b16 %v7108
        %v7409 = vunpack.c.l.b16 %v7118
        %v7410 = vunpack.c.l.b16 %v7132
        %v7411 = vunpack.c.l.b16 %v7142
        %v7412 = vunpack.c.l.b16 %v7156
        %v7413 = vunpack.c.l.b16 %v7166
        %v7414 = vunpack.c.l.b16 %v7180
        %v7415 = vunpack.c.l.b16 %v7190
        %v7416 = vunpack.c.l.b16 %v7204
        %v7417 = vunpack.c.l.b16 %v7214
        %v7418 = vunpack.c.l.b16 %v7228
        %v7419 = vunpack.c.l.b16 %v7238
        %v7420 = vunpack.c.l.b16 %v7252
        %v7421 = vunpack.c.l.b16 %v7262
        %v7422 = vunpack.c.l.b16 %v7276
        %v7423 = vunpack.c.l.b16 %v7286
        %v7424 = vunpack.c.l.b16 %v7300
        %v7425 = vunpack.c.l.b16 %v7310
        %v7426 = vunpack.c.l.b16 %v7324
        %v7427 = vunpack.c.l.b16 %v7334
        %v7428 = vunpack.c.l.b16 %v7348
        %v7429 = vunpack.c.l.b16 %v7358
        %v7430 = vunpack.c.l.b16 %v7372
        %v7431 = vunpack.c.l.b16 %v7382
        %v7432 = vpack.c.b16 %v7401, %v7400
        %v7433 = vpack.c.b16 %v7403, %v7402
        %v7434 = vpack.c.b16 %v7405, %v7404
        %v7435 = vpack.c.b16 %v7407, %v7406
        %v7436 = vpack.c.b16 %v7409, %v7408
        %v7437 = vpack.c.b16 %v7411, %v7410
        %v7438 = vpack.c.b16 %v7413, %v7412
        %v7439 = vpack.c.b16 %v7415, %v7414
        %v7440 = vpack.c.b16 %v7417, %v7416
        %v7441 = vpack.c.b16 %v7419, %v7418
        %v7442 = vpack.c.b16 %v7421, %v7420
        %v7443 = vpack.c.b16 %v7423, %v7422
        %v7444 = vpack.c.b16 %v7425, %v7424
        %v7445 = vpack.c.b16 %v7427, %v7426
        %v7446 = vpack.c.b16 %v7429, %v7428
        %v7447 = vpack.c.b16 %v7431, %v7430
        %v7480 = vunpack.c.l.b16 %v7384
        %v7481 = vunpack.c.l.b16 %v7385
        %v7482 = vunpack.c.l.b16 %v7386
        %v7483 = vunpack.c.l.b16 %v7387
        %v7484 = vunpack.c.l.b16 %v7388
        %v7485 = vunpack.c.l.b16 %v7389
        %v7486 = vunpack.c.l.b16 %v7390
        %v7487 = vunpack.c.l.b16 %v7391
        %v7488 = vunpack.c.l.b16 %v7392
        %v7489 = vunpack.c.l.b16 %v7393
        %v7490 = vunpack.c.l.b16 %v7394
        %v7491 = vunpack.c.l.b16 %v7395
        %v7492 = vunpack.c.l.b16 %v7396
        %v7493 = vunpack.c.l.b16 %v7397
        %v7494 = vunpack.c.l.b16 %v7398
        %v7495 = vunpack.c.l.b16 %v7399
        %v7496 = vpack.c.b16 %v7481, %v7480
        %v7497 = vpack.c.b16 %v7483, %v7482
        %v7498 = vpack.c.b16 %v7485, %v7484
        %v7499 = vpack.c.b16 %v7487, %v7486
        %v7500 = vpack.c.b16 %v7489, %v7488
        %v7501 = vpack.c.b16 %v7491, %v7490
        %v7502 = vpack.c.b16 %v7493, %v7492
        %v7503 = vpack.c.b16 %v7495, %v7494
        %7512 = vmatprep.subr.bf16.mxu0 0
        %7513 = vmatpush1.bf16.msra.mxu0 %v7496
        %7514 = vmatprep.subr.bf16.mxu0 0
        %7515 = vmatpush1.bf16.msra.mxu0 %v7497
        %7516 = vmatprep.subr.bf16.mxu0 0
        %7517 = vmatpush1.bf16.msra.mxu0 %v7498
        %7518 = vmatprep.subr.bf16.mxu0 0
        %7519 = vmatpush1.bf16.msra.mxu0 %v7499
        %7520 = vmatprep.subr.bf16.mxu0 0
        %7521 = vmatpush1.bf16.msra.mxu0 %v7500
        %7522 = vmatprep.subr.bf16.mxu0 0
        %7523 = vmatpush1.bf16.msra.mxu0 %v7501
        %7524 = vmatprep.subr.bf16.mxu0 0
        %7525 = vmatpush1.bf16.msra.mxu0 %v7502
        %7526 = vmatprep.subr.bf16.mxu0 0
        %7527 = vmatpush1.bf16.msra.mxu0 %v7503
        %7528 = vmatprep.subr.bf16.mxu0 0
        %7529 = vmatpush1.bf16.msra.mxu0 0
        %7530 = vmatprep.subr.bf16.mxu0 0
        %7531 = vmatpush1.bf16.msra.mxu0 0
        %7532 = vmatprep.subr.bf16.mxu0 0
        %7533 = vmatpush1.bf16.msra.mxu0 0
        %7534 = vmatprep.subr.bf16.mxu0 0
        %7535 = vmatpush1.bf16.msra.mxu0 0
        %7536 = vmatprep.subr.bf16.mxu0 0
        %7537 = vmatpush1.bf16.msra.mxu0 0
        %7538 = vmatprep.subr.bf16.mxu0 0
        %7539 = vmatpush1.bf16.msra.mxu0 0
        %7540 = vmatprep.subr.bf16.mxu0 0
        %7541 = vmatpush1.bf16.msra.mxu0 0
        %7542 = vmatprep.subr.bf16.mxu0 0
        %7543 = vmatpush1.bf16.msra.mxu0 0
        %7544 = vmatprep.mubr.bf16.mxu0 0
        %7545 = vmatmul.mubr.bf16.gmra.mrb[0].mxu0 %v7432
        %v7546 = vpop.f32.mrb[0].mxu0
        %v7547 = vadd.f32 0.0, %v7546
        %v7548 = vpop.f32.mrb[0].mxu0
        %v7549 = vpop.f32.mrb[0].mxu0
        %v7550 = vadd.f32 0.0, %v7549
        %v7551 = vpop.f32.mrb[0].mxu0
        %7552 = vmatprep.mubr.bf16.mxu0 0
        %7553 = vmatmul.mubr.bf16.gmra.mrb[0].mxu0 %v7433
        %v7554 = vpop.f32.mrb[0].mxu0
        %v7555 = vadd.f32 0.0, %v7554
        %v7556 = vpop.f32.mrb[0].mxu0
        %v7557 = vpop.f32.mrb[0].mxu0
        %v7558 = vadd.f32 0.0, %v7557
        %v7559 = vpop.f32.mrb[0].mxu0
        %7560 = vmatprep.mubr.bf16.mxu0 0
        %7561 = vmatmul.mubr.bf16.gmra.mrb[0].mxu0 %v7434
        %v7562 = vpop.f32.mrb[0].mxu0
        %v7563 = vadd.f32 0.0, %v7562
        %v7564 = vpop.f32.mrb[0].mxu0
        %v7565 = vpop.f32.mrb[0].mxu0
        %v7566 = vadd.f32 0.0, %v7565
        %v7567 = vpop.f32.mrb[0].mxu0
        %7568 = vmatprep.mubr.bf16.mxu0 0
        %7569 = vmatmul.mubr.bf16.gmra.mrb[0].mxu0 %v7435
        %v7570 = vpop.f32.mrb[0].mxu0
        %v7571 = vadd.f32 0.0, %v7570
        %v7572 = vpop.f32.mrb[0].mxu0
        %v7573 = vpop.f32.mrb[0].mxu0
        %v7574 = vadd.f32 0.0, %v7573
        %v7575 = vpop.f32.mrb[0].mxu0
        %7576 = vmatprep.mubr.bf16.mxu0 0
        %7577 = vmatmul.mubr.bf16.gmra.mrb[0].mxu0 %v7436
        %v7578 = vpop.f32.mrb[0].mxu0
        %v7579 = vadd.f32 0.0, %v7578
        %v7580 = vpop.f32.mrb[0].mxu0
        %v7581 = vpop.f32.mrb[0].mxu0
        %v7582 = vadd.f32 0.0, %v7581
        %v7583 = vpop.f32.mrb[0].mxu0
        %7584 = vmatprep.mubr.bf16.mxu0 0
        %7585 = vmatmul.mubr.bf16.gmra.mrb[0].mxu0 %v7437
        %v7586 = vpop.f32.mrb[0].mxu0
        %v7587 = vadd.f32 0.0, %v7586
        %v7588 = vpop.f32.mrb[0].mxu0
        %v7589 = vpop.f32.mrb[0].mxu0
        %v7590 = vadd.f32 0.0, %v7589
        %v7591 = vpop.f32.mrb[0].mxu0
        %7592 = vmatprep.mubr.bf16.mxu0 0
        %7593 = vmatmul.mubr.bf16.gmra.mrb[0].mxu0 %v7438
        %v7594 = vpop.f32.mrb[0].mxu0
        %v7595 = vadd.f32 0.0, %v7594
        %v7596 = vpop.f32.mrb[0].mxu0
        %v7597 = vpop.f32.mrb[0].mxu0
        %v7598 = vadd.f32 0.0, %v7597
        %v7599 = vpop.f32.mrb[0].mxu0
        %7600 = vmatprep.mubr.bf16.mxu0 0
        %7601 = vmatmul.mubr.bf16.gmra.mrb[0].mxu0 %v7439
        %v7602 = vpop.f32.mrb[0].mxu0
        %v7603 = vadd.f32 0.0, %v7602
        %v7604 = vpop.f32.mrb[0].mxu0
        %v7605 = vpop.f32.mrb[0].mxu0
        %v7606 = vadd.f32 0.0, %v7605
        %v7607 = vpop.f32.mrb[0].mxu0
        %7608 = vmatprep.mubr.bf16.mxu0 0
        %7609 = vmatmul.mubr.bf16.gmra.mrb[0].mxu0 %v7440
        %v7610 = vpop.f32.mrb[0].mxu0
        %v7611 = vadd.f32 0.0, %v7610
        %v7612 = vpop.f32.mrb[0].mxu0
        %v7613 = vpop.f32.mrb[0].mxu0
        %v7614 = vadd.f32 0.0, %v7613
        %v7615 = vpop.f32.mrb[0].mxu0
        %7616 = vmatprep.mubr.bf16.mxu0 0
        %7617 = vmatmul.mubr.bf16.gmra.mrb[0].mxu0 %v7441
        %v7618 = vpop.f32.mrb[0].mxu0
        %v7619 = vadd.f32 0.0, %v7618
        %v7620 = vpop.f32.mrb[0].mxu0
        %v7621 = vpop.f32.mrb[0].mxu0
        %v7622 = vadd.f32 0.0, %v7621
        %v7623 = vpop.f32.mrb[0].mxu0
        %7624 = vmatprep.mubr.bf16.mxu0 0
        %7625 = vmatmul.mubr.bf16.gmra.mrb[0].mxu0 %v7442
        %v7626 = vpop.f32.mrb[0].mxu0
        %v7627 = vadd.f32 0.0, %v7626
        %v7628 = vpop.f32.mrb[0].mxu0
        %v7629 = vpop.f32.mrb[0].mxu0
        %v7630 = vadd.f32 0.0, %v7629
        %v7631 = vpop.f32.mrb[0].mxu0
        %7632 = vmatprep.mubr.bf16.mxu0 0
        %7633 = vmatmul.mubr.bf16.gmra.mrb[0].mxu0 %v7443
        %v7634 = vpop.f32.mrb[0].mxu0
        %v7635 = vadd.f32 0.0, %v7634
        %v7636 = vpop.f32.mrb[0].mxu0
        %v7637 = vpop.f32.mrb[0].mxu0
        %v7638 = vadd.f32 0.0, %v7637
        %v7639 = vpop.f32.mrb[0].mxu0
        %7640 = vmatprep.mubr.bf16.mxu0 0
        %7641 = vmatmul.mubr.bf16.gmra.mrb[0].mxu0 %v7444
        %v7642 = vpop.f32.mrb[0].mxu0
        %v7643 = vadd.f32 0.0, %v7642
        %v7644 = vpop.f32.mrb[0].mxu0
        %v7645 = vpop.f32.mrb[0].mxu0
        %v7646 = vadd.f32 0.0, %v7645
        %v7647 = vpop.f32.mrb[0].mxu0
        %7648 = vmatprep.mubr.bf16.mxu0 0
        %7649 = vmatmul.mubr.bf16.gmra.mrb[0].mxu0 %v7445
        %v7650 = vpop.f32.mrb[0].mxu0
        %v7651 = vadd.f32 0.0, %v7650
        %v7652 = vpop.f32.mrb[0].mxu0
        %v7653 = vpop.f32.mrb[0].mxu0
        %v7654 = vadd.f32 0.0, %v7653
        %v7655 = vpop.f32.mrb[0].mxu0
        %7656 = vmatprep.mubr.bf16.mxu0 0
        %7657 = vmatmul.mubr.bf16.gmra.mrb[0].mxu0 %v7446
        %v7658 = vpop.f32.mrb[0].mxu0
        %v7659 = vadd.f32 0.0, %v7658
        %v7660 = vpop.f32.mrb[0].mxu0
        %v7661 = vpop.f32.mrb[0].mxu0
        %v7662 = vadd.f32 0.0, %v7661
        %v7663 = vpop.f32.mrb[0].mxu0
        %7664 = vmatprep.mubr.bf16.mxu0 0
        %7665 = vmatmul.mubr.bf16.gmra.mrb[0].mxu0 %v7447
        %v7666 = vpop.f32.mrb[0].mxu0
        %v7667 = vadd.f32 0.0, %v7666
        %v7668 = vpop.f32.mrb[0].mxu0
        %v7669 = vpop.f32.mrb[0].mxu0
        %v7670 = vadd.f32 0.0, %v7669
        %v7671 = vpop.f32.mrb[0].mxu0
        %7672 = vdwg.mxu0
        %v7705 = vunpack.c.l.b16 %v6935
        %v7706 = vunpack.c.l.b16 %v6936
        %v7707 = vunpack.c.l.b16 %v6937
        %v7708 = vunpack.c.l.b16 %v6938
        %v7709 = vunpack.c.l.b16 %v6939
        %v7710 = vunpack.c.l.b16 %v6940
        %v7711 = vunpack.c.l.b16 %v6941
        %v7712 = vunpack.c.l.b16 %v6942
        %v7713 = vunpack.c.l.b16 %v6943
        %v7714 = vunpack.c.l.b16 %v6944
        %v7715 = vunpack.c.l.b16 %v6945
        %v7716 = vunpack.c.l.b16 %v6946
        %v7717 = vunpack.c.l.b16 %v6947
        %v7718 = vunpack.c.l.b16 %v6948
        %v7719 = vunpack.c.l.b16 %v6949
        %v7720 = vunpack.c.l.b16 %v6950
        %v7721 = vunpack.c.l.b16 %v6951
        %v7722 = vunpack.c.l.b16 %v6952
        %v7723 = vunpack.c.l.b16 %v6953
        %v7724 = vunpack.c.l.b16 %v6954
        %v7725 = vunpack.c.l.b16 %v6955
        %v7726 = vunpack.c.l.b16 %v6956
        %v7727 = vunpack.c.l.b16 %v6957
        %v7728 = vunpack.c.l.b16 %v6958
        %v7729 = vunpack.c.l.b16 %v6959
        %v7730 = vunpack.c.l.b16 %v6960
        %v7731 = vunpack.c.l.b16 %v6961
        %v7732 = vunpack.c.l.b16 %v6962
        %v7733 = vunpack.c.l.b16 %v6963
        %v7734 = vunpack.c.l.b16 %v6964
        %v7735 = vunpack.c.l.b16 %v6965
        %v7736 = vunpack.c.l.b16 %v6966
        %v7737 = vpack.c.b16 %v7706, %v7705
        %v7738 = vpack.c.b16 %v7708, %v7707
        %v7739 = vpack.c.b16 %v7710, %v7709
        %v7740 = vpack.c.b16 %v7712, %v7711
        %v7741 = vpack.c.b16 %v7714, %v7713
        %v7742 = vpack.c.b16 %v7716, %v7715
        %v7743 = vpack.c.b16 %v7718, %v7717
        %v7744 = vpack.c.b16 %v7720, %v7719
        %v7745 = vpack.c.b16 %v7722, %v7721
        %v7746 = vpack.c.b16 %v7724, %v7723
        %v7747 = vpack.c.b16 %v7726, %v7725
        %v7748 = vpack.c.b16 %v7728, %v7727
        %v7749 = vpack.c.b16 %v7730, %v7729
        %v7750 = vpack.c.b16 %v7732, %v7731
        %v7751 = vpack.c.b16 %v7734, %v7733
        %v7752 = vpack.c.b16 %v7736, %v7735
        %v7785 = vunpack.c.l.b16 %v6967
        %v7786 = vunpack.c.l.b16 %v6968
        %v7787 = vunpack.c.l.b16 %v6969
        %v7788 = vunpack.c.l.b16 %v6970
        %v7789 = vunpack.c.l.b16 %v6971
        %v7790 = vunpack.c.l.b16 %v6972
        %v7791 = vunpack.c.l.b16 %v6973
        %v7792 = vunpack.c.l.b16 %v6974
        %v7793 = vunpack.c.l.b16 %v6975
        %v7794 = vunpack.c.l.b16 %v6976
        %v7795 = vunpack.c.l.b16 %v6977
        %v7796 = vunpack.c.l.b16 %v6978
        %v7797 = vunpack.c.l.b16 %v6979
        %v7798 = vunpack.c.l.b16 %v6980
        %v7799 = vunpack.c.l.b16 %v6981
        %v7800 = vunpack.c.l.b16 %v6982
        %v7801 = vpack.c.b16 %v7786, %v7785
        %v7802 = vpack.c.b16 %v7788, %v7787
        %v7803 = vpack.c.b16 %v7790, %v7789
        %v7804 = vpack.c.b16 %v7792, %v7791
        %v7805 = vpack.c.b16 %v7794, %v7793
        %v7806 = vpack.c.b16 %v7796, %v7795
        %v7807 = vpack.c.b16 %v7798, %v7797
        %v7808 = vpack.c.b16 %v7800, %v7799
        %7817 = vmatprep.subr.bf16.mxu0 0
        %7818 = vmatpush1.bf16.msra.mxu0 %v7801
        %7819 = vmatprep.subr.bf16.mxu0 0
        %7820 = vmatpush1.bf16.msra.mxu0 %v7802
        %7821 = vmatprep.subr.bf16.mxu0 0
        %7822 = vmatpush1.bf16.msra.mxu0 %v7803
        %7823 = vmatprep.subr.bf16.mxu0 0
        %7824 = vmatpush1.bf16.msra.mxu0 %v7804
        %7825 = vmatprep.subr.bf16.mxu0 0
        %7826 = vmatpush1.bf16.msra.mxu0 %v7805
        %7827 = vmatprep.subr.bf16.mxu0 0
        %7828 = vmatpush1.bf16.msra.mxu0 %v7806
        %7829 = vmatprep.subr.bf16.mxu0 0
        %7830 = vmatpush1.bf16.msra.mxu0 %v7807
        %7831 = vmatprep.subr.bf16.mxu0 0
        %7832 = vmatpush1.bf16.msra.mxu0 %v7808
        %7833 = vmatprep.subr.bf16.mxu0 0
        %7834 = vmatpush1.bf16.msra.mxu0 0
        %7835 = vmatprep.subr.bf16.mxu0 0
        %7836 = vmatpush1.bf16.msra.mxu0 0
        %7837 = vmatprep.subr.bf16.mxu0 0
        %7838 = vmatpush1.bf16.msra.mxu0 0
        %7839 = vmatprep.subr.bf16.mxu0 0
        %7840 = vmatpush1.bf16.msra.mxu0 0
        %7841 = vmatprep.subr.bf16.mxu0 0
        %7842 = vmatpush1.bf16.msra.mxu0 0
        %7843 = vmatprep.subr.bf16.mxu0 0
        %7844 = vmatpush1.bf16.msra.mxu0 0
        %7845 = vmatprep.subr.bf16.mxu0 0
        %7846 = vmatpush1.bf16.msra.mxu0 0
        %7847 = vmatprep.subr.bf16.mxu0 0
        %7848 = vmatpush1.bf16.msra.mxu0 0
        %7849 = vmatprep.mubr.bf16.mxu0 0
        %7850 = vmatmul.mubr.bf16.gmra.mrb[0].mxu0 %v7737
        %v7851 = vpop.f32.mrb[0].mxu0
        %v7852 = vadd.f32 %v7547, %v7851
        %v7853 = vpop.f32.mrb[0].mxu0
        %v7854 = vpop.f32.mrb[0].mxu0
        %v7855 = vadd.f32 %v7550, %v7854
        %v7856 = vpop.f32.mrb[0].mxu0
        %7857 = vmatprep.mubr.bf16.mxu0 0
        %7858 = vmatmul.mubr.bf16.gmra.mrb[0].mxu0 %v7738
        %v7859 = vpop.f32.mrb[0].mxu0
        %v7860 = vadd.f32 %v7555, %v7859
        %v7861 = vpop.f32.mrb[0].mxu0
        %v7862 = vpop.f32.mrb[0].mxu0
        %v7863 = vadd.f32 %v7558, %v7862
        %v7864 = vpop.f32.mrb[0].mxu0
        %7865 = vmatprep.mubr.bf16.mxu0 0
        %7866 = vmatmul.mubr.bf16.gmra.mrb[0].mxu0 %v7739
        %v7867 = vpop.f32.mrb[0].mxu0
        %v7868 = vadd.f32 %v7563, %v7867
        %v7869 = vpop.f32.mrb[0].mxu0
        %v7870 = vpop.f32.mrb[0].mxu0
        %v7871 = vadd.f32 %v7566, %v7870
        %v7872 = vpop.f32.mrb[0].mxu0
        %7873 = vmatprep.mubr.bf16.mxu0 0
        %7874 = vmatmul.mubr.bf16.gmra.mrb[0].mxu0 %v7740
        %v7875 = vpop.f32.mrb[0].mxu0
        %v7876 = vadd.f32 %v7571, %v7875
        %v7877 = vpop.f32.mrb[0].mxu0
        %v7878 = vpop.f32.mrb[0].mxu0
        %v7879 = vadd.f32 %v7574, %v7878
        %v7880 = vpop.f32.mrb[0].mxu0
        %7881 = vmatprep.mubr.bf16.mxu0 0
        %7882 = vmatmul.mubr.bf16.gmra.mrb[0].mxu0 %v7741
        %v7883 = vpop.f32.mrb[0].mxu0
        %v7884 = vadd.f32 %v7579, %v7883
        %v7885 = vpop.f32.mrb[0].mxu0
        %v7886 = vpop.f32.mrb[0].mxu0
        %v7887 = vadd.f32 %v7582, %v7886
        %v7888 = vpop.f32.mrb[0].mxu0
        %7889 = vmatprep.mubr.bf16.mxu0 0
        %7890 = vmatmul.mubr.bf16.gmra.mrb[0].mxu0 %v7742
        %v7891 = vpop.f32.mrb[0].mxu0
        %v7892 = vadd.f32 %v7587, %v7891
        %v7893 = vpop.f32.mrb[0].mxu0
        %v7894 = vpop.f32.mrb[0].mxu0
        %v7895 = vadd.f32 %v7590, %v7894
        %v7896 = vpop.f32.mrb[0].mxu0
        %7897 = vmatprep.mubr.bf16.mxu0 0
        %7898 = vmatmul.mubr.bf16.gmra.mrb[0].mxu0 %v7743
        %v7899 = vpop.f32.mrb[0].mxu0
        %v7900 = vadd.f32 %v7595, %v7899
        %v7901 = vpop.f32.mrb[0].mxu0
        %v7902 = vpop.f32.mrb[0].mxu0
        %v7903 = vadd.f32 %v7598, %v7902
        %v7904 = vpop.f32.mrb[0].mxu0
        %7905 = vmatprep.mubr.bf16.mxu0 0
        %7906 = vmatmul.mubr.bf16.gmra.mrb[0].mxu0 %v7744
        %v7907 = vpop.f32.mrb[0].mxu0
        %v7908 = vadd.f32 %v7603, %v7907
        %v7909 = vpop.f32.mrb[0].mxu0
        %v7910 = vpop.f32.mrb[0].mxu0
        %v7911 = vadd.f32 %v7606, %v7910
        %v7912 = vpop.f32.mrb[0].mxu0
        %7913 = vmatprep.mubr.bf16.mxu0 0
        %7914 = vmatmul.mubr.bf16.gmra.mrb[0].mxu0 %v7745
        %v7915 = vpop.f32.mrb[0].mxu0
        %v7916 = vadd.f32 %v7611, %v7915
        %v7917 = vpop.f32.mrb[0].mxu0
        %v7918 = vpop.f32.mrb[0].mxu0
        %v7919 = vadd.f32 %v7614, %v7918
        %v7920 = vpop.f32.mrb[0].mxu0
        %7921 = vmatprep.mubr.bf16.mxu0 0
        %7922 = vmatmul.mubr.bf16.gmra.mrb[0].mxu0 %v7746
        %v7923 = vpop.f32.mrb[0].mxu0
        %v7924 = vadd.f32 %v7619, %v7923
        %v7925 = vpop.f32.mrb[0].mxu0
        %v7926 = vpop.f32.mrb[0].mxu0
        %v7927 = vadd.f32 %v7622, %v7926
        %v7928 = vpop.f32.mrb[0].mxu0
        %7929 = vmatprep.mubr.bf16.mxu0 0
        %7930 = vmatmul.mubr.bf16.gmra.mrb[0].mxu0 %v7747
        %v7931 = vpop.f32.mrb[0].mxu0
        %v7932 = vadd.f32 %v7627, %v7931
        %v7933 = vpop.f32.mrb[0].mxu0
        %v7934 = vpop.f32.mrb[0].mxu0
        %v7935 = vadd.f32 %v7630, %v7934
        %v7936 = vpop.f32.mrb[0].mxu0
        %7937 = vmatprep.mubr.bf16.mxu0 0
        %7938 = vmatmul.mubr.bf16.gmra.mrb[0].mxu0 %v7748
        %v7939 = vpop.f32.mrb[0].mxu0
        %v7940 = vadd.f32 %v7635, %v7939
        %v7941 = vpop.f32.mrb[0].mxu0
        %v7942 = vpop.f32.mrb[0].mxu0
        %v7943 = vadd.f32 %v7638, %v7942
        %v7944 = vpop.f32.mrb[0].mxu0
        %7945 = vmatprep.mubr.bf16.mxu0 0
        %7946 = vmatmul.mubr.bf16.gmra.mrb[0].mxu0 %v7749
        %v7947 = vpop.f32.mrb[0].mxu0
        %v7948 = vadd.f32 %v7643, %v7947
        %v7949 = vpop.f32.mrb[0].mxu0
        %v7950 = vpop.f32.mrb[0].mxu0
        %v7951 = vadd.f32 %v7646, %v7950
        %v7952 = vpop.f32.mrb[0].mxu0
        %7953 = vmatprep.mubr.bf16.mxu0 0
        %7954 = vmatmul.mubr.bf16.gmra.mrb[0].mxu0 %v7750
        %v7955 = vpop.f32.mrb[0].mxu0
        %v7956 = vadd.f32 %v7651, %v7955
        %v7957 = vpop.f32.mrb[0].mxu0
        %v7958 = vpop.f32.mrb[0].mxu0
        %v7959 = vadd.f32 %v7654, %v7958
        %v7960 = vpop.f32.mrb[0].mxu0
        %7961 = vmatprep.mubr.bf16.mxu0 0
        %7962 = vmatmul.mubr.bf16.gmra.mrb[0].mxu0 %v7751
        %v7963 = vpop.f32.mrb[0].mxu0
        %v7964 = vadd.f32 %v7659, %v7963
        %v7965 = vpop.f32.mrb[0].mxu0
        %v7966 = vpop.f32.mrb[0].mxu0
        %v7967 = vadd.f32 %v7662, %v7966
        %v7968 = vpop.f32.mrb[0].mxu0
        %7969 = vmatprep.mubr.bf16.mxu0 0
        %7970 = vmatmul.mubr.bf16.gmra.mrb[0].mxu0 %v7752
        %v7971 = vpop.f32.mrb[0].mxu0
        %v7972 = vadd.f32 %v7667, %v7971
        %v7973 = vpop.f32.mrb[0].mxu0
        %v7974 = vpop.f32.mrb[0].mxu0
        %v7975 = vadd.f32 %v7670, %v7974
        %v7976 = vpop.f32.mrb[0].mxu0
        %7977 = vdwg.mxu0
        %v7978 = vld [vmem:[#allocation2] sm:$0xe]
        %v7979 = vld [vmem:[#allocation2 + $0xc] sm:$0xe]
        %v7980 = vld [vmem:[#allocation2 + $0x18] sm:$0xe]
        %v7981 = vld [vmem:[#allocation2 + $0x24] sm:$0xe]
        %v7982 = vld [vmem:[#allocation2 + $0x30] sm:$0xe]
        %v7983 = vld [vmem:[#allocation2 + $0x3c] sm:$0xe]
        %v7984 = vld [vmem:[#allocation2 + $0x48] sm:$0xe]
        %v7985 = vld [vmem:[#allocation2 + $0x54] sm:$0xe]
        %v7986 = vld [vmem:[#allocation2 + $0x60] sm:$0xe]
        %v7987 = vld [vmem:[#allocation2 + $0x6c] sm:$0xe]
        %v7988 = vld [vmem:[#allocation2 + $0x78] sm:$0xe]
        %v7989 = vld [vmem:[#allocation2 + $0x84] sm:$0xe]
        %v7990 = vld [vmem:[#allocation2 + $0x90] sm:$0xe]
        %v7991 = vld [vmem:[#allocation2 + $0x9c] sm:$0xe]
        %v7992 = vld [vmem:[#allocation2 + $0xa8] sm:$0xe]
        %v7993 = vld [vmem:[#allocation2 + $0xb4] sm:$0xe]
        %v8026 = vrot.slane %v7978, 5
        %v8027 = vrot.slane %v8026, 4
        %v8028 = vrot.slane %v6936, 5
        %v8029 = vsel %vm2188, %v8027, %v8028
        %v8030 = vrot.slane %v8028, 4
        %v8031 = vrot.slane %v6983, 5
        %v8032 = vsel %vm2188, %v8030, %v8031
        %v8033 = vrot.slane %v7979, 5
        %v8034 = vrot.slane %v8033, 4
        %v8035 = vrot.slane %v6938, 5
        %v8036 = vsel %vm2188, %v8034, %v8035
        %v8037 = vrot.slane %v8035, 4
        %v8038 = vrot.slane %v6984, 5
        %v8039 = vsel %vm2188, %v8037, %v8038
        %v8040 = vrot.slane %v7980, 5
        %v8041 = vrot.slane %v8040, 4
        %v8042 = vrot.slane %v6940, 5
        %v8043 = vsel %vm2188, %v8041, %v8042
        %v8044 = vrot.slane %v8042, 4
        %v8045 = vrot.slane %v6985, 5
        %v8046 = vsel %vm2188, %v8044, %v8045
        %v8047 = vrot.slane %v7981, 5
        %v8048 = vrot.slane %v8047, 4
        %v8049 = vrot.slane %v6942, 5
        %v8050 = vsel %vm2188, %v8048, %v8049
        %v8051 = vrot.slane %v8049, 4
        %v8052 = vrot.slane %v6986, 5
        %v8053 = vsel %vm2188, %v8051, %v8052
        %v8054 = vrot.slane %v7982, 5
        %v8055 = vrot.slane %v8054, 4
        %v8056 = vrot.slane %v6944, 5
        %v8057 = vsel %vm2188, %v8055, %v8056
        %v8058 = vrot.slane %v8056, 4
        %v8059 = vrot.slane %v6987, 5
        %v8060 = vsel %vm2188, %v8058, %v8059
        %v8061 = vrot.slane %v7983, 5
        %v8062 = vrot.slane %v8061, 4
        %v8063 = vrot.slane %v6946, 5
        %v8064 = vsel %vm2188, %v8062, %v8063
        %v8065 = vrot.slane %v8063, 4
        %v8066 = vrot.slane %v6988, 5
        %v8067 = vsel %vm2188, %v8065, %v8066
        %v8068 = vrot.slane %v7984, 5
        %v8069 = vrot.slane %v8068, 4
        %v8070 = vrot.slane %v6948, 5
        %v8071 = vsel %vm2188, %v8069, %v8070
        %v8072 = vrot.slane %v8070, 4
        %v8073 = vrot.slane %v6989, 5
        %v8074 = vsel %vm2188, %v8072, %v8073
        %v8075 = vrot.slane %v7985, 5
        %v8076 = vrot.slane %v8075, 4
        %v8077 = vrot.slane %v6950, 5
        %v8078 = vsel %vm2188, %v8076, %v8077
        %v8079 = vrot.slane %v8077, 4
        %v8080 = vrot.slane %v6990, 5
        %v8081 = vsel %vm2188, %v8079, %v8080
        %v8082 = vrot.slane %v7986, 5
        %v8083 = vrot.slane %v8082, 4
        %v8084 = vrot.slane %v6952, 5
        %v8085 = vsel %vm2188, %v8083, %v8084
        %v8086 = vrot.slane %v8084, 4
        %v8087 = vrot.slane %v6991, 5
        %v8088 = vsel %vm2188, %v8086, %v8087
        %v8089 = vrot.slane %v7987, 5
        %v8090 = vrot.slane %v8089, 4
        %v8091 = vrot.slane %v6954, 5
        %v8092 = vsel %vm2188, %v8090, %v8091
        %v8093 = vrot.slane %v8091, 4
        %v8094 = vrot.slane %v6992, 5
        %v8095 = vsel %vm2188, %v8093, %v8094
        %v8096 = vrot.slane %v7988, 5
        %v8097 = vrot.slane %v8096, 4
        %v8098 = vrot.slane %v6956, 5
        %v8099 = vsel %vm2188, %v8097, %v8098
        %v8100 = vrot.slane %v8098, 4
        %v8101 = vrot.slane %v6993, 5
        %v8102 = vsel %vm2188, %v8100, %v8101
        %v8103 = vrot.slane %v7989, 5
        %v8104 = vrot.slane %v8103, 4
        %v8105 = vrot.slane %v6958, 5
        %v8106 = vsel %vm2188, %v8104, %v8105
        %v8107 = vrot.slane %v8105, 4
        %v8108 = vrot.slane %v6994, 5
        %v8109 = vsel %vm2188, %v8107, %v8108
        %v8110 = vrot.slane %v7990, 5
        %v8111 = vrot.slane %v8110, 4
        %v8112 = vrot.slane %v6960, 5
        %v8113 = vsel %vm2188, %v8111, %v8112
        %v8114 = vrot.slane %v8112, 4
        %v8115 = vrot.slane %v6995, 5
        %v8116 = vsel %vm2188, %v8114, %v8115
        %v8117 = vrot.slane %v7991, 5
        %v8118 = vrot.slane %v8117, 4
        %v8119 = vrot.slane %v6962, 5
        %v8120 = vsel %vm2188, %v8118, %v8119
        %v8121 = vrot.slane %v8119, 4
        %v8122 = vrot.slane %v6996, 5
        %v8123 = vsel %vm2188, %v8121, %v8122
        %v8124 = vrot.slane %v7992, 5
        %v8125 = vrot.slane %v8124, 4
        %v8126 = vrot.slane %v6964, 5
        %v8127 = vsel %vm2188, %v8125, %v8126
        %v8128 = vrot.slane %v8126, 4
        %v8129 = vrot.slane %v6997, 5
        %v8130 = vsel %vm2188, %v8128, %v8129
        %v8131 = vrot.slane %v7993, 5
        %v8132 = vrot.slane %v8131, 4
        %v8133 = vrot.slane %v6966, 5
        %v8134 = vsel %vm2188, %v8132, %v8133
        %v8135 = vrot.slane %v8133, 4
        %v8136 = vrot.slane %v6998, 5
        %v8137 = vsel %vm2188, %v8135, %v8136
        %s8138 = scalar_lea.vmem [#allocation8], 128
        %v8139 = vld [vmem:[%s8138] sm:$0xf]
        %v8140 = vld [vmem:[%s8138 + $0x4] sm:$0xf]
        %v8141 = vld [vmem:[%s8138 + $0x8] sm:$0xf]
        %v8142 = vld [vmem:[%s8138 + $0xc] sm:$0xf]
        %v8143 = vld [vmem:[%s8138 + $0x10] sm:$0xf]
        %v8144 = vld [vmem:[%s8138 + $0x14] sm:$0xf]
        %v8145 = vld [vmem:[%s8138 + $0x18] sm:$0xf]
        %v8146 = vld [vmem:[%s8138 + $0x1c] sm:$0xf]
        %v8147 = vld [vmem:[%s8138 + $0x20] sm:$0xf]
        %v8148 = vld [vmem:[%s8138 + $0x24] sm:$0xf]
        %v8149 = vld [vmem:[%s8138 + $0x28] sm:$0xf]
        %v8150 = vld [vmem:[%s8138 + $0x2c] sm:$0xf]
        %v8151 = vld [vmem:[%s8138 + $0x30] sm:$0xf]
        %v8152 = vld [vmem:[%s8138 + $0x34] sm:$0xf]
        %v8153 = vld [vmem:[%s8138 + $0x38] sm:$0xf]
        %v8154 = vld [vmem:[%s8138 + $0x3c] sm:$0xf]
        %v8155 = vunpack.c.l.b16 %v8029
        %v8156 = vunpack.c.l.b16 %v8032
        %v8157 = vunpack.c.l.b16 %v8036
        %v8158 = vunpack.c.l.b16 %v8039
        %v8159 = vunpack.c.l.b16 %v8043
        %v8160 = vunpack.c.l.b16 %v8046
        %v8161 = vunpack.c.l.b16 %v8050
        %v8162 = vunpack.c.l.b16 %v8053
        %v8163 = vunpack.c.l.b16 %v8057
        %v8164 = vunpack.c.l.b16 %v8060
        %v8165 = vunpack.c.l.b16 %v8064
        %v8166 = vunpack.c.l.b16 %v8067
        %v8167 = vunpack.c.l.b16 %v8071
        %v8168 = vunpack.c.l.b16 %v8074
        %v8169 = vunpack.c.l.b16 %v8078
        %v8170 = vunpack.c.l.b16 %v8081
        %v8171 = vunpack.c.l.b16 %v8085
        %v8172 = vunpack.c.l.b16 %v8088
        %v8173 = vunpack.c.l.b16 %v8092
        %v8174 = vunpack.c.l.b16 %v8095
        %v8175 = vunpack.c.l.b16 %v8099
        %v8176 = vunpack.c.l.b16 %v8102
        %v8177 = vunpack.c.l.b16 %v8106
        %v8178 = vunpack.c.l.b16 %v8109
        %v8179 = vunpack.c.l.b16 %v8113
        %v8180 = vunpack.c.l.b16 %v8116
        %v8181 = vunpack.c.l.b16 %v8120
        %v8182 = vunpack.c.l.b16 %v8123
        %v8183 = vunpack.c.l.b16 %v8127
        %v8184 = vunpack.c.l.b16 %v8130
        %v8185 = vunpack.c.l.b16 %v8134
        %v8186 = vunpack.c.l.b16 %v8137
        %v8187 = vpack.c.b16 %v8156, %v8155
        %v8188 = vpack.c.b16 %v8158, %v8157
        %v8189 = vpack.c.b16 %v8160, %v8159
        %v8190 = vpack.c.b16 %v8162, %v8161
        %v8191 = vpack.c.b16 %v8164, %v8163
        %v8192 = vpack.c.b16 %v8166, %v8165
        %v8193 = vpack.c.b16 %v8168, %v8167
        %v8194 = vpack.c.b16 %v8170, %v8169
        %v8195 = vpack.c.b16 %v8172, %v8171
        %v8196 = vpack.c.b16 %v8174, %v8173
        %v8197 = vpack.c.b16 %v8176, %v8175
        %v8198 = vpack.c.b16 %v8178, %v8177
        %v8199 = vpack.c.b16 %v8180, %v8179
        %v8200 = vpack.c.b16 %v8182, %v8181
        %v8201 = vpack.c.b16 %v8184, %v8183
        %v8202 = vpack.c.b16 %v8186, %v8185
        %v8235 = vunpack.c.l.b16 %v8139
        %v8236 = vunpack.c.l.b16 %v8140
        %v8237 = vunpack.c.l.b16 %v8141
        %v8238 = vunpack.c.l.b16 %v8142
        %v8239 = vunpack.c.l.b16 %v8143
        %v8240 = vunpack.c.l.b16 %v8144
        %v8241 = vunpack.c.l.b16 %v8145
        %v8242 = vunpack.c.l.b16 %v8146
        %v8243 = vunpack.c.l.b16 %v8147
        %v8244 = vunpack.c.l.b16 %v8148
        %v8245 = vunpack.c.l.b16 %v8149
        %v8246 = vunpack.c.l.b16 %v8150
        %v8247 = vunpack.c.l.b16 %v8151
        %v8248 = vunpack.c.l.b16 %v8152
        %v8249 = vunpack.c.l.b16 %v8153
        %v8250 = vunpack.c.l.b16 %v8154
        %v8251 = vpack.c.b16 %v8236, %v8235
        %v8252 = vpack.c.b16 %v8238, %v8237
        %v8253 = vpack.c.b16 %v8240, %v8239
        %v8254 = vpack.c.b16 %v8242, %v8241
        %v8255 = vpack.c.b16 %v8244, %v8243
        %v8256 = vpack.c.b16 %v8246, %v8245
        %v8257 = vpack.c.b16 %v8248, %v8247
        %v8258 = vpack.c.b16 %v8250, %v8249
        %8267 = vmatprep.subr.bf16.mxu0 0
        %8268 = vmatpush1.bf16.msra.mxu0 %v8251
        %8269 = vmatprep.subr.bf16.mxu0 0
        %8270 = vmatpush1.bf16.msra.mxu0 %v8252
        %8271 = vmatprep.subr.bf16.mxu0 0
        %8272 = vmatpush1.bf16.msra.mxu0 %v8253
        %8273 = vmatprep.subr.bf16.mxu0 0
        %8274 = vmatpush1.bf16.msra.mxu0 %v8254
        %8275 = vmatprep.subr.bf16.mxu0 0
        %8276 = vmatpush1.bf16.msra.mxu0 %v8255
        %8277 = vmatprep.subr.bf16.mxu0 0
        %8278 = vmatpush1.bf16.msra.mxu0 %v8256
        %8279 = vmatprep.subr.bf16.mxu0 0
        %8280 = vmatpush1.bf16.msra.mxu0 %v8257
        %8281 = vmatprep.subr.bf16.mxu0 0
        %8282 = vmatpush1.bf16.msra.mxu0 %v8258
        %8283 = vmatprep.subr.bf16.mxu0 0
        %8284 = vmatpush1.bf16.msra.mxu0 0
        %8285 = vmatprep.subr.bf16.mxu0 0
        %8286 = vmatpush1.bf16.msra.mxu0 0
        %8287 = vmatprep.subr.bf16.mxu0 0
        %8288 = vmatpush1.bf16.msra.mxu0 0
        %8289 = vmatprep.subr.bf16.mxu0 0
        %8290 = vmatpush1.bf16.msra.mxu0 0
        %8291 = vmatprep.subr.bf16.mxu0 0
        %8292 = vmatpush1.bf16.msra.mxu0 0
        %8293 = vmatprep.subr.bf16.mxu0 0
        %8294 = vmatpush1.bf16.msra.mxu0 0
        %8295 = vmatprep.subr.bf16.mxu0 0
        %8296 = vmatpush1.bf16.msra.mxu0 0
        %8297 = vmatprep.subr.bf16.mxu0 0
        %8298 = vmatpush1.bf16.msra.mxu0 0
        %8299 = vmatprep.mubr.bf16.mxu0 0
        %8300 = vmatmul.mubr.bf16.gmra.mrb[0].mxu0 %v8187
        %v8301 = vpop.f32.mrb[0].mxu0
        %v8302 = vadd.f32 0.0, %v8301
        %v8303 = vpop.f32.mrb[0].mxu0
        %v8304 = vpop.f32.mrb[0].mxu0
        %v8305 = vadd.f32 0.0, %v8304
        %v8306 = vpop.f32.mrb[0].mxu0
        %8307 = vmatprep.mubr.bf16.mxu0 0
        %8308 = vmatmul.mubr.bf16.gmra.mrb[0].mxu0 %v8188
        %v8309 = vpop.f32.mrb[0].mxu0
        %v8310 = vadd.f32 0.0, %v8309
        %v8311 = vpop.f32.mrb[0].mxu0
        %v8312 = vpop.f32.mrb[0].mxu0
        %v8313 = vadd.f32 0.0, %v8312
        %v8314 = vpop.f32.mrb[0].mxu0
        %8315 = vmatprep.mubr.bf16.mxu0 0
        %8316 = vmatmul.mubr.bf16.gmra.mrb[0].mxu0 %v8189
        %v8317 = vpop.f32.mrb[0].mxu0
        %v8318 = vadd.f32 0.0, %v8317
        %v8319 = vpop.f32.mrb[0].mxu0
        %v8320 = vpop.f32.mrb[0].mxu0
        %v8321 = vadd.f32 0.0, %v8320
        %v8322 = vpop.f32.mrb[0].mxu0
        %8323 = vmatprep.mubr.bf16.mxu0 0
        %8324 = vmatmul.mubr.bf16.gmra.mrb[0].mxu0 %v8190
        %v8325 = vpop.f32.mrb[0].mxu0
        %v8326 = vadd.f32 0.0, %v8325
        %v8327 = vpop.f32.mrb[0].mxu0
        %v8328 = vpop.f32.mrb[0].mxu0
        %v8329 = vadd.f32 0.0, %v8328
        %v8330 = vpop.f32.mrb[0].mxu0
        %8331 = vmatprep.mubr.bf16.mxu0 0
        %8332 = vmatmul.mubr.bf16.gmra.mrb[0].mxu0 %v8191
        %v8333 = vpop.f32.mrb[0].mxu0
        %v8334 = vadd.f32 0.0, %v8333
        %v8335 = vpop.f32.mrb[0].mxu0
        %v8336 = vpop.f32.mrb[0].mxu0
        %v8337 = vadd.f32 0.0, %v8336
        %v8338 = vpop.f32.mrb[0].mxu0
        %8339 = vmatprep.mubr.bf16.mxu0 0
        %8340 = vmatmul.mubr.bf16.gmra.mrb[0].mxu0 %v8192
        %v8341 = vpop.f32.mrb[0].mxu0
        %v8342 = vadd.f32 0.0, %v8341
        %v8343 = vpop.f32.mrb[0].mxu0
        %v8344 = vpop.f32.mrb[0].mxu0
        %v8345 = vadd.f32 0.0, %v8344
        %v8346 = vpop.f32.mrb[0].mxu0
        %8347 = vmatprep.mubr.bf16.mxu0 0
        %8348 = vmatmul.mubr.bf16.gmra.mrb[0].mxu0 %v8193
        %v8349 = vpop.f32.mrb[0].mxu0
        %v8350 = vadd.f32 0.0, %v8349
        %v8351 = vpop.f32.mrb[0].mxu0
        %v8352 = vpop.f32.mrb[0].mxu0
        %v8353 = vadd.f32 0.0, %v8352
        %v8354 = vpop.f32.mrb[0].mxu0
        %8355 = vmatprep.mubr.bf16.mxu0 0
        %8356 = vmatmul.mubr.bf16.gmra.mrb[0].mxu0 %v8194
        %v8357 = vpop.f32.mrb[0].mxu0
        %v8358 = vadd.f32 0.0, %v8357
        %v8359 = vpop.f32.mrb[0].mxu0
        %v8360 = vpop.f32.mrb[0].mxu0
        %v8361 = vadd.f32 0.0, %v8360
        %v8362 = vpop.f32.mrb[0].mxu0
        %8363 = vmatprep.mubr.bf16.mxu0 0
        %8364 = vmatmul.mubr.bf16.gmra.mrb[0].mxu0 %v8195
        %v8365 = vpop.f32.mrb[0].mxu0
        %v8366 = vadd.f32 0.0, %v8365
        %v8367 = vpop.f32.mrb[0].mxu0
        %v8368 = vpop.f32.mrb[0].mxu0
        %v8369 = vadd.f32 0.0, %v8368
        %v8370 = vpop.f32.mrb[0].mxu0
        %8371 = vmatprep.mubr.bf16.mxu0 0
        %8372 = vmatmul.mubr.bf16.gmra.mrb[0].mxu0 %v8196
        %v8373 = vpop.f32.mrb[0].mxu0
        %v8374 = vadd.f32 0.0, %v8373
        %v8375 = vpop.f32.mrb[0].mxu0
        %v8376 = vpop.f32.mrb[0].mxu0
        %v8377 = vadd.f32 0.0, %v8376
        %v8378 = vpop.f32.mrb[0].mxu0
        %8379 = vmatprep.mubr.bf16.mxu0 0
        %8380 = vmatmul.mubr.bf16.gmra.mrb[0].mxu0 %v8197
        %v8381 = vpop.f32.mrb[0].mxu0
        %v8382 = vadd.f32 0.0, %v8381
        %v8383 = vpop.f32.mrb[0].mxu0
        %v8384 = vpop.f32.mrb[0].mxu0
        %v8385 = vadd.f32 0.0, %v8384
        %v8386 = vpop.f32.mrb[0].mxu0
        %8387 = vmatprep.mubr.bf16.mxu0 0
        %8388 = vmatmul.mubr.bf16.gmra.mrb[0].mxu0 %v8198
        %v8389 = vpop.f32.mrb[0].mxu0
        %v8390 = vadd.f32 0.0, %v8389
        %v8391 = vpop.f32.mrb[0].mxu0
        %v8392 = vpop.f32.mrb[0].mxu0
        %v8393 = vadd.f32 0.0, %v8392
        %v8394 = vpop.f32.mrb[0].mxu0
        %8395 = vmatprep.mubr.bf16.mxu0 0
        %8396 = vmatmul.mubr.bf16.gmra.mrb[0].mxu0 %v8199
        %v8397 = vpop.f32.mrb[0].mxu0
        %v8398 = vadd.f32 0.0, %v8397
        %v8399 = vpop.f32.mrb[0].mxu0
        %v8400 = vpop.f32.mrb[0].mxu0
        %v8401 = vadd.f32 0.0, %v8400
        %v8402 = vpop.f32.mrb[0].mxu0
        %8403 = vmatprep.mubr.bf16.mxu0 0
        %8404 = vmatmul.mubr.bf16.gmra.mrb[0].mxu0 %v8200
        %v8405 = vpop.f32.mrb[0].mxu0
        %v8406 = vadd.f32 0.0, %v8405
        %v8407 = vpop.f32.mrb[0].mxu0
        %v8408 = vpop.f32.mrb[0].mxu0
        %v8409 = vadd.f32 0.0, %v8408
        %v8410 = vpop.f32.mrb[0].mxu0
        %8411 = vmatprep.mubr.bf16.mxu0 0
        %8412 = vmatmul.mubr.bf16.gmra.mrb[0].mxu0 %v8201
        %v8413 = vpop.f32.mrb[0].mxu0
        %v8414 = vadd.f32 0.0, %v8413
        %v8415 = vpop.f32.mrb[0].mxu0
        %v8416 = vpop.f32.mrb[0].mxu0
        %v8417 = vadd.f32 0.0, %v8416
        %v8418 = vpop.f32.mrb[0].mxu0
        %8419 = vmatprep.mubr.bf16.mxu0 0
        %8420 = vmatmul.mubr.bf16.gmra.mrb[0].mxu0 %v8202
        %v8421 = vpop.f32.mrb[0].mxu0
        %v8422 = vadd.f32 0.0, %v8421
        %v8423 = vpop.f32.mrb[0].mxu0
        %v8424 = vpop.f32.mrb[0].mxu0
        %v8425 = vadd.f32 0.0, %v8424
        %v8426 = vpop.f32.mrb[0].mxu0
        %8427 = vdwg.mxu0
        %v8428 = vadd.f32 %v7852, %v8302
        %v8429 = vadd.f32 %v7855, %v8305
        %v8430 = vadd.f32 %v7860, %v8310
        %v8431 = vadd.f32 %v7863, %v8313
        %v8432 = vadd.f32 %v7868, %v8318
        %v8433 = vadd.f32 %v7871, %v8321
        %v8434 = vadd.f32 %v7876, %v8326
        %v8435 = vadd.f32 %v7879, %v8329
        %v8436 = vadd.f32 %v7884, %v8334
        %v8437 = vadd.f32 %v7887, %v8337
        %v8438 = vadd.f32 %v7892, %v8342
        %v8439 = vadd.f32 %v7895, %v8345
        %v8440 = vadd.f32 %v7900, %v8350
        %v8441 = vadd.f32 %v7903, %v8353
        %v8442 = vadd.f32 %v7908, %v8358
        %v8443 = vadd.f32 %v7911, %v8361
        %v8444 = vadd.f32 %v7916, %v8366
        %v8445 = vadd.f32 %v7919, %v8369
        %v8446 = vadd.f32 %v7924, %v8374
        %v8447 = vadd.f32 %v7927, %v8377
        %v8448 = vadd.f32 %v7932, %v8382
        %v8449 = vadd.f32 %v7935, %v8385
        %v8450 = vadd.f32 %v7940, %v8390
        %v8451 = vadd.f32 %v7943, %v8393
        %v8452 = vadd.f32 %v7948, %v8398
        %v8453 = vadd.f32 %v7951, %v8401
        %v8454 = vadd.f32 %v7956, %v8406
        %v8455 = vadd.f32 %v7959, %v8409
        %v8456 = vadd.f32 %v7964, %v8414
        %v8457 = vadd.f32 %v7967, %v8417
        %v8458 = vadd.f32 %v7972, %v8422
        %v8459 = vadd.f32 %v7975, %v8425
        %v8460 = vld [vmem:[%s670] sm:$0xf]
        %v8461 = vld [vmem:[%s670 + $0x4] sm:$0xf]
        %v8462 = vld [vmem:[%s670 + $0xc] sm:$0xf]
        %v8463 = vld [vmem:[%s670 + $0x10] sm:$0xf]
        %v8464 = vld [vmem:[%s670 + $0x18] sm:$0xf]
        %v8465 = vld [vmem:[%s670 + $0x1c] sm:$0xf]
        %v8466 = vld [vmem:[%s670 + $0x24] sm:$0xf]
        %v8467 = vld [vmem:[%s670 + $0x28] sm:$0xf]
        %v8468 = vld [vmem:[%s670 + $0x30] sm:$0xf]
        %v8469 = vld [vmem:[%s670 + $0x34] sm:$0xf]
        %v8470 = vld [vmem:[%s670 + $0x3c] sm:$0xf]
        %v8471 = vld [vmem:[%s670 + $0x40] sm:$0xf]
        %v8472 = vld [vmem:[%s670 + $0x48] sm:$0xf]
        %v8473 = vld [vmem:[%s670 + $0x4c] sm:$0xf]
        %v8474 = vld [vmem:[%s670 + $0x54] sm:$0xf]
        %v8475 = vld [vmem:[%s670 + $0x58] sm:$0xf]
        %v8476 = vld [vmem:[%s670 + $0x60] sm:$0xf]
        %v8477 = vld [vmem:[%s670 + $0x64] sm:$0xf]
        %v8478 = vld [vmem:[%s670 + $0x6c] sm:$0xf]
        %v8479 = vld [vmem:[%s670 + $0x70] sm:$0xf]
        %v8480 = vld [vmem:[%s670 + $0x78] sm:$0xf]
        %v8481 = vld [vmem:[%s670 + $0x7c] sm:$0xf]
        %v8482 = vld [vmem:[%s670 + $0x84] sm:$0xf]
        %v8483 = vld [vmem:[%s670 + $0x88] sm:$0xf]
        %v8484 = vld [vmem:[%s670 + $0x90] sm:$0xf]
        %v8485 = vld [vmem:[%s670 + $0x94] sm:$0xf]
        %v8486 = vld [vmem:[%s670 + $0x9c] sm:$0xf]
        %v8487 = vld [vmem:[%s670 + $0xa0] sm:$0xf]
        %v8488 = vld [vmem:[%s670 + $0xa8] sm:$0xf]
        %v8489 = vld [vmem:[%s670 + $0xac] sm:$0xf]
        %v8490 = vld [vmem:[%s670 + $0xb4] sm:$0xf]
        %v8491 = vld [vmem:[%s670 + $0xb8] sm:$0xf]
        %s8492 = scalar_lea.vmem [#allocation8], 192
        %v8493 = vld [vmem:[%s8492] sm:$0xf]
        %v8494 = vld [vmem:[%s8492 + $0x4] sm:$0xf]
        %v8495 = vld [vmem:[%s8492 + $0x8] sm:$0xf]
        %v8496 = vld [vmem:[%s8492 + $0xc] sm:$0xf]
        %v8497 = vld [vmem:[%s8492 + $0x10] sm:$0xf]
        %v8498 = vld [vmem:[%s8492 + $0x14] sm:$0xf]
        %v8499 = vld [vmem:[%s8492 + $0x18] sm:$0xf]
        %v8500 = vld [vmem:[%s8492 + $0x1c] sm:$0xf]
        %v8501 = vld [vmem:[%s8492 + $0x20] sm:$0xf]
        %v8502 = vld [vmem:[%s8492 + $0x24] sm:$0xf]
        %v8503 = vld [vmem:[%s8492 + $0x28] sm:$0xf]
        %v8504 = vld [vmem:[%s8492 + $0x2c] sm:$0xf]
        %v8505 = vld [vmem:[%s8492 + $0x30] sm:$0xf]
        %v8506 = vld [vmem:[%s8492 + $0x34] sm:$0xf]
        %v8507 = vld [vmem:[%s8492 + $0x38] sm:$0xf]
        %v8508 = vld [vmem:[%s8492 + $0x3c] sm:$0xf]
        %v8541 = vunpack.c.l.b16 %v8460
        %v8542 = vunpack.c.l.b16 %v8461
        %v8543 = vunpack.c.l.b16 %v8462
        %v8544 = vunpack.c.l.b16 %v8463
        %v8545 = vunpack.c.l.b16 %v8464
        %v8546 = vunpack.c.l.b16 %v8465
        %v8547 = vunpack.c.l.b16 %v8466
        %v8548 = vunpack.c.l.b16 %v8467
        %v8549 = vunpack.c.l.b16 %v8468
        %v8550 = vunpack.c.l.b16 %v8469
        %v8551 = vunpack.c.l.b16 %v8470
        %v8552 = vunpack.c.l.b16 %v8471
        %v8553 = vunpack.c.l.b16 %v8472
        %v8554 = vunpack.c.l.b16 %v8473
        %v8555 = vunpack.c.l.b16 %v8474
        %v8556 = vunpack.c.l.b16 %v8475
        %v8557 = vunpack.c.l.b16 %v8476
        %v8558 = vunpack.c.l.b16 %v8477
        %v8559 = vunpack.c.l.b16 %v8478
        %v8560 = vunpack.c.l.b16 %v8479
        %v8561 = vunpack.c.l.b16 %v8480
        %v8562 = vunpack.c.l.b16 %v8481
        %v8563 = vunpack.c.l.b16 %v8482
        %v8564 = vunpack.c.l.b16 %v8483
        %v8565 = vunpack.c.l.b16 %v8484
        %v8566 = vunpack.c.l.b16 %v8485
        %v8567 = vunpack.c.l.b16 %v8486
        %v8568 = vunpack.c.l.b16 %v8487
        %v8569 = vunpack.c.l.b16 %v8488
        %v8570 = vunpack.c.l.b16 %v8489
        %v8571 = vunpack.c.l.b16 %v8490
        %v8572 = vunpack.c.l.b16 %v8491
        %v8573 = vpack.c.b16 %v8542, %v8541
        %v8574 = vpack.c.b16 %v8544, %v8543
        %v8575 = vpack.c.b16 %v8546, %v8545
        %v8576 = vpack.c.b16 %v8548, %v8547
        %v8577 = vpack.c.b16 %v8550, %v8549
        %v8578 = vpack.c.b16 %v8552, %v8551
        %v8579 = vpack.c.b16 %v8554, %v8553
        %v8580 = vpack.c.b16 %v8556, %v8555
        %v8581 = vpack.c.b16 %v8558, %v8557
        %v8582 = vpack.c.b16 %v8560, %v8559
        %v8583 = vpack.c.b16 %v8562, %v8561
        %v8584 = vpack.c.b16 %v8564, %v8563
        %v8585 = vpack.c.b16 %v8566, %v8565
        %v8586 = vpack.c.b16 %v8568, %v8567
        %v8587 = vpack.c.b16 %v8570, %v8569
        %v8588 = vpack.c.b16 %v8572, %v8571
        %v8621 = vunpack.c.l.b16 %v8493
        %v8622 = vunpack.c.l.b16 %v8494
        %v8623 = vunpack.c.l.b16 %v8495
        %v8624 = vunpack.c.l.b16 %v8496
        %v8625 = vunpack.c.l.b16 %v8497
        %v8626 = vunpack.c.l.b16 %v8498
        %v8627 = vunpack.c.l.b16 %v8499
        %v8628 = vunpack.c.l.b16 %v8500
        %v8629 = vunpack.c.l.b16 %v8501
        %v8630 = vunpack.c.l.b16 %v8502
        %v8631 = vunpack.c.l.b16 %v8503
        %v8632 = vunpack.c.l.b16 %v8504
        %v8633 = vunpack.c.l.b16 %v8505
        %v8634 = vunpack.c.l.b16 %v8506
        %v8635 = vunpack.c.l.b16 %v8507
        %v8636 = vunpack.c.l.b16 %v8508
        %v8637 = vpack.c.b16 %v8622, %v8621
        %v8638 = vpack.c.b16 %v8624, %v8623
        %v8639 = vpack.c.b16 %v8626, %v8625
        %v8640 = vpack.c.b16 %v8628, %v8627
        %v8641 = vpack.c.b16 %v8630, %v8629
        %v8642 = vpack.c.b16 %v8632, %v8631
        %v8643 = vpack.c.b16 %v8634, %v8633
        %v8644 = vpack.c.b16 %v8636, %v8635
        %8653 = vmatprep.subr.bf16.mxu0 0
        %8654 = vmatpush1.bf16.msra.mxu0 %v8637
        %8655 = vmatprep.subr.bf16.mxu0 0
        %8656 = vmatpush1.bf16.msra.mxu0 %v8638
        %8657 = vmatprep.subr.bf16.mxu0 0
        %8658 = vmatpush1.bf16.msra.mxu0 %v8639
        %8659 = vmatprep.subr.bf16.mxu0 0
        %8660 = vmatpush1.bf16.msra.mxu0 %v8640
        %8661 = vmatprep.subr.bf16.mxu0 0
        %8662 = vmatpush1.bf16.msra.mxu0 %v8641
        %8663 = vmatprep.subr.bf16.mxu0 0
        %8664 = vmatpush1.bf16.msra.mxu0 %v8642
        %8665 = vmatprep.subr.bf16.mxu0 0
        %8666 = vmatpush1.bf16.msra.mxu0 %v8643
        %8667 = vmatprep.subr.bf16.mxu0 0
        %8668 = vmatpush1.bf16.msra.mxu0 %v8644
        %8669 = vmatprep.subr.bf16.mxu0 0
        %8670 = vmatpush1.bf16.msra.mxu0 0
        %8671 = vmatprep.subr.bf16.mxu0 0
        %8672 = vmatpush1.bf16.msra.mxu0 0
        %8673 = vmatprep.subr.bf16.mxu0 0
        %8674 = vmatpush1.bf16.msra.mxu0 0
        %8675 = vmatprep.subr.bf16.mxu0 0
        %8676 = vmatpush1.bf16.msra.mxu0 0
        %8677 = vmatprep.subr.bf16.mxu0 0
        %8678 = vmatpush1.bf16.msra.mxu0 0
        %8679 = vmatprep.subr.bf16.mxu0 0
        %8680 = vmatpush1.bf16.msra.mxu0 0
        %8681 = vmatprep.subr.bf16.mxu0 0
        %8682 = vmatpush1.bf16.msra.mxu0 0
        %8683 = vmatprep.subr.bf16.mxu0 0
        %8684 = vmatpush1.bf16.msra.mxu0 0
        %8685 = vmatprep.mubr.bf16.mxu0 0
        %8686 = vmatmul.mubr.bf16.gmra.mrb[0].mxu0 %v8573
        %v8687 = vpop.f32.mrb[0].mxu0
        %v8688 = vadd.f32 0.0, %v8687
        %v8689 = vpop.f32.mrb[0].mxu0
        %v8690 = vpop.f32.mrb[0].mxu0
        %v8691 = vadd.f32 0.0, %v8690
        %v8692 = vpop.f32.mrb[0].mxu0
        %8693 = vmatprep.mubr.bf16.mxu0 0
        %8694 = vmatmul.mubr.bf16.gmra.mrb[0].mxu0 %v8574
        %v8695 = vpop.f32.mrb[0].mxu0
        %v8696 = vadd.f32 0.0, %v8695
        %v8697 = vpop.f32.mrb[0].mxu0
        %v8698 = vpop.f32.mrb[0].mxu0
        %v8699 = vadd.f32 0.0, %v8698
        %v8700 = vpop.f32.mrb[0].mxu0
        %8701 = vmatprep.mubr.bf16.mxu0 0
        %8702 = vmatmul.mubr.bf16.gmra.mrb[0].mxu0 %v8575
        %v8703 = vpop.f32.mrb[0].mxu0
        %v8704 = vadd.f32 0.0, %v8703
        %v8705 = vpop.f32.mrb[0].mxu0
        %v8706 = vpop.f32.mrb[0].mxu0
        %v8707 = vadd.f32 0.0, %v8706
        %v8708 = vpop.f32.mrb[0].mxu0
        %8709 = vmatprep.mubr.bf16.mxu0 0
        %8710 = vmatmul.mubr.bf16.gmra.mrb[0].mxu0 %v8576
        %v8711 = vpop.f32.mrb[0].mxu0
        %v8712 = vadd.f32 0.0, %v8711
        %v8713 = vpop.f32.mrb[0].mxu0
        %v8714 = vpop.f32.mrb[0].mxu0
        %v8715 = vadd.f32 0.0, %v8714
        %v8716 = vpop.f32.mrb[0].mxu0
        %8717 = vmatprep.mubr.bf16.mxu0 0
        %8718 = vmatmul.mubr.bf16.gmra.mrb[0].mxu0 %v8577
        %v8719 = vpop.f32.mrb[0].mxu0
        %v8720 = vadd.f32 0.0, %v8719
        %v8721 = vpop.f32.mrb[0].mxu0
        %v8722 = vpop.f32.mrb[0].mxu0
        %v8723 = vadd.f32 0.0, %v8722
        %v8724 = vpop.f32.mrb[0].mxu0
        %8725 = vmatprep.mubr.bf16.mxu0 0
        %8726 = vmatmul.mubr.bf16.gmra.mrb[0].mxu0 %v8578
        %v8727 = vpop.f32.mrb[0].mxu0
        %v8728 = vadd.f32 0.0, %v8727
        %v8729 = vpop.f32.mrb[0].mxu0
        %v8730 = vpop.f32.mrb[0].mxu0
        %v8731 = vadd.f32 0.0, %v8730
        %v8732 = vpop.f32.mrb[0].mxu0
        %8733 = vmatprep.mubr.bf16.mxu0 0
        %8734 = vmatmul.mubr.bf16.gmra.mrb[0].mxu0 %v8579
        %v8735 = vpop.f32.mrb[0].mxu0
        %v8736 = vadd.f32 0.0, %v8735
        %v8737 = vpop.f32.mrb[0].mxu0
        %v8738 = vpop.f32.mrb[0].mxu0
        %v8739 = vadd.f32 0.0, %v8738
        %v8740 = vpop.f32.mrb[0].mxu0
        %8741 = vmatprep.mubr.bf16.mxu0 0
        %8742 = vmatmul.mubr.bf16.gmra.mrb[0].mxu0 %v8580
        %v8743 = vpop.f32.mrb[0].mxu0
        %v8744 = vadd.f32 0.0, %v8743
        %v8745 = vpop.f32.mrb[0].mxu0
        %v8746 = vpop.f32.mrb[0].mxu0
        %v8747 = vadd.f32 0.0, %v8746
        %v8748 = vpop.f32.mrb[0].mxu0
        %8749 = vmatprep.mubr.bf16.mxu0 0
        %8750 = vmatmul.mubr.bf16.gmra.mrb[0].mxu0 %v8581
        %v8751 = vpop.f32.mrb[0].mxu0
        %v8752 = vadd.f32 0.0, %v8751
        %v8753 = vpop.f32.mrb[0].mxu0
        %v8754 = vpop.f32.mrb[0].mxu0
        %v8755 = vadd.f32 0.0, %v8754
        %v8756 = vpop.f32.mrb[0].mxu0
        %8757 = vmatprep.mubr.bf16.mxu0 0
        %8758 = vmatmul.mubr.bf16.gmra.mrb[0].mxu0 %v8582
        %v8759 = vpop.f32.mrb[0].mxu0
        %v8760 = vadd.f32 0.0, %v8759
        %v8761 = vpop.f32.mrb[0].mxu0
        %v8762 = vpop.f32.mrb[0].mxu0
        %v8763 = vadd.f32 0.0, %v8762
        %v8764 = vpop.f32.mrb[0].mxu0
        %8765 = vmatprep.mubr.bf16.mxu0 0
        %8766 = vmatmul.mubr.bf16.gmra.mrb[0].mxu0 %v8583
        %v8767 = vpop.f32.mrb[0].mxu0
        %v8768 = vadd.f32 0.0, %v8767
        %v8769 = vpop.f32.mrb[0].mxu0
        %v8770 = vpop.f32.mrb[0].mxu0
        %v8771 = vadd.f32 0.0, %v8770
        %v8772 = vpop.f32.mrb[0].mxu0
        %8773 = vmatprep.mubr.bf16.mxu0 0
        %8774 = vmatmul.mubr.bf16.gmra.mrb[0].mxu0 %v8584
        %v8775 = vpop.f32.mrb[0].mxu0
        %v8776 = vadd.f32 0.0, %v8775
        %v8777 = vpop.f32.mrb[0].mxu0
        %v8778 = vpop.f32.mrb[0].mxu0
        %v8779 = vadd.f32 0.0, %v8778
        %v8780 = vpop.f32.mrb[0].mxu0
        %8781 = vmatprep.mubr.bf16.mxu0 0
        %8782 = vmatmul.mubr.bf16.gmra.mrb[0].mxu0 %v8585
        %v8783 = vpop.f32.mrb[0].mxu0
        %v8784 = vadd.f32 0.0, %v8783
        %v8785 = vpop.f32.mrb[0].mxu0
        %v8786 = vpop.f32.mrb[0].mxu0
        %v8787 = vadd.f32 0.0, %v8786
        %v8788 = vpop.f32.mrb[0].mxu0
        %8789 = vmatprep.mubr.bf16.mxu0 0
        %8790 = vmatmul.mubr.bf16.gmra.mrb[0].mxu0 %v8586
        %v8791 = vpop.f32.mrb[0].mxu0
        %v8792 = vadd.f32 0.0, %v8791
        %v8793 = vpop.f32.mrb[0].mxu0
        %v8794 = vpop.f32.mrb[0].mxu0
        %v8795 = vadd.f32 0.0, %v8794
        %v8796 = vpop.f32.mrb[0].mxu0
        %8797 = vmatprep.mubr.bf16.mxu0 0
        %8798 = vmatmul.mubr.bf16.gmra.mrb[0].mxu0 %v8587
        %v8799 = vpop.f32.mrb[0].mxu0
        %v8800 = vadd.f32 0.0, %v8799
        %v8801 = vpop.f32.mrb[0].mxu0
        %v8802 = vpop.f32.mrb[0].mxu0
        %v8803 = vadd.f32 0.0, %v8802
        %v8804 = vpop.f32.mrb[0].mxu0
        %8805 = vmatprep.mubr.bf16.mxu0 0
        %8806 = vmatmul.mubr.bf16.gmra.mrb[0].mxu0 %v8588
        %v8807 = vpop.f32.mrb[0].mxu0
        %v8808 = vadd.f32 0.0, %v8807
        %v8809 = vpop.f32.mrb[0].mxu0
        %v8810 = vpop.f32.mrb[0].mxu0
        %v8811 = vadd.f32 0.0, %v8810
        %v8812 = vpop.f32.mrb[0].mxu0
        %8813 = vdwg.mxu0
        %v8814 = vadd.f32 %v8428, %v8688
        %v8815 = vadd.f32 %v8429, %v8691
        %v8816 = vadd.f32 %v8430, %v8696
        %v8817 = vadd.f32 %v8431, %v8699
        %v8818 = vadd.f32 %v8432, %v8704
        %v8819 = vadd.f32 %v8433, %v8707
        %v8820 = vadd.f32 %v8434, %v8712
        %v8821 = vadd.f32 %v8435, %v8715
        %v8822 = vadd.f32 %v8436, %v8720
        %v8823 = vadd.f32 %v8437, %v8723
        %v8824 = vadd.f32 %v8438, %v8728
        %v8825 = vadd.f32 %v8439, %v8731
        %v8826 = vadd.f32 %v8440, %v8736
        %v8827 = vadd.f32 %v8441, %v8739
        %v8828 = vadd.f32 %v8442, %v8744
        %v8829 = vadd.f32 %v8443, %v8747
        %v8830 = vadd.f32 %v8444, %v8752
        %v8831 = vadd.f32 %v8445, %v8755
        %v8832 = vadd.f32 %v8446, %v8760
        %v8833 = vadd.f32 %v8447, %v8763
        %v8834 = vadd.f32 %v8448, %v8768
        %v8835 = vadd.f32 %v8449, %v8771
        %v8836 = vadd.f32 %v8450, %v8776
        %v8837 = vadd.f32 %v8451, %v8779
        %v8838 = vadd.f32 %v8452, %v8784
        %v8839 = vadd.f32 %v8453, %v8787
        %v8840 = vadd.f32 %v8454, %v8792
        %v8841 = vadd.f32 %v8455, %v8795
        %v8842 = vadd.f32 %v8456, %v8800
        %v8843 = vadd.f32 %v8457, %v8803
        %v8844 = vadd.f32 %v8458, %v8808
        %v8845 = vadd.f32 %v8459, %v8811
        %v8846 = vld [vmem:[%s670] sm:$0xf]
        %v8847 = vld [vmem:[%s670 + $0x4] sm:$0xf]
        %v8848 = vld [vmem:[%s670 + $0x8] sm:$0x1]
        %v8849 = vld [vmem:[%s670 + $0xc] sm:$0xf]
        %v8850 = vld [vmem:[%s670 + $0x10] sm:$0xf]
        %v8851 = vld [vmem:[%s670 + $0x14] sm:$0x1]
        %v8852 = vld [vmem:[%s670 + $0x18] sm:$0xf]
        %v8853 = vld [vmem:[%s670 + $0x1c] sm:$0xf]
        %v8854 = vld [vmem:[%s670 + $0x20] sm:$0x1]
        %v8855 = vld [vmem:[%s670 + $0x24] sm:$0xf]
        %v8856 = vld [vmem:[%s670 + $0x28] sm:$0xf]
        %v8857 = vld [vmem:[%s670 + $0x2c] sm:$0x1]
        %v8858 = vld [vmem:[%s670 + $0x30] sm:$0xf]
        %v8859 = vld [vmem:[%s670 + $0x34] sm:$0xf]
        %v8860 = vld [vmem:[%s670 + $0x38] sm:$0x1]
        %v8861 = vld [vmem:[%s670 + $0x3c] sm:$0xf]
        %v8862 = vld [vmem:[%s670 + $0x40] sm:$0xf]
        %v8863 = vld [vmem:[%s670 + $0x44] sm:$0x1]
        %v8864 = vld [vmem:[%s670 + $0x48] sm:$0xf]
        %v8865 = vld [vmem:[%s670 + $0x4c] sm:$0xf]
        %v8866 = vld [vmem:[%s670 + $0x50] sm:$0x1]
        %v8867 = vld [vmem:[%s670 + $0x54] sm:$0xf]
        %v8868 = vld [vmem:[%s670 + $0x58] sm:$0xf]
        %v8869 = vld [vmem:[%s670 + $0x5c] sm:$0x1]
        %v8870 = vld [vmem:[%s670 + $0x60] sm:$0xf]
        %v8871 = vld [vmem:[%s670 + $0x64] sm:$0xf]
        %v8872 = vld [vmem:[%s670 + $0x68] sm:$0x1]
        %v8873 = vld [vmem:[%s670 + $0x6c] sm:$0xf]
        %v8874 = vld [vmem:[%s670 + $0x70] sm:$0xf]
        %v8875 = vld [vmem:[%s670 + $0x74] sm:$0x1]
        %v8876 = vld [vmem:[%s670 + $0x78] sm:$0xf]
        %v8877 = vld [vmem:[%s670 + $0x7c] sm:$0xf]
        %v8878 = vld [vmem:[%s670 + $0x80] sm:$0x1]
        %v8879 = vld [vmem:[%s670 + $0x84] sm:$0xf]
        %v8880 = vld [vmem:[%s670 + $0x88] sm:$0xf]
        %v8881 = vld [vmem:[%s670 + $0x8c] sm:$0x1]
        %v8882 = vld [vmem:[%s670 + $0x90] sm:$0xf]
        %v8883 = vld [vmem:[%s670 + $0x94] sm:$0xf]
        %v8884 = vld [vmem:[%s670 + $0x98] sm:$0x1]
        %v8885 = vld [vmem:[%s670 + $0x9c] sm:$0xf]
        %v8886 = vld [vmem:[%s670 + $0xa0] sm:$0xf]
        %v8887 = vld [vmem:[%s670 + $0xa4] sm:$0x1]
        %v8888 = vld [vmem:[%s670 + $0xa8] sm:$0xf]
        %v8889 = vld [vmem:[%s670 + $0xac] sm:$0xf]
        %v8890 = vld [vmem:[%s670 + $0xb0] sm:$0x1]
        %v8891 = vld [vmem:[%s670 + $0xb4] sm:$0xf]
        %v8892 = vld [vmem:[%s670 + $0xb8] sm:$0xf]
        %v8893 = vld [vmem:[%s670 + $0xbc] sm:$0x1]
        %v8895 = vshrl.u32 %v8846, 16
        %v8897 = vrot.slane %v8895, 4
        %v8898 = vshll.u32 %v8846, 16
        %v8900 = vrot.slane %v8898, 5
        %v8901 = vor.u32 %v8897, %v8900
        %v8902 = vrot.slane %v8901, 4
        %v8904 = vshll.u32 %v8847, 16
        %v8906 = vrot.slane %v8904, 5
        %v8907 = vsel %vm1158, %v8902, %v8906
        %v8908 = vshrl.u32 %v8847, 16
        %v8910 = vrot.slane %v8908, 4
        %v8911 = vor.u32 %v8910, %v8906
        %v8912 = vrot.slane %v8911, 4
        %v8914 = vshll.u32 %v8848, 16
        %v8916 = vrot.slane %v8914, 5
        %v8917 = vsel %vm1158, %v8912, %v8916
        %v8919 = vshrl.u32 %v8849, 16
        %v8921 = vrot.slane %v8919, 4
        %v8922 = vshll.u32 %v8849, 16
        %v8924 = vrot.slane %v8922, 5
        %v8925 = vor.u32 %v8921, %v8924
        %v8926 = vrot.slane %v8925, 4
        %v8928 = vshll.u32 %v8850, 16
        %v8930 = vrot.slane %v8928, 5
        %v8931 = vsel %vm1158, %v8926, %v8930
        %v8932 = vshrl.u32 %v8850, 16
        %v8934 = vrot.slane %v8932, 4
        %v8935 = vor.u32 %v8934, %v8930
        %v8936 = vrot.slane %v8935, 4
        %v8938 = vshll.u32 %v8851, 16
        %v8940 = vrot.slane %v8938, 5
        %v8941 = vsel %vm1158, %v8936, %v8940
        %v8943 = vshrl.u32 %v8852, 16
        %v8945 = vrot.slane %v8943, 4
        %v8946 = vshll.u32 %v8852, 16
        %v8948 = vrot.slane %v8946, 5
        %v8949 = vor.u32 %v8945, %v8948
        %v8950 = vrot.slane %v8949, 4
        %v8952 = vshll.u32 %v8853, 16
        %v8954 = vrot.slane %v8952, 5
        %v8955 = vsel %vm1158, %v8950, %v8954
        %v8956 = vshrl.u32 %v8853, 16
        %v8958 = vrot.slane %v8956, 4
        %v8959 = vor.u32 %v8958, %v8954
        %v8960 = vrot.slane %v8959, 4
        %v8962 = vshll.u32 %v8854, 16
        %v8964 = vrot.slane %v8962, 5
        %v8965 = vsel %vm1158, %v8960, %v8964
        %v8967 = vshrl.u32 %v8855, 16
        %v8969 = vrot.slane %v8967, 4
        %v8970 = vshll.u32 %v8855, 16
        %v8972 = vrot.slane %v8970, 5
        %v8973 = vor.u32 %v8969, %v8972
        %v8974 = vrot.slane %v8973, 4
        %v8976 = vshll.u32 %v8856, 16
        %v8978 = vrot.slane %v8976, 5
        %v8979 = vsel %vm1158, %v8974, %v8978
        %v8980 = vshrl.u32 %v8856, 16
        %v8982 = vrot.slane %v8980, 4
        %v8983 = vor.u32 %v8982, %v8978
        %v8984 = vrot.slane %v8983, 4
        %v8986 = vshll.u32 %v8857, 16
        %v8988 = vrot.slane %v8986, 5
        %v8989 = vsel %vm1158, %v8984, %v8988
        %v8991 = vshrl.u32 %v8858, 16
        %v8993 = vrot.slane %v8991, 4
        %v8994 = vshll.u32 %v8858, 16
        %v8996 = vrot.slane %v8994, 5
        %v8997 = vor.u32 %v8993, %v8996
        %v8998 = vrot.slane %v8997, 4
        %v9000 = vshll.u32 %v8859, 16
        %v9002 = vrot.slane %v9000, 5
        %v9003 = vsel %vm1158, %v8998, %v9002
        %v9004 = vshrl.u32 %v8859, 16
        %v9006 = vrot.slane %v9004, 4
        %v9007 = vor.u32 %v9006, %v9002
        %v9008 = vrot.slane %v9007, 4
        %v9010 = vshll.u32 %v8860, 16
        %v9012 = vrot.slane %v9010, 5
        %v9013 = vsel %vm1158, %v9008, %v9012
        %v9015 = vshrl.u32 %v8861, 16
        %v9017 = vrot.slane %v9015, 4
        %v9018 = vshll.u32 %v8861, 16
        %v9020 = vrot.slane %v9018, 5
        %v9021 = vor.u32 %v9017, %v9020
        %v9022 = vrot.slane %v9021, 4
        %v9024 = vshll.u32 %v8862, 16
        %v9026 = vrot.slane %v9024, 5
        %v9027 = vsel %vm1158, %v9022, %v9026
        %v9028 = vshrl.u32 %v8862, 16
        %v9030 = vrot.slane %v9028, 4
        %v9031 = vor.u32 %v9030, %v9026
        %v9032 = vrot.slane %v9031, 4
        %v9034 = vshll.u32 %v8863, 16
        %v9036 = vrot.slane %v9034, 5
        %v9037 = vsel %vm1158, %v9032, %v9036
        %v9039 = vshrl.u32 %v8864, 16
        %v9041 = vrot.slane %v9039, 4
        %v9042 = vshll.u32 %v8864, 16
        %v9044 = vrot.slane %v9042, 5
        %v9045 = vor.u32 %v9041, %v9044
        %v9046 = vrot.slane %v9045, 4
        %v9048 = vshll.u32 %v8865, 16
        %v9050 = vrot.slane %v9048, 5
        %v9051 = vsel %vm1158, %v9046, %v9050
        %v9052 = vshrl.u32 %v8865, 16
        %v9054 = vrot.slane %v9052, 4
        %v9055 = vor.u32 %v9054, %v9050
        %v9056 = vrot.slane %v9055, 4
        %v9058 = vshll.u32 %v8866, 16
        %v9060 = vrot.slane %v9058, 5
        %v9061 = vsel %vm1158, %v9056, %v9060
        %v9063 = vshrl.u32 %v8867, 16
        %v9065 = vrot.slane %v9063, 4
        %v9066 = vshll.u32 %v8867, 16
        %v9068 = vrot.slane %v9066, 5
        %v9069 = vor.u32 %v9065, %v9068
        %v9070 = vrot.slane %v9069, 4
        %v9072 = vshll.u32 %v8868, 16
        %v9074 = vrot.slane %v9072, 5
        %v9075 = vsel %vm1158, %v9070, %v9074
        %v9076 = vshrl.u32 %v8868, 16
        %v9078 = vrot.slane %v9076, 4
        %v9079 = vor.u32 %v9078, %v9074
        %v9080 = vrot.slane %v9079, 4
        %v9082 = vshll.u32 %v8869, 16
        %v9084 = vrot.slane %v9082, 5
        %v9085 = vsel %vm1158, %v9080, %v9084
        %v9087 = vshrl.u32 %v8870, 16
        %v9089 = vrot.slane %v9087, 4
        %v9090 = vshll.u32 %v8870, 16
        %v9092 = vrot.slane %v9090, 5
        %v9093 = vor.u32 %v9089, %v9092
        %v9094 = vrot.slane %v9093, 4
        %v9096 = vshll.u32 %v8871, 16
        %v9098 = vrot.slane %v9096, 5
        %v9099 = vsel %vm1158, %v9094, %v9098
        %v9100 = vshrl.u32 %v8871, 16
        %v9102 = vrot.slane %v9100, 4
        %v9103 = vor.u32 %v9102, %v9098
        %v9104 = vrot.slane %v9103, 4
        %v9106 = vshll.u32 %v8872, 16
        %v9108 = vrot.slane %v9106, 5
        %v9109 = vsel %vm1158, %v9104, %v9108
        %v9111 = vshrl.u32 %v8873, 16
        %v9113 = vrot.slane %v9111, 4
        %v9114 = vshll.u32 %v8873, 16
        %v9116 = vrot.slane %v9114, 5
        %v9117 = vor.u32 %v9113, %v9116
        %v9118 = vrot.slane %v9117, 4
        %v9120 = vshll.u32 %v8874, 16
        %v9122 = vrot.slane %v9120, 5
        %v9123 = vsel %vm1158, %v9118, %v9122
        %v9124 = vshrl.u32 %v8874, 16
        %v9126 = vrot.slane %v9124, 4
        %v9127 = vor.u32 %v9126, %v9122
        %v9128 = vrot.slane %v9127, 4
        %v9130 = vshll.u32 %v8875, 16
        %v9132 = vrot.slane %v9130, 5
        %v9133 = vsel %vm1158, %v9128, %v9132
        %v9135 = vshrl.u32 %v8876, 16
        %v9137 = vrot.slane %v9135, 4
        %v9138 = vshll.u32 %v8876, 16
        %v9140 = vrot.slane %v9138, 5
        %v9141 = vor.u32 %v9137, %v9140
        %v9142 = vrot.slane %v9141, 4
        %v9144 = vshll.u32 %v8877, 16
        %v9146 = vrot.slane %v9144, 5
        %v9147 = vsel %vm1158, %v9142, %v9146
        %v9148 = vshrl.u32 %v8877, 16
        %v9150 = vrot.slane %v9148, 4
        %v9151 = vor.u32 %v9150, %v9146
        %v9152 = vrot.slane %v9151, 4
        %v9154 = vshll.u32 %v8878, 16
        %v9156 = vrot.slane %v9154, 5
        %v9157 = vsel %vm1158, %v9152, %v9156
        %v9159 = vshrl.u32 %v8879, 16
        %v9161 = vrot.slane %v9159, 4
        %v9162 = vshll.u32 %v8879, 16
        %v9164 = vrot.slane %v9162, 5
        %v9165 = vor.u32 %v9161, %v9164
        %v9166 = vrot.slane %v9165, 4
        %v9168 = vshll.u32 %v8880, 16
        %v9170 = vrot.slane %v9168, 5
        %v9171 = vsel %vm1158, %v9166, %v9170
        %v9172 = vshrl.u32 %v8880, 16
        %v9174 = vrot.slane %v9172, 4
        %v9175 = vor.u32 %v9174, %v9170
        %v9176 = vrot.slane %v9175, 4
        %v9178 = vshll.u32 %v8881, 16
        %v9180 = vrot.slane %v9178, 5
        %v9181 = vsel %vm1158, %v9176, %v9180
        %v9183 = vshrl.u32 %v8882, 16
        %v9185 = vrot.slane %v9183, 4
        %v9186 = vshll.u32 %v8882, 16
        %v9188 = vrot.slane %v9186, 5
        %v9189 = vor.u32 %v9185, %v9188
        %v9190 = vrot.slane %v9189, 4
        %v9192 = vshll.u32 %v8883, 16
        %v9194 = vrot.slane %v9192, 5
        %v9195 = vsel %vm1158, %v9190, %v9194
        %v9196 = vshrl.u32 %v8883, 16
        %v9198 = vrot.slane %v9196, 4
        %v9199 = vor.u32 %v9198, %v9194
        %v9200 = vrot.slane %v9199, 4
        %v9202 = vshll.u32 %v8884, 16
        %v9204 = vrot.slane %v9202, 5
        %v9205 = vsel %vm1158, %v9200, %v9204
        %v9207 = vshrl.u32 %v8885, 16
        %v9209 = vrot.slane %v9207, 4
        %v9210 = vshll.u32 %v8885, 16
        %v9212 = vrot.slane %v9210, 5
        %v9213 = vor.u32 %v9209, %v9212
        %v9214 = vrot.slane %v9213, 4
        %v9216 = vshll.u32 %v8886, 16
        %v9218 = vrot.slane %v9216, 5
        %v9219 = vsel %vm1158, %v9214, %v9218
        %v9220 = vshrl.u32 %v8886, 16
        %v9222 = vrot.slane %v9220, 4
        %v9223 = vor.u32 %v9222, %v9218
        %v9224 = vrot.slane %v9223, 4
        %v9226 = vshll.u32 %v8887, 16
        %v9228 = vrot.slane %v9226, 5
        %v9229 = vsel %vm1158, %v9224, %v9228
        %v9231 = vshrl.u32 %v8888, 16
        %v9233 = vrot.slane %v9231, 4
        %v9234 = vshll.u32 %v8888, 16
        %v9236 = vrot.slane %v9234, 5
        %v9237 = vor.u32 %v9233, %v9236
        %v9238 = vrot.slane %v9237, 4
        %v9240 = vshll.u32 %v8889, 16
        %v9242 = vrot.slane %v9240, 5
        %v9243 = vsel %vm1158, %v9238, %v9242
        %v9244 = vshrl.u32 %v8889, 16
        %v9246 = vrot.slane %v9244, 4
        %v9247 = vor.u32 %v9246, %v9242
        %v9248 = vrot.slane %v9247, 4
        %v9250 = vshll.u32 %v8890, 16
        %v9252 = vrot.slane %v9250, 5
        %v9253 = vsel %vm1158, %v9248, %v9252
        %v9255 = vshrl.u32 %v8891, 16
        %v9257 = vrot.slane %v9255, 4
        %v9258 = vshll.u32 %v8891, 16
        %v9260 = vrot.slane %v9258, 5
        %v9261 = vor.u32 %v9257, %v9260
        %v9262 = vrot.slane %v9261, 4
        %v9264 = vshll.u32 %v8892, 16
        %v9266 = vrot.slane %v9264, 5
        %v9267 = vsel %vm1158, %v9262, %v9266
        %v9268 = vshrl.u32 %v8892, 16
        %v9270 = vrot.slane %v9268, 4
        %v9271 = vor.u32 %v9270, %v9266
        %v9272 = vrot.slane %v9271, 4
        %v9274 = vshll.u32 %v8893, 16
        %v9276 = vrot.slane %v9274, 5
        %v9277 = vsel %vm1158, %v9272, %v9276
        %s9278 = scalar_lea.vmem [#allocation8], 256
        %v9279 = vld [vmem:[%s9278] sm:$0xf]
        %v9280 = vld [vmem:[%s9278 + $0x4] sm:$0xf]
        %v9281 = vld [vmem:[%s9278 + $0x8] sm:$0xf]
        %v9282 = vld [vmem:[%s9278 + $0xc] sm:$0xf]
        %v9283 = vld [vmem:[%s9278 + $0x10] sm:$0xf]
        %v9284 = vld [vmem:[%s9278 + $0x14] sm:$0xf]
        %v9285 = vld [vmem:[%s9278 + $0x18] sm:$0xf]
        %v9286 = vld [vmem:[%s9278 + $0x1c] sm:$0xf]
        %v9287 = vld [vmem:[%s9278 + $0x20] sm:$0xf]
        %v9288 = vld [vmem:[%s9278 + $0x24] sm:$0xf]
        %v9289 = vld [vmem:[%s9278 + $0x28] sm:$0xf]
        %v9290 = vld [vmem:[%s9278 + $0x2c] sm:$0xf]
        %v9291 = vld [vmem:[%s9278 + $0x30] sm:$0xf]
        %v9292 = vld [vmem:[%s9278 + $0x34] sm:$0xf]
        %v9293 = vld [vmem:[%s9278 + $0x38] sm:$0xf]
        %v9294 = vld [vmem:[%s9278 + $0x3c] sm:$0xf]
        %v9295 = vunpack.c.l.b16 %v8907
        %v9296 = vunpack.c.l.b16 %v8917
        %v9297 = vunpack.c.l.b16 %v8931
        %v9298 = vunpack.c.l.b16 %v8941
        %v9299 = vunpack.c.l.b16 %v8955
        %v9300 = vunpack.c.l.b16 %v8965
        %v9301 = vunpack.c.l.b16 %v8979
        %v9302 = vunpack.c.l.b16 %v8989
        %v9303 = vunpack.c.l.b16 %v9003
        %v9304 = vunpack.c.l.b16 %v9013
        %v9305 = vunpack.c.l.b16 %v9027
        %v9306 = vunpack.c.l.b16 %v9037
        %v9307 = vunpack.c.l.b16 %v9051
        %v9308 = vunpack.c.l.b16 %v9061
        %v9309 = vunpack.c.l.b16 %v9075
        %v9310 = vunpack.c.l.b16 %v9085
        %v9311 = vunpack.c.l.b16 %v9099
        %v9312 = vunpack.c.l.b16 %v9109
        %v9313 = vunpack.c.l.b16 %v9123
        %v9314 = vunpack.c.l.b16 %v9133
        %v9315 = vunpack.c.l.b16 %v9147
        %v9316 = vunpack.c.l.b16 %v9157
        %v9317 = vunpack.c.l.b16 %v9171
        %v9318 = vunpack.c.l.b16 %v9181
        %v9319 = vunpack.c.l.b16 %v9195
        %v9320 = vunpack.c.l.b16 %v9205
        %v9321 = vunpack.c.l.b16 %v9219
        %v9322 = vunpack.c.l.b16 %v9229
        %v9323 = vunpack.c.l.b16 %v9243
        %v9324 = vunpack.c.l.b16 %v9253
        %v9325 = vunpack.c.l.b16 %v9267
        %v9326 = vunpack.c.l.b16 %v9277
        %v9327 = vpack.c.b16 %v9296, %v9295
        %v9328 = vpack.c.b16 %v9298, %v9297
        %v9329 = vpack.c.b16 %v9300, %v9299
        %v9330 = vpack.c.b16 %v9302, %v9301
        %v9331 = vpack.c.b16 %v9304, %v9303
        %v9332 = vpack.c.b16 %v9306, %v9305
        %v9333 = vpack.c.b16 %v9308, %v9307
        %v9334 = vpack.c.b16 %v9310, %v9309
        %v9335 = vpack.c.b16 %v9312, %v9311
        %v9336 = vpack.c.b16 %v9314, %v9313
        %v9337 = vpack.c.b16 %v9316, %v9315
        %v9338 = vpack.c.b16 %v9318, %v9317
        %v9339 = vpack.c.b16 %v9320, %v9319
        %v9340 = vpack.c.b16 %v9322, %v9321
        %v9341 = vpack.c.b16 %v9324, %v9323
        %v9342 = vpack.c.b16 %v9326, %v9325
        %v9375 = vunpack.c.l.b16 %v9279
        %v9376 = vunpack.c.l.b16 %v9280
        %v9377 = vunpack.c.l.b16 %v9281
        %v9378 = vunpack.c.l.b16 %v9282
        %v9379 = vunpack.c.l.b16 %v9283
        %v9380 = vunpack.c.l.b16 %v9284
        %v9381 = vunpack.c.l.b16 %v9285
        %v9382 = vunpack.c.l.b16 %v9286
        %v9383 = vunpack.c.l.b16 %v9287
        %v9384 = vunpack.c.l.b16 %v9288
        %v9385 = vunpack.c.l.b16 %v9289
        %v9386 = vunpack.c.l.b16 %v9290
        %v9387 = vunpack.c.l.b16 %v9291
        %v9388 = vunpack.c.l.b16 %v9292
        %v9389 = vunpack.c.l.b16 %v9293
        %v9390 = vunpack.c.l.b16 %v9294
        %v9391 = vpack.c.b16 %v9376, %v9375
        %v9392 = vpack.c.b16 %v9378, %v9377
        %v9393 = vpack.c.b16 %v9380, %v9379
        %v9394 = vpack.c.b16 %v9382, %v9381
        %v9395 = vpack.c.b16 %v9384, %v9383
        %v9396 = vpack.c.b16 %v9386, %v9385
        %v9397 = vpack.c.b16 %v9388, %v9387
        %v9398 = vpack.c.b16 %v9390, %v9389
        %9407 = vmatprep.subr.bf16.mxu0 0
        %9408 = vmatpush1.bf16.msra.mxu0 %v9391
        %9409 = vmatprep.subr.bf16.mxu0 0
        %9410 = vmatpush1.bf16.msra.mxu0 %v9392
        %9411 = vmatprep.subr.bf16.mxu0 0
        %9412 = vmatpush1.bf16.msra.mxu0 %v9393
        %9413 = vmatprep.subr.bf16.mxu0 0
        %9414 = vmatpush1.bf16.msra.mxu0 %v9394
        %9415 = vmatprep.subr.bf16.mxu0 0
        %9416 = vmatpush1.bf16.msra.mxu0 %v9395
        %9417 = vmatprep.subr.bf16.mxu0 0
        %9418 = vmatpush1.bf16.msra.mxu0 %v9396
        %9419 = vmatprep.subr.bf16.mxu0 0
        %9420 = vmatpush1.bf16.msra.mxu0 %v9397
        %9421 = vmatprep.subr.bf16.mxu0 0
        %9422 = vmatpush1.bf16.msra.mxu0 %v9398
        %9423 = vmatprep.subr.bf16.mxu0 0
        %9424 = vmatpush1.bf16.msra.mxu0 0
        %9425 = vmatprep.subr.bf16.mxu0 0
        %9426 = vmatpush1.bf16.msra.mxu0 0
        %9427 = vmatprep.subr.bf16.mxu0 0
        %9428 = vmatpush1.bf16.msra.mxu0 0
        %9429 = vmatprep.subr.bf16.mxu0 0
        %9430 = vmatpush1.bf16.msra.mxu0 0
        %9431 = vmatprep.subr.bf16.mxu0 0
        %9432 = vmatpush1.bf16.msra.mxu0 0
        %9433 = vmatprep.subr.bf16.mxu0 0
        %9434 = vmatpush1.bf16.msra.mxu0 0
        %9435 = vmatprep.subr.bf16.mxu0 0
        %9436 = vmatpush1.bf16.msra.mxu0 0
        %9437 = vmatprep.subr.bf16.mxu0 0
        %9438 = vmatpush1.bf16.msra.mxu0 0
        %9439 = vmatprep.mubr.bf16.mxu0 0
        %9440 = vmatmul.mubr.bf16.gmra.mrb[0].mxu0 %v9327
        %v9441 = vpop.f32.mrb[0].mxu0
        %v9442 = vadd.f32 0.0, %v9441
        %v9443 = vpop.f32.mrb[0].mxu0
        %v9444 = vpop.f32.mrb[0].mxu0
        %v9445 = vadd.f32 0.0, %v9444
        %v9446 = vpop.f32.mrb[0].mxu0
        %9447 = vmatprep.mubr.bf16.mxu0 0
        %9448 = vmatmul.mubr.bf16.gmra.mrb[0].mxu0 %v9328
        %v9449 = vpop.f32.mrb[0].mxu0
        %v9450 = vadd.f32 0.0, %v9449
        %v9451 = vpop.f32.mrb[0].mxu0
        %v9452 = vpop.f32.mrb[0].mxu0
        %v9453 = vadd.f32 0.0, %v9452
        %v9454 = vpop.f32.mrb[0].mxu0
        %9455 = vmatprep.mubr.bf16.mxu0 0
        %9456 = vmatmul.mubr.bf16.gmra.mrb[0].mxu0 %v9329
        %v9457 = vpop.f32.mrb[0].mxu0
        %v9458 = vadd.f32 0.0, %v9457
        %v9459 = vpop.f32.mrb[0].mxu0
        %v9460 = vpop.f32.mrb[0].mxu0
        %v9461 = vadd.f32 0.0, %v9460
        %v9462 = vpop.f32.mrb[0].mxu0
        %9463 = vmatprep.mubr.bf16.mxu0 0
        %9464 = vmatmul.mubr.bf16.gmra.mrb[0].mxu0 %v9330
        %v9465 = vpop.f32.mrb[0].mxu0
        %v9466 = vadd.f32 0.0, %v9465
        %v9467 = vpop.f32.mrb[0].mxu0
        %v9468 = vpop.f32.mrb[0].mxu0
        %v9469 = vadd.f32 0.0, %v9468
        %v9470 = vpop.f32.mrb[0].mxu0
        %9471 = vmatprep.mubr.bf16.mxu0 0
        %9472 = vmatmul.mubr.bf16.gmra.mrb[0].mxu0 %v9331
        %v9473 = vpop.f32.mrb[0].mxu0
        %v9474 = vadd.f32 0.0, %v9473
        %v9475 = vpop.f32.mrb[0].mxu0
        %v9476 = vpop.f32.mrb[0].mxu0
        %v9477 = vadd.f32 0.0, %v9476
        %v9478 = vpop.f32.mrb[0].mxu0
        %9479 = vmatprep.mubr.bf16.mxu0 0
        %9480 = vmatmul.mubr.bf16.gmra.mrb[0].mxu0 %v9332
        %v9481 = vpop.f32.mrb[0].mxu0
        %v9482 = vadd.f32 0.0, %v9481
        %v9483 = vpop.f32.mrb[0].mxu0
        %v9484 = vpop.f32.mrb[0].mxu0
        %v9485 = vadd.f32 0.0, %v9484
        %v9486 = vpop.f32.mrb[0].mxu0
        %9487 = vmatprep.mubr.bf16.mxu0 0
        %9488 = vmatmul.mubr.bf16.gmra.mrb[0].mxu0 %v9333
        %v9489 = vpop.f32.mrb[0].mxu0
        %v9490 = vadd.f32 0.0, %v9489
        %v9491 = vpop.f32.mrb[0].mxu0
        %v9492 = vpop.f32.mrb[0].mxu0
        %v9493 = vadd.f32 0.0, %v9492
        %v9494 = vpop.f32.mrb[0].mxu0
        %9495 = vmatprep.mubr.bf16.mxu0 0
        %9496 = vmatmul.mubr.bf16.gmra.mrb[0].mxu0 %v9334
        %v9497 = vpop.f32.mrb[0].mxu0
        %v9498 = vadd.f32 0.0, %v9497
        %v9499 = vpop.f32.mrb[0].mxu0
        %v9500 = vpop.f32.mrb[0].mxu0
        %v9501 = vadd.f32 0.0, %v9500
        %v9502 = vpop.f32.mrb[0].mxu0
        %9503 = vmatprep.mubr.bf16.mxu0 0
        %9504 = vmatmul.mubr.bf16.gmra.mrb[0].mxu0 %v9335
        %v9505 = vpop.f32.mrb[0].mxu0
        %v9506 = vadd.f32 0.0, %v9505
        %v9507 = vpop.f32.mrb[0].mxu0
        %v9508 = vpop.f32.mrb[0].mxu0
        %v9509 = vadd.f32 0.0, %v9508
        %v9510 = vpop.f32.mrb[0].mxu0
        %9511 = vmatprep.mubr.bf16.mxu0 0
        %9512 = vmatmul.mubr.bf16.gmra.mrb[0].mxu0 %v9336
        %v9513 = vpop.f32.mrb[0].mxu0
        %v9514 = vadd.f32 0.0, %v9513
        %v9515 = vpop.f32.mrb[0].mxu0
        %v9516 = vpop.f32.mrb[0].mxu0
        %v9517 = vadd.f32 0.0, %v9516
        %v9518 = vpop.f32.mrb[0].mxu0
        %9519 = vmatprep.mubr.bf16.mxu0 0
        %9520 = vmatmul.mubr.bf16.gmra.mrb[0].mxu0 %v9337
        %v9521 = vpop.f32.mrb[0].mxu0
        %v9522 = vadd.f32 0.0, %v9521
        %v9523 = vpop.f32.mrb[0].mxu0
        %v9524 = vpop.f32.mrb[0].mxu0
        %v9525 = vadd.f32 0.0, %v9524
        %v9526 = vpop.f32.mrb[0].mxu0
        %9527 = vmatprep.mubr.bf16.mxu0 0
        %9528 = vmatmul.mubr.bf16.gmra.mrb[0].mxu0 %v9338
        %v9529 = vpop.f32.mrb[0].mxu0
        %v9530 = vadd.f32 0.0, %v9529
        %v9531 = vpop.f32.mrb[0].mxu0
        %v9532 = vpop.f32.mrb[0].mxu0
        %v9533 = vadd.f32 0.0, %v9532
        %v9534 = vpop.f32.mrb[0].mxu0
        %9535 = vmatprep.mubr.bf16.mxu0 0
        %9536 = vmatmul.mubr.bf16.gmra.mrb[0].mxu0 %v9339
        %v9537 = vpop.f32.mrb[0].mxu0
        %v9538 = vadd.f32 0.0, %v9537
        %v9539 = vpop.f32.mrb[0].mxu0
        %v9540 = vpop.f32.mrb[0].mxu0
        %v9541 = vadd.f32 0.0, %v9540
        %v9542 = vpop.f32.mrb[0].mxu0
        %9543 = vmatprep.mubr.bf16.mxu0 0
        %9544 = vmatmul.mubr.bf16.gmra.mrb[0].mxu0 %v9340
        %v9545 = vpop.f32.mrb[0].mxu0
        %v9546 = vadd.f32 0.0, %v9545
        %v9547 = vpop.f32.mrb[0].mxu0
        %v9548 = vpop.f32.mrb[0].mxu0
        %v9549 = vadd.f32 0.0, %v9548
        %v9550 = vpop.f32.mrb[0].mxu0
        %9551 = vmatprep.mubr.bf16.mxu0 0
        %9552 = vmatmul.mubr.bf16.gmra.mrb[0].mxu0 %v9341
        %v9553 = vpop.f32.mrb[0].mxu0
        %v9554 = vadd.f32 0.0, %v9553
        %v9555 = vpop.f32.mrb[0].mxu0
        %v9556 = vpop.f32.mrb[0].mxu0
        %v9557 = vadd.f32 0.0, %v9556
        %v9558 = vpop.f32.mrb[0].mxu0
        %9559 = vmatprep.mubr.bf16.mxu0 0
        %9560 = vmatmul.mubr.bf16.gmra.mrb[0].mxu0 %v9342
        %v9561 = vpop.f32.mrb[0].mxu0
        %v9562 = vadd.f32 0.0, %v9561
        %v9563 = vpop.f32.mrb[0].mxu0
        %v9564 = vpop.f32.mrb[0].mxu0
        %v9565 = vadd.f32 0.0, %v9564
        %v9566 = vpop.f32.mrb[0].mxu0
        %9567 = vdwg.mxu0
        %v9568 = vadd.f32 %v8814, %v9442
        %v9569 = vadd.f32 %v8815, %v9445
        %v9570 = vadd.f32 %v8816, %v9450
        %v9571 = vadd.f32 %v8817, %v9453
        %v9572 = vadd.f32 %v8818, %v9458
        %v9573 = vadd.f32 %v8819, %v9461
        %v9574 = vadd.f32 %v8820, %v9466
        %v9575 = vadd.f32 %v8821, %v9469
        %v9576 = vadd.f32 %v8822, %v9474
        %v9577 = vadd.f32 %v8823, %v9477
        %v9578 = vadd.f32 %v8824, %v9482
        %v9579 = vadd.f32 %v8825, %v9485
        %v9580 = vadd.f32 %v8826, %v9490
        %v9581 = vadd.f32 %v8827, %v9493
        %v9582 = vadd.f32 %v8828, %v9498
        %v9583 = vadd.f32 %v8829, %v9501
        %v9584 = vadd.f32 %v8830, %v9506
        %v9585 = vadd.f32 %v8831, %v9509
        %v9586 = vadd.f32 %v8832, %v9514
        %v9587 = vadd.f32 %v8833, %v9517
        %v9588 = vadd.f32 %v8834, %v9522
        %v9589 = vadd.f32 %v8835, %v9525
        %v9590 = vadd.f32 %v8836, %v9530
        %v9591 = vadd.f32 %v8837, %v9533
        %v9592 = vadd.f32 %v8838, %v9538
        %v9593 = vadd.f32 %v8839, %v9541
        %v9594 = vadd.f32 %v8840, %v9546
        %v9595 = vadd.f32 %v8841, %v9549
        %v9596 = vadd.f32 %v8842, %v9554
        %v9597 = vadd.f32 %v8843, %v9557
        %v9598 = vadd.f32 %v8844, %v9562
        %v9599 = vadd.f32 %v8845, %v9565
        %v9600 = vld [vmem:[%s670] sm:$0xe]
        %v9601 = vld [vmem:[%s670 + $0xc] sm:$0xe]
        %v9602 = vld [vmem:[%s670 + $0x18] sm:$0xe]
        %v9603 = vld [vmem:[%s670 + $0x24] sm:$0xe]
        %v9604 = vld [vmem:[%s670 + $0x30] sm:$0xe]
        %v9605 = vld [vmem:[%s670 + $0x3c] sm:$0xe]
        %v9606 = vld [vmem:[%s670 + $0x48] sm:$0xe]
        %v9607 = vld [vmem:[%s670 + $0x54] sm:$0xe]
        %v9608 = vld [vmem:[%s670 + $0x60] sm:$0xe]
        %v9609 = vld [vmem:[%s670 + $0x6c] sm:$0xe]
        %v9610 = vld [vmem:[%s670 + $0x78] sm:$0xe]
        %v9611 = vld [vmem:[%s670 + $0x84] sm:$0xe]
        %v9612 = vld [vmem:[%s670 + $0x90] sm:$0xe]
        %v9613 = vld [vmem:[%s670 + $0x9c] sm:$0xe]
        %v9614 = vld [vmem:[%s670 + $0xa8] sm:$0xe]
        %v9615 = vld [vmem:[%s670 + $0xb4] sm:$0xe]
        %v9664 = vrot.slane %v9600, 5
        %v9665 = vrot.slane %v9664, 4
        %v9666 = vrot.slane %v8847, 5
        %v9667 = vsel %vm2188, %v9665, %v9666
        %v9668 = vrot.slane %v9666, 4
        %v9669 = vrot.slane %v8848, 5
        %v9670 = vsel %vm2188, %v9668, %v9669
        %v9671 = vrot.slane %v9601, 5
        %v9672 = vrot.slane %v9671, 4
        %v9673 = vrot.slane %v8850, 5
        %v9674 = vsel %vm2188, %v9672, %v9673
        %v9675 = vrot.slane %v9673, 4
        %v9676 = vrot.slane %v8851, 5
        %v9677 = vsel %vm2188, %v9675, %v9676
        %v9678 = vrot.slane %v9602, 5
        %v9679 = vrot.slane %v9678, 4
        %v9680 = vrot.slane %v8853, 5
        %v9681 = vsel %vm2188, %v9679, %v9680
        %v9682 = vrot.slane %v9680, 4
        %v9683 = vrot.slane %v8854, 5
        %v9684 = vsel %vm2188, %v9682, %v9683
        %v9685 = vrot.slane %v9603, 5
        %v9686 = vrot.slane %v9685, 4
        %v9687 = vrot.slane %v8856, 5
        %v9688 = vsel %vm2188, %v9686, %v9687
        %v9689 = vrot.slane %v9687, 4
        %v9690 = vrot.slane %v8857, 5
        %v9691 = vsel %vm2188, %v9689, %v9690
        %v9692 = vrot.slane %v9604, 5
        %v9693 = vrot.slane %v9692, 4
        %v9694 = vrot.slane %v8859, 5
        %v9695 = vsel %vm2188, %v9693, %v9694
        %v9696 = vrot.slane %v9694, 4
        %v9697 = vrot.slane %v8860, 5
        %v9698 = vsel %vm2188, %v9696, %v9697
        %v9699 = vrot.slane %v9605, 5
        %v9700 = vrot.slane %v9699, 4
        %v9701 = vrot.slane %v8862, 5
        %v9702 = vsel %vm2188, %v9700, %v9701
        %v9703 = vrot.slane %v9701, 4
        %v9704 = vrot.slane %v8863, 5
        %v9705 = vsel %vm2188, %v9703, %v9704
        %v9706 = vrot.slane %v9606, 5
        %v9707 = vrot.slane %v9706, 4
        %v9708 = vrot.slane %v8865, 5
        %v9709 = vsel %vm2188, %v9707, %v9708
        %v9710 = vrot.slane %v9708, 4
        %v9711 = vrot.slane %v8866, 5
        %v9712 = vsel %vm2188, %v9710, %v9711
        %v9713 = vrot.slane %v9607, 5
        %v9714 = vrot.slane %v9713, 4
        %v9715 = vrot.slane %v8868, 5
        %v9716 = vsel %vm2188, %v9714, %v9715
        %v9717 = vrot.slane %v9715, 4
        %v9718 = vrot.slane %v8869, 5
        %v9719 = vsel %vm2188, %v9717, %v9718
        %v9720 = vrot.slane %v9608, 5
        %v9721 = vrot.slane %v9720, 4
        %v9722 = vrot.slane %v8871, 5
        %v9723 = vsel %vm2188, %v9721, %v9722
        %v9724 = vrot.slane %v9722, 4
        %v9725 = vrot.slane %v8872, 5
        %v9726 = vsel %vm2188, %v9724, %v9725
        %v9727 = vrot.slane %v9609, 5
        %v9728 = vrot.slane %v9727, 4
        %v9729 = vrot.slane %v8874, 5
        %v9730 = vsel %vm2188, %v9728, %v9729
        %v9731 = vrot.slane %v9729, 4
        %v9732 = vrot.slane %v8875, 5
        %v9733 = vsel %vm2188, %v9731, %v9732
        %v9734 = vrot.slane %v9610, 5
        %v9735 = vrot.slane %v9734, 4
        %v9736 = vrot.slane %v8877, 5
        %v9737 = vsel %vm2188, %v9735, %v9736
        %v9738 = vrot.slane %v9736, 4
        %v9739 = vrot.slane %v8878, 5
        %v9740 = vsel %vm2188, %v9738, %v9739
        %v9741 = vrot.slane %v9611, 5
        %v9742 = vrot.slane %v9741, 4
        %v9743 = vrot.slane %v8880, 5
        %v9744 = vsel %vm2188, %v9742, %v9743
        %v9745 = vrot.slane %v9743, 4
        %v9746 = vrot.slane %v8881, 5
        %v9747 = vsel %vm2188, %v9745, %v9746
        %v9748 = vrot.slane %v9612, 5
        %v9749 = vrot.slane %v9748, 4
        %v9750 = vrot.slane %v8883, 5
        %v9751 = vsel %vm2188, %v9749, %v9750
        %v9752 = vrot.slane %v9750, 4
        %v9753 = vrot.slane %v8884, 5
        %v9754 = vsel %vm2188, %v9752, %v9753
        %v9755 = vrot.slane %v9613, 5
        %v9756 = vrot.slane %v9755, 4
        %v9757 = vrot.slane %v8886, 5
        %v9758 = vsel %vm2188, %v9756, %v9757
        %v9759 = vrot.slane %v9757, 4
        %v9760 = vrot.slane %v8887, 5
        %v9761 = vsel %vm2188, %v9759, %v9760
        %v9762 = vrot.slane %v9614, 5
        %v9763 = vrot.slane %v9762, 4
        %v9764 = vrot.slane %v8889, 5
        %v9765 = vsel %vm2188, %v9763, %v9764
        %v9766 = vrot.slane %v9764, 4
        %v9767 = vrot.slane %v8890, 5
        %v9768 = vsel %vm2188, %v9766, %v9767
        %v9769 = vrot.slane %v9615, 5
        %v9770 = vrot.slane %v9769, 4
        %v9771 = vrot.slane %v8892, 5
        %v9772 = vsel %vm2188, %v9770, %v9771
        %v9773 = vrot.slane %v9771, 4
        %v9774 = vrot.slane %v8893, 5
        %v9775 = vsel %vm2188, %v9773, %v9774
        %s9776 = scalar_lea.vmem [#allocation8], 320
        %v9777 = vld [vmem:[%s9776] sm:$0xf]
        %v9778 = vld [vmem:[%s9776 + $0x4] sm:$0xf]
        %v9779 = vld [vmem:[%s9776 + $0x8] sm:$0xf]
        %v9780 = vld [vmem:[%s9776 + $0xc] sm:$0xf]
        %v9781 = vld [vmem:[%s9776 + $0x10] sm:$0xf]
        %v9782 = vld [vmem:[%s9776 + $0x14] sm:$0xf]
        %v9783 = vld [vmem:[%s9776 + $0x18] sm:$0xf]
        %v9784 = vld [vmem:[%s9776 + $0x1c] sm:$0xf]
        %v9785 = vld [vmem:[%s9776 + $0x20] sm:$0xf]
        %v9786 = vld [vmem:[%s9776 + $0x24] sm:$0xf]
        %v9787 = vld [vmem:[%s9776 + $0x28] sm:$0xf]
        %v9788 = vld [vmem:[%s9776 + $0x2c] sm:$0xf]
        %v9789 = vld [vmem:[%s9776 + $0x30] sm:$0xf]
        %v9790 = vld [vmem:[%s9776 + $0x34] sm:$0xf]
        %v9791 = vld [vmem:[%s9776 + $0x38] sm:$0xf]
        %v9792 = vld [vmem:[%s9776 + $0x3c] sm:$0xf]
        %v9793 = vunpack.c.l.b16 %v9667
        %v9794 = vunpack.c.l.b16 %v9670
        %v9795 = vunpack.c.l.b16 %v9674
        %v9796 = vunpack.c.l.b16 %v9677
        %v9797 = vunpack.c.l.b16 %v9681
        %v9798 = vunpack.c.l.b16 %v9684
        %v9799 = vunpack.c.l.b16 %v9688
        %v9800 = vunpack.c.l.b16 %v9691
        %v9801 = vunpack.c.l.b16 %v9695
        %v9802 = vunpack.c.l.b16 %v9698
        %v9803 = vunpack.c.l.b16 %v9702
        %v9804 = vunpack.c.l.b16 %v9705
        %v9805 = vunpack.c.l.b16 %v9709
        %v9806 = vunpack.c.l.b16 %v9712
        %v9807 = vunpack.c.l.b16 %v9716
        %v9808 = vunpack.c.l.b16 %v9719
        %v9809 = vunpack.c.l.b16 %v9723
        %v9810 = vunpack.c.l.b16 %v9726
        %v9811 = vunpack.c.l.b16 %v9730
        %v9812 = vunpack.c.l.b16 %v9733
        %v9813 = vunpack.c.l.b16 %v9737
        %v9814 = vunpack.c.l.b16 %v9740
        %v9815 = vunpack.c.l.b16 %v9744
        %v9816 = vunpack.c.l.b16 %v9747
        %v9817 = vunpack.c.l.b16 %v9751
        %v9818 = vunpack.c.l.b16 %v9754
        %v9819 = vunpack.c.l.b16 %v9758
        %v9820 = vunpack.c.l.b16 %v9761
        %v9821 = vunpack.c.l.b16 %v9765
        %v9822 = vunpack.c.l.b16 %v9768
        %v9823 = vunpack.c.l.b16 %v9772
        %v9824 = vunpack.c.l.b16 %v9775
        %v9825 = vpack.c.b16 %v9794, %v9793
        %v9826 = vpack.c.b16 %v9796, %v9795
        %v9827 = vpack.c.b16 %v9798, %v9797
        %v9828 = vpack.c.b16 %v9800, %v9799
        %v9829 = vpack.c.b16 %v9802, %v9801
        %v9830 = vpack.c.b16 %v9804, %v9803
        %v9831 = vpack.c.b16 %v9806, %v9805
        %v9832 = vpack.c.b16 %v9808, %v9807
        %v9833 = vpack.c.b16 %v9810, %v9809
        %v9834 = vpack.c.b16 %v9812, %v9811
        %v9835 = vpack.c.b16 %v9814, %v9813
        %v9836 = vpack.c.b16 %v9816, %v9815
        %v9837 = vpack.c.b16 %v9818, %v9817
        %v9838 = vpack.c.b16 %v9820, %v9819
        %v9839 = vpack.c.b16 %v9822, %v9821
        %v9840 = vpack.c.b16 %v9824, %v9823
        %v9873 = vunpack.c.l.b16 %v9777
        %v9874 = vunpack.c.l.b16 %v9778
        %v9875 = vunpack.c.l.b16 %v9779
        %v9876 = vunpack.c.l.b16 %v9780
        %v9877 = vunpack.c.l.b16 %v9781
        %v9878 = vunpack.c.l.b16 %v9782
        %v9879 = vunpack.c.l.b16 %v9783
        %v9880 = vunpack.c.l.b16 %v9784
        %v9881 = vunpack.c.l.b16 %v9785
        %v9882 = vunpack.c.l.b16 %v9786
        %v9883 = vunpack.c.l.b16 %v9787
        %v9884 = vunpack.c.l.b16 %v9788
        %v9885 = vunpack.c.l.b16 %v9789
        %v9886 = vunpack.c.l.b16 %v9790
        %v9887 = vunpack.c.l.b16 %v9791
        %v9888 = vunpack.c.l.b16 %v9792
        %v9889 = vpack.c.b16 %v9874, %v9873
        %v9890 = vpack.c.b16 %v9876, %v9875
        %v9891 = vpack.c.b16 %v9878, %v9877
        %v9892 = vpack.c.b16 %v9880, %v9879
        %v9893 = vpack.c.b16 %v9882, %v9881
        %v9894 = vpack.c.b16 %v9884, %v9883
        %v9895 = vpack.c.b16 %v9886, %v9885
        %v9896 = vpack.c.b16 %v9888, %v9887
        %9905 = vmatprep.subr.bf16.mxu0 0
        %9906 = vmatpush1.bf16.msra.mxu0 %v9889
        %9907 = vmatprep.subr.bf16.mxu0 0
        %9908 = vmatpush1.bf16.msra.mxu0 %v9890
        %9909 = vmatprep.subr.bf16.mxu0 0
        %9910 = vmatpush1.bf16.msra.mxu0 %v9891
        %9911 = vmatprep.subr.bf16.mxu0 0
        %9912 = vmatpush1.bf16.msra.mxu0 %v9892
        %9913 = vmatprep.subr.bf16.mxu0 0
        %9914 = vmatpush1.bf16.msra.mxu0 %v9893
        %9915 = vmatprep.subr.bf16.mxu0 0
        %9916 = vmatpush1.bf16.msra.mxu0 %v9894
        %9917 = vmatprep.subr.bf16.mxu0 0
        %9918 = vmatpush1.bf16.msra.mxu0 %v9895
        %9919 = vmatprep.subr.bf16.mxu0 0
        %9920 = vmatpush1.bf16.msra.mxu0 %v9896
        %9921 = vmatprep.subr.bf16.mxu0 0
        %9922 = vmatpush1.bf16.msra.mxu0 0
        %9923 = vmatprep.subr.bf16.mxu0 0
        %9924 = vmatpush1.bf16.msra.mxu0 0
        %9925 = vmatprep.subr.bf16.mxu0 0
        %9926 = vmatpush1.bf16.msra.mxu0 0
        %9927 = vmatprep.subr.bf16.mxu0 0
        %9928 = vmatpush1.bf16.msra.mxu0 0
        %9929 = vmatprep.subr.bf16.mxu0 0
        %9930 = vmatpush1.bf16.msra.mxu0 0
        %9931 = vmatprep.subr.bf16.mxu0 0
        %9932 = vmatpush1.bf16.msra.mxu0 0
        %9933 = vmatprep.subr.bf16.mxu0 0
        %9934 = vmatpush1.bf16.msra.mxu0 0
        %9935 = vmatprep.subr.bf16.mxu0 0
        %9936 = vmatpush1.bf16.msra.mxu0 0
        %9937 = vmatprep.mubr.bf16.mxu0 0
        %9938 = vmatmul.mubr.bf16.gmra.mrb[0].mxu0 %v9825
        %v9939 = vpop.f32.mrb[0].mxu0
        %v9940 = vadd.f32 0.0, %v9939
        %v9941 = vpop.f32.mrb[0].mxu0
        %v9942 = vpop.f32.mrb[0].mxu0
        %v9943 = vadd.f32 0.0, %v9942
        %v9944 = vpop.f32.mrb[0].mxu0
        %9945 = vmatprep.mubr.bf16.mxu0 0
        %9946 = vmatmul.mubr.bf16.gmra.mrb[0].mxu0 %v9826
        %v9947 = vpop.f32.mrb[0].mxu0
        %v9948 = vadd.f32 0.0, %v9947
        %v9949 = vpop.f32.mrb[0].mxu0
        %v9950 = vpop.f32.mrb[0].mxu0
        %v9951 = vadd.f32 0.0, %v9950
        %v9952 = vpop.f32.mrb[0].mxu0
        %9953 = vmatprep.mubr.bf16.mxu0 0
        %9954 = vmatmul.mubr.bf16.gmra.mrb[0].mxu0 %v9827
        %v9955 = vpop.f32.mrb[0].mxu0
        %v9956 = vadd.f32 0.0, %v9955
        %v9957 = vpop.f32.mrb[0].mxu0
        %v9958 = vpop.f32.mrb[0].mxu0
        %v9959 = vadd.f32 0.0, %v9958
        %v9960 = vpop.f32.mrb[0].mxu0
        %9961 = vmatprep.mubr.bf16.mxu0 0
        %9962 = vmatmul.mubr.bf16.gmra.mrb[0].mxu0 %v9828
        %v9963 = vpop.f32.mrb[0].mxu0
        %v9964 = vadd.f32 0.0, %v9963
        %v9965 = vpop.f32.mrb[0].mxu0
        %v9966 = vpop.f32.mrb[0].mxu0
        %v9967 = vadd.f32 0.0, %v9966
        %v9968 = vpop.f32.mrb[0].mxu0
        %9969 = vmatprep.mubr.bf16.mxu0 0
        %9970 = vmatmul.mubr.bf16.gmra.mrb[0].mxu0 %v9829
        %v9971 = vpop.f32.mrb[0].mxu0
        %v9972 = vadd.f32 0.0, %v9971
        %v9973 = vpop.f32.mrb[0].mxu0
        %v9974 = vpop.f32.mrb[0].mxu0
        %v9975 = vadd.f32 0.0, %v9974
        %v9976 = vpop.f32.mrb[0].mxu0
        %9977 = vmatprep.mubr.bf16.mxu0 0
        %9978 = vmatmul.mubr.bf16.gmra.mrb[0].mxu0 %v9830
        %v9979 = vpop.f32.mrb[0].mxu0
        %v9980 = vadd.f32 0.0, %v9979
        %v9981 = vpop.f32.mrb[0].mxu0
        %v9982 = vpop.f32.mrb[0].mxu0
        %v9983 = vadd.f32 0.0, %v9982
        %v9984 = vpop.f32.mrb[0].mxu0
        %9985 = vmatprep.mubr.bf16.mxu0 0
        %9986 = vmatmul.mubr.bf16.gmra.mrb[0].mxu0 %v9831
        %v9987 = vpop.f32.mrb[0].mxu0
        %v9988 = vadd.f32 0.0, %v9987
        %v9989 = vpop.f32.mrb[0].mxu0
        %v9990 = vpop.f32.mrb[0].mxu0
        %v9991 = vadd.f32 0.0, %v9990
        %v9992 = vpop.f32.mrb[0].mxu0
        %9993 = vmatprep.mubr.bf16.mxu0 0
        %9994 = vmatmul.mubr.bf16.gmra.mrb[0].mxu0 %v9832
        %v9995 = vpop.f32.mrb[0].mxu0
        %v9996 = vadd.f32 0.0, %v9995
        %v9997 = vpop.f32.mrb[0].mxu0
        %v9998 = vpop.f32.mrb[0].mxu0
        %v9999 = vadd.f32 0.0, %v9998
        %v10000 = vpop.f32.mrb[0].mxu0
        %10001 = vmatprep.mubr.bf16.mxu0 0
        %10002 = vmatmul.mubr.bf16.gmra.mrb[0].mxu0 %v9833
        %v10003 = vpop.f32.mrb[0].mxu0
        %v10004 = vadd.f32 0.0, %v10003
        %v10005 = vpop.f32.mrb[0].mxu0
        %v10006 = vpop.f32.mrb[0].mxu0
        %v10007 = vadd.f32 0.0, %v10006
        %v10008 = vpop.f32.mrb[0].mxu0
        %10009 = vmatprep.mubr.bf16.mxu0 0
        %10010 = vmatmul.mubr.bf16.gmra.mrb[0].mxu0 %v9834
        %v10011 = vpop.f32.mrb[0].mxu0
        %v10012 = vadd.f32 0.0, %v10011
        %v10013 = vpop.f32.mrb[0].mxu0
        %v10014 = vpop.f32.mrb[0].mxu0
        %v10015 = vadd.f32 0.0, %v10014
        %v10016 = vpop.f32.mrb[0].mxu0
        %10017 = vmatprep.mubr.bf16.mxu0 0
        %10018 = vmatmul.mubr.bf16.gmra.mrb[0].mxu0 %v9835
        %v10019 = vpop.f32.mrb[0].mxu0
        %v10020 = vadd.f32 0.0, %v10019
        %v10021 = vpop.f32.mrb[0].mxu0
        %v10022 = vpop.f32.mrb[0].mxu0
        %v10023 = vadd.f32 0.0, %v10022
        %v10024 = vpop.f32.mrb[0].mxu0
        %10025 = vmatprep.mubr.bf16.mxu0 0
        %10026 = vmatmul.mubr.bf16.gmra.mrb[0].mxu0 %v9836
        %v10027 = vpop.f32.mrb[0].mxu0
        %v10028 = vadd.f32 0.0, %v10027
        %v10029 = vpop.f32.mrb[0].mxu0
        %v10030 = vpop.f32.mrb[0].mxu0
        %v10031 = vadd.f32 0.0, %v10030
        %v10032 = vpop.f32.mrb[0].mxu0
        %10033 = vmatprep.mubr.bf16.mxu0 0
        %10034 = vmatmul.mubr.bf16.gmra.mrb[0].mxu0 %v9837
        %v10035 = vpop.f32.mrb[0].mxu0
        %v10036 = vadd.f32 0.0, %v10035
        %v10037 = vpop.f32.mrb[0].mxu0
        %v10038 = vpop.f32.mrb[0].mxu0
        %v10039 = vadd.f32 0.0, %v10038
        %v10040 = vpop.f32.mrb[0].mxu0
        %10041 = vmatprep.mubr.bf16.mxu0 0
        %10042 = vmatmul.mubr.bf16.gmra.mrb[0].mxu0 %v9838
        %v10043 = vpop.f32.mrb[0].mxu0
        %v10044 = vadd.f32 0.0, %v10043
        %v10045 = vpop.f32.mrb[0].mxu0
        %v10046 = vpop.f32.mrb[0].mxu0
        %v10047 = vadd.f32 0.0, %v10046
        %v10048 = vpop.f32.mrb[0].mxu0
        %10049 = vmatprep.mubr.bf16.mxu0 0
        %10050 = vmatmul.mubr.bf16.gmra.mrb[0].mxu0 %v9839
        %v10051 = vpop.f32.mrb[0].mxu0
        %v10052 = vadd.f32 0.0, %v10051
        %v10053 = vpop.f32.mrb[0].mxu0
        %v10054 = vpop.f32.mrb[0].mxu0
        %v10055 = vadd.f32 0.0, %v10054
        %v10056 = vpop.f32.mrb[0].mxu0
        %10057 = vmatprep.mubr.bf16.mxu0 0
        %10058 = vmatmul.mubr.bf16.gmra.mrb[0].mxu0 %v9840
        %v10059 = vpop.f32.mrb[0].mxu0
        %v10060 = vadd.f32 0.0, %v10059
        %v10061 = vpop.f32.mrb[0].mxu0
        %v10062 = vpop.f32.mrb[0].mxu0
        %v10063 = vadd.f32 0.0, %v10062
        %v10064 = vpop.f32.mrb[0].mxu0
        %10065 = vdwg.mxu0
        %v10066 = vadd.f32 %v9568, %v9940
        %v10067 = vadd.f32 %v9569, %v9943
        %v10068 = vadd.f32 %v9570, %v9948
        %v10069 = vadd.f32 %v9571, %v9951
        %v10070 = vadd.f32 %v9572, %v9956
        %v10071 = vadd.f32 %v9573, %v9959
        %v10072 = vadd.f32 %v9574, %v9964
        %v10073 = vadd.f32 %v9575, %v9967
        %v10074 = vadd.f32 %v9576, %v9972
        %v10075 = vadd.f32 %v9577, %v9975
        %v10076 = vadd.f32 %v9578, %v9980
        %v10077 = vadd.f32 %v9579, %v9983
        %v10078 = vadd.f32 %v9580, %v9988
        %v10079 = vadd.f32 %v9581, %v9991
        %v10080 = vadd.f32 %v9582, %v9996
        %v10081 = vadd.f32 %v9583, %v9999
        %v10082 = vadd.f32 %v9584, %v10004
        %v10083 = vadd.f32 %v9585, %v10007
        %v10084 = vadd.f32 %v9586, %v10012
        %v10085 = vadd.f32 %v9587, %v10015
        %v10086 = vadd.f32 %v9588, %v10020
        %v10087 = vadd.f32 %v9589, %v10023
        %v10088 = vadd.f32 %v9590, %v10028
        %v10089 = vadd.f32 %v9591, %v10031
        %v10090 = vadd.f32 %v9592, %v10036
        %v10091 = vadd.f32 %v9593, %v10039
        %v10092 = vadd.f32 %v9594, %v10044
        %v10093 = vadd.f32 %v9595, %v10047
        %v10094 = vadd.f32 %v9596, %v10052
        %v10095 = vadd.f32 %v9597, %v10055
        %v10096 = vadd.f32 %v9598, %v10060
        %v10097 = vadd.f32 %v9599, %v10063
        %v10098 = vld [vmem:[%s4261] sm:$0xf]
        %v10099 = vld [vmem:[%s4261 + $0x4] sm:$0xf]
        %v10100 = vld [vmem:[%s4261 + $0xc] sm:$0xf]
        %v10101 = vld [vmem:[%s4261 + $0x10] sm:$0xf]
        %v10102 = vld [vmem:[%s4261 + $0x18] sm:$0xf]
        %v10103 = vld [vmem:[%s4261 + $0x1c] sm:$0xf]
        %v10104 = vld [vmem:[%s4261 + $0x24] sm:$0xf]
        %v10105 = vld [vmem:[%s4261 + $0x28] sm:$0xf]
        %v10106 = vld [vmem:[%s4261 + $0x30] sm:$0xf]
        %v10107 = vld [vmem:[%s4261 + $0x34] sm:$0xf]
        %v10108 = vld [vmem:[%s4261 + $0x3c] sm:$0xf]
        %v10109 = vld [vmem:[%s4261 + $0x40] sm:$0xf]
        %v10110 = vld [vmem:[%s4261 + $0x48] sm:$0xf]
        %v10111 = vld [vmem:[%s4261 + $0x4c] sm:$0xf]
        %v10112 = vld [vmem:[%s4261 + $0x54] sm:$0xf]
        %v10113 = vld [vmem:[%s4261 + $0x58] sm:$0xf]
        %v10114 = vld [vmem:[%s4261 + $0x60] sm:$0xf]
        %v10115 = vld [vmem:[%s4261 + $0x64] sm:$0xf]
        %v10116 = vld [vmem:[%s4261 + $0x6c] sm:$0xf]
        %v10117 = vld [vmem:[%s4261 + $0x70] sm:$0xf]
        %v10118 = vld [vmem:[%s4261 + $0x78] sm:$0xf]
        %v10119 = vld [vmem:[%s4261 + $0x7c] sm:$0xf]
        %v10120 = vld [vmem:[%s4261 + $0x84] sm:$0xf]
        %v10121 = vld [vmem:[%s4261 + $0x88] sm:$0xf]
        %v10122 = vld [vmem:[%s4261 + $0x90] sm:$0xf]
        %v10123 = vld [vmem:[%s4261 + $0x94] sm:$0xf]
        %v10124 = vld [vmem:[%s4261 + $0x9c] sm:$0xf]
        %v10125 = vld [vmem:[%s4261 + $0xa0] sm:$0xf]
        %v10126 = vld [vmem:[%s4261 + $0xa8] sm:$0xf]
        %v10127 = vld [vmem:[%s4261 + $0xac] sm:$0xf]
        %v10128 = vld [vmem:[%s4261 + $0xb4] sm:$0xf]
        %v10129 = vld [vmem:[%s4261 + $0xb8] sm:$0xf]
        %s10130 = scalar_lea.vmem [#allocation8], 384
        %v10131 = vld [vmem:[%s10130] sm:$0xf]
        %v10132 = vld [vmem:[%s10130 + $0x4] sm:$0xf]
        %v10133 = vld [vmem:[%s10130 + $0x8] sm:$0xf]
        %v10134 = vld [vmem:[%s10130 + $0xc] sm:$0xf]
        %v10135 = vld [vmem:[%s10130 + $0x10] sm:$0xf]
        %v10136 = vld [vmem:[%s10130 + $0x14] sm:$0xf]
        %v10137 = vld [vmem:[%s10130 + $0x18] sm:$0xf]
        %v10138 = vld [vmem:[%s10130 + $0x1c] sm:$0xf]
        %v10139 = vld [vmem:[%s10130 + $0x20] sm:$0xf]
        %v10140 = vld [vmem:[%s10130 + $0x24] sm:$0xf]
        %v10141 = vld [vmem:[%s10130 + $0x28] sm:$0xf]
        %v10142 = vld [vmem:[%s10130 + $0x2c] sm:$0xf]
        %v10143 = vld [vmem:[%s10130 + $0x30] sm:$0xf]
        %v10144 = vld [vmem:[%s10130 + $0x34] sm:$0xf]
        %v10145 = vld [vmem:[%s10130 + $0x38] sm:$0xf]
        %v10146 = vld [vmem:[%s10130 + $0x3c] sm:$0xf]
        %v10179 = vunpack.c.l.b16 %v10098
        %v10180 = vunpack.c.l.b16 %v10099
        %v10181 = vunpack.c.l.b16 %v10100
        %v10182 = vunpack.c.l.b16 %v10101
        %v10183 = vunpack.c.l.b16 %v10102
        %v10184 = vunpack.c.l.b16 %v10103
        %v10185 = vunpack.c.l.b16 %v10104
        %v10186 = vunpack.c.l.b16 %v10105
        %v10187 = vunpack.c.l.b16 %v10106
        %v10188 = vunpack.c.l.b16 %v10107
        %v10189 = vunpack.c.l.b16 %v10108
        %v10190 = vunpack.c.l.b16 %v10109
        %v10191 = vunpack.c.l.b16 %v10110
        %v10192 = vunpack.c.l.b16 %v10111
        %v10193 = vunpack.c.l.b16 %v10112
        %v10194 = vunpack.c.l.b16 %v10113
        %v10195 = vunpack.c.l.b16 %v10114
        %v10196 = vunpack.c.l.b16 %v10115
        %v10197 = vunpack.c.l.b16 %v10116
        %v10198 = vunpack.c.l.b16 %v10117
        %v10199 = vunpack.c.l.b16 %v10118
        %v10200 = vunpack.c.l.b16 %v10119
        %v10201 = vunpack.c.l.b16 %v10120
        %v10202 = vunpack.c.l.b16 %v10121
        %v10203 = vunpack.c.l.b16 %v10122
        %v10204 = vunpack.c.l.b16 %v10123
        %v10205 = vunpack.c.l.b16 %v10124
        %v10206 = vunpack.c.l.b16 %v10125
        %v10207 = vunpack.c.l.b16 %v10126
        %v10208 = vunpack.c.l.b16 %v10127
        %v10209 = vunpack.c.l.b16 %v10128
        %v10210 = vunpack.c.l.b16 %v10129
        %v10211 = vpack.c.b16 %v10180, %v10179
        %v10212 = vpack.c.b16 %v10182, %v10181
        %v10213 = vpack.c.b16 %v10184, %v10183
        %v10214 = vpack.c.b16 %v10186, %v10185
        %v10215 = vpack.c.b16 %v10188, %v10187
        %v10216 = vpack.c.b16 %v10190, %v10189
        %v10217 = vpack.c.b16 %v10192, %v10191
        %v10218 = vpack.c.b16 %v10194, %v10193
        %v10219 = vpack.c.b16 %v10196, %v10195
        %v10220 = vpack.c.b16 %v10198, %v10197
        %v10221 = vpack.c.b16 %v10200, %v10199
        %v10222 = vpack.c.b16 %v10202, %v10201
        %v10223 = vpack.c.b16 %v10204, %v10203
        %v10224 = vpack.c.b16 %v10206, %v10205
        %v10225 = vpack.c.b16 %v10208, %v10207
        %v10226 = vpack.c.b16 %v10210, %v10209
        %v10259 = vunpack.c.l.b16 %v10131
        %v10260 = vunpack.c.l.b16 %v10132
        %v10261 = vunpack.c.l.b16 %v10133
        %v10262 = vunpack.c.l.b16 %v10134
        %v10263 = vunpack.c.l.b16 %v10135
        %v10264 = vunpack.c.l.b16 %v10136
        %v10265 = vunpack.c.l.b16 %v10137
        %v10266 = vunpack.c.l.b16 %v10138
        %v10267 = vunpack.c.l.b16 %v10139
        %v10268 = vunpack.c.l.b16 %v10140
        %v10269 = vunpack.c.l.b16 %v10141
        %v10270 = vunpack.c.l.b16 %v10142
        %v10271 = vunpack.c.l.b16 %v10143
        %v10272 = vunpack.c.l.b16 %v10144
        %v10273 = vunpack.c.l.b16 %v10145
        %v10274 = vunpack.c.l.b16 %v10146
        %v10275 = vpack.c.b16 %v10260, %v10259
        %v10276 = vpack.c.b16 %v10262, %v10261
        %v10277 = vpack.c.b16 %v10264, %v10263
        %v10278 = vpack.c.b16 %v10266, %v10265
        %v10279 = vpack.c.b16 %v10268, %v10267
        %v10280 = vpack.c.b16 %v10270, %v10269
        %v10281 = vpack.c.b16 %v10272, %v10271
        %v10282 = vpack.c.b16 %v10274, %v10273
        %10291 = vmatprep.subr.bf16.mxu0 0
        %10292 = vmatpush1.bf16.msra.mxu0 %v10275
        %10293 = vmatprep.subr.bf16.mxu0 0
        %10294 = vmatpush1.bf16.msra.mxu0 %v10276
        %10295 = vmatprep.subr.bf16.mxu0 0
        %10296 = vmatpush1.bf16.msra.mxu0 %v10277
        %10297 = vmatprep.subr.bf16.mxu0 0
        %10298 = vmatpush1.bf16.msra.mxu0 %v10278
        %10299 = vmatprep.subr.bf16.mxu0 0
        %10300 = vmatpush1.bf16.msra.mxu0 %v10279
        %10301 = vmatprep.subr.bf16.mxu0 0
        %10302 = vmatpush1.bf16.msra.mxu0 %v10280
        %10303 = vmatprep.subr.bf16.mxu0 0
        %10304 = vmatpush1.bf16.msra.mxu0 %v10281
        %10305 = vmatprep.subr.bf16.mxu0 0
        %10306 = vmatpush1.bf16.msra.mxu0 %v10282
        %10307 = vmatprep.subr.bf16.mxu0 0
        %10308 = vmatpush1.bf16.msra.mxu0 0
        %10309 = vmatprep.subr.bf16.mxu0 0
        %10310 = vmatpush1.bf16.msra.mxu0 0
        %10311 = vmatprep.subr.bf16.mxu0 0
        %10312 = vmatpush1.bf16.msra.mxu0 0
        %10313 = vmatprep.subr.bf16.mxu0 0
        %10314 = vmatpush1.bf16.msra.mxu0 0
        %10315 = vmatprep.subr.bf16.mxu0 0
        %10316 = vmatpush1.bf16.msra.mxu0 0
        %10317 = vmatprep.subr.bf16.mxu0 0
        %10318 = vmatpush1.bf16.msra.mxu0 0
        %10319 = vmatprep.subr.bf16.mxu0 0
        %10320 = vmatpush1.bf16.msra.mxu0 0
        %10321 = vmatprep.subr.bf16.mxu0 0
        %10322 = vmatpush1.bf16.msra.mxu0 0
        %10323 = vmatprep.mubr.bf16.mxu0 0
        %10324 = vmatmul.mubr.bf16.gmra.mrb[0].mxu0 %v10211
        %v10325 = vpop.f32.mrb[0].mxu0
        %v10326 = vadd.f32 0.0, %v10325
        %v10327 = vpop.f32.mrb[0].mxu0
        %v10328 = vpop.f32.mrb[0].mxu0
        %v10329 = vadd.f32 0.0, %v10328
        %v10330 = vpop.f32.mrb[0].mxu0
        %10331 = vmatprep.mubr.bf16.mxu0 0
        %10332 = vmatmul.mubr.bf16.gmra.mrb[0].mxu0 %v10212
        %v10333 = vpop.f32.mrb[0].mxu0
        %v10334 = vadd.f32 0.0, %v10333
        %v10335 = vpop.f32.mrb[0].mxu0
        %v10336 = vpop.f32.mrb[0].mxu0
        %v10337 = vadd.f32 0.0, %v10336
        %v10338 = vpop.f32.mrb[0].mxu0
        %10339 = vmatprep.mubr.bf16.mxu0 0
        %10340 = vmatmul.mubr.bf16.gmra.mrb[0].mxu0 %v10213
        %v10341 = vpop.f32.mrb[0].mxu0
        %v10342 = vadd.f32 0.0, %v10341
        %v10343 = vpop.f32.mrb[0].mxu0
        %v10344 = vpop.f32.mrb[0].mxu0
        %v10345 = vadd.f32 0.0, %v10344
        %v10346 = vpop.f32.mrb[0].mxu0
        %10347 = vmatprep.mubr.bf16.mxu0 0
        %10348 = vmatmul.mubr.bf16.gmra.mrb[0].mxu0 %v10214
        %v10349 = vpop.f32.mrb[0].mxu0
        %v10350 = vadd.f32 0.0, %v10349
        %v10351 = vpop.f32.mrb[0].mxu0
        %v10352 = vpop.f32.mrb[0].mxu0
        %v10353 = vadd.f32 0.0, %v10352
        %v10354 = vpop.f32.mrb[0].mxu0
        %10355 = vmatprep.mubr.bf16.mxu0 0
        %10356 = vmatmul.mubr.bf16.gmra.mrb[0].mxu0 %v10215
        %v10357 = vpop.f32.mrb[0].mxu0
        %v10358 = vadd.f32 0.0, %v10357
        %v10359 = vpop.f32.mrb[0].mxu0
        %v10360 = vpop.f32.mrb[0].mxu0
        %v10361 = vadd.f32 0.0, %v10360
        %v10362 = vpop.f32.mrb[0].mxu0
        %10363 = vmatprep.mubr.bf16.mxu0 0
        %10364 = vmatmul.mubr.bf16.gmra.mrb[0].mxu0 %v10216
        %v10365 = vpop.f32.mrb[0].mxu0
        %v10366 = vadd.f32 0.0, %v10365
        %v10367 = vpop.f32.mrb[0].mxu0
        %v10368 = vpop.f32.mrb[0].mxu0
        %v10369 = vadd.f32 0.0, %v10368
        %v10370 = vpop.f32.mrb[0].mxu0
        %10371 = vmatprep.mubr.bf16.mxu0 0
        %10372 = vmatmul.mubr.bf16.gmra.mrb[0].mxu0 %v10217
        %v10373 = vpop.f32.mrb[0].mxu0
        %v10374 = vadd.f32 0.0, %v10373
        %v10375 = vpop.f32.mrb[0].mxu0
        %v10376 = vpop.f32.mrb[0].mxu0
        %v10377 = vadd.f32 0.0, %v10376
        %v10378 = vpop.f32.mrb[0].mxu0
        %10379 = vmatprep.mubr.bf16.mxu0 0
        %10380 = vmatmul.mubr.bf16.gmra.mrb[0].mxu0 %v10218
        %v10381 = vpop.f32.mrb[0].mxu0
        %v10382 = vadd.f32 0.0, %v10381
        %v10383 = vpop.f32.mrb[0].mxu0
        %v10384 = vpop.f32.mrb[0].mxu0
        %v10385 = vadd.f32 0.0, %v10384
        %v10386 = vpop.f32.mrb[0].mxu0
        %10387 = vmatprep.mubr.bf16.mxu0 0
        %10388 = vmatmul.mubr.bf16.gmra.mrb[0].mxu0 %v10219
        %v10389 = vpop.f32.mrb[0].mxu0
        %v10390 = vadd.f32 0.0, %v10389
        %v10391 = vpop.f32.mrb[0].mxu0
        %v10392 = vpop.f32.mrb[0].mxu0
        %v10393 = vadd.f32 0.0, %v10392
        %v10394 = vpop.f32.mrb[0].mxu0
        %10395 = vmatprep.mubr.bf16.mxu0 0
        %10396 = vmatmul.mubr.bf16.gmra.mrb[0].mxu0 %v10220
        %v10397 = vpop.f32.mrb[0].mxu0
        %v10398 = vadd.f32 0.0, %v10397
        %v10399 = vpop.f32.mrb[0].mxu0
        %v10400 = vpop.f32.mrb[0].mxu0
        %v10401 = vadd.f32 0.0, %v10400
        %v10402 = vpop.f32.mrb[0].mxu0
        %10403 = vmatprep.mubr.bf16.mxu0 0
        %10404 = vmatmul.mubr.bf16.gmra.mrb[0].mxu0 %v10221
        %v10405 = vpop.f32.mrb[0].mxu0
        %v10406 = vadd.f32 0.0, %v10405
        %v10407 = vpop.f32.mrb[0].mxu0
        %v10408 = vpop.f32.mrb[0].mxu0
        %v10409 = vadd.f32 0.0, %v10408
        %v10410 = vpop.f32.mrb[0].mxu0
        %10411 = vmatprep.mubr.bf16.mxu0 0
        %10412 = vmatmul.mubr.bf16.gmra.mrb[0].mxu0 %v10222
        %v10413 = vpop.f32.mrb[0].mxu0
        %v10414 = vadd.f32 0.0, %v10413
        %v10415 = vpop.f32.mrb[0].mxu0
        %v10416 = vpop.f32.mrb[0].mxu0
        %v10417 = vadd.f32 0.0, %v10416
        %v10418 = vpop.f32.mrb[0].mxu0
        %10419 = vmatprep.mubr.bf16.mxu0 0
        %10420 = vmatmul.mubr.bf16.gmra.mrb[0].mxu0 %v10223
        %v10421 = vpop.f32.mrb[0].mxu0
        %v10422 = vadd.f32 0.0, %v10421
        %v10423 = vpop.f32.mrb[0].mxu0
        %v10424 = vpop.f32.mrb[0].mxu0
        %v10425 = vadd.f32 0.0, %v10424
        %v10426 = vpop.f32.mrb[0].mxu0
        %10427 = vmatprep.mubr.bf16.mxu0 0
        %10428 = vmatmul.mubr.bf16.gmra.mrb[0].mxu0 %v10224
        %v10429 = vpop.f32.mrb[0].mxu0
        %v10430 = vadd.f32 0.0, %v10429
        %v10431 = vpop.f32.mrb[0].mxu0
        %v10432 = vpop.f32.mrb[0].mxu0
        %v10433 = vadd.f32 0.0, %v10432
        %v10434 = vpop.f32.mrb[0].mxu0
        %10435 = vmatprep.mubr.bf16.mxu0 0
        %10436 = vmatmul.mubr.bf16.gmra.mrb[0].mxu0 %v10225
        %v10437 = vpop.f32.mrb[0].mxu0
        %v10438 = vadd.f32 0.0, %v10437
        %v10439 = vpop.f32.mrb[0].mxu0
        %v10440 = vpop.f32.mrb[0].mxu0
        %v10441 = vadd.f32 0.0, %v10440
        %v10442 = vpop.f32.mrb[0].mxu0
        %10443 = vmatprep.mubr.bf16.mxu0 0
        %10444 = vmatmul.mubr.bf16.gmra.mrb[0].mxu0 %v10226
        %v10445 = vpop.f32.mrb[0].mxu0
        %v10446 = vadd.f32 0.0, %v10445
        %v10447 = vpop.f32.mrb[0].mxu0
        %v10448 = vpop.f32.mrb[0].mxu0
        %v10449 = vadd.f32 0.0, %v10448
        %v10450 = vpop.f32.mrb[0].mxu0
        %10451 = vdwg.mxu0
        %v10452 = vadd.f32 %v10066, %v10326
        %v10453 = vadd.f32 %v10067, %v10329
        %v10454 = vadd.f32 %v10068, %v10334
        %v10455 = vadd.f32 %v10069, %v10337
        %v10456 = vadd.f32 %v10070, %v10342
        %v10457 = vadd.f32 %v10071, %v10345
        %v10458 = vadd.f32 %v10072, %v10350
        %v10459 = vadd.f32 %v10073, %v10353
        %v10460 = vadd.f32 %v10074, %v10358
        %v10461 = vadd.f32 %v10075, %v10361
        %v10462 = vadd.f32 %v10076, %v10366
        %v10463 = vadd.f32 %v10077, %v10369
        %v10464 = vadd.f32 %v10078, %v10374
        %v10465 = vadd.f32 %v10079, %v10377
        %v10466 = vadd.f32 %v10080, %v10382
        %v10467 = vadd.f32 %v10081, %v10385
        %v10468 = vadd.f32 %v10082, %v10390
        %v10469 = vadd.f32 %v10083, %v10393
        %v10470 = vadd.f32 %v10084, %v10398
        %v10471 = vadd.f32 %v10085, %v10401
        %v10472 = vadd.f32 %v10086, %v10406
        %v10473 = vadd.f32 %v10087, %v10409
        %v10474 = vadd.f32 %v10088, %v10414
        %v10475 = vadd.f32 %v10089, %v10417
        %v10476 = vadd.f32 %v10090, %v10422
        %v10477 = vadd.f32 %v10091, %v10425
        %v10478 = vadd.f32 %v10092, %v10430
        %v10479 = vadd.f32 %v10093, %v10433
        %v10480 = vadd.f32 %v10094, %v10438
        %v10481 = vadd.f32 %v10095, %v10441
        %v10482 = vadd.f32 %v10096, %v10446
        %v10483 = vadd.f32 %v10097, %v10449
        %v10484 = vld [vmem:[%s4261] sm:$0xf]
        %v10485 = vld [vmem:[%s4261 + $0x4] sm:$0xf]
        %v10486 = vld [vmem:[%s4261 + $0x8] sm:$0x1]
        %v10487 = vld [vmem:[%s4261 + $0xc] sm:$0xf]
        %v10488 = vld [vmem:[%s4261 + $0x10] sm:$0xf]
        %v10489 = vld [vmem:[%s4261 + $0x14] sm:$0x1]
        %v10490 = vld [vmem:[%s4261 + $0x18] sm:$0xf]
        %v10491 = vld [vmem:[%s4261 + $0x1c] sm:$0xf]
        %v10492 = vld [vmem:[%s4261 + $0x20] sm:$0x1]
        %v10493 = vld [vmem:[%s4261 + $0x24] sm:$0xf]
        %v10494 = vld [vmem:[%s4261 + $0x28] sm:$0xf]
        %v10495 = vld [vmem:[%s4261 + $0x2c] sm:$0x1]
        %v10496 = vld [vmem:[%s4261 + $0x30] sm:$0xf]
        %v10497 = vld [vmem:[%s4261 + $0x34] sm:$0xf]
        %v10498 = vld [vmem:[%s4261 + $0x38] sm:$0x1]
        %v10499 = vld [vmem:[%s4261 + $0x3c] sm:$0xf]
        %v10500 = vld [vmem:[%s4261 + $0x40] sm:$0xf]
        %v10501 = vld [vmem:[%s4261 + $0x44] sm:$0x1]
        %v10502 = vld [vmem:[%s4261 + $0x48] sm:$0xf]
        %v10503 = vld [vmem:[%s4261 + $0x4c] sm:$0xf]
        %v10504 = vld [vmem:[%s4261 + $0x50] sm:$0x1]
        %v10505 = vld [vmem:[%s4261 + $0x54] sm:$0xf]
        %v10506 = vld [vmem:[%s4261 + $0x58] sm:$0xf]
        %v10507 = vld [vmem:[%s4261 + $0x5c] sm:$0x1]
        %v10508 = vld [vmem:[%s4261 + $0x60] sm:$0xf]
        %v10509 = vld [vmem:[%s4261 + $0x64] sm:$0xf]
        %v10510 = vld [vmem:[%s4261 + $0x68] sm:$0x1]
        %v10511 = vld [vmem:[%s4261 + $0x6c] sm:$0xf]
        %v10512 = vld [vmem:[%s4261 + $0x70] sm:$0xf]
        %v10513 = vld [vmem:[%s4261 + $0x74] sm:$0x1]
        %v10514 = vld [vmem:[%s4261 + $0x78] sm:$0xf]
        %v10515 = vld [vmem:[%s4261 + $0x7c] sm:$0xf]
        %v10516 = vld [vmem:[%s4261 + $0x80] sm:$0x1]
        %v10517 = vld [vmem:[%s4261 + $0x84] sm:$0xf]
        %v10518 = vld [vmem:[%s4261 + $0x88] sm:$0xf]
        %v10519 = vld [vmem:[%s4261 + $0x8c] sm:$0x1]
        %v10520 = vld [vmem:[%s4261 + $0x90] sm:$0xf]
        %v10521 = vld [vmem:[%s4261 + $0x94] sm:$0xf]
        %v10522 = vld [vmem:[%s4261 + $0x98] sm:$0x1]
        %v10523 = vld [vmem:[%s4261 + $0x9c] sm:$0xf]
        %v10524 = vld [vmem:[%s4261 + $0xa0] sm:$0xf]
        %v10525 = vld [vmem:[%s4261 + $0xa4] sm:$0x1]
        %v10526 = vld [vmem:[%s4261 + $0xa8] sm:$0xf]
        %v10527 = vld [vmem:[%s4261 + $0xac] sm:$0xf]
        %v10528 = vld [vmem:[%s4261 + $0xb0] sm:$0x1]
        %v10529 = vld [vmem:[%s4261 + $0xb4] sm:$0xf]
        %v10530 = vld [vmem:[%s4261 + $0xb8] sm:$0xf]
        %v10531 = vld [vmem:[%s4261 + $0xbc] sm:$0x1]
        %v10533 = vshrl.u32 %v10484, 16
        %v10535 = vrot.slane %v10533, 4
        %v10536 = vshll.u32 %v10484, 16
        %v10538 = vrot.slane %v10536, 5
        %v10539 = vor.u32 %v10535, %v10538
        %v10540 = vrot.slane %v10539, 4
        %v10542 = vshll.u32 %v10485, 16
        %v10544 = vrot.slane %v10542, 5
        %v10545 = vsel %vm1158, %v10540, %v10544
        %v10546 = vshrl.u32 %v10485, 16
        %v10548 = vrot.slane %v10546, 4
        %v10549 = vor.u32 %v10548, %v10544
        %v10550 = vrot.slane %v10549, 4
        %v10552 = vshll.u32 %v10486, 16
        %v10554 = vrot.slane %v10552, 5
        %v10555 = vsel %vm1158, %v10550, %v10554
        %v10557 = vshrl.u32 %v10487, 16
        %v10559 = vrot.slane %v10557, 4
        %v10560 = vshll.u32 %v10487, 16
        %v10562 = vrot.slane %v10560, 5
        %v10563 = vor.u32 %v10559, %v10562
        %v10564 = vrot.slane %v10563, 4
        %v10566 = vshll.u32 %v10488, 16
        %v10568 = vrot.slane %v10566, 5
        %v10569 = vsel %vm1158, %v10564, %v10568
        %v10570 = vshrl.u32 %v10488, 16
        %v10572 = vrot.slane %v10570, 4
        %v10573 = vor.u32 %v10572, %v10568
        %v10574 = vrot.slane %v10573, 4
        %v10576 = vshll.u32 %v10489, 16
        %v10578 = vrot.slane %v10576, 5
        %v10579 = vsel %vm1158, %v10574, %v10578
        %v10581 = vshrl.u32 %v10490, 16
        %v10583 = vrot.slane %v10581, 4
        %v10584 = vshll.u32 %v10490, 16
        %v10586 = vrot.slane %v10584, 5
        %v10587 = vor.u32 %v10583, %v10586
        %v10588 = vrot.slane %v10587, 4
        %v10590 = vshll.u32 %v10491, 16
        %v10592 = vrot.slane %v10590, 5
        %v10593 = vsel %vm1158, %v10588, %v10592
        %v10594 = vshrl.u32 %v10491, 16
        %v10596 = vrot.slane %v10594, 4
        %v10597 = vor.u32 %v10596, %v10592
        %v10598 = vrot.slane %v10597, 4
        %v10600 = vshll.u32 %v10492, 16
        %v10602 = vrot.slane %v10600, 5
        %v10603 = vsel %vm1158, %v10598, %v10602
        %v10605 = vshrl.u32 %v10493, 16
        %v10607 = vrot.slane %v10605, 4
        %v10608 = vshll.u32 %v10493, 16
        %v10610 = vrot.slane %v10608, 5
        %v10611 = vor.u32 %v10607, %v10610
        %v10612 = vrot.slane %v10611, 4
        %v10614 = vshll.u32 %v10494, 16
        %v10616 = vrot.slane %v10614, 5
        %v10617 = vsel %vm1158, %v10612, %v10616
        %v10618 = vshrl.u32 %v10494, 16
        %v10620 = vrot.slane %v10618, 4
        %v10621 = vor.u32 %v10620, %v10616
        %v10622 = vrot.slane %v10621, 4
        %v10624 = vshll.u32 %v10495, 16
        %v10626 = vrot.slane %v10624, 5
        %v10627 = vsel %vm1158, %v10622, %v10626
        %v10629 = vshrl.u32 %v10496, 16
        %v10631 = vrot.slane %v10629, 4
        %v10632 = vshll.u32 %v10496, 16
        %v10634 = vrot.slane %v10632, 5
        %v10635 = vor.u32 %v10631, %v10634
        %v10636 = vrot.slane %v10635, 4
        %v10638 = vshll.u32 %v10497, 16
        %v10640 = vrot.slane %v10638, 5
        %v10641 = vsel %vm1158, %v10636, %v10640
        %v10642 = vshrl.u32 %v10497, 16
        %v10644 = vrot.slane %v10642, 4
        %v10645 = vor.u32 %v10644, %v10640
        %v10646 = vrot.slane %v10645, 4
        %v10648 = vshll.u32 %v10498, 16
        %v10650 = vrot.slane %v10648, 5
        %v10651 = vsel %vm1158, %v10646, %v10650
        %v10653 = vshrl.u32 %v10499, 16
        %v10655 = vrot.slane %v10653, 4
        %v10656 = vshll.u32 %v10499, 16
        %v10658 = vrot.slane %v10656, 5
        %v10659 = vor.u32 %v10655, %v10658
        %v10660 = vrot.slane %v10659, 4
        %v10662 = vshll.u32 %v10500, 16
        %v10664 = vrot.slane %v10662, 5
        %v10665 = vsel %vm1158, %v10660, %v10664
        %v10666 = vshrl.u32 %v10500, 16
        %v10668 = vrot.slane %v10666, 4
        %v10669 = vor.u32 %v10668, %v10664
        %v10670 = vrot.slane %v10669, 4
        %v10672 = vshll.u32 %v10501, 16
        %v10674 = vrot.slane %v10672, 5
        %v10675 = vsel %vm1158, %v10670, %v10674
        %v10677 = vshrl.u32 %v10502, 16
        %v10679 = vrot.slane %v10677, 4
        %v10680 = vshll.u32 %v10502, 16
        %v10682 = vrot.slane %v10680, 5
        %v10683 = vor.u32 %v10679, %v10682
        %v10684 = vrot.slane %v10683, 4
        %v10686 = vshll.u32 %v10503, 16
        %v10688 = vrot.slane %v10686, 5
        %v10689 = vsel %vm1158, %v10684, %v10688
        %v10690 = vshrl.u32 %v10503, 16
        %v10692 = vrot.slane %v10690, 4
        %v10693 = vor.u32 %v10692, %v10688
        %v10694 = vrot.slane %v10693, 4
        %v10696 = vshll.u32 %v10504, 16
        %v10698 = vrot.slane %v10696, 5
        %v10699 = vsel %vm1158, %v10694, %v10698
        %v10701 = vshrl.u32 %v10505, 16
        %v10703 = vrot.slane %v10701, 4
        %v10704 = vshll.u32 %v10505, 16
        %v10706 = vrot.slane %v10704, 5
        %v10707 = vor.u32 %v10703, %v10706
        %v10708 = vrot.slane %v10707, 4
        %v10710 = vshll.u32 %v10506, 16
        %v10712 = vrot.slane %v10710, 5
        %v10713 = vsel %vm1158, %v10708, %v10712
        %v10714 = vshrl.u32 %v10506, 16
        %v10716 = vrot.slane %v10714, 4
        %v10717 = vor.u32 %v10716, %v10712
        %v10718 = vrot.slane %v10717, 4
        %v10720 = vshll.u32 %v10507, 16
        %v10722 = vrot.slane %v10720, 5
        %v10723 = vsel %vm1158, %v10718, %v10722
        %v10725 = vshrl.u32 %v10508, 16
        %v10727 = vrot.slane %v10725, 4
        %v10728 = vshll.u32 %v10508, 16
        %v10730 = vrot.slane %v10728, 5
        %v10731 = vor.u32 %v10727, %v10730
        %v10732 = vrot.slane %v10731, 4
        %v10734 = vshll.u32 %v10509, 16
        %v10736 = vrot.slane %v10734, 5
        %v10737 = vsel %vm1158, %v10732, %v10736
        %v10738 = vshrl.u32 %v10509, 16
        %v10740 = vrot.slane %v10738, 4
        %v10741 = vor.u32 %v10740, %v10736
        %v10742 = vrot.slane %v10741, 4
        %v10744 = vshll.u32 %v10510, 16
        %v10746 = vrot.slane %v10744, 5
        %v10747 = vsel %vm1158, %v10742, %v10746
        %v10749 = vshrl.u32 %v10511, 16
        %v10751 = vrot.slane %v10749, 4
        %v10752 = vshll.u32 %v10511, 16
        %v10754 = vrot.slane %v10752, 5
        %v10755 = vor.u32 %v10751, %v10754
        %v10756 = vrot.slane %v10755, 4
        %v10758 = vshll.u32 %v10512, 16
        %v10760 = vrot.slane %v10758, 5
        %v10761 = vsel %vm1158, %v10756, %v10760
        %v10762 = vshrl.u32 %v10512, 16
        %v10764 = vrot.slane %v10762, 4
        %v10765 = vor.u32 %v10764, %v10760
        %v10766 = vrot.slane %v10765, 4
        %v10768 = vshll.u32 %v10513, 16
        %v10770 = vrot.slane %v10768, 5
        %v10771 = vsel %vm1158, %v10766, %v10770
        %v10773 = vshrl.u32 %v10514, 16
        %v10775 = vrot.slane %v10773, 4
        %v10776 = vshll.u32 %v10514, 16
        %v10778 = vrot.slane %v10776, 5
        %v10779 = vor.u32 %v10775, %v10778
        %v10780 = vrot.slane %v10779, 4
        %v10782 = vshll.u32 %v10515, 16
        %v10784 = vrot.slane %v10782, 5
        %v10785 = vsel %vm1158, %v10780, %v10784
        %v10786 = vshrl.u32 %v10515, 16
        %v10788 = vrot.slane %v10786, 4
        %v10789 = vor.u32 %v10788, %v10784
        %v10790 = vrot.slane %v10789, 4
        %v10792 = vshll.u32 %v10516, 16
        %v10794 = vrot.slane %v10792, 5
        %v10795 = vsel %vm1158, %v10790, %v10794
        %v10797 = vshrl.u32 %v10517, 16
        %v10799 = vrot.slane %v10797, 4
        %v10800 = vshll.u32 %v10517, 16
        %v10802 = vrot.slane %v10800, 5
        %v10803 = vor.u32 %v10799, %v10802
        %v10804 = vrot.slane %v10803, 4
        %v10806 = vshll.u32 %v10518, 16
        %v10808 = vrot.slane %v10806, 5
        %v10809 = vsel %vm1158, %v10804, %v10808
        %v10810 = vshrl.u32 %v10518, 16
        %v10812 = vrot.slane %v10810, 4
        %v10813 = vor.u32 %v10812, %v10808
        %v10814 = vrot.slane %v10813, 4
        %v10816 = vshll.u32 %v10519, 16
        %v10818 = vrot.slane %v10816, 5
        %v10819 = vsel %vm1158, %v10814, %v10818
        %v10821 = vshrl.u32 %v10520, 16
        %v10823 = vrot.slane %v10821, 4
        %v10824 = vshll.u32 %v10520, 16
        %v10826 = vrot.slane %v10824, 5
        %v10827 = vor.u32 %v10823, %v10826
        %v10828 = vrot.slane %v10827, 4
        %v10830 = vshll.u32 %v10521, 16
        %v10832 = vrot.slane %v10830, 5
        %v10833 = vsel %vm1158, %v10828, %v10832
        %v10834 = vshrl.u32 %v10521, 16
        %v10836 = vrot.slane %v10834, 4
        %v10837 = vor.u32 %v10836, %v10832
        %v10838 = vrot.slane %v10837, 4
        %v10840 = vshll.u32 %v10522, 16
        %v10842 = vrot.slane %v10840, 5
        %v10843 = vsel %vm1158, %v10838, %v10842
        %v10845 = vshrl.u32 %v10523, 16
        %v10847 = vrot.slane %v10845, 4
        %v10848 = vshll.u32 %v10523, 16
        %v10850 = vrot.slane %v10848, 5
        %v10851 = vor.u32 %v10847, %v10850
        %v10852 = vrot.slane %v10851, 4
        %v10854 = vshll.u32 %v10524, 16
        %v10856 = vrot.slane %v10854, 5
        %v10857 = vsel %vm1158, %v10852, %v10856
        %v10858 = vshrl.u32 %v10524, 16
        %v10860 = vrot.slane %v10858, 4
        %v10861 = vor.u32 %v10860, %v10856
        %v10862 = vrot.slane %v10861, 4
        %v10864 = vshll.u32 %v10525, 16
        %v10866 = vrot.slane %v10864, 5
        %v10867 = vsel %vm1158, %v10862, %v10866
        %v10869 = vshrl.u32 %v10526, 16
        %v10871 = vrot.slane %v10869, 4
        %v10872 = vshll.u32 %v10526, 16
        %v10874 = vrot.slane %v10872, 5
        %v10875 = vor.u32 %v10871, %v10874
        %v10876 = vrot.slane %v10875, 4
        %v10878 = vshll.u32 %v10527, 16
        %v10880 = vrot.slane %v10878, 5
        %v10881 = vsel %vm1158, %v10876, %v10880
        %v10882 = vshrl.u32 %v10527, 16
        %v10884 = vrot.slane %v10882, 4
        %v10885 = vor.u32 %v10884, %v10880
        %v10886 = vrot.slane %v10885, 4
        %v10888 = vshll.u32 %v10528, 16
        %v10890 = vrot.slane %v10888, 5
        %v10891 = vsel %vm1158, %v10886, %v10890
        %v10893 = vshrl.u32 %v10529, 16
        %v10895 = vrot.slane %v10893, 4
        %v10896 = vshll.u32 %v10529, 16
        %v10898 = vrot.slane %v10896, 5
        %v10899 = vor.u32 %v10895, %v10898
        %v10900 = vrot.slane %v10899, 4
        %v10902 = vshll.u32 %v10530, 16
        %v10904 = vrot.slane %v10902, 5
        %v10905 = vsel %vm1158, %v10900, %v10904
        %v10906 = vshrl.u32 %v10530, 16
        %v10908 = vrot.slane %v10906, 4
        %v10909 = vor.u32 %v10908, %v10904
        %v10910 = vrot.slane %v10909, 4
        %v10912 = vshll.u32 %v10531, 16
        %v10914 = vrot.slane %v10912, 5
        %v10915 = vsel %vm1158, %v10910, %v10914
        %s10916 = scalar_lea.vmem [#allocation8], 448
        %v10917 = vld [vmem:[%s10916] sm:$0xf]
        %v10918 = vld [vmem:[%s10916 + $0x4] sm:$0xf]
        %v10919 = vld [vmem:[%s10916 + $0x8] sm:$0xf]
        %v10920 = vld [vmem:[%s10916 + $0xc] sm:$0xf]
        %v10921 = vld [vmem:[%s10916 + $0x10] sm:$0xf]
        %v10922 = vld [vmem:[%s10916 + $0x14] sm:$0xf]
        %v10923 = vld [vmem:[%s10916 + $0x18] sm:$0xf]
        %v10924 = vld [vmem:[%s10916 + $0x1c] sm:$0xf]
        %v10925 = vld [vmem:[%s10916 + $0x20] sm:$0xf]
        %v10926 = vld [vmem:[%s10916 + $0x24] sm:$0xf]
        %v10927 = vld [vmem:[%s10916 + $0x28] sm:$0xf]
        %v10928 = vld [vmem:[%s10916 + $0x2c] sm:$0xf]
        %v10929 = vld [vmem:[%s10916 + $0x30] sm:$0xf]
        %v10930 = vld [vmem:[%s10916 + $0x34] sm:$0xf]
        %v10931 = vld [vmem:[%s10916 + $0x38] sm:$0xf]
        %v10932 = vld [vmem:[%s10916 + $0x3c] sm:$0xf]
        %v10933 = vunpack.c.l.b16 %v10545
        %v10934 = vunpack.c.l.b16 %v10555
        %v10935 = vunpack.c.l.b16 %v10569
        %v10936 = vunpack.c.l.b16 %v10579
        %v10937 = vunpack.c.l.b16 %v10593
        %v10938 = vunpack.c.l.b16 %v10603
        %v10939 = vunpack.c.l.b16 %v10617
        %v10940 = vunpack.c.l.b16 %v10627
        %v10941 = vunpack.c.l.b16 %v10641
        %v10942 = vunpack.c.l.b16 %v10651
        %v10943 = vunpack.c.l.b16 %v10665
        %v10944 = vunpack.c.l.b16 %v10675
        %v10945 = vunpack.c.l.b16 %v10689
        %v10946 = vunpack.c.l.b16 %v10699
        %v10947 = vunpack.c.l.b16 %v10713
        %v10948 = vunpack.c.l.b16 %v10723
        %v10949 = vunpack.c.l.b16 %v10737
        %v10950 = vunpack.c.l.b16 %v10747
        %v10951 = vunpack.c.l.b16 %v10761
        %v10952 = vunpack.c.l.b16 %v10771
        %v10953 = vunpack.c.l.b16 %v10785
        %v10954 = vunpack.c.l.b16 %v10795
        %v10955 = vunpack.c.l.b16 %v10809
        %v10956 = vunpack.c.l.b16 %v10819
        %v10957 = vunpack.c.l.b16 %v10833
        %v10958 = vunpack.c.l.b16 %v10843
        %v10959 = vunpack.c.l.b16 %v10857
        %v10960 = vunpack.c.l.b16 %v10867
        %v10961 = vunpack.c.l.b16 %v10881
        %v10962 = vunpack.c.l.b16 %v10891
        %v10963 = vunpack.c.l.b16 %v10905
        %v10964 = vunpack.c.l.b16 %v10915
        %v10965 = vpack.c.b16 %v10934, %v10933
        %v10966 = vpack.c.b16 %v10936, %v10935
        %v10967 = vpack.c.b16 %v10938, %v10937
        %v10968 = vpack.c.b16 %v10940, %v10939
        %v10969 = vpack.c.b16 %v10942, %v10941
        %v10970 = vpack.c.b16 %v10944, %v10943
        %v10971 = vpack.c.b16 %v10946, %v10945
        %v10972 = vpack.c.b16 %v10948, %v10947
        %v10973 = vpack.c.b16 %v10950, %v10949
        %v10974 = vpack.c.b16 %v10952, %v10951
        %v10975 = vpack.c.b16 %v10954, %v10953
        %v10976 = vpack.c.b16 %v10956, %v10955
        %v10977 = vpack.c.b16 %v10958, %v10957
        %v10978 = vpack.c.b16 %v10960, %v10959
        %v10979 = vpack.c.b16 %v10962, %v10961
        %v10980 = vpack.c.b16 %v10964, %v10963
        %v11013 = vunpack.c.l.b16 %v10917
        %v11014 = vunpack.c.l.b16 %v10918
        %v11015 = vunpack.c.l.b16 %v10919
        %v11016 = vunpack.c.l.b16 %v10920
        %v11017 = vunpack.c.l.b16 %v10921
        %v11018 = vunpack.c.l.b16 %v10922
        %v11019 = vunpack.c.l.b16 %v10923
        %v11020 = vunpack.c.l.b16 %v10924
        %v11021 = vunpack.c.l.b16 %v10925
        %v11022 = vunpack.c.l.b16 %v10926
        %v11023 = vunpack.c.l.b16 %v10927
        %v11024 = vunpack.c.l.b16 %v10928
        %v11025 = vunpack.c.l.b16 %v10929
        %v11026 = vunpack.c.l.b16 %v10930
        %v11027 = vunpack.c.l.b16 %v10931
        %v11028 = vunpack.c.l.b16 %v10932
        %v11029 = vpack.c.b16 %v11014, %v11013
        %v11030 = vpack.c.b16 %v11016, %v11015
        %v11031 = vpack.c.b16 %v11018, %v11017
        %v11032 = vpack.c.b16 %v11020, %v11019
        %v11033 = vpack.c.b16 %v11022, %v11021
        %v11034 = vpack.c.b16 %v11024, %v11023
        %v11035 = vpack.c.b16 %v11026, %v11025
        %v11036 = vpack.c.b16 %v11028, %v11027
        %11045 = vmatprep.subr.bf16.mxu0 0
        %11046 = vmatpush1.bf16.msra.mxu0 %v11029
        %11047 = vmatprep.subr.bf16.mxu0 0
        %11048 = vmatpush1.bf16.msra.mxu0 %v11030
        %11049 = vmatprep.subr.bf16.mxu0 0
        %11050 = vmatpush1.bf16.msra.mxu0 %v11031
        %11051 = vmatprep.subr.bf16.mxu0 0
        %11052 = vmatpush1.bf16.msra.mxu0 %v11032
        %11053 = vmatprep.subr.bf16.mxu0 0
        %11054 = vmatpush1.bf16.msra.mxu0 %v11033
        %11055 = vmatprep.subr.bf16.mxu0 0
        %11056 = vmatpush1.bf16.msra.mxu0 %v11034
        %11057 = vmatprep.subr.bf16.mxu0 0
        %11058 = vmatpush1.bf16.msra.mxu0 %v11035
        %11059 = vmatprep.subr.bf16.mxu0 0
        %11060 = vmatpush1.bf16.msra.mxu0 %v11036
        %11061 = vmatprep.subr.bf16.mxu0 0
        %11062 = vmatpush1.bf16.msra.mxu0 0
        %11063 = vmatprep.subr.bf16.mxu0 0
        %11064 = vmatpush1.bf16.msra.mxu0 0
        %11065 = vmatprep.subr.bf16.mxu0 0
        %11066 = vmatpush1.bf16.msra.mxu0 0
        %11067 = vmatprep.subr.bf16.mxu0 0
        %11068 = vmatpush1.bf16.msra.mxu0 0
        %11069 = vmatprep.subr.bf16.mxu0 0
        %11070 = vmatpush1.bf16.msra.mxu0 0
        %11071 = vmatprep.subr.bf16.mxu0 0
        %11072 = vmatpush1.bf16.msra.mxu0 0
        %11073 = vmatprep.subr.bf16.mxu0 0
        %11074 = vmatpush1.bf16.msra.mxu0 0
        %11075 = vmatprep.subr.bf16.mxu0 0
        %11076 = vmatpush1.bf16.msra.mxu0 0
        %11077 = vmatprep.mubr.bf16.mxu0 0
        %11078 = vmatmul.mubr.bf16.gmra.mrb[0].mxu0 %v10965
        %v11079 = vpop.f32.mrb[0].mxu0
        %v11080 = vadd.f32 0.0, %v11079
        %v11081 = vpop.f32.mrb[0].mxu0
        %v11082 = vpop.f32.mrb[0].mxu0
        %v11083 = vadd.f32 0.0, %v11082
        %v11084 = vpop.f32.mrb[0].mxu0
        %11085 = vmatprep.mubr.bf16.mxu0 0
        %11086 = vmatmul.mubr.bf16.gmra.mrb[0].mxu0 %v10966
        %v11087 = vpop.f32.mrb[0].mxu0
        %v11088 = vadd.f32 0.0, %v11087
        %v11089 = vpop.f32.mrb[0].mxu0
        %v11090 = vpop.f32.mrb[0].mxu0
        %v11091 = vadd.f32 0.0, %v11090
        %v11092 = vpop.f32.mrb[0].mxu0
        %11093 = vmatprep.mubr.bf16.mxu0 0
        %11094 = vmatmul.mubr.bf16.gmra.mrb[0].mxu0 %v10967
        %v11095 = vpop.f32.mrb[0].mxu0
        %v11096 = vadd.f32 0.0, %v11095
        %v11097 = vpop.f32.mrb[0].mxu0
        %v11098 = vpop.f32.mrb[0].mxu0
        %v11099 = vadd.f32 0.0, %v11098
        %v11100 = vpop.f32.mrb[0].mxu0
        %11101 = vmatprep.mubr.bf16.mxu0 0
        %11102 = vmatmul.mubr.bf16.gmra.mrb[0].mxu0 %v10968
        %v11103 = vpop.f32.mrb[0].mxu0
        %v11104 = vadd.f32 0.0, %v11103
        %v11105 = vpop.f32.mrb[0].mxu0
        %v11106 = vpop.f32.mrb[0].mxu0
        %v11107 = vadd.f32 0.0, %v11106
        %v11108 = vpop.f32.mrb[0].mxu0
        %11109 = vmatprep.mubr.bf16.mxu0 0
        %11110 = vmatmul.mubr.bf16.gmra.mrb[0].mxu0 %v10969
        %v11111 = vpop.f32.mrb[0].mxu0
        %v11112 = vadd.f32 0.0, %v11111
        %v11113 = vpop.f32.mrb[0].mxu0
        %v11114 = vpop.f32.mrb[0].mxu0
        %v11115 = vadd.f32 0.0, %v11114
        %v11116 = vpop.f32.mrb[0].mxu0
        %11117 = vmatprep.mubr.bf16.mxu0 0
        %11118 = vmatmul.mubr.bf16.gmra.mrb[0].mxu0 %v10970
        %v11119 = vpop.f32.mrb[0].mxu0
        %v11120 = vadd.f32 0.0, %v11119
        %v11121 = vpop.f32.mrb[0].mxu0
        %v11122 = vpop.f32.mrb[0].mxu0
        %v11123 = vadd.f32 0.0, %v11122
        %v11124 = vpop.f32.mrb[0].mxu0
        %11125 = vmatprep.mubr.bf16.mxu0 0
        %11126 = vmatmul.mubr.bf16.gmra.mrb[0].mxu0 %v10971
        %v11127 = vpop.f32.mrb[0].mxu0
        %v11128 = vadd.f32 0.0, %v11127
        %v11129 = vpop.f32.mrb[0].mxu0
        %v11130 = vpop.f32.mrb[0].mxu0
        %v11131 = vadd.f32 0.0, %v11130
        %v11132 = vpop.f32.mrb[0].mxu0
        %11133 = vmatprep.mubr.bf16.mxu0 0
        %11134 = vmatmul.mubr.bf16.gmra.mrb[0].mxu0 %v10972
        %v11135 = vpop.f32.mrb[0].mxu0
        %v11136 = vadd.f32 0.0, %v11135
        %v11137 = vpop.f32.mrb[0].mxu0
        %v11138 = vpop.f32.mrb[0].mxu0
        %v11139 = vadd.f32 0.0, %v11138
        %v11140 = vpop.f32.mrb[0].mxu0
        %11141 = vmatprep.mubr.bf16.mxu0 0
        %11142 = vmatmul.mubr.bf16.gmra.mrb[0].mxu0 %v10973
        %v11143 = vpop.f32.mrb[0].mxu0
        %v11144 = vadd.f32 0.0, %v11143
        %v11145 = vpop.f32.mrb[0].mxu0
        %v11146 = vpop.f32.mrb[0].mxu0
        %v11147 = vadd.f32 0.0, %v11146
        %v11148 = vpop.f32.mrb[0].mxu0
        %11149 = vmatprep.mubr.bf16.mxu0 0
        %11150 = vmatmul.mubr.bf16.gmra.mrb[0].mxu0 %v10974
        %v11151 = vpop.f32.mrb[0].mxu0
        %v11152 = vadd.f32 0.0, %v11151
        %v11153 = vpop.f32.mrb[0].mxu0
        %v11154 = vpop.f32.mrb[0].mxu0
        %v11155 = vadd.f32 0.0, %v11154
        %v11156 = vpop.f32.mrb[0].mxu0
        %11157 = vmatprep.mubr.bf16.mxu0 0
        %11158 = vmatmul.mubr.bf16.gmra.mrb[0].mxu0 %v10975
        %v11159 = vpop.f32.mrb[0].mxu0
        %v11160 = vadd.f32 0.0, %v11159
        %v11161 = vpop.f32.mrb[0].mxu0
        %v11162 = vpop.f32.mrb[0].mxu0
        %v11163 = vadd.f32 0.0, %v11162
        %v11164 = vpop.f32.mrb[0].mxu0
        %11165 = vmatprep.mubr.bf16.mxu0 0
        %11166 = vmatmul.mubr.bf16.gmra.mrb[0].mxu0 %v10976
        %v11167 = vpop.f32.mrb[0].mxu0
        %v11168 = vadd.f32 0.0, %v11167
        %v11169 = vpop.f32.mrb[0].mxu0
        %v11170 = vpop.f32.mrb[0].mxu0
        %v11171 = vadd.f32 0.0, %v11170
        %v11172 = vpop.f32.mrb[0].mxu0
        %11173 = vmatprep.mubr.bf16.mxu0 0
        %11174 = vmatmul.mubr.bf16.gmra.mrb[0].mxu0 %v10977
        %v11175 = vpop.f32.mrb[0].mxu0
        %v11176 = vadd.f32 0.0, %v11175
        %v11177 = vpop.f32.mrb[0].mxu0
        %v11178 = vpop.f32.mrb[0].mxu0
        %v11179 = vadd.f32 0.0, %v11178
        %v11180 = vpop.f32.mrb[0].mxu0
        %11181 = vmatprep.mubr.bf16.mxu0 0
        %11182 = vmatmul.mubr.bf16.gmra.mrb[0].mxu0 %v10978
        %v11183 = vpop.f32.mrb[0].mxu0
        %v11184 = vadd.f32 0.0, %v11183
        %v11185 = vpop.f32.mrb[0].mxu0
        %v11186 = vpop.f32.mrb[0].mxu0
        %v11187 = vadd.f32 0.0, %v11186
        %v11188 = vpop.f32.mrb[0].mxu0
        %11189 = vmatprep.mubr.bf16.mxu0 0
        %11190 = vmatmul.mubr.bf16.gmra.mrb[0].mxu0 %v10979
        %v11191 = vpop.f32.mrb[0].mxu0
        %v11192 = vadd.f32 0.0, %v11191
        %v11193 = vpop.f32.mrb[0].mxu0
        %v11194 = vpop.f32.mrb[0].mxu0
        %v11195 = vadd.f32 0.0, %v11194
        %v11196 = vpop.f32.mrb[0].mxu0
        %11197 = vmatprep.mubr.bf16.mxu0 0
        %11198 = vmatmul.mubr.bf16.gmra.mrb[0].mxu0 %v10980
        %v11199 = vpop.f32.mrb[0].mxu0
        %v11200 = vadd.f32 0.0, %v11199
        %v11201 = vpop.f32.mrb[0].mxu0
        %v11202 = vpop.f32.mrb[0].mxu0
        %v11203 = vadd.f32 0.0, %v11202
        %v11204 = vpop.f32.mrb[0].mxu0
        %11205 = vdwg.mxu0
        %v11206 = vadd.f32 %v10452, %v11080
        %v11207 = vadd.f32 %v10453, %v11083
        %v11208 = vadd.f32 %v10454, %v11088
        %v11209 = vadd.f32 %v10455, %v11091
        %v11210 = vadd.f32 %v10456, %v11096
        %v11211 = vadd.f32 %v10457, %v11099
        %v11212 = vadd.f32 %v10458, %v11104
        %v11213 = vadd.f32 %v10459, %v11107
        %v11214 = vadd.f32 %v10460, %v11112
        %v11215 = vadd.f32 %v10461, %v11115
        %v11216 = vadd.f32 %v10462, %v11120
        %v11217 = vadd.f32 %v10463, %v11123
        %v11218 = vadd.f32 %v10464, %v11128
        %v11219 = vadd.f32 %v10465, %v11131
        %v11220 = vadd.f32 %v10466, %v11136
        %v11221 = vadd.f32 %v10467, %v11139
        %v11222 = vadd.f32 %v10468, %v11144
        %v11223 = vadd.f32 %v10469, %v11147
        %v11224 = vadd.f32 %v10470, %v11152
        %v11225 = vadd.f32 %v10471, %v11155
        %v11226 = vadd.f32 %v10472, %v11160
        %v11227 = vadd.f32 %v10473, %v11163
        %v11228 = vadd.f32 %v10474, %v11168
        %v11229 = vadd.f32 %v10475, %v11171
        %v11230 = vadd.f32 %v10476, %v11176
        %v11231 = vadd.f32 %v10477, %v11179
        %v11232 = vadd.f32 %v10478, %v11184
        %v11233 = vadd.f32 %v10479, %v11187
        %v11234 = vadd.f32 %v10480, %v11192
        %v11235 = vadd.f32 %v10481, %v11195
        %v11236 = vadd.f32 %v10482, %v11200
        %v11237 = vadd.f32 %v10483, %v11203
        %v11238 = vld [vmem:[%s4261] sm:$0xe]
        %v11239 = vld [vmem:[%s4261 + $0xc] sm:$0xe]
        %v11240 = vld [vmem:[%s4261 + $0x18] sm:$0xe]
        %v11241 = vld [vmem:[%s4261 + $0x24] sm:$0xe]
        %v11242 = vld [vmem:[%s4261 + $0x30] sm:$0xe]
        %v11243 = vld [vmem:[%s4261 + $0x3c] sm:$0xe]
        %v11244 = vld [vmem:[%s4261 + $0x48] sm:$0xe]
        %v11245 = vld [vmem:[%s4261 + $0x54] sm:$0xe]
        %v11246 = vld [vmem:[%s4261 + $0x60] sm:$0xe]
        %v11247 = vld [vmem:[%s4261 + $0x6c] sm:$0xe]
        %v11248 = vld [vmem:[%s4261 + $0x78] sm:$0xe]
        %v11249 = vld [vmem:[%s4261 + $0x84] sm:$0xe]
        %v11250 = vld [vmem:[%s4261 + $0x90] sm:$0xe]
        %v11251 = vld [vmem:[%s4261 + $0x9c] sm:$0xe]
        %v11252 = vld [vmem:[%s4261 + $0xa8] sm:$0xe]
        %v11253 = vld [vmem:[%s4261 + $0xb4] sm:$0xe]
        %v11302 = vrot.slane %v11238, 5
        %v11303 = vrot.slane %v11302, 4
        %v11304 = vrot.slane %v10485, 5
        %v11305 = vsel %vm2188, %v11303, %v11304
        %v11306 = vrot.slane %v11304, 4
        %v11307 = vrot.slane %v10486, 5
        %v11308 = vsel %vm2188, %v11306, %v11307
        %v11309 = vrot.slane %v11239, 5
        %v11310 = vrot.slane %v11309, 4
        %v11311 = vrot.slane %v10488, 5
        %v11312 = vsel %vm2188, %v11310, %v11311
        %v11313 = vrot.slane %v11311, 4
        %v11314 = vrot.slane %v10489, 5
        %v11315 = vsel %vm2188, %v11313, %v11314
        %v11316 = vrot.slane %v11240, 5
        %v11317 = vrot.slane %v11316, 4
        %v11318 = vrot.slane %v10491, 5
        %v11319 = vsel %vm2188, %v11317, %v11318
        %v11320 = vrot.slane %v11318, 4
        %v11321 = vrot.slane %v10492, 5
        %v11322 = vsel %vm2188, %v11320, %v11321
        %v11323 = vrot.slane %v11241, 5
        %v11324 = vrot.slane %v11323, 4
        %v11325 = vrot.slane %v10494, 5
        %v11326 = vsel %vm2188, %v11324, %v11325
        %v11327 = vrot.slane %v11325, 4
        %v11328 = vrot.slane %v10495, 5
        %v11329 = vsel %vm2188, %v11327, %v11328
        %v11330 = vrot.slane %v11242, 5
        %v11331 = vrot.slane %v11330, 4
        %v11332 = vrot.slane %v10497, 5
        %v11333 = vsel %vm2188, %v11331, %v11332
        %v11334 = vrot.slane %v11332, 4
        %v11335 = vrot.slane %v10498, 5
        %v11336 = vsel %vm2188, %v11334, %v11335
        %v11337 = vrot.slane %v11243, 5
        %v11338 = vrot.slane %v11337, 4
        %v11339 = vrot.slane %v10500, 5
        %v11340 = vsel %vm2188, %v11338, %v11339
        %v11341 = vrot.slane %v11339, 4
        %v11342 = vrot.slane %v10501, 5
        %v11343 = vsel %vm2188, %v11341, %v11342
        %v11344 = vrot.slane %v11244, 5
        %v11345 = vrot.slane %v11344, 4
        %v11346 = vrot.slane %v10503, 5
        %v11347 = vsel %vm2188, %v11345, %v11346
        %v11348 = vrot.slane %v11346, 4
        %v11349 = vrot.slane %v10504, 5
        %v11350 = vsel %vm2188, %v11348, %v11349
        %v11351 = vrot.slane %v11245, 5
        %v11352 = vrot.slane %v11351, 4
        %v11353 = vrot.slane %v10506, 5
        %v11354 = vsel %vm2188, %v11352, %v11353
        %v11355 = vrot.slane %v11353, 4
        %v11356 = vrot.slane %v10507, 5
        %v11357 = vsel %vm2188, %v11355, %v11356
        %v11358 = vrot.slane %v11246, 5
        %v11359 = vrot.slane %v11358, 4
        %v11360 = vrot.slane %v10509, 5
        %v11361 = vsel %vm2188, %v11359, %v11360
        %v11362 = vrot.slane %v11360, 4
        %v11363 = vrot.slane %v10510, 5
        %v11364 = vsel %vm2188, %v11362, %v11363
        %v11365 = vrot.slane %v11247, 5
        %v11366 = vrot.slane %v11365, 4
        %v11367 = vrot.slane %v10512, 5
        %v11368 = vsel %vm2188, %v11366, %v11367
        %v11369 = vrot.slane %v11367, 4
        %v11370 = vrot.slane %v10513, 5
        %v11371 = vsel %vm2188, %v11369, %v11370
        %v11372 = vrot.slane %v11248, 5
        %v11373 = vrot.slane %v11372, 4
        %v11374 = vrot.slane %v10515, 5
        %v11375 = vsel %vm2188, %v11373, %v11374
        %v11376 = vrot.slane %v11374, 4
        %v11377 = vrot.slane %v10516, 5
        %v11378 = vsel %vm2188, %v11376, %v11377
        %v11379 = vrot.slane %v11249, 5
        %v11380 = vrot.slane %v11379, 4
        %v11381 = vrot.slane %v10518, 5
        %v11382 = vsel %vm2188, %v11380, %v11381
        %v11383 = vrot.slane %v11381, 4
        %v11384 = vrot.slane %v10519, 5
        %v11385 = vsel %vm2188, %v11383, %v11384
        %v11386 = vrot.slane %v11250, 5
        %v11387 = vrot.slane %v11386, 4
        %v11388 = vrot.slane %v10521, 5
        %v11389 = vsel %vm2188, %v11387, %v11388
        %v11390 = vrot.slane %v11388, 4
        %v11391 = vrot.slane %v10522, 5
        %v11392 = vsel %vm2188, %v11390, %v11391
        %v11393 = vrot.slane %v11251, 5
        %v11394 = vrot.slane %v11393, 4
        %v11395 = vrot.slane %v10524, 5
        %v11396 = vsel %vm2188, %v11394, %v11395
        %v11397 = vrot.slane %v11395, 4
        %v11398 = vrot.slane %v10525, 5
        %v11399 = vsel %vm2188, %v11397, %v11398
        %v11400 = vrot.slane %v11252, 5
        %v11401 = vrot.slane %v11400, 4
        %v11402 = vrot.slane %v10527, 5
        %v11403 = vsel %vm2188, %v11401, %v11402
        %v11404 = vrot.slane %v11402, 4
        %v11405 = vrot.slane %v10528, 5
        %v11406 = vsel %vm2188, %v11404, %v11405
        %v11407 = vrot.slane %v11253, 5
        %v11408 = vrot.slane %v11407, 4
        %v11409 = vrot.slane %v10530, 5
        %v11410 = vsel %vm2188, %v11408, %v11409
        %v11411 = vrot.slane %v11409, 4
        %v11412 = vrot.slane %v10531, 5
        %v11413 = vsel %vm2188, %v11411, %v11412
        %s11414 = scalar_lea.vmem [#allocation8], 512
        %v11415 = vld [vmem:[%s11414] sm:$0xf]
        %v11416 = vld [vmem:[%s11414 + $0x4] sm:$0xf]
        %v11417 = vld [vmem:[%s11414 + $0x8] sm:$0xf]
        %v11418 = vld [vmem:[%s11414 + $0xc] sm:$0xf]
        %v11419 = vld [vmem:[%s11414 + $0x10] sm:$0xf]
        %v11420 = vld [vmem:[%s11414 + $0x14] sm:$0xf]
        %v11421 = vld [vmem:[%s11414 + $0x18] sm:$0xf]
        %v11422 = vld [vmem:[%s11414 + $0x1c] sm:$0xf]
        %v11423 = vld [vmem:[%s11414 + $0x20] sm:$0xf]
        %v11424 = vld [vmem:[%s11414 + $0x24] sm:$0xf]
        %v11425 = vld [vmem:[%s11414 + $0x28] sm:$0xf]
        %v11426 = vld [vmem:[%s11414 + $0x2c] sm:$0xf]
        %v11427 = vld [vmem:[%s11414 + $0x30] sm:$0xf]
        %v11428 = vld [vmem:[%s11414 + $0x34] sm:$0xf]
        %v11429 = vld [vmem:[%s11414 + $0x38] sm:$0xf]
        %v11430 = vld [vmem:[%s11414 + $0x3c] sm:$0xf]
        %v11431 = vunpack.c.l.b16 %v11305
        %v11432 = vunpack.c.l.b16 %v11308
        %v11433 = vunpack.c.l.b16 %v11312
        %v11434 = vunpack.c.l.b16 %v11315
        %v11435 = vunpack.c.l.b16 %v11319
        %v11436 = vunpack.c.l.b16 %v11322
        %v11437 = vunpack.c.l.b16 %v11326
        %v11438 = vunpack.c.l.b16 %v11329
        %v11439 = vunpack.c.l.b16 %v11333
        %v11440 = vunpack.c.l.b16 %v11336
        %v11441 = vunpack.c.l.b16 %v11340
        %v11442 = vunpack.c.l.b16 %v11343
        %v11443 = vunpack.c.l.b16 %v11347
        %v11444 = vunpack.c.l.b16 %v11350
        %v11445 = vunpack.c.l.b16 %v11354
        %v11446 = vunpack.c.l.b16 %v11357
        %v11447 = vunpack.c.l.b16 %v11361
        %v11448 = vunpack.c.l.b16 %v11364
        %v11449 = vunpack.c.l.b16 %v11368
        %v11450 = vunpack.c.l.b16 %v11371
        %v11451 = vunpack.c.l.b16 %v11375
        %v11452 = vunpack.c.l.b16 %v11378
        %v11453 = vunpack.c.l.b16 %v11382
        %v11454 = vunpack.c.l.b16 %v11385
        %v11455 = vunpack.c.l.b16 %v11389
        %v11456 = vunpack.c.l.b16 %v11392
        %v11457 = vunpack.c.l.b16 %v11396
        %v11458 = vunpack.c.l.b16 %v11399
        %v11459 = vunpack.c.l.b16 %v11403
        %v11460 = vunpack.c.l.b16 %v11406
        %v11461 = vunpack.c.l.b16 %v11410
        %v11462 = vunpack.c.l.b16 %v11413
        %v11463 = vpack.c.b16 %v11432, %v11431
        %v11464 = vpack.c.b16 %v11434, %v11433
        %v11465 = vpack.c.b16 %v11436, %v11435
        %v11466 = vpack.c.b16 %v11438, %v11437
        %v11467 = vpack.c.b16 %v11440, %v11439
        %v11468 = vpack.c.b16 %v11442, %v11441
        %v11469 = vpack.c.b16 %v11444, %v11443
        %v11470 = vpack.c.b16 %v11446, %v11445
        %v11471 = vpack.c.b16 %v11448, %v11447
        %v11472 = vpack.c.b16 %v11450, %v11449
        %v11473 = vpack.c.b16 %v11452, %v11451
        %v11474 = vpack.c.b16 %v11454, %v11453
        %v11475 = vpack.c.b16 %v11456, %v11455
        %v11476 = vpack.c.b16 %v11458, %v11457
        %v11477 = vpack.c.b16 %v11460, %v11459
        %v11478 = vpack.c.b16 %v11462, %v11461
        %v11511 = vunpack.c.l.b16 %v11415
        %v11512 = vunpack.c.l.b16 %v11416
        %v11513 = vunpack.c.l.b16 %v11417
        %v11514 = vunpack.c.l.b16 %v11418
        %v11515 = vunpack.c.l.b16 %v11419
        %v11516 = vunpack.c.l.b16 %v11420
        %v11517 = vunpack.c.l.b16 %v11421
        %v11518 = vunpack.c.l.b16 %v11422
        %v11519 = vunpack.c.l.b16 %v11423
        %v11520 = vunpack.c.l.b16 %v11424
        %v11521 = vunpack.c.l.b16 %v11425
        %v11522 = vunpack.c.l.b16 %v11426
        %v11523 = vunpack.c.l.b16 %v11427
        %v11524 = vunpack.c.l.b16 %v11428
        %v11525 = vunpack.c.l.b16 %v11429
        %v11526 = vunpack.c.l.b16 %v11430
        %v11527 = vpack.c.b16 %v11512, %v11511
        %v11528 = vpack.c.b16 %v11514, %v11513
        %v11529 = vpack.c.b16 %v11516, %v11515
        %v11530 = vpack.c.b16 %v11518, %v11517
        %v11531 = vpack.c.b16 %v11520, %v11519
        %v11532 = vpack.c.b16 %v11522, %v11521
        %v11533 = vpack.c.b16 %v11524, %v11523
        %v11534 = vpack.c.b16 %v11526, %v11525
        %11543 = vmatprep.subr.bf16.mxu0 0
        %11544 = vmatpush1.bf16.msra.mxu0 %v11527
        %11545 = vmatprep.subr.bf16.mxu0 0
        %11546 = vmatpush1.bf16.msra.mxu0 %v11528
        %11547 = vmatprep.subr.bf16.mxu0 0
        %11548 = vmatpush1.bf16.msra.mxu0 %v11529
        %11549 = vmatprep.subr.bf16.mxu0 0
        %11550 = vmatpush1.bf16.msra.mxu0 %v11530
        %11551 = vmatprep.subr.bf16.mxu0 0
        %11552 = vmatpush1.bf16.msra.mxu0 %v11531
        %11553 = vmatprep.subr.bf16.mxu0 0
        %11554 = vmatpush1.bf16.msra.mxu0 %v11532
        %11555 = vmatprep.subr.bf16.mxu0 0
        %11556 = vmatpush1.bf16.msra.mxu0 %v11533
        %11557 = vmatprep.subr.bf16.mxu0 0
        %11558 = vmatpush1.bf16.msra.mxu0 %v11534
        %11559 = vmatprep.subr.bf16.mxu0 0
        %11560 = vmatpush1.bf16.msra.mxu0 0
        %11561 = vmatprep.subr.bf16.mxu0 0
        %11562 = vmatpush1.bf16.msra.mxu0 0
        %11563 = vmatprep.subr.bf16.mxu0 0
        %11564 = vmatpush1.bf16.msra.mxu0 0
        %11565 = vmatprep.subr.bf16.mxu0 0
        %11566 = vmatpush1.bf16.msra.mxu0 0
        %11567 = vmatprep.subr.bf16.mxu0 0
        %11568 = vmatpush1.bf16.msra.mxu0 0
        %11569 = vmatprep.subr.bf16.mxu0 0
        %11570 = vmatpush1.bf16.msra.mxu0 0
        %11571 = vmatprep.subr.bf16.mxu0 0
        %11572 = vmatpush1.bf16.msra.mxu0 0
        %11573 = vmatprep.subr.bf16.mxu0 0
        %11574 = vmatpush1.bf16.msra.mxu0 0
        %11575 = vmatprep.mubr.bf16.mxu0 0
        %11576 = vmatmul.mubr.bf16.gmra.mrb[0].mxu0 %v11463
        %v11577 = vpop.f32.mrb[0].mxu0
        %v11578 = vadd.f32 0.0, %v11577
        %v11579 = vpop.f32.mrb[0].mxu0
        %v11580 = vpop.f32.mrb[0].mxu0
        %v11581 = vadd.f32 0.0, %v11580
        %v11582 = vpop.f32.mrb[0].mxu0
        %11583 = vmatprep.mubr.bf16.mxu0 0
        %11584 = vmatmul.mubr.bf16.gmra.mrb[0].mxu0 %v11464
        %v11585 = vpop.f32.mrb[0].mxu0
        %v11586 = vadd.f32 0.0, %v11585
        %v11587 = vpop.f32.mrb[0].mxu0
        %v11588 = vpop.f32.mrb[0].mxu0
        %v11589 = vadd.f32 0.0, %v11588
        %v11590 = vpop.f32.mrb[0].mxu0
        %11591 = vmatprep.mubr.bf16.mxu0 0
        %11592 = vmatmul.mubr.bf16.gmra.mrb[0].mxu0 %v11465
        %v11593 = vpop.f32.mrb[0].mxu0
        %v11594 = vadd.f32 0.0, %v11593
        %v11595 = vpop.f32.mrb[0].mxu0
        %v11596 = vpop.f32.mrb[0].mxu0
        %v11597 = vadd.f32 0.0, %v11596
        %v11598 = vpop.f32.mrb[0].mxu0
        %11599 = vmatprep.mubr.bf16.mxu0 0
        %11600 = vmatmul.mubr.bf16.gmra.mrb[0].mxu0 %v11466
        %v11601 = vpop.f32.mrb[0].mxu0
        %v11602 = vadd.f32 0.0, %v11601
        %v11603 = vpop.f32.mrb[0].mxu0
        %v11604 = vpop.f32.mrb[0].mxu0
        %v11605 = vadd.f32 0.0, %v11604
        %v11606 = vpop.f32.mrb[0].mxu0
        %11607 = vmatprep.mubr.bf16.mxu0 0
        %11608 = vmatmul.mubr.bf16.gmra.mrb[0].mxu0 %v11467
        %v11609 = vpop.f32.mrb[0].mxu0
        %v11610 = vadd.f32 0.0, %v11609
        %v11611 = vpop.f32.mrb[0].mxu0
        %v11612 = vpop.f32.mrb[0].mxu0
        %v11613 = vadd.f32 0.0, %v11612
        %v11614 = vpop.f32.mrb[0].mxu0
        %11615 = vmatprep.mubr.bf16.mxu0 0
        %11616 = vmatmul.mubr.bf16.gmra.mrb[0].mxu0 %v11468
        %v11617 = vpop.f32.mrb[0].mxu0
        %v11618 = vadd.f32 0.0, %v11617
        %v11619 = vpop.f32.mrb[0].mxu0
        %v11620 = vpop.f32.mrb[0].mxu0
        %v11621 = vadd.f32 0.0, %v11620
        %v11622 = vpop.f32.mrb[0].mxu0
        %11623 = vmatprep.mubr.bf16.mxu0 0
        %11624 = vmatmul.mubr.bf16.gmra.mrb[0].mxu0 %v11469
        %v11625 = vpop.f32.mrb[0].mxu0
        %v11626 = vadd.f32 0.0, %v11625
        %v11627 = vpop.f32.mrb[0].mxu0
        %v11628 = vpop.f32.mrb[0].mxu0
        %v11629 = vadd.f32 0.0, %v11628
        %v11630 = vpop.f32.mrb[0].mxu0
        %11631 = vmatprep.mubr.bf16.mxu0 0
        %11632 = vmatmul.mubr.bf16.gmra.mrb[0].mxu0 %v11470
        %v11633 = vpop.f32.mrb[0].mxu0
        %v11634 = vadd.f32 0.0, %v11633
        %v11635 = vpop.f32.mrb[0].mxu0
        %v11636 = vpop.f32.mrb[0].mxu0
        %v11637 = vadd.f32 0.0, %v11636
        %v11638 = vpop.f32.mrb[0].mxu0
        %11639 = vmatprep.mubr.bf16.mxu0 0
        %11640 = vmatmul.mubr.bf16.gmra.mrb[0].mxu0 %v11471
        %v11641 = vpop.f32.mrb[0].mxu0
        %v11642 = vadd.f32 0.0, %v11641
        %v11643 = vpop.f32.mrb[0].mxu0
        %v11644 = vpop.f32.mrb[0].mxu0
        %v11645 = vadd.f32 0.0, %v11644
        %v11646 = vpop.f32.mrb[0].mxu0
        %11647 = vmatprep.mubr.bf16.mxu0 0
        %11648 = vmatmul.mubr.bf16.gmra.mrb[0].mxu0 %v11472
        %v11649 = vpop.f32.mrb[0].mxu0
        %v11650 = vadd.f32 0.0, %v11649
        %v11651 = vpop.f32.mrb[0].mxu0
        %v11652 = vpop.f32.mrb[0].mxu0
        %v11653 = vadd.f32 0.0, %v11652
        %v11654 = vpop.f32.mrb[0].mxu0
        %11655 = vmatprep.mubr.bf16.mxu0 0
        %11656 = vmatmul.mubr.bf16.gmra.mrb[0].mxu0 %v11473
        %v11657 = vpop.f32.mrb[0].mxu0
        %v11658 = vadd.f32 0.0, %v11657
        %v11659 = vpop.f32.mrb[0].mxu0
        %v11660 = vpop.f32.mrb[0].mxu0
        %v11661 = vadd.f32 0.0, %v11660
        %v11662 = vpop.f32.mrb[0].mxu0
        %11663 = vmatprep.mubr.bf16.mxu0 0
        %11664 = vmatmul.mubr.bf16.gmra.mrb[0].mxu0 %v11474
        %v11665 = vpop.f32.mrb[0].mxu0
        %v11666 = vadd.f32 0.0, %v11665
        %v11667 = vpop.f32.mrb[0].mxu0
        %v11668 = vpop.f32.mrb[0].mxu0
        %v11669 = vadd.f32 0.0, %v11668
        %v11670 = vpop.f32.mrb[0].mxu0
        %11671 = vmatprep.mubr.bf16.mxu0 0
        %11672 = vmatmul.mubr.bf16.gmra.mrb[0].mxu0 %v11475
        %v11673 = vpop.f32.mrb[0].mxu0
        %v11674 = vadd.f32 0.0, %v11673
        %v11675 = vpop.f32.mrb[0].mxu0
        %v11676 = vpop.f32.mrb[0].mxu0
        %v11677 = vadd.f32 0.0, %v11676
        %v11678 = vpop.f32.mrb[0].mxu0
        %11679 = vmatprep.mubr.bf16.mxu0 0
        %11680 = vmatmul.mubr.bf16.gmra.mrb[0].mxu0 %v11476
        %v11681 = vpop.f32.mrb[0].mxu0
        %v11682 = vadd.f32 0.0, %v11681
        %v11683 = vpop.f32.mrb[0].mxu0
        %v11684 = vpop.f32.mrb[0].mxu0
        %v11685 = vadd.f32 0.0, %v11684
        %v11686 = vpop.f32.mrb[0].mxu0
        %11687 = vmatprep.mubr.bf16.mxu0 0
        %11688 = vmatmul.mubr.bf16.gmra.mrb[0].mxu0 %v11477
        %v11689 = vpop.f32.mrb[0].mxu0
        %v11690 = vadd.f32 0.0, %v11689
        %v11691 = vpop.f32.mrb[0].mxu0
        %v11692 = vpop.f32.mrb[0].mxu0
        %v11693 = vadd.f32 0.0, %v11692
        %v11694 = vpop.f32.mrb[0].mxu0
        %11695 = vmatprep.mubr.bf16.mxu0 0
        %11696 = vmatmul.mubr.bf16.gmra.mrb[0].mxu0 %v11478
        %v11697 = vpop.f32.mrb[0].mxu0
        %v11698 = vadd.f32 0.0, %v11697
        %v11699 = vpop.f32.mrb[0].mxu0
        %v11700 = vpop.f32.mrb[0].mxu0
        %v11701 = vadd.f32 0.0, %v11700
        %v11702 = vpop.f32.mrb[0].mxu0
        %11703 = vdwg.mxu0
        %v11704 = vadd.f32 %v11206, %v11578
        %v11705 = vadd.f32 %v11207, %v11581
        %v11706 = vadd.f32 %v11208, %v11586
        %v11707 = vadd.f32 %v11209, %v11589
        %v11708 = vadd.f32 %v11210, %v11594
        %v11709 = vadd.f32 %v11211, %v11597
        %v11710 = vadd.f32 %v11212, %v11602
        %v11711 = vadd.f32 %v11213, %v11605
        %v11712 = vadd.f32 %v11214, %v11610
        %v11713 = vadd.f32 %v11215, %v11613
        %v11714 = vadd.f32 %v11216, %v11618
        %v11715 = vadd.f32 %v11217, %v11621
        %v11716 = vadd.f32 %v11218, %v11626
        %v11717 = vadd.f32 %v11219, %v11629
        %v11718 = vadd.f32 %v11220, %v11634
        %v11719 = vadd.f32 %v11221, %v11637
        %v11720 = vadd.f32 %v11222, %v11642
        %v11721 = vadd.f32 %v11223, %v11645
        %v11722 = vadd.f32 %v11224, %v11650
        %v11723 = vadd.f32 %v11225, %v11653
        %v11724 = vadd.f32 %v11226, %v11658
        %v11725 = vadd.f32 %v11227, %v11661
        %v11726 = vadd.f32 %v11228, %v11666
        %v11727 = vadd.f32 %v11229, %v11669
        %v11728 = vadd.f32 %v11230, %v11674
        %v11729 = vadd.f32 %v11231, %v11677
        %v11730 = vadd.f32 %v11232, %v11682
        %v11731 = vadd.f32 %v11233, %v11685
        %v11732 = vadd.f32 %v11234, %v11690
        %v11733 = vadd.f32 %v11235, %v11693
        %v11734 = vadd.f32 %v11236, %v11698
        %v11735 = vadd.f32 %v11237, %v11701
        %v11736 = vadd.f32 %v11704, %v11705
        %v11737 = vadd.f32 %v11736, %v11706
        %v11738 = vadd.f32 %v11737, %v11707
        %v11739 = vadd.f32 %v11738, %v11708
        %v11740 = vadd.f32 %v11739, %v11709
        %v11741 = vadd.f32 %v11740, %v11710
        %v11742 = vadd.f32 %v11741, %v11711
        %v11743 = vadd.f32 %v11742, %v11712
        %v11744 = vadd.f32 %v11743, %v11713
        %v11745 = vadd.f32 %v11744, %v11714
        %v11746 = vadd.f32 %v11745, %v11715
        %v11747 = vadd.f32 %v11746, %v11716
        %v11748 = vadd.f32 %v11747, %v11717
        %v11749 = vadd.f32 %v11748, %v11718
        %v11750 = vadd.f32 %v11749, %v11719
        %v11751 = vadd.f32 %v11750, %v11720
        %v11752 = vadd.f32 %v11751, %v11721
        %v11753 = vadd.f32 %v11752, %v11722
        %v11754 = vadd.f32 %v11753, %v11723
        %v11755 = vadd.f32 %v11754, %v11724
        %v11756 = vadd.f32 %v11755, %v11725
        %v11757 = vadd.f32 %v11756, %v11726
        %v11758 = vadd.f32 %v11757, %v11727
        %v11759 = vadd.f32 %v11758, %v11728
        %v11760 = vadd.f32 %v11759, %v11729
        %v11761 = vadd.f32 %v11760, %v11730
        %v11762 = vadd.f32 %v11761, %v11731
        %v11763 = vadd.f32 %v11762, %v11732
        %v11764 = vadd.f32 %v11763, %v11733
        %v11765 = vadd.f32 %v11764, %v11734
        %v11766 = vadd.f32 %v11765, %v11735
        %v11767 = vrot.slane %v11766, 4
        %v11768 = vadd.f32 %v11766, %v11767
        %v11769 = vrot.slane %v11768, 2
        %v11770 = vadd.f32 %v11768, %v11769
        %v11771 = vrot.slane %v11770, 1
        %v11772 = vadd.f32 %v11770, %v11771
        %v11773 = vmul.f32 %v11772, 0.00390625
        %v11774 = vsub.f32 %v11704, %v11773
        %v11775 = vsub.f32 %v11705, %v11773
        %v11776 = vsub.f32 %v11706, %v11773
        %v11777 = vsub.f32 %v11707, %v11773
        %v11778 = vsub.f32 %v11708, %v11773
        %v11779 = vsub.f32 %v11709, %v11773
        %v11780 = vsub.f32 %v11710, %v11773
        %v11781 = vsub.f32 %v11711, %v11773
        %v11782 = vsub.f32 %v11712, %v11773
        %v11783 = vsub.f32 %v11713, %v11773
        %v11784 = vsub.f32 %v11714, %v11773
        %v11785 = vsub.f32 %v11715, %v11773
        %v11786 = vsub.f32 %v11716, %v11773
        %v11787 = vsub.f32 %v11717, %v11773
        %v11788 = vsub.f32 %v11718, %v11773
        %v11789 = vsub.f32 %v11719, %v11773
        %v11790 = vsub.f32 %v11720, %v11773
        %v11791 = vsub.f32 %v11721, %v11773
        %v11792 = vsub.f32 %v11722, %v11773
        %v11793 = vsub.f32 %v11723, %v11773
        %v11794 = vsub.f32 %v11724, %v11773
        %v11795 = vsub.f32 %v11725, %v11773
        %v11796 = vsub.f32 %v11726, %v11773
        %v11797 = vsub.f32 %v11727, %v11773
        %v11798 = vsub.f32 %v11728, %v11773
        %v11799 = vsub.f32 %v11729, %v11773
        %v11800 = vsub.f32 %v11730, %v11773
        %v11801 = vsub.f32 %v11731, %v11773
        %v11802 = vsub.f32 %v11732, %v11773
        %v11803 = vsub.f32 %v11733, %v11773
        %v11804 = vsub.f32 %v11734, %v11773
        %v11805 = vsub.f32 %v11735, %v11773
        %v11806 = vmul.f32 %v11774, %v11774
        %v11807 = vmul.f32 %v11775, %v11775
        %v11808 = vmul.f32 %v11776, %v11776
        %v11809 = vmul.f32 %v11777, %v11777
        %v11810 = vmul.f32 %v11778, %v11778
        %v11811 = vmul.f32 %v11779, %v11779
        %v11812 = vmul.f32 %v11780, %v11780
        %v11813 = vmul.f32 %v11781, %v11781
        %v11814 = vmul.f32 %v11782, %v11782
        %v11815 = vmul.f32 %v11783, %v11783
        %v11816 = vmul.f32 %v11784, %v11784
        %v11817 = vmul.f32 %v11785, %v11785
        %v11818 = vmul.f32 %v11786, %v11786
        %v11819 = vmul.f32 %v11787, %v11787
        %v11820 = vmul.f32 %v11788, %v11788
        %v11821 = vmul.f32 %v11789, %v11789
        %v11822 = vmul.f32 %v11790, %v11790
        %v11823 = vmul.f32 %v11791, %v11791
        %v11824 = vmul.f32 %v11792, %v11792
        %v11825 = vmul.f32 %v11793, %v11793
        %v11826 = vmul.f32 %v11794, %v11794
        %v11827 = vmul.f32 %v11795, %v11795
        %v11828 = vmul.f32 %v11796, %v11796
        %v11829 = vmul.f32 %v11797, %v11797
        %v11830 = vmul.f32 %v11798, %v11798
        %v11831 = vmul.f32 %v11799, %v11799
        %v11832 = vmul.f32 %v11800, %v11800
        %v11833 = vmul.f32 %v11801, %v11801
        %v11834 = vmul.f32 %v11802, %v11802
        %v11835 = vmul.f32 %v11803, %v11803
        %v11836 = vmul.f32 %v11804, %v11804
        %v11837 = vmul.f32 %v11805, %v11805
        %v11838 = vadd.f32 %v11806, %v11807
        %v11839 = vadd.f32 %v11838, %v11808
        %v11840 = vadd.f32 %v11839, %v11809
        %v11841 = vadd.f32 %v11840, %v11810
        %v11842 = vadd.f32 %v11841, %v11811
        %v11843 = vadd.f32 %v11842, %v11812
        %v11844 = vadd.f32 %v11843, %v11813
        %v11845 = vadd.f32 %v11844, %v11814
        %v11846 = vadd.f32 %v11845, %v11815
        %v11847 = vadd.f32 %v11846, %v11816
        %v11848 = vadd.f32 %v11847, %v11817
        %v11849 = vadd.f32 %v11848, %v11818
        %v11850 = vadd.f32 %v11849, %v11819
        %v11851 = vadd.f32 %v11850, %v11820
        %v11852 = vadd.f32 %v11851, %v11821
        %v11853 = vadd.f32 %v11852, %v11822
        %v11854 = vadd.f32 %v11853, %v11823
        %v11855 = vadd.f32 %v11854, %v11824
        %v11856 = vadd.f32 %v11855, %v11825
        %v11857 = vadd.f32 %v11856, %v11826
        %v11858 = vadd.f32 %v11857, %v11827
        %v11859 = vadd.f32 %v11858, %v11828
        %v11860 = vadd.f32 %v11859, %v11829
        %v11861 = vadd.f32 %v11860, %v11830
        %v11862 = vadd.f32 %v11861, %v11831
        %v11863 = vadd.f32 %v11862, %v11832
        %v11864 = vadd.f32 %v11863, %v11833
        %v11865 = vadd.f32 %v11864, %v11834
        %v11866 = vadd.f32 %v11865, %v11835
        %v11867 = vadd.f32 %v11866, %v11836
        %v11868 = vadd.f32 %v11867, %v11837
        %v11869 = vrot.slane %v11868, 4
        %v11870 = vadd.f32 %v11868, %v11869
        %v11871 = vrot.slane %v11870, 2
        %v11872 = vadd.f32 %v11870, %v11871
        %v11873 = vrot.slane %v11872, 1
        %v11874 = vadd.f32 %v11872, %v11873
        %v11875 = vmul.f32 %v11874, 0.00390625
        %v11876 = vadd.f32 %v11875, 1e-05
        %v11877 = vrsqrt.pop %v11876
        %v11878 = vmul.f32 %v11774, %v11877
        %v11879 = vmul.f32 %v11775, %v11877
        %v11880 = vmul.f32 %v11776, %v11877
        %v11881 = vmul.f32 %v11777, %v11877
        %v11882 = vmul.f32 %v11778, %v11877
        %v11883 = vmul.f32 %v11779, %v11877
        %v11884 = vmul.f32 %v11780, %v11877
        %v11885 = vmul.f32 %v11781, %v11877
        %v11886 = vmul.f32 %v11782, %v11877
        %v11887 = vmul.f32 %v11783, %v11877
        %v11888 = vmul.f32 %v11784, %v11877
        %v11889 = vmul.f32 %v11785, %v11877
        %v11890 = vmul.f32 %v11786, %v11877
        %v11891 = vmul.f32 %v11787, %v11877
        %v11892 = vmul.f32 %v11788, %v11877
        %v11893 = vmul.f32 %v11789, %v11877
        %v11894 = vmul.f32 %v11790, %v11877
        %v11895 = vmul.f32 %v11791, %v11877
        %v11896 = vmul.f32 %v11792, %v11877
        %v11897 = vmul.f32 %v11793, %v11877
        %v11898 = vmul.f32 %v11794, %v11877
        %v11899 = vmul.f32 %v11795, %v11877
        %v11900 = vmul.f32 %v11796, %v11877
        %v11901 = vmul.f32 %v11797, %v11877
        %v11902 = vmul.f32 %v11798, %v11877
        %v11903 = vmul.f32 %v11799, %v11877
        %v11904 = vmul.f32 %v11800, %v11877
        %v11905 = vmul.f32 %v11801, %v11877
        %v11906 = vmul.f32 %v11802, %v11877
        %v11907 = vmul.f32 %v11803, %v11877
        %v11908 = vmul.f32 %v11804, %v11877
        %v11909 = vmul.f32 %v11805, %v11877
        %v11910 = vld [vmem:[%s187] sm:$0xff]
        %v11911 = vld [vmem:[%s187 + $0x8] sm:$0xff]
        %v11912 = vld [vmem:[%s187 + $0x10] sm:$0xff]
        %v11913 = vld [vmem:[%s187 + $0x18] sm:$0xff]
        %v11914 = vld [vmem:[%s187 + $0x20] sm:$0xff]
        %v11915 = vld [vmem:[%s187 + $0x28] sm:$0xff]
        %v11916 = vld [vmem:[%s187 + $0x30] sm:$0xff]
        %v11917 = vld [vmem:[%s187 + $0x38] sm:$0xff]
        %v11918 = vld [vmem:[%s187 + $0x40] sm:$0xff]
        %v11919 = vld [vmem:[%s187 + $0x48] sm:$0xff]
        %v11920 = vld [vmem:[%s187 + $0x50] sm:$0xff]
        %v11921 = vld [vmem:[%s187 + $0x58] sm:$0xff]
        %v11922 = vld [vmem:[%s187 + $0x60] sm:$0xff]
        %v11923 = vld [vmem:[%s187 + $0x68] sm:$0xff]
        %v11924 = vld [vmem:[%s187 + $0x70] sm:$0xff]
        %v11925 = vld [vmem:[%s187 + $0x78] sm:$0xff]
        %v11926 = vld [vmem:[%s187 + $0x80] sm:$0xff]
        %v11927 = vld [vmem:[%s187 + $0x88] sm:$0xff]
        %v11928 = vld [vmem:[%s187 + $0x90] sm:$0xff]
        %v11929 = vld [vmem:[%s187 + $0x98] sm:$0xff]
        %v11930 = vld [vmem:[%s187 + $0xa0] sm:$0xff]
        %v11931 = vld [vmem:[%s187 + $0xa8] sm:$0xff]
        %v11932 = vld [vmem:[%s187 + $0xb0] sm:$0xff]
        %v11933 = vld [vmem:[%s187 + $0xb8] sm:$0xff]
        %v11934 = vld [vmem:[%s187 + $0xc0] sm:$0xff]
        %v11935 = vld [vmem:[%s187 + $0xc8] sm:$0xff]
        %v11936 = vld [vmem:[%s187 + $0xd0] sm:$0xff]
        %v11937 = vld [vmem:[%s187 + $0xd8] sm:$0xff]
        %v11938 = vld [vmem:[%s187 + $0xe0] sm:$0xff]
        %v11939 = vld [vmem:[%s187 + $0xe8] sm:$0xff]
        %v11940 = vld [vmem:[%s187 + $0xf0] sm:$0xff]
        %v11941 = vld [vmem:[%s187 + $0xf8] sm:$0xff]
        %v11942 = vadd.f32 %v11910, %v11878
        %v11943 = vadd.f32 %v11911, %v11879
        %v11944 = vadd.f32 %v11912, %v11880
        %v11945 = vadd.f32 %v11913, %v11881
        %v11946 = vadd.f32 %v11914, %v11882
        %v11947 = vadd.f32 %v11915, %v11883
        %v11948 = vadd.f32 %v11916, %v11884
        %v11949 = vadd.f32 %v11917, %v11885
        %v11950 = vadd.f32 %v11918, %v11886
        %v11951 = vadd.f32 %v11919, %v11887
        %v11952 = vadd.f32 %v11920, %v11888
        %v11953 = vadd.f32 %v11921, %v11889
        %v11954 = vadd.f32 %v11922, %v11890
        %v11955 = vadd.f32 %v11923, %v11891
        %v11956 = vadd.f32 %v11924, %v11892
        %v11957 = vadd.f32 %v11925, %v11893
        %v11958 = vadd.f32 %v11926, %v11894
        %v11959 = vadd.f32 %v11927, %v11895
        %v11960 = vadd.f32 %v11928, %v11896
        %v11961 = vadd.f32 %v11929, %v11897
        %v11962 = vadd.f32 %v11930, %v11898
        %v11963 = vadd.f32 %v11931, %v11899
        %v11964 = vadd.f32 %v11932, %v11900
        %v11965 = vadd.f32 %v11933, %v11901
        %v11966 = vadd.f32 %v11934, %v11902
        %v11967 = vadd.f32 %v11935, %v11903
        %v11968 = vadd.f32 %v11936, %v11904
        %v11969 = vadd.f32 %v11937, %v11905
        %v11970 = vadd.f32 %v11938, %v11906
        %v11971 = vadd.f32 %v11939, %v11907
        %v11972 = vadd.f32 %v11940, %v11908
        %v11973 = vadd.f32 %v11941, %v11909
        %11974 = vst [vmem:[%s217] sm:$0xff] %v11942
        %11975 = vst [vmem:[%s217 + $0x8] sm:$0xff] %v11943
        %11976 = vst [vmem:[%s217 + $0x10] sm:$0xff] %v11944
        %11977 = vst [vmem:[%s217 + $0x18] sm:$0xff] %v11945
        %11978 = vst [vmem:[%s217 + $0x20] sm:$0xff] %v11946
        %11979 = vst [vmem:[%s217 + $0x28] sm:$0xff] %v11947
        %11980 = vst [vmem:[%s217 + $0x30] sm:$0xff] %v11948
        %11981 = vst [vmem:[%s217 + $0x38] sm:$0xff] %v11949
        %11982 = vst [vmem:[%s217 + $0x40] sm:$0xff] %v11950
        %11983 = vst [vmem:[%s217 + $0x48] sm:$0xff] %v11951
        %11984 = vst [vmem:[%s217 + $0x50] sm:$0xff] %v11952
        %11985 = vst [vmem:[%s217 + $0x58] sm:$0xff] %v11953
        %11986 = vst [vmem:[%s217 + $0x60] sm:$0xff] %v11954
        %11987 = vst [vmem:[%s217 + $0x68] sm:$0xff] %v11955
        %11988 = vst [vmem:[%s217 + $0x70] sm:$0xff] %v11956
        %11989 = vst [vmem:[%s217 + $0x78] sm:$0xff] %v11957
        %11990 = vst [vmem:[%s217 + $0x80] sm:$0xff] %v11958
        %11991 = vst [vmem:[%s217 + $0x88] sm:$0xff] %v11959
        %11992 = vst [vmem:[%s217 + $0x90] sm:$0xff] %v11960
        %11993 = vst [vmem:[%s217 + $0x98] sm:$0xff] %v11961
        %11994 = vst [vmem:[%s217 + $0xa0] sm:$0xff] %v11962
        %11995 = vst [vmem:[%s217 + $0xa8] sm:$0xff] %v11963
        %11996 = vst [vmem:[%s217 + $0xb0] sm:$0xff] %v11964
        %11997 = vst [vmem:[%s217 + $0xb8] sm:$0xff] %v11965
        %11998 = vst [vmem:[%s217 + $0xc0] sm:$0xff] %v11966
        %11999 = vst [vmem:[%s217 + $0xc8] sm:$0xff] %v11967
        %12000 = vst [vmem:[%s217 + $0xd0] sm:$0xff] %v11968
        %12001 = vst [vmem:[%s217 + $0xd8] sm:$0xff] %v11969
        %12002 = vst [vmem:[%s217 + $0xe0] sm:$0xff] %v11970
        %12003 = vst [vmem:[%s217 + $0xe8] sm:$0xff] %v11971
        %12004 = vst [vmem:[%s217 + $0xf0] sm:$0xff] %v11972
        %12005 = vst [vmem:[%s217 + $0xf8] sm:$0xff] %v11973
        %s12006 = sand.u32 %s97, 1
        %s12007 = scalar_lea.sflag [#allocation5], %s12006
        %s12008 = sand.u32 %s97, 1
        %s12009 = smul.addr %s12008, 256
        %s12010 = scalar_lea.vmem [#allocation9], %s12009
        // Predicated region
        $region45: #{tpu_custom_call.1} parent=31 // pred_check
          %p12011 = pneg %p107
        $region46: #{tpu_custom_call.1} parent=31 // pred_check_branch
          %12013 = sbr.rel (%p12011) target = $region48
        $region47: #{tpu_custom_call.1} parent=31 // pred_region
          %s12015 = ssub.s32 4096, 4096
          %12016 = vsyncadd %s12007, %s12015
          %s12017 = smul.addr %s21, 32
          %s12018 = smul.addr %s12017, 128
          %s12019 = scalar_lea.hbm %s3, %s12018
          %s12020 = sshll.u32 %s12010, 4
          %s12021 = int_to_ptr.vmem [resolvable:$true] %s12020
          %12026 = dma.vmem_to_hbm [thread:$0]  %s12021, 4096, %s12019, %s12007, 128, 128, 8
        $region48: #{tpu_custom_call.1} parent=31 // pred_fallthru
          _
      $region32: #{tpu_custom_call.1} parent=5 // pred_fallthru
        _
      %p12027 = scmp.le.s32.totalorder 2, %s16
      // Predicated region
      $region49: #{tpu_custom_call.1} parent=5 // pred_check
        %p12028 = pneg %p12027
      $region50: #{tpu_custom_call.1} parent=5 // pred_check_branch
        %12030 = sbr.rel (%p12028) target = $region52
      $region51: #{tpu_custom_call.1} parent=5 // pred_region
        %s12031 = ssub.s32 %s16, 2
        // Predicated region
        $region53: #{tpu_custom_call.1} parent=51 // pred_check
          %p12032 = pneg %p113
        $region54: #{tpu_custom_call.1} parent=51 // pred_check_branch
          %12034 = sbr.rel (%p12032) target = $region56
        $region55: #{tpu_custom_call.1} parent=51 // pred_region
          %s12035 = sand.u32 %s98, 1
          %s12036 = scalar_lea.sflag [#allocation5], %s12035
          %s12037 = sand.u32 %s98, 1
          %s12038 = smul.addr %s12037, 256
          %s12039 = scalar_lea.vmem [#allocation9], %s12038
          %12040 = dma.done %s12036, 4096
        $region56: #{tpu_custom_call.1} parent=51 // pred_fallthru
          _
      $region52: #{tpu_custom_call.1} parent=5 // pred_fallthru
        _
    $region6: #{tpu_custom_call.1} parent=1 // loop_footer
      %s20 = sadd.s32 1, %s16
    $region7: #{tpu_custom_call.1} parent=1 // loop_footer_branch
      %15 = sbr.rel target = $region3
    $region8: #{tpu_custom_call.1} parent=1 // loop_exit
      _
    %12041 = vsyncpa [#allocation4], 1
    %s12042 = scalar_lea.sflag [#allocation4], 1
    %12043 = vsyncpa %s12042, 1
    %12044 = vsyncpa [#allocation7], 1
    %12045 = vsyncpa [#allocation5], 1
    %s12046 = scalar_lea.sflag [#allocation5], 1
    %12047 = vsyncpa %s12046, 1

</llo_original>
